<compile_context>
chip_gen: v5e
topology: v5e:2x2
jax: 0.10.0
libtpu: 0.0.40
codegen_flags: <defaults>
</compile_context>

<pallas_src>
import functools
import math

import jax
import jax.numpy as jnp
from jax.experimental import pallas as pl
from jax.experimental.pallas import tpu as pltpu

FEATURE_CHUNK_SIZE = 50
NUM_HEADS = 8
NUM_LAYERS = 6
FFN_DIM = 128


def _layer_norm(x, g, b, eps=1e-5):
    mu = jnp.mean(x, axis=-1, keepdims=True)
    var = jnp.mean((x - mu) ** 2, axis=-1, keepdims=True)
    return (x - mu) * jax.lax.rsqrt(var + eps) * g + b


# ------------------------- fully fused network kernel -------------------------
def fused_network_kernel(x_ref, wc_ref, bc_ref,
                         wqkv_ref, bqkv_ref, wo_ref, bo_ref,
                         w1_ref, b1_ref, w2_ref, b2_ref,
                         g1_ref, beta1_ref, g2_ref, beta2_ref,
                         o_ref, *, num_heads):
    """One grid step == one batch element: inception stem over its C chunks,
    followed by all L transformer encoder layers; every weight stays in VMEM."""
    x = x_ref[0]                                   # (C, S, D)
    C, S, D = x.shape
    L = wqkv_ref.shape[0]
    dh = D // num_heads
    scale = 1.0 / math.sqrt(dh)

    # ---- inception stem: fused 3-tap conv (+ folded k=1 branch), ReLU, mean pool
    # The three K=D tap matmuls collapse into a single K=3D matmul per chunk by
    # concatenating shifted copies of x along the feature (lane) axis.
    zero_row = jnp.zeros((1, D), jnp.float32)
    pooled = []
    for c in range(C):                             # C is small & static
        xc = x[c]                                  # (S, D)
        x_prev = jnp.concatenate([zero_row, xc[:S - 1, :]], axis=0)   # shift down
        x_next = jnp.concatenate([xc[1:, :], zero_row], axis=0)       # shift up
        xcat = jnp.concatenate([x_prev, xc, x_next], axis=-1)         # (S, 3D)
        y = jnp.dot(xcat, wc_ref[...], preferred_element_type=jnp.float32)
        y = jnp.maximum(y + bc_ref[...], 0.0)
        pooled.append(jnp.sum(y, axis=0, keepdims=True) * (1.0 / S))  # (1, D)
    h = jnp.concatenate(pooled, axis=0)            # (C, D)

    # ---- L transformer encoder layers looped in-kernel (weights stacked on L) ----
    for l in range(L):
        qkv = jnp.dot(h, wqkv_ref[l], preferred_element_type=jnp.float32) + bqkv_ref[l]
        q = qkv[:, :D]
        k = qkv[:, D:2 * D]
        v = qkv[:, 2 * D:]

        heads = []
        for hh in range(num_heads):                # static unroll, tiny per-head work
            lo = hh * dh
            qh = q[:, lo:lo + dh]
            kh = k[:, lo:lo + dh]
            vh = v[:, lo:lo + dh]
            s = jax.lax.dot_general(qh, kh, (((1,), (1,)), ((), ())),
                                    preferred_element_type=jnp.float32) * scale
            s = s - jnp.max(s, axis=-1, keepdims=True)
            p = jnp.exp(s)
            p = p * pl.reciprocal(jnp.sum(p, axis=-1, keepdims=True), approx=True)
            heads.append(jnp.dot(p, vh, preferred_element_type=jnp.float32))
        o_cat = jnp.concatenate(heads, axis=-1)    # (C, D): concat(heads)
        attn = jnp.dot(o_cat, wo_ref[l], preferred_element_type=jnp.float32) + bo_ref[l]

        x1 = _layer_norm(h + attn, g1_ref[l], beta1_ref[l])
        hid = jnp.maximum(
            jnp.dot(x1, w1_ref[l], preferred_element_type=jnp.float32) + b1_ref[l], 0.0)
        ff = jnp.dot(hid, w2_ref[l], preferred_element_type=jnp.float32) + b2_ref[l]
        h = _layer_norm(x1 + ff, g2_ref[l], beta2_ref[l])

    o_ref[0] = h


def fused_forward(chunked_x, wc, bc, t, num_heads=NUM_HEADS):
    B, C, S, D = chunked_x.shape
    L, _, F = t["w1"].shape

    def full(shape):
        n = len(shape)
        return pl.BlockSpec(shape, lambda i, n=n: (0,) * n)

    kernel = functools.partial(fused_network_kernel, num_heads=num_heads)
    return pl.pallas_call(
        kernel,
        out_shape=jax.ShapeDtypeStruct((B, C, D), jnp.float32),
        grid=(B,),
        in_specs=[
            pl.BlockSpec((1, C, S, D), lambda i: (i, 0, 0, 0)),
            full((3 * D, D)), full((1, D)),
            full((L, D, 3 * D)), full((L, 1, 3 * D)),
            full((L, D, D)), full((L, 1, D)),
            full((L, D, F)), full((L, 1, F)),
            full((L, F, D)), full((L, 1, D)),
            full((L, 1, D)), full((L, 1, D)), full((L, 1, D)), full((L, 1, D)),
        ],
        out_specs=pl.BlockSpec((1, C, D), lambda i: (i, 0, 0)),
        compiler_params=pltpu.CompilerParams(
            dimension_semantics=("parallel",),
            vmem_limit_bytes=64 << 20,
        ),
    )(chunked_x, wc, bc,
      t["wqkv"], t["bqkv"], t["wo"], t["bo"],
      t["w1"], t["b1"], t["w2"], t["b2"],
      t["g1"], t["beta1"], t["g2"], t["beta2"])


# ------------------------------- full network -------------------------------
def forward(x, params):
    b_n, s_n, d_n = x.shape
    c_n = s_n // FEATURE_CHUNK_SIZE
    chunked_x = x[:, :FEATURE_CHUNK_SIZE * c_n, :]
    chunked_x = chunked_x.reshape(b_n, c_n, FEATURE_CHUNK_SIZE, d_n)
    inc = params["inception"]
    # Fold the kernel-size-1 branch into the middle conv tap -> single (3D, D) weight.
    wc = jnp.concatenate([inc["w3"][0], inc["w3"][1] + inc["w1"], inc["w3"][2]], axis=0)
    return fused_forward(chunked_x, wc, inc["b"], params["transformer"])


def init_params(key, D, F=FFN_DIM, H=NUM_HEADS, L=NUM_LAYERS):
    scale = 0.02
    k = jax.random.split(key, 6)
    inception = {
        "w1": jax.random.normal(k[0], (D, D), jnp.float32) * scale,
        "w3": jax.random.normal(k[1], (3, D, D), jnp.float32) * scale,
        "b": jnp.zeros((1, D), jnp.float32),
    }
    transformer = {
        "wqkv": jax.random.normal(k[2], (L, D, 3 * D), jnp.float32) * scale,
        "bqkv": jnp.zeros((L, 1, 3 * D), jnp.float32),
        "wo": jax.random.normal(k[3], (L, D, D), jnp.float32) * scale,
        "bo": jnp.zeros((L, 1, D), jnp.float32),
        "w1": jax.random.normal(k[4], (L, D, F), jnp.float32) * scale,
        "b1": jnp.zeros((L, 1, F), jnp.float32),
        "w2": jax.random.normal(k[5], (L, F, D), jnp.float32) * scale,
        "b2": jnp.zeros((L, 1, D), jnp.float32),
        "g1": jnp.ones((L, 1, D), jnp.float32),
        "beta1": jnp.zeros((L, 1, D), jnp.float32),
        "g2": jnp.ones((L, 1, D), jnp.float32),
        "beta2": jnp.zeros((L, 1, D), jnp.float32),
    }
    return {"inception": inception, "transformer": transformer}


if __name__ == "__main__":
    hidden_dim = 32                      # d_n; divisible by 8 heads
    batch, seq = 2, 105                  # 105 // 50 = 2 chunks (exercises truncation)
    key = jax.random.PRNGKey(0)
    kx, kp = jax.random.split(key)
    x = jax.random.normal(kx, (batch, seq, hidden_dim), jnp.float32)
    params = init_params(kp, hidden_dim)

    out = jax.jit(forward)(x, params)
    jax.block_until_ready(out)
    assert out.shape == (batch, seq // FEATURE_CHUNK_SIZE, hidden_dim)
    assert bool(jnp.all(jnp.isfinite(out)))
    print("KERNEL_OK")
</pallas_src>

<mosaic_0001>
module attributes {stable_mosaic.version = 11 : i64} {
  func.func @fused_network_kernel(%arg0: i32, %arg1: memref<1x2x50x32xf32, #tpu.memory_space<vmem>>, %arg2: memref<96x32xf32, #tpu.memory_space<vmem>>, %arg3: memref<1x32xf32, #tpu.memory_space<vmem>>, %arg4: memref<6x32x96xf32, #tpu.memory_space<vmem>>, %arg5: memref<6x1x96xf32, #tpu.memory_space<vmem>>, %arg6: memref<6x32x32xf32, #tpu.memory_space<vmem>>, %arg7: memref<6x1x32xf32, #tpu.memory_space<vmem>>, %arg8: memref<6x32x128xf32, #tpu.memory_space<vmem>>, %arg9: memref<6x1x128xf32, #tpu.memory_space<vmem>>, %arg10: memref<6x128x32xf32, #tpu.memory_space<vmem>>, %arg11: memref<6x1x32xf32, #tpu.memory_space<vmem>>, %arg12: memref<6x1x32xf32, #tpu.memory_space<vmem>>, %arg13: memref<6x1x32xf32, #tpu.memory_space<vmem>>, %arg14: memref<6x1x32xf32, #tpu.memory_space<vmem>>, %arg15: memref<6x1x32xf32, #tpu.memory_space<vmem>>, %arg16: memref<1x2x32xf32, #tpu.memory_space<vmem>>) attributes {dimension_semantics = [#tpu.dimension_semantics<parallel>], iteration_bounds = array<i64: 2>, scalar_prefetch = 0 : i64, scratch_operands = 0 : i64, tpu.core_type = #tpu.core_type<tc>, window_params = [{transform_indices = @transform_0, window_bounds = array<i64: 1, 2, 50, 32>}, {pipeline_mode = #tpu.pipeline_mode<synchronous>, transform_indices = @transform_1, window_bounds = array<i64: 96, 32>}, {pipeline_mode = #tpu.pipeline_mode<synchronous>, transform_indices = @transform_2, window_bounds = array<i64: 1, 32>}, {pipeline_mode = #tpu.pipeline_mode<synchronous>, transform_indices = @transform_3, window_bounds = array<i64: 6, 32, 96>}, {pipeline_mode = #tpu.pipeline_mode<synchronous>, transform_indices = @transform_4, window_bounds = array<i64: 6, 1, 96>}, {pipeline_mode = #tpu.pipeline_mode<synchronous>, transform_indices = @transform_5, window_bounds = array<i64: 6, 32, 32>}, {pipeline_mode = #tpu.pipeline_mode<synchronous>, transform_indices = @transform_6, window_bounds = array<i64: 6, 1, 32>}, {pipeline_mode = #tpu.pipeline_mode<synchronous>, transform_indices = @transform_7, window_bounds = array<i64: 6, 32, 128>}, {pipeline_mode = #tpu.pipeline_mode<synchronous>, transform_indices = @transform_8, window_bounds = array<i64: 6, 1, 128>}, {pipeline_mode = #tpu.pipeline_mode<synchronous>, transform_indices = @transform_9, window_bounds = array<i64: 6, 128, 32>}, {pipeline_mode = #tpu.pipeline_mode<synchronous>, transform_indices = @transform_10, window_bounds = array<i64: 6, 1, 32>}, {pipeline_mode = #tpu.pipeline_mode<synchronous>, transform_indices = @transform_11, window_bounds = array<i64: 6, 1, 32>}, {pipeline_mode = #tpu.pipeline_mode<synchronous>, transform_indices = @transform_12, window_bounds = array<i64: 6, 1, 32>}, {pipeline_mode = #tpu.pipeline_mode<synchronous>, transform_indices = @transform_13, window_bounds = array<i64: 6, 1, 32>}, {pipeline_mode = #tpu.pipeline_mode<synchronous>, transform_indices = @transform_14, window_bounds = array<i64: 6, 1, 32>}, {transform_indices = @transform_15, window_bounds = array<i64: 1, 2, 32>}]} {
    %c0 = arith.constant 0 : index
    %c0_0 = arith.constant 0 : index
    %c0_1 = arith.constant 0 : index
    %c0_2 = arith.constant 0 : index
    %0 = vector.load %arg1[%c0, %c0_0, %c0_1, %c0_2] : memref<1x2x50x32xf32, #tpu.memory_space<vmem>>, vector<1x2x50x32xf32>
    %1 = vector.shape_cast %0 : vector<1x2x50x32xf32> to vector<2x50x32xf32>
    %cst = arith.constant 0.000000e+00 : f32
    %2 = vector.broadcast %cst : f32 to vector<1x32xf32>
    %3 = vector.extract_strided_slice %1 {offsets = [0, 0, 0], sizes = [1, 50, 32], strides = [1, 1, 1]} : vector<2x50x32xf32> to vector<1x50x32xf32>
    %4 = vector.shape_cast %3 : vector<1x50x32xf32> to vector<50x32xf32>
    %5 = vector.extract_strided_slice %4 {offsets = [0, 0], sizes = [49, 32], strides = [1, 1]} : vector<50x32xf32> to vector<49x32xf32>
    %6 = tpu.concatenate %2, %5 in 0 : vector<1x32xf32>, vector<49x32xf32> -> vector<50x32xf32>
    %7 = vector.extract_strided_slice %4 {offsets = [1, 0], sizes = [49, 32], strides = [1, 1]} : vector<50x32xf32> to vector<49x32xf32>
    %8 = tpu.concatenate %7, %2 in 0 : vector<49x32xf32>, vector<1x32xf32> -> vector<50x32xf32>
    %9 = tpu.concatenate %6, %4, %8 in 1 : vector<50x32xf32>, vector<50x32xf32>, vector<50x32xf32> -> vector<50x96xf32>
    %c0_3 = arith.constant 0 : index
    %c0_4 = arith.constant 0 : index
    %10 = vector.load %arg2[%c0_3, %c0_4] : memref<96x32xf32, #tpu.memory_space<vmem>>, vector<96x32xf32>
    %cst_5 = arith.constant dense<0.000000e+00> : vector<50x32xf32>
    %11 = tpu.matmul %9, %10, %cst_5 {dimension_numbers = #tpu.dot_dimension_numbers<[1], [0], [0], [1], [0, 0, 1, 1], [], []>} : vector<50x96xf32>, vector<96x32xf32>, vector<50x32xf32> -> vector<50x32xf32>
    %c0_6 = arith.constant 0 : index
    %c0_7 = arith.constant 0 : index
    %12 = vector.load %arg3[%c0_6, %c0_7] : memref<1x32xf32, #tpu.memory_space<vmem>>, vector<1x32xf32>
    %13 = vector.broadcast %12 : vector<1x32xf32> to vector<50x32xf32>
    %14 = arith.addf %11, %13 : vector<50x32xf32>
    %cst_8 = arith.constant 0.000000e+00 : f32
    %15 = vector.broadcast %cst_8 : f32 to vector<50x32xf32>
    %16 = arith.maximumf %14, %15 : vector<50x32xf32>
    %cst_9 = arith.constant dense<0.000000e+00> : vector<32xf32>
    %17 = vector.multi_reduction <add>, %16, %cst_9 [0] : vector<50x32xf32> to vector<32xf32>
    %18 = vector.shape_cast %17 : vector<32xf32> to vector<1x32xf32>
    %cst_10 = arith.constant 2.000000e-02 : f32
    %19 = vector.broadcast %cst_10 : f32 to vector<1x32xf32>
    %20 = arith.mulf %18, %19 : vector<1x32xf32>
    %21 = vector.extract_strided_slice %1 {offsets = [1, 0, 0], sizes = [1, 50, 32], strides = [1, 1, 1]} : vector<2x50x32xf32> to vector<1x50x32xf32>
    %22 = vector.shape_cast %21 : vector<1x50x32xf32> to vector<50x32xf32>
    %23 = vector.extract_strided_slice %22 {offsets = [0, 0], sizes = [49, 32], strides = [1, 1]} : vector<50x32xf32> to vector<49x32xf32>
    %24 = tpu.concatenate %2, %23 in 0 : vector<1x32xf32>, vector<49x32xf32> -> vector<50x32xf32>
    %25 = vector.extract_strided_slice %22 {offsets = [1, 0], sizes = [49, 32], strides = [1, 1]} : vector<50x32xf32> to vector<49x32xf32>
    %26 = tpu.concatenate %25, %2 in 0 : vector<49x32xf32>, vector<1x32xf32> -> vector<50x32xf32>
    %27 = tpu.concatenate %24, %22, %26 in 1 : vector<50x32xf32>, vector<50x32xf32>, vector<50x32xf32> -> vector<50x96xf32>
    %c0_11 = arith.constant 0 : index
    %c0_12 = arith.constant 0 : index
    %28 = vector.load %arg2[%c0_11, %c0_12] : memref<96x32xf32, #tpu.memory_space<vmem>>, vector<96x32xf32>
    %cst_13 = arith.constant dense<0.000000e+00> : vector<50x32xf32>
    %29 = tpu.matmul %27, %28, %cst_13 {dimension_numbers = #tpu.dot_dimension_numbers<[1], [0], [0], [1], [0, 0, 1, 1], [], []>} : vector<50x96xf32>, vector<96x32xf32>, vector<50x32xf32> -> vector<50x32xf32>
    %c0_14 = arith.constant 0 : index
    %c0_15 = arith.constant 0 : index
    %30 = vector.load %arg3[%c0_14, %c0_15] : memref<1x32xf32, #tpu.memory_space<vmem>>, vector<1x32xf32>
    %31 = vector.broadcast %30 : vector<1x32xf32> to vector<50x32xf32>
    %32 = arith.addf %29, %31 : vector<50x32xf32>
    %cst_16 = arith.constant 0.000000e+00 : f32
    %33 = vector.broadcast %cst_16 : f32 to vector<50x32xf32>
    %34 = arith.maximumf %32, %33 : vector<50x32xf32>
    %cst_17 = arith.constant dense<0.000000e+00> : vector<32xf32>
    %35 = vector.multi_reduction <add>, %34, %cst_17 [0] : vector<50x32xf32> to vector<32xf32>
    %36 = vector.shape_cast %35 : vector<32xf32> to vector<1x32xf32>
    %cst_18 = arith.constant 2.000000e-02 : f32
    %37 = vector.broadcast %cst_18 : f32 to vector<1x32xf32>
    %38 = arith.mulf %36, %37 : vector<1x32xf32>
    %39 = tpu.concatenate %20, %38 in 0 : vector<1x32xf32>, vector<1x32xf32> -> vector<2x32xf32>
    %c0_19 = arith.constant 0 : index
    %c0_20 = arith.constant 0 : index
    %c0_21 = arith.constant 0 : index
    %40 = vector.load %arg4[%c0_19, %c0_20, %c0_21] : memref<6x32x96xf32, #tpu.memory_space<vmem>>, vector<1x32x96xf32>
    %41 = vector.shape_cast %40 : vector<1x32x96xf32> to vector<32x96xf32>
    %cst_22 = arith.constant dense<0.000000e+00> : vector<2x96xf32>
    %42 = tpu.matmul %39, %41, %cst_22 {dimension_numbers = #tpu.dot_dimension_numbers<[1], [0], [0], [1], [0, 0, 1, 1], [], []>} : vector<2x32xf32>, vector<32x96xf32>, vector<2x96xf32> -> vector<2x96xf32>
    %c0_23 = arith.constant 0 : index
    %c0_24 = arith.constant 0 : index
    %c0_25 = arith.constant 0 : index
    %43 = vector.load %arg5[%c0_23, %c0_24, %c0_25] : memref<6x1x96xf32, #tpu.memory_space<vmem>>, vector<1x1x96xf32>
    %44 = vector.shape_cast %43 : vector<1x1x96xf32> to vector<1x96xf32>
    %45 = vector.broadcast %44 : vector<1x96xf32> to vector<2x96xf32>
    %46 = arith.addf %42, %45 : vector<2x96xf32>
    %47 = vector.extract_strided_slice %46 {offsets = [0, 0], sizes = [2, 32], strides = [1, 1]} : vector<2x96xf32> to vector<2x32xf32>
    %48 = vector.extract_strided_slice %46 {offsets = [0, 32], sizes = [2, 32], strides = [1, 1]} : vector<2x96xf32> to vector<2x32xf32>
    %49 = vector.extract_strided_slice %46 {offsets = [0, 64], sizes = [2, 32], strides = [1, 1]} : vector<2x96xf32> to vector<2x32xf32>
    %50 = vector.extract_strided_slice %47 {offsets = [0, 0], sizes = [2, 4], strides = [1, 1]} : vector<2x32xf32> to vector<2x4xf32>
    %51 = vector.extract_strided_slice %48 {offsets = [0, 0], sizes = [2, 4], strides = [1, 1]} : vector<2x32xf32> to vector<2x4xf32>
    %52 = vector.extract_strided_slice %49 {offsets = [0, 0], sizes = [2, 4], strides = [1, 1]} : vector<2x32xf32> to vector<2x4xf32>
    %cst_26 = arith.constant dense<0.000000e+00> : vector<2x2xf32>
    %53 = tpu.matmul %50, %51, %cst_26 {dimension_numbers = #tpu.dot_dimension_numbers<[1], [1], [0], [0], [0, 0, 1, 0], [], []>} : vector<2x4xf32>, vector<2x4xf32>, vector<2x2xf32> -> vector<2x2xf32>
    %cst_27 = arith.constant 5.000000e-01 : f32
    %54 = vector.broadcast %cst_27 : f32 to vector<2x2xf32>
    %55 = arith.mulf %53, %54 : vector<2x2xf32>
    %cst_28 = arith.constant dense<0xFF800000> : vector<2xf32>
    %56 = vector.multi_reduction <maximumf>, %55, %cst_28 [1] : vector<2x2xf32> to vector<2xf32>
    %57 = vector.shape_cast %56 : vector<2xf32> to vector<2x1xf32>
    %58 = vector.broadcast %57 : vector<2x1xf32> to vector<2x2xf32>
    %59 = arith.subf %55, %58 : vector<2x2xf32>
    %60 = math.exp %59 : vector<2x2xf32>
    %cst_29 = arith.constant dense<0.000000e+00> : vector<2xf32>
    %61 = vector.multi_reduction <add>, %60, %cst_29 [1] : vector<2x2xf32> to vector<2xf32>
    %62 = vector.shape_cast %61 : vector<2xf32> to vector<2x1xf32>
    %63 = tpu.reciprocal %62 {approx = true} : vector<2x1xf32> -> vector<2x1xf32>
    %64 = vector.broadcast %63 : vector<2x1xf32> to vector<2x2xf32>
    %65 = arith.mulf %60, %64 : vector<2x2xf32>
    %cst_30 = arith.constant dense<0.000000e+00> : vector<2x4xf32>
    %66 = tpu.matmul %65, %52, %cst_30 {dimension_numbers = #tpu.dot_dimension_numbers<[1], [0], [0], [1], [0, 0, 1, 1], [], []>} : vector<2x2xf32>, vector<2x4xf32>, vector<2x4xf32> -> vector<2x4xf32>
    %67 = vector.extract_strided_slice %47 {offsets = [0, 4], sizes = [2, 4], strides = [1, 1]} : vector<2x32xf32> to vector<2x4xf32>
    %68 = vector.extract_strided_slice %48 {offsets = [0, 4], sizes = [2, 4], strides = [1, 1]} : vector<2x32xf32> to vector<2x4xf32>
    %69 = vector.extract_strided_slice %49 {offsets = [0, 4], sizes = [2, 4], strides = [1, 1]} : vector<2x32xf32> to vector<2x4xf32>
    %cst_31 = arith.constant dense<0.000000e+00> : vector<2x2xf32>
    %70 = tpu.matmul %67, %68, %cst_31 {dimension_numbers = #tpu.dot_dimension_numbers<[1], [1], [0], [0], [0, 0, 1, 0], [], []>} : vector<2x4xf32>, vector<2x4xf32>, vector<2x2xf32> -> vector<2x2xf32>
    %cst_32 = arith.constant 5.000000e-01 : f32
    %71 = vector.broadcast %cst_32 : f32 to vector<2x2xf32>
    %72 = arith.mulf %70, %71 : vector<2x2xf32>
    %cst_33 = arith.constant dense<0xFF800000> : vector<2xf32>
    %73 = vector.multi_reduction <maximumf>, %72, %cst_33 [1] : vector<2x2xf32> to vector<2xf32>
    %74 = vector.shape_cast %73 : vector<2xf32> to vector<2x1xf32>
    %75 = vector.broadcast %74 : vector<2x1xf32> to vector<2x2xf32>
    %76 = arith.subf %72, %75 : vector<2x2xf32>
    %77 = math.exp %76 : vector<2x2xf32>
    %cst_34 = arith.constant dense<0.000000e+00> : vector<2xf32>
    %78 = vector.multi_reduction <add>, %77, %cst_34 [1] : vector<2x2xf32> to vector<2xf32>
    %79 = vector.shape_cast %78 : vector<2xf32> to vector<2x1xf32>
    %80 = tpu.reciprocal %79 {approx = true} : vector<2x1xf32> -> vector<2x1xf32>
    %81 = vector.broadcast %80 : vector<2x1xf32> to vector<2x2xf32>
    %82 = arith.mulf %77, %81 : vector<2x2xf32>
    %cst_35 = arith.constant dense<0.000000e+00> : vector<2x4xf32>
    %83 = tpu.matmul %82, %69, %cst_35 {dimension_numbers = #tpu.dot_dimension_numbers<[1], [0], [0], [1], [0, 0, 1, 1], [], []>} : vector<2x2xf32>, vector<2x4xf32>, vector<2x4xf32> -> vector<2x4xf32>
    %84 = vector.extract_strided_slice %47 {offsets = [0, 8], sizes = [2, 4], strides = [1, 1]} : vector<2x32xf32> to vector<2x4xf32>
    %85 = vector.extract_strided_slice %48 {offsets = [0, 8], sizes = [2, 4], strides = [1, 1]} : vector<2x32xf32> to vector<2x4xf32>
    %86 = vector.extract_strided_slice %49 {offsets = [0, 8], sizes = [2, 4], strides = [1, 1]} : vector<2x32xf32> to vector<2x4xf32>
    %cst_36 = arith.constant dense<0.000000e+00> : vector<2x2xf32>
    %87 = tpu.matmul %84, %85, %cst_36 {dimension_numbers = #tpu.dot_dimension_numbers<[1], [1], [0], [0], [0, 0, 1, 0], [], []>} : vector<2x4xf32>, vector<2x4xf32>, vector<2x2xf32> -> vector<2x2xf32>
    %cst_37 = arith.constant 5.000000e-01 : f32
    %88 = vector.broadcast %cst_37 : f32 to vector<2x2xf32>
    %89 = arith.mulf %87, %88 : vector<2x2xf32>
    %cst_38 = arith.constant dense<0xFF800000> : vector<2xf32>
    %90 = vector.multi_reduction <maximumf>, %89, %cst_38 [1] : vector<2x2xf32> to vector<2xf32>
    %91 = vector.shape_cast %90 : vector<2xf32> to vector<2x1xf32>
    %92 = vector.broadcast %91 : vector<2x1xf32> to vector<2x2xf32>
    %93 = arith.subf %89, %92 : vector<2x2xf32>
    %94 = math.exp %93 : vector<2x2xf32>
    %cst_39 = arith.constant dense<0.000000e+00> : vector<2xf32>
    %95 = vector.multi_reduction <add>, %94, %cst_39 [1] : vector<2x2xf32> to vector<2xf32>
    %96 = vector.shape_cast %95 : vector<2xf32> to vector<2x1xf32>
    %97 = tpu.reciprocal %96 {approx = true} : vector<2x1xf32> -> vector<2x1xf32>
    %98 = vector.broadcast %97 : vector<2x1xf32> to vector<2x2xf32>
    %99 = arith.mulf %94, %98 : vector<2x2xf32>
    %cst_40 = arith.constant dense<0.000000e+00> : vector<2x4xf32>
    %100 = tpu.matmul %99, %86, %cst_40 {dimension_numbers = #tpu.dot_dimension_numbers<[1], [0], [0], [1], [0, 0, 1, 1], [], []>} : vector<2x2xf32>, vector<2x4xf32>, vector<2x4xf32> -> vector<2x4xf32>
    %101 = vector.extract_strided_slice %47 {offsets = [0, 12], sizes = [2, 4], strides = [1, 1]} : vector<2x32xf32> to vector<2x4xf32>
    %102 = vector.extract_strided_slice %48 {offsets = [0, 12], sizes = [2, 4], strides = [1, 1]} : vector<2x32xf32> to vector<2x4xf32>
    %103 = vector.extract_strided_slice %49 {offsets = [0, 12], sizes = [2, 4], strides = [1, 1]} : vector<2x32xf32> to vector<2x4xf32>
    %cst_41 = arith.constant dense<0.000000e+00> : vector<2x2xf32>
    %104 = tpu.matmul %101, %102, %cst_41 {dimension_numbers = #tpu.dot_dimension_numbers<[1], [1], [0], [0], [0, 0, 1, 0], [], []>} : vector<2x4xf32>, vector<2x4xf32>, vector<2x2xf32> -> vector<2x2xf32>
    %cst_42 = arith.constant 5.000000e-01 : f32
    %105 = vector.broadcast %cst_42 : f32 to vector<2x2xf32>
    %106 = arith.mulf %104, %105 : vector<2x2xf32>
    %cst_43 = arith.constant dense<0xFF800000> : vector<2xf32>
    %107 = vector.multi_reduction <maximumf>, %106, %cst_43 [1] : vector<2x2xf32> to vector<2xf32>
    %108 = vector.shape_cast %107 : vector<2xf32> to vector<2x1xf32>
    %109 = vector.broadcast %108 : vector<2x1xf32> to vector<2x2xf32>
    %110 = arith.subf %106, %109 : vector<2x2xf32>
    %111 = math.exp %110 : vector<2x2xf32>
    %cst_44 = arith.constant dense<0.000000e+00> : vector<2xf32>
    %112 = vector.multi_reduction <add>, %111, %cst_44 [1] : vector<2x2xf32> to vector<2xf32>
    %113 = vector.shape_cast %112 : vector<2xf32> to vector<2x1xf32>
    %114 = tpu.reciprocal %113 {approx = true} : vector<2x1xf32> -> vector<2x1xf32>
    %115 = vector.broadcast %114 : vector<2x1xf32> to vector<2x2xf32>
    %116 = arith.mulf %111, %115 : vector<2x2xf32>
    %cst_45 = arith.constant dense<0.000000e+00> : vector<2x4xf32>
    %117 = tpu.matmul %116, %103, %cst_45 {dimension_numbers = #tpu.dot_dimension_numbers<[1], [0], [0], [1], [0, 0, 1, 1], [], []>} : vector<2x2xf32>, vector<2x4xf32>, vector<2x4xf32> -> vector<2x4xf32>
    %118 = vector.extract_strided_slice %47 {offsets = [0, 16], sizes = [2, 4], strides = [1, 1]} : vector<2x32xf32> to vector<2x4xf32>
    %119 = vector.extract_strided_slice %48 {offsets = [0, 16], sizes = [2, 4], strides = [1, 1]} : vector<2x32xf32> to vector<2x4xf32>
    %120 = vector.extract_strided_slice %49 {offsets = [0, 16], sizes = [2, 4], strides = [1, 1]} : vector<2x32xf32> to vector<2x4xf32>
    %cst_46 = arith.constant dense<0.000000e+00> : vector<2x2xf32>
    %121 = tpu.matmul %118, %119, %cst_46 {dimension_numbers = #tpu.dot_dimension_numbers<[1], [1], [0], [0], [0, 0, 1, 0], [], []>} : vector<2x4xf32>, vector<2x4xf32>, vector<2x2xf32> -> vector<2x2xf32>
    %cst_47 = arith.constant 5.000000e-01 : f32
    %122 = vector.broadcast %cst_47 : f32 to vector<2x2xf32>
    %123 = arith.mulf %121, %122 : vector<2x2xf32>
    %cst_48 = arith.constant dense<0xFF800000> : vector<2xf32>
    %124 = vector.multi_reduction <maximumf>, %123, %cst_48 [1] : vector<2x2xf32> to vector<2xf32>
    %125 = vector.shape_cast %124 : vector<2xf32> to vector<2x1xf32>
    %126 = vector.broadcast %125 : vector<2x1xf32> to vector<2x2xf32>
    %127 = arith.subf %123, %126 : vector<2x2xf32>
    %128 = math.exp %127 : vector<2x2xf32>
    %cst_49 = arith.constant dense<0.000000e+00> : vector<2xf32>
    %129 = vector.multi_reduction <add>, %128, %cst_49 [1] : vector<2x2xf32> to vector<2xf32>
    %130 = vector.shape_cast %129 : vector<2xf32> to vector<2x1xf32>
    %131 = tpu.reciprocal %130 {approx = true} : vector<2x1xf32> -> vector<2x1xf32>
    %132 = vector.broadcast %131 : vector<2x1xf32> to vector<2x2xf32>
    %133 = arith.mulf %128, %132 : vector<2x2xf32>
    %cst_50 = arith.constant dense<0.000000e+00> : vector<2x4xf32>
    %134 = tpu.matmul %133, %120, %cst_50 {dimension_numbers = #tpu.dot_dimension_numbers<[1], [0], [0], [1], [0, 0, 1, 1], [], []>} : vector<2x2xf32>, vector<2x4xf32>, vector<2x4xf32> -> vector<2x4xf32>
    %135 = vector.extract_strided_slice %47 {offsets = [0, 20], sizes = [2, 4], strides = [1, 1]} : vector<2x32xf32> to vector<2x4xf32>
    %136 = vector.extract_strided_slice %48 {offsets = [0, 20], sizes = [2, 4], strides = [1, 1]} : vector<2x32xf32> to vector<2x4xf32>
    %137 = vector.extract_strided_slice %49 {offsets = [0, 20], sizes = [2, 4], strides = [1, 1]} : vector<2x32xf32> to vector<2x4xf32>
    %cst_51 = arith.constant dense<0.000000e+00> : vector<2x2xf32>
    %138 = tpu.matmul %135, %136, %cst_51 {dimension_numbers = #tpu.dot_dimension_numbers<[1], [1], [0], [0], [0, 0, 1, 0], [], []>} : vector<2x4xf32>, vector<2x4xf32>, vector<2x2xf32> -> vector<2x2xf32>
    %cst_52 = arith.constant 5.000000e-01 : f32
    %139 = vector.broadcast %cst_52 : f32 to vector<2x2xf32>
    %140 = arith.mulf %138, %139 : vector<2x2xf32>
    %cst_53 = arith.constant dense<0xFF800000> : vector<2xf32>
    %141 = vector.multi_reduction <maximumf>, %140, %cst_53 [1] : vector<2x2xf32> to vector<2xf32>
    %142 = vector.shape_cast %141 : vector<2xf32> to vector<2x1xf32>
    %143 = vector.broadcast %142 : vector<2x1xf32> to vector<2x2xf32>
    %144 = arith.subf %140, %143 : vector<2x2xf32>
    %145 = math.exp %144 : vector<2x2xf32>
    %cst_54 = arith.constant dense<0.000000e+00> : vector<2xf32>
    %146 = vector.multi_reduction <add>, %145, %cst_54 [1] : vector<2x2xf32> to vector<2xf32>
    %147 = vector.shape_cast %146 : vector<2xf32> to vector<2x1xf32>
    %148 = tpu.reciprocal %147 {approx = true} : vector<2x1xf32> -> vector<2x1xf32>
    %149 = vector.broadcast %148 : vector<2x1xf32> to vector<2x2xf32>
    %150 = arith.mulf %145, %149 : vector<2x2xf32>
    %cst_55 = arith.constant dense<0.000000e+00> : vector<2x4xf32>
    %151 = tpu.matmul %150, %137, %cst_55 {dimension_numbers = #tpu.dot_dimension_numbers<[1], [0], [0], [1], [0, 0, 1, 1], [], []>} : vector<2x2xf32>, vector<2x4xf32>, vector<2x4xf32> -> vector<2x4xf32>
    %152 = vector.extract_strided_slice %47 {offsets = [0, 24], sizes = [2, 4], strides = [1, 1]} : vector<2x32xf32> to vector<2x4xf32>
    %153 = vector.extract_strided_slice %48 {offsets = [0, 24], sizes = [2, 4], strides = [1, 1]} : vector<2x32xf32> to vector<2x4xf32>
    %154 = vector.extract_strided_slice %49 {offsets = [0, 24], sizes = [2, 4], strides = [1, 1]} : vector<2x32xf32> to vector<2x4xf32>
    %cst_56 = arith.constant dense<0.000000e+00> : vector<2x2xf32>
    %155 = tpu.matmul %152, %153, %cst_56 {dimension_numbers = #tpu.dot_dimension_numbers<[1], [1], [0], [0], [0, 0, 1, 0], [], []>} : vector<2x4xf32>, vector<2x4xf32>, vector<2x2xf32> -> vector<2x2xf32>
    %cst_57 = arith.constant 5.000000e-01 : f32
    %156 = vector.broadcast %cst_57 : f32 to vector<2x2xf32>
    %157 = arith.mulf %155, %156 : vector<2x2xf32>
    %cst_58 = arith.constant dense<0xFF800000> : vector<2xf32>
    %158 = vector.multi_reduction <maximumf>, %157, %cst_58 [1] : vector<2x2xf32> to vector<2xf32>
    %159 = vector.shape_cast %158 : vector<2xf32> to vector<2x1xf32>
    %160 = vector.broadcast %159 : vector<2x1xf32> to vector<2x2xf32>
    %161 = arith.subf %157, %160 : vector<2x2xf32>
    %162 = math.exp %161 : vector<2x2xf32>
    %cst_59 = arith.constant dense<0.000000e+00> : vector<2xf32>
    %163 = vector.multi_reduction <add>, %162, %cst_59 [1] : vector<2x2xf32> to vector<2xf32>
    %164 = vector.shape_cast %163 : vector<2xf32> to vector<2x1xf32>
    %165 = tpu.reciprocal %164 {approx = true} : vector<2x1xf32> -> vector<2x1xf32>
    %166 = vector.broadcast %165 : vector<2x1xf32> to vector<2x2xf32>
    %167 = arith.mulf %162, %166 : vector<2x2xf32>
    %cst_60 = arith.constant dense<0.000000e+00> : vector<2x4xf32>
    %168 = tpu.matmul %167, %154, %cst_60 {dimension_numbers = #tpu.dot_dimension_numbers<[1], [0], [0], [1], [0, 0, 1, 1], [], []>} : vector<2x2xf32>, vector<2x4xf32>, vector<2x4xf32> -> vector<2x4xf32>
    %169 = vector.extract_strided_slice %47 {offsets = [0, 28], sizes = [2, 4], strides = [1, 1]} : vector<2x32xf32> to vector<2x4xf32>
    %170 = vector.extract_strided_slice %48 {offsets = [0, 28], sizes = [2, 4], strides = [1, 1]} : vector<2x32xf32> to vector<2x4xf32>
    %171 = vector.extract_strided_slice %49 {offsets = [0, 28], sizes = [2, 4], strides = [1, 1]} : vector<2x32xf32> to vector<2x4xf32>
    %cst_61 = arith.constant dense<0.000000e+00> : vector<2x2xf32>
    %172 = tpu.matmul %169, %170, %cst_61 {dimension_numbers = #tpu.dot_dimension_numbers<[1], [1], [0], [0], [0, 0, 1, 0], [], []>} : vector<2x4xf32>, vector<2x4xf32>, vector<2x2xf32> -> vector<2x2xf32>
    %cst_62 = arith.constant 5.000000e-01 : f32
    %173 = vector.broadcast %cst_62 : f32 to vector<2x2xf32>
    %174 = arith.mulf %172, %173 : vector<2x2xf32>
    %cst_63 = arith.constant dense<0xFF800000> : vector<2xf32>
    %175 = vector.multi_reduction <maximumf>, %174, %cst_63 [1] : vector<2x2xf32> to vector<2xf32>
    %176 = vector.shape_cast %175 : vector<2xf32> to vector<2x1xf32>
    %177 = vector.broadcast %176 : vector<2x1xf32> to vector<2x2xf32>
    %178 = arith.subf %174, %177 : vector<2x2xf32>
    %179 = math.exp %178 : vector<2x2xf32>
    %cst_64 = arith.constant dense<0.000000e+00> : vector<2xf32>
    %180 = vector.multi_reduction <add>, %179, %cst_64 [1] : vector<2x2xf32> to vector<2xf32>
    %181 = vector.shape_cast %180 : vector<2xf32> to vector<2x1xf32>
    %182 = tpu.reciprocal %181 {approx = true} : vector<2x1xf32> -> vector<2x1xf32>
    %183 = vector.broadcast %182 : vector<2x1xf32> to vector<2x2xf32>
    %184 = arith.mulf %179, %183 : vector<2x2xf32>
    %cst_65 = arith.constant dense<0.000000e+00> : vector<2x4xf32>
    %185 = tpu.matmul %184, %171, %cst_65 {dimension_numbers = #tpu.dot_dimension_numbers<[1], [0], [0], [1], [0, 0, 1, 1], [], []>} : vector<2x2xf32>, vector<2x4xf32>, vector<2x4xf32> -> vector<2x4xf32>
    %186 = tpu.concatenate %66, %83, %100, %117, %134, %151, %168, %185 in 1 : vector<2x4xf32>, vector<2x4xf32>, vector<2x4xf32>, vector<2x4xf32>, vector<2x4xf32>, vector<2x4xf32>, vector<2x4xf32>, vector<2x4xf32> -> vector<2x32xf32>
    %c0_66 = arith.constant 0 : index
    %c0_67 = arith.constant 0 : index
    %c0_68 = arith.constant 0 : index
    %187 = vector.load %arg6[%c0_66, %c0_67, %c0_68] : memref<6x32x32xf32, #tpu.memory_space<vmem>>, vector<1x32x32xf32>
    %188 = vector.shape_cast %187 : vector<1x32x32xf32> to vector<32x32xf32>
    %cst_69 = arith.constant dense<0.000000e+00> : vector<2x32xf32>
    %189 = tpu.matmul %186, %188, %cst_69 {dimension_numbers = #tpu.dot_dimension_numbers<[1], [0], [0], [1], [0, 0, 1, 1], [], []>} : vector<2x32xf32>, vector<32x32xf32>, vector<2x32xf32> -> vector<2x32xf32>
    %c0_70 = arith.constant 0 : index
    %c0_71 = arith.constant 0 : index
    %c0_72 = arith.constant 0 : index
    %190 = vector.load %arg7[%c0_70, %c0_71, %c0_72] : memref<6x1x32xf32, #tpu.memory_space<vmem>>, vector<1x1x32xf32>
    %191 = vector.shape_cast %190 : vector<1x1x32xf32> to vector<1x32xf32>
    %192 = vector.broadcast %191 : vector<1x32xf32> to vector<2x32xf32>
    %193 = arith.addf %189, %192 : vector<2x32xf32>
    %194 = arith.addf %39, %193 : vector<2x32xf32>
    %c0_73 = arith.constant 0 : index
    %c0_74 = arith.constant 0 : index
    %c0_75 = arith.constant 0 : index
    %195 = vector.load %arg12[%c0_73, %c0_74, %c0_75] : memref<6x1x32xf32, #tpu.memory_space<vmem>>, vector<1x1x32xf32>
    %196 = vector.shape_cast %195 : vector<1x1x32xf32> to vector<1x32xf32>
    %c0_76 = arith.constant 0 : index
    %c0_77 = arith.constant 0 : index
    %c0_78 = arith.constant 0 : index
    %197 = vector.load %arg13[%c0_76, %c0_77, %c0_78] : memref<6x1x32xf32, #tpu.memory_space<vmem>>, vector<1x1x32xf32>
    %198 = vector.shape_cast %197 : vector<1x1x32xf32> to vector<1x32xf32>
    %cst_79 = arith.constant dense<0.000000e+00> : vector<2xf32>
    %199 = vector.multi_reduction <add>, %194, %cst_79 [1] : vector<2x32xf32> to vector<2xf32>
    %200 = vector.shape_cast %199 : vector<2xf32> to vector<2x1xf32>
    %cst_80 = arith.constant 3.200000e+01 : f32
    %201 = vector.broadcast %cst_80 : f32 to vector<2x1xf32>
    %202 = arith.divf %200, %201 : vector<2x1xf32>
    %203 = vector.broadcast %202 : vector<2x1xf32> to vector<2x32xf32>
    %204 = arith.subf %194, %203 : vector<2x32xf32>
    %205 = arith.mulf %204, %204 : vector<2x32xf32>
    %cst_81 = arith.constant dense<0.000000e+00> : vector<2xf32>
    %206 = vector.multi_reduction <add>, %205, %cst_81 [1] : vector<2x32xf32> to vector<2xf32>
    %207 = vector.shape_cast %206 : vector<2xf32> to vector<2x1xf32>
    %cst_82 = arith.constant 3.200000e+01 : f32
    %208 = vector.broadcast %cst_82 : f32 to vector<2x1xf32>
    %209 = arith.divf %207, %208 : vector<2x1xf32>
    %210 = vector.broadcast %202 : vector<2x1xf32> to vector<2x32xf32>
    %211 = arith.subf %194, %210 : vector<2x32xf32>
    %cst_83 = arith.constant 9.99999974E-6 : f32
    %212 = vector.broadcast %cst_83 : f32 to vector<2x1xf32>
    %213 = arith.addf %209, %212 : vector<2x1xf32>
    %214 = math.rsqrt %213 : vector<2x1xf32>
    %215 = vector.broadcast %214 : vector<2x1xf32> to vector<2x32xf32>
    %216 = arith.mulf %211, %215 : vector<2x32xf32>
    %217 = vector.broadcast %196 : vector<1x32xf32> to vector<2x32xf32>
    %218 = arith.mulf %216, %217 : vector<2x32xf32>
    %219 = vector.broadcast %198 : vector<1x32xf32> to vector<2x32xf32>
    %220 = arith.addf %218, %219 : vector<2x32xf32>
    %c0_84 = arith.constant 0 : index
    %c0_85 = arith.constant 0 : index
    %c0_86 = arith.constant 0 : index
    %221 = vector.load %arg8[%c0_84, %c0_85, %c0_86] : memref<6x32x128xf32, #tpu.memory_space<vmem>>, vector<1x32x128xf32>
    %222 = vector.shape_cast %221 : vector<1x32x128xf32> to vector<32x128xf32>
    %cst_87 = arith.constant dense<0.000000e+00> : vector<2x128xf32>
    %223 = tpu.matmul %220, %222, %cst_87 {dimension_numbers = #tpu.dot_dimension_numbers<[1], [0], [0], [1], [0, 0, 1, 1], [], []>} : vector<2x32xf32>, vector<32x128xf32>, vector<2x128xf32> -> vector<2x128xf32>
    %c0_88 = arith.constant 0 : index
    %c0_89 = arith.constant 0 : index
    %c0_90 = arith.constant 0 : index
    %224 = vector.load %arg9[%c0_88, %c0_89, %c0_90] : memref<6x1x128xf32, #tpu.memory_space<vmem>>, vector<1x1x128xf32>
    %225 = vector.shape_cast %224 : vector<1x1x128xf32> to vector<1x128xf32>
    %226 = vector.broadcast %225 : vector<1x128xf32> to vector<2x128xf32>
    %227 = arith.addf %223, %226 : vector<2x128xf32>
    %cst_91 = arith.constant 0.000000e+00 : f32
    %228 = vector.broadcast %cst_91 : f32 to vector<2x128xf32>
    %229 = arith.maximumf %227, %228 : vector<2x128xf32>
    %c0_92 = arith.constant 0 : index
    %c0_93 = arith.constant 0 : index
    %c0_94 = arith.constant 0 : index
    %230 = vector.load %arg10[%c0_92, %c0_93, %c0_94] : memref<6x128x32xf32, #tpu.memory_space<vmem>>, vector<1x128x32xf32>
    %231 = vector.shape_cast %230 : vector<1x128x32xf32> to vector<128x32xf32>
    %cst_95 = arith.constant dense<0.000000e+00> : vector<2x32xf32>
    %232 = tpu.matmul %229, %231, %cst_95 {dimension_numbers = #tpu.dot_dimension_numbers<[1], [0], [0], [1], [0, 0, 1, 1], [], []>} : vector<2x128xf32>, vector<128x32xf32>, vector<2x32xf32> -> vector<2x32xf32>
    %c0_96 = arith.constant 0 : index
    %c0_97 = arith.constant 0 : index
    %c0_98 = arith.constant 0 : index
    %233 = vector.load %arg11[%c0_96, %c0_97, %c0_98] : memref<6x1x32xf32, #tpu.memory_space<vmem>>, vector<1x1x32xf32>
    %234 = vector.shape_cast %233 : vector<1x1x32xf32> to vector<1x32xf32>
    %235 = vector.broadcast %234 : vector<1x32xf32> to vector<2x32xf32>
    %236 = arith.addf %232, %235 : vector<2x32xf32>
    %237 = arith.addf %220, %236 : vector<2x32xf32>
    %c0_99 = arith.constant 0 : index
    %c0_100 = arith.constant 0 : index
    %c0_101 = arith.constant 0 : index
    %238 = vector.load %arg14[%c0_99, %c0_100, %c0_101] : memref<6x1x32xf32, #tpu.memory_space<vmem>>, vector<1x1x32xf32>
    %239 = vector.shape_cast %238 : vector<1x1x32xf32> to vector<1x32xf32>
    %c0_102 = arith.constant 0 : index
    %c0_103 = arith.constant 0 : index
    %c0_104 = arith.constant 0 : index
    %240 = vector.load %arg15[%c0_102, %c0_103, %c0_104] : memref<6x1x32xf32, #tpu.memory_space<vmem>>, vector<1x1x32xf32>
    %241 = vector.shape_cast %240 : vector<1x1x32xf32> to vector<1x32xf32>
    %cst_105 = arith.constant dense<0.000000e+00> : vector<2xf32>
    %242 = vector.multi_reduction <add>, %237, %cst_105 [1] : vector<2x32xf32> to vector<2xf32>
    %243 = vector.shape_cast %242 : vector<2xf32> to vector<2x1xf32>
    %cst_106 = arith.constant 3.200000e+01 : f32
    %244 = vector.broadcast %cst_106 : f32 to vector<2x1xf32>
    %245 = arith.divf %243, %244 : vector<2x1xf32>
    %246 = vector.broadcast %245 : vector<2x1xf32> to vector<2x32xf32>
    %247 = arith.subf %237, %246 : vector<2x32xf32>
    %248 = arith.mulf %247, %247 : vector<2x32xf32>
    %cst_107 = arith.constant dense<0.000000e+00> : vector<2xf32>
    %249 = vector.multi_reduction <add>, %248, %cst_107 [1] : vector<2x32xf32> to vector<2xf32>
    %250 = vector.shape_cast %249 : vector<2xf32> to vector<2x1xf32>
    %cst_108 = arith.constant 3.200000e+01 : f32
    %251 = vector.broadcast %cst_108 : f32 to vector<2x1xf32>
    %252 = arith.divf %250, %251 : vector<2x1xf32>
    %253 = vector.broadcast %245 : vector<2x1xf32> to vector<2x32xf32>
    %254 = arith.subf %237, %253 : vector<2x32xf32>
    %cst_109 = arith.constant 9.99999974E-6 : f32
    %255 = vector.broadcast %cst_109 : f32 to vector<2x1xf32>
    %256 = arith.addf %252, %255 : vector<2x1xf32>
    %257 = math.rsqrt %256 : vector<2x1xf32>
    %258 = vector.broadcast %257 : vector<2x1xf32> to vector<2x32xf32>
    %259 = arith.mulf %254, %258 : vector<2x32xf32>
    %260 = vector.broadcast %239 : vector<1x32xf32> to vector<2x32xf32>
    %261 = arith.mulf %259, %260 : vector<2x32xf32>
    %262 = vector.broadcast %241 : vector<1x32xf32> to vector<2x32xf32>
    %263 = arith.addf %261, %262 : vector<2x32xf32>
    %c1 = arith.constant 1 : index
    %c0_110 = arith.constant 0 : index
    %c0_111 = arith.constant 0 : index
    %264 = vector.load %arg4[%c1, %c0_110, %c0_111] : memref<6x32x96xf32, #tpu.memory_space<vmem>>, vector<1x32x96xf32>
    %265 = vector.shape_cast %264 : vector<1x32x96xf32> to vector<32x96xf32>
    %cst_112 = arith.constant dense<0.000000e+00> : vector<2x96xf32>
    %266 = tpu.matmul %263, %265, %cst_112 {dimension_numbers = #tpu.dot_dimension_numbers<[1], [0], [0], [1], [0, 0, 1, 1], [], []>} : vector<2x32xf32>, vector<32x96xf32>, vector<2x96xf32> -> vector<2x96xf32>
    %c1_113 = arith.constant 1 : index
    %c0_114 = arith.constant 0 : index
    %c0_115 = arith.constant 0 : index
    %267 = vector.load %arg5[%c1_113, %c0_114, %c0_115] : memref<6x1x96xf32, #tpu.memory_space<vmem>>, vector<1x1x96xf32>
    %268 = vector.shape_cast %267 : vector<1x1x96xf32> to vector<1x96xf32>
    %269 = vector.broadcast %268 : vector<1x96xf32> to vector<2x96xf32>
    %270 = arith.addf %266, %269 : vector<2x96xf32>
    %271 = vector.extract_strided_slice %270 {offsets = [0, 0], sizes = [2, 32], strides = [1, 1]} : vector<2x96xf32> to vector<2x32xf32>
    %272 = vector.extract_strided_slice %270 {offsets = [0, 32], sizes = [2, 32], strides = [1, 1]} : vector<2x96xf32> to vector<2x32xf32>
    %273 = vector.extract_strided_slice %270 {offsets = [0, 64], sizes = [2, 32], strides = [1, 1]} : vector<2x96xf32> to vector<2x32xf32>
    %274 = vector.extract_strided_slice %271 {offsets = [0, 0], sizes = [2, 4], strides = [1, 1]} : vector<2x32xf32> to vector<2x4xf32>
    %275 = vector.extract_strided_slice %272 {offsets = [0, 0], sizes = [2, 4], strides = [1, 1]} : vector<2x32xf32> to vector<2x4xf32>
    %276 = vector.extract_strided_slice %273 {offsets = [0, 0], sizes = [2, 4], strides = [1, 1]} : vector<2x32xf32> to vector<2x4xf32>
    %cst_116 = arith.constant dense<0.000000e+00> : vector<2x2xf32>
    %277 = tpu.matmul %274, %275, %cst_116 {dimension_numbers = #tpu.dot_dimension_numbers<[1], [1], [0], [0], [0, 0, 1, 0], [], []>} : vector<2x4xf32>, vector<2x4xf32>, vector<2x2xf32> -> vector<2x2xf32>
    %cst_117 = arith.constant 5.000000e-01 : f32
    %278 = vector.broadcast %cst_117 : f32 to vector<2x2xf32>
    %279 = arith.mulf %277, %278 : vector<2x2xf32>
    %cst_118 = arith.constant dense<0xFF800000> : vector<2xf32>
    %280 = vector.multi_reduction <maximumf>, %279, %cst_118 [1] : vector<2x2xf32> to vector<2xf32>
    %281 = vector.shape_cast %280 : vector<2xf32> to vector<2x1xf32>
    %282 = vector.broadcast %281 : vector<2x1xf32> to vector<2x2xf32>
    %283 = arith.subf %279, %282 : vector<2x2xf32>
    %284 = math.exp %283 : vector<2x2xf32>
    %cst_119 = arith.constant dense<0.000000e+00> : vector<2xf32>
    %285 = vector.multi_reduction <add>, %284, %cst_119 [1] : vector<2x2xf32> to vector<2xf32>
    %286 = vector.shape_cast %285 : vector<2xf32> to vector<2x1xf32>
    %287 = tpu.reciprocal %286 {approx = true} : vector<2x1xf32> -> vector<2x1xf32>
    %288 = vector.broadcast %287 : vector<2x1xf32> to vector<2x2xf32>
    %289 = arith.mulf %284, %288 : vector<2x2xf32>
    %cst_120 = arith.constant dense<0.000000e+00> : vector<2x4xf32>
    %290 = tpu.matmul %289, %276, %cst_120 {dimension_numbers = #tpu.dot_dimension_numbers<[1], [0], [0], [1], [0, 0, 1, 1], [], []>} : vector<2x2xf32>, vector<2x4xf32>, vector<2x4xf32> -> vector<2x4xf32>
    %291 = vector.extract_strided_slice %271 {offsets = [0, 4], sizes = [2, 4], strides = [1, 1]} : vector<2x32xf32> to vector<2x4xf32>
    %292 = vector.extract_strided_slice %272 {offsets = [0, 4], sizes = [2, 4], strides = [1, 1]} : vector<2x32xf32> to vector<2x4xf32>
    %293 = vector.extract_strided_slice %273 {offsets = [0, 4], sizes = [2, 4], strides = [1, 1]} : vector<2x32xf32> to vector<2x4xf32>
    %cst_121 = arith.constant dense<0.000000e+00> : vector<2x2xf32>
    %294 = tpu.matmul %291, %292, %cst_121 {dimension_numbers = #tpu.dot_dimension_numbers<[1], [1], [0], [0], [0, 0, 1, 0], [], []>} : vector<2x4xf32>, vector<2x4xf32>, vector<2x2xf32> -> vector<2x2xf32>
    %cst_122 = arith.constant 5.000000e-01 : f32
    %295 = vector.broadcast %cst_122 : f32 to vector<2x2xf32>
    %296 = arith.mulf %294, %295 : vector<2x2xf32>
    %cst_123 = arith.constant dense<0xFF800000> : vector<2xf32>
    %297 = vector.multi_reduction <maximumf>, %296, %cst_123 [1] : vector<2x2xf32> to vector<2xf32>
    %298 = vector.shape_cast %297 : vector<2xf32> to vector<2x1xf32>
    %299 = vector.broadcast %298 : vector<2x1xf32> to vector<2x2xf32>
    %300 = arith.subf %296, %299 : vector<2x2xf32>
    %301 = math.exp %300 : vector<2x2xf32>
    %cst_124 = arith.constant dense<0.000000e+00> : vector<2xf32>
    %302 = vector.multi_reduction <add>, %301, %cst_124 [1] : vector<2x2xf32> to vector<2xf32>
    %303 = vector.shape_cast %302 : vector<2xf32> to vector<2x1xf32>
    %304 = tpu.reciprocal %303 {approx = true} : vector<2x1xf32> -> vector<2x1xf32>
    %305 = vector.broadcast %304 : vector<2x1xf32> to vector<2x2xf32>
    %306 = arith.mulf %301, %305 : vector<2x2xf32>
    %cst_125 = arith.constant dense<0.000000e+00> : vector<2x4xf32>
    %307 = tpu.matmul %306, %293, %cst_125 {dimension_numbers = #tpu.dot_dimension_numbers<[1], [0], [0], [1], [0, 0, 1, 1], [], []>} : vector<2x2xf32>, vector<2x4xf32>, vector<2x4xf32> -> vector<2x4xf32>
    %308 = vector.extract_strided_slice %271 {offsets = [0, 8], sizes = [2, 4], strides = [1, 1]} : vector<2x32xf32> to vector<2x4xf32>
    %309 = vector.extract_strided_slice %272 {offsets = [0, 8], sizes = [2, 4], strides = [1, 1]} : vector<2x32xf32> to vector<2x4xf32>
    %310 = vector.extract_strided_slice %273 {offsets = [0, 8], sizes = [2, 4], strides = [1, 1]} : vector<2x32xf32> to vector<2x4xf32>
    %cst_126 = arith.constant dense<0.000000e+00> : vector<2x2xf32>
    %311 = tpu.matmul %308, %309, %cst_126 {dimension_numbers = #tpu.dot_dimension_numbers<[1], [1], [0], [0], [0, 0, 1, 0], [], []>} : vector<2x4xf32>, vector<2x4xf32>, vector<2x2xf32> -> vector<2x2xf32>
    %cst_127 = arith.constant 5.000000e-01 : f32
    %312 = vector.broadcast %cst_127 : f32 to vector<2x2xf32>
    %313 = arith.mulf %311, %312 : vector<2x2xf32>
    %cst_128 = arith.constant dense<0xFF800000> : vector<2xf32>
    %314 = vector.multi_reduction <maximumf>, %313, %cst_128 [1] : vector<2x2xf32> to vector<2xf32>
    %315 = vector.shape_cast %314 : vector<2xf32> to vector<2x1xf32>
    %316 = vector.broadcast %315 : vector<2x1xf32> to vector<2x2xf32>
    %317 = arith.subf %313, %316 : vector<2x2xf32>
    %318 = math.exp %317 : vector<2x2xf32>
    %cst_129 = arith.constant dense<0.000000e+00> : vector<2xf32>
    %319 = vector.multi_reduction <add>, %318, %cst_129 [1] : vector<2x2xf32> to vector<2xf32>
    %320 = vector.shape_cast %319 : vector<2xf32> to vector<2x1xf32>
    %321 = tpu.reciprocal %320 {approx = true} : vector<2x1xf32> -> vector<2x1xf32>
    %322 = vector.broadcast %321 : vector<2x1xf32> to vector<2x2xf32>
    %323 = arith.mulf %318, %322 : vector<2x2xf32>
    %cst_130 = arith.constant dense<0.000000e+00> : vector<2x4xf32>
    %324 = tpu.matmul %323, %310, %cst_130 {dimension_numbers = #tpu.dot_dimension_numbers<[1], [0], [0], [1], [0, 0, 1, 1], [], []>} : vector<2x2xf32>, vector<2x4xf32>, vector<2x4xf32> -> vector<2x4xf32>
    %325 = vector.extract_strided_slice %271 {offsets = [0, 12], sizes = [2, 4], strides = [1, 1]} : vector<2x32xf32> to vector<2x4xf32>
    %326 = vector.extract_strided_slice %272 {offsets = [0, 12], sizes = [2, 4], strides = [1, 1]} : vector<2x32xf32> to vector<2x4xf32>
    %327 = vector.extract_strided_slice %273 {offsets = [0, 12], sizes = [2, 4], strides = [1, 1]} : vector<2x32xf32> to vector<2x4xf32>
    %cst_131 = arith.constant dense<0.000000e+00> : vector<2x2xf32>
    %328 = tpu.matmul %325, %326, %cst_131 {dimension_numbers = #tpu.dot_dimension_numbers<[1], [1], [0], [0], [0, 0, 1, 0], [], []>} : vector<2x4xf32>, vector<2x4xf32>, vector<2x2xf32> -> vector<2x2xf32>
    %cst_132 = arith.constant 5.000000e-01 : f32
    %329 = vector.broadcast %cst_132 : f32 to vector<2x2xf32>
    %330 = arith.mulf %328, %329 : vector<2x2xf32>
    %cst_133 = arith.constant dense<0xFF800000> : vector<2xf32>
    %331 = vector.multi_reduction <maximumf>, %330, %cst_133 [1] : vector<2x2xf32> to vector<2xf32>
    %332 = vector.shape_cast %331 : vector<2xf32> to vector<2x1xf32>
    %333 = vector.broadcast %332 : vector<2x1xf32> to vector<2x2xf32>
    %334 = arith.subf %330, %333 : vector<2x2xf32>
    %335 = math.exp %334 : vector<2x2xf32>
    %cst_134 = arith.constant dense<0.000000e+00> : vector<2xf32>
    %336 = vector.multi_reduction <add>, %335, %cst_134 [1] : vector<2x2xf32> to vector<2xf32>
    %337 = vector.shape_cast %336 : vector<2xf32> to vector<2x1xf32>
    %338 = tpu.reciprocal %337 {approx = true} : vector<2x1xf32> -> vector<2x1xf32>
    %339 = vector.broadcast %338 : vector<2x1xf32> to vector<2x2xf32>
    %340 = arith.mulf %335, %339 : vector<2x2xf32>
    %cst_135 = arith.constant dense<0.000000e+00> : vector<2x4xf32>
    %341 = tpu.matmul %340, %327, %cst_135 {dimension_numbers = #tpu.dot_dimension_numbers<[1], [0], [0], [1], [0, 0, 1, 1], [], []>} : vector<2x2xf32>, vector<2x4xf32>, vector<2x4xf32> -> vector<2x4xf32>
    %342 = vector.extract_strided_slice %271 {offsets = [0, 16], sizes = [2, 4], strides = [1, 1]} : vector<2x32xf32> to vector<2x4xf32>
    %343 = vector.extract_strided_slice %272 {offsets = [0, 16], sizes = [2, 4], strides = [1, 1]} : vector<2x32xf32> to vector<2x4xf32>
    %344 = vector.extract_strided_slice %273 {offsets = [0, 16], sizes = [2, 4], strides = [1, 1]} : vector<2x32xf32> to vector<2x4xf32>
    %cst_136 = arith.constant dense<0.000000e+00> : vector<2x2xf32>
    %345 = tpu.matmul %342, %343, %cst_136 {dimension_numbers = #tpu.dot_dimension_numbers<[1], [1], [0], [0], [0, 0, 1, 0], [], []>} : vector<2x4xf32>, vector<2x4xf32>, vector<2x2xf32> -> vector<2x2xf32>
    %cst_137 = arith.constant 5.000000e-01 : f32
    %346 = vector.broadcast %cst_137 : f32 to vector<2x2xf32>
    %347 = arith.mulf %345, %346 : vector<2x2xf32>
    %cst_138 = arith.constant dense<0xFF800000> : vector<2xf32>
    %348 = vector.multi_reduction <maximumf>, %347, %cst_138 [1] : vector<2x2xf32> to vector<2xf32>
    %349 = vector.shape_cast %348 : vector<2xf32> to vector<2x1xf32>
    %350 = vector.broadcast %349 : vector<2x1xf32> to vector<2x2xf32>
    %351 = arith.subf %347, %350 : vector<2x2xf32>
    %352 = math.exp %351 : vector<2x2xf32>
    %cst_139 = arith.constant dense<0.000000e+00> : vector<2xf32>
    %353 = vector.multi_reduction <add>, %352, %cst_139 [1] : vector<2x2xf32> to vector<2xf32>
    %354 = vector.shape_cast %353 : vector<2xf32> to vector<2x1xf32>
    %355 = tpu.reciprocal %354 {approx = true} : vector<2x1xf32> -> vector<2x1xf32>
    %356 = vector.broadcast %355 : vector<2x1xf32> to vector<2x2xf32>
    %357 = arith.mulf %352, %356 : vector<2x2xf32>
    %cst_140 = arith.constant dense<0.000000e+00> : vector<2x4xf32>
    %358 = tpu.matmul %357, %344, %cst_140 {dimension_numbers = #tpu.dot_dimension_numbers<[1], [0], [0], [1], [0, 0, 1, 1], [], []>} : vector<2x2xf32>, vector<2x4xf32>, vector<2x4xf32> -> vector<2x4xf32>
    %359 = vector.extract_strided_slice %271 {offsets = [0, 20], sizes = [2, 4], strides = [1, 1]} : vector<2x32xf32> to vector<2x4xf32>
    %360 = vector.extract_strided_slice %272 {offsets = [0, 20], sizes = [2, 4], strides = [1, 1]} : vector<2x32xf32> to vector<2x4xf32>
    %361 = vector.extract_strided_slice %273 {offsets = [0, 20], sizes = [2, 4], strides = [1, 1]} : vector<2x32xf32> to vector<2x4xf32>
    %cst_141 = arith.constant dense<0.000000e+00> : vector<2x2xf32>
    %362 = tpu.matmul %359, %360, %cst_141 {dimension_numbers = #tpu.dot_dimension_numbers<[1], [1], [0], [0], [0, 0, 1, 0], [], []>} : vector<2x4xf32>, vector<2x4xf32>, vector<2x2xf32> -> vector<2x2xf32>
    %cst_142 = arith.constant 5.000000e-01 : f32
    %363 = vector.broadcast %cst_142 : f32 to vector<2x2xf32>
    %364 = arith.mulf %362, %363 : vector<2x2xf32>
    %cst_143 = arith.constant dense<0xFF800000> : vector<2xf32>
    %365 = vector.multi_reduction <maximumf>, %364, %cst_143 [1] : vector<2x2xf32> to vector<2xf32>
    %366 = vector.shape_cast %365 : vector<2xf32> to vector<2x1xf32>
    %367 = vector.broadcast %366 : vector<2x1xf32> to vector<2x2xf32>
    %368 = arith.subf %364, %367 : vector<2x2xf32>
    %369 = math.exp %368 : vector<2x2xf32>
    %cst_144 = arith.constant dense<0.000000e+00> : vector<2xf32>
    %370 = vector.multi_reduction <add>, %369, %cst_144 [1] : vector<2x2xf32> to vector<2xf32>
    %371 = vector.shape_cast %370 : vector<2xf32> to vector<2x1xf32>
    %372 = tpu.reciprocal %371 {approx = true} : vector<2x1xf32> -> vector<2x1xf32>
    %373 = vector.broadcast %372 : vector<2x1xf32> to vector<2x2xf32>
    %374 = arith.mulf %369, %373 : vector<2x2xf32>
    %cst_145 = arith.constant dense<0.000000e+00> : vector<2x4xf32>
    %375 = tpu.matmul %374, %361, %cst_145 {dimension_numbers = #tpu.dot_dimension_numbers<[1], [0], [0], [1], [0, 0, 1, 1], [], []>} : vector<2x2xf32>, vector<2x4xf32>, vector<2x4xf32> -> vector<2x4xf32>
    %376 = vector.extract_strided_slice %271 {offsets = [0, 24], sizes = [2, 4], strides = [1, 1]} : vector<2x32xf32> to vector<2x4xf32>
    %377 = vector.extract_strided_slice %272 {offsets = [0, 24], sizes = [2, 4], strides = [1, 1]} : vector<2x32xf32> to vector<2x4xf32>
    %378 = vector.extract_strided_slice %273 {offsets = [0, 24], sizes = [2, 4], strides = [1, 1]} : vector<2x32xf32> to vector<2x4xf32>
    %cst_146 = arith.constant dense<0.000000e+00> : vector<2x2xf32>
    %379 = tpu.matmul %376, %377, %cst_146 {dimension_numbers = #tpu.dot_dimension_numbers<[1], [1], [0], [0], [0, 0, 1, 0], [], []>} : vector<2x4xf32>, vector<2x4xf32>, vector<2x2xf32> -> vector<2x2xf32>
    %cst_147 = arith.constant 5.000000e-01 : f32
    %380 = vector.broadcast %cst_147 : f32 to vector<2x2xf32>
    %381 = arith.mulf %379, %380 : vector<2x2xf32>
    %cst_148 = arith.constant dense<0xFF800000> : vector<2xf32>
    %382 = vector.multi_reduction <maximumf>, %381, %cst_148 [1] : vector<2x2xf32> to vector<2xf32>
    %383 = vector.shape_cast %382 : vector<2xf32> to vector<2x1xf32>
    %384 = vector.broadcast %383 : vector<2x1xf32> to vector<2x2xf32>
    %385 = arith.subf %381, %384 : vector<2x2xf32>
    %386 = math.exp %385 : vector<2x2xf32>
    %cst_149 = arith.constant dense<0.000000e+00> : vector<2xf32>
    %387 = vector.multi_reduction <add>, %386, %cst_149 [1] : vector<2x2xf32> to vector<2xf32>
    %388 = vector.shape_cast %387 : vector<2xf32> to vector<2x1xf32>
    %389 = tpu.reciprocal %388 {approx = true} : vector<2x1xf32> -> vector<2x1xf32>
    %390 = vector.broadcast %389 : vector<2x1xf32> to vector<2x2xf32>
    %391 = arith.mulf %386, %390 : vector<2x2xf32>
    %cst_150 = arith.constant dense<0.000000e+00> : vector<2x4xf32>
    %392 = tpu.matmul %391, %378, %cst_150 {dimension_numbers = #tpu.dot_dimension_numbers<[1], [0], [0], [1], [0, 0, 1, 1], [], []>} : vector<2x2xf32>, vector<2x4xf32>, vector<2x4xf32> -> vector<2x4xf32>
    %393 = vector.extract_strided_slice %271 {offsets = [0, 28], sizes = [2, 4], strides = [1, 1]} : vector<2x32xf32> to vector<2x4xf32>
    %394 = vector.extract_strided_slice %272 {offsets = [0, 28], sizes = [2, 4], strides = [1, 1]} : vector<2x32xf32> to vector<2x4xf32>
    %395 = vector.extract_strided_slice %273 {offsets = [0, 28], sizes = [2, 4], strides = [1, 1]} : vector<2x32xf32> to vector<2x4xf32>
    %cst_151 = arith.constant dense<0.000000e+00> : vector<2x2xf32>
    %396 = tpu.matmul %393, %394, %cst_151 {dimension_numbers = #tpu.dot_dimension_numbers<[1], [1], [0], [0], [0, 0, 1, 0], [], []>} : vector<2x4xf32>, vector<2x4xf32>, vector<2x2xf32> -> vector<2x2xf32>
    %cst_152 = arith.constant 5.000000e-01 : f32
    %397 = vector.broadcast %cst_152 : f32 to vector<2x2xf32>
    %398 = arith.mulf %396, %397 : vector<2x2xf32>
    %cst_153 = arith.constant dense<0xFF800000> : vector<2xf32>
    %399 = vector.multi_reduction <maximumf>, %398, %cst_153 [1] : vector<2x2xf32> to vector<2xf32>
    %400 = vector.shape_cast %399 : vector<2xf32> to vector<2x1xf32>
    %401 = vector.broadcast %400 : vector<2x1xf32> to vector<2x2xf32>
    %402 = arith.subf %398, %401 : vector<2x2xf32>
    %403 = math.exp %402 : vector<2x2xf32>
    %cst_154 = arith.constant dense<0.000000e+00> : vector<2xf32>
    %404 = vector.multi_reduction <add>, %403, %cst_154 [1] : vector<2x2xf32> to vector<2xf32>
    %405 = vector.shape_cast %404 : vector<2xf32> to vector<2x1xf32>
    %406 = tpu.reciprocal %405 {approx = true} : vector<2x1xf32> -> vector<2x1xf32>
    %407 = vector.broadcast %406 : vector<2x1xf32> to vector<2x2xf32>
    %408 = arith.mulf %403, %407 : vector<2x2xf32>
    %cst_155 = arith.constant dense<0.000000e+00> : vector<2x4xf32>
    %409 = tpu.matmul %408, %395, %cst_155 {dimension_numbers = #tpu.dot_dimension_numbers<[1], [0], [0], [1], [0, 0, 1, 1], [], []>} : vector<2x2xf32>, vector<2x4xf32>, vector<2x4xf32> -> vector<2x4xf32>
    %410 = tpu.concatenate %290, %307, %324, %341, %358, %375, %392, %409 in 1 : vector<2x4xf32>, vector<2x4xf32>, vector<2x4xf32>, vector<2x4xf32>, vector<2x4xf32>, vector<2x4xf32>, vector<2x4xf32>, vector<2x4xf32> -> vector<2x32xf32>
    %c1_156 = arith.constant 1 : index
    %c0_157 = arith.constant 0 : index
    %c0_158 = arith.constant 0 : index
    %411 = vector.load %arg6[%c1_156, %c0_157, %c0_158] : memref<6x32x32xf32, #tpu.memory_space<vmem>>, vector<1x32x32xf32>
    %412 = vector.shape_cast %411 : vector<1x32x32xf32> to vector<32x32xf32>
    %cst_159 = arith.constant dense<0.000000e+00> : vector<2x32xf32>
    %413 = tpu.matmul %410, %412, %cst_159 {dimension_numbers = #tpu.dot_dimension_numbers<[1], [0], [0], [1], [0, 0, 1, 1], [], []>} : vector<2x32xf32>, vector<32x32xf32>, vector<2x32xf32> -> vector<2x32xf32>
    %c1_160 = arith.constant 1 : index
    %c0_161 = arith.constant 0 : index
    %c0_162 = arith.constant 0 : index
    %414 = vector.load %arg7[%c1_160, %c0_161, %c0_162] : memref<6x1x32xf32, #tpu.memory_space<vmem>>, vector<1x1x32xf32>
    %415 = vector.shape_cast %414 : vector<1x1x32xf32> to vector<1x32xf32>
    %416 = vector.broadcast %415 : vector<1x32xf32> to vector<2x32xf32>
    %417 = arith.addf %413, %416 : vector<2x32xf32>
    %418 = arith.addf %263, %417 : vector<2x32xf32>
    %c1_163 = arith.constant 1 : index
    %c0_164 = arith.constant 0 : index
    %c0_165 = arith.constant 0 : index
    %419 = vector.load %arg12[%c1_163, %c0_164, %c0_165] : memref<6x1x32xf32, #tpu.memory_space<vmem>>, vector<1x1x32xf32>
    %420 = vector.shape_cast %419 : vector<1x1x32xf32> to vector<1x32xf32>
    %c1_166 = arith.constant 1 : index
    %c0_167 = arith.constant 0 : index
    %c0_168 = arith.constant 0 : index
    %421 = vector.load %arg13[%c1_166, %c0_167, %c0_168] : memref<6x1x32xf32, #tpu.memory_space<vmem>>, vector<1x1x32xf32>
    %422 = vector.shape_cast %421 : vector<1x1x32xf32> to vector<1x32xf32>
    %cst_169 = arith.constant dense<0.000000e+00> : vector<2xf32>
    %423 = vector.multi_reduction <add>, %418, %cst_169 [1] : vector<2x32xf32> to vector<2xf32>
    %424 = vector.shape_cast %423 : vector<2xf32> to vector<2x1xf32>
    %cst_170 = arith.constant 3.200000e+01 : f32
    %425 = vector.broadcast %cst_170 : f32 to vector<2x1xf32>
    %426 = arith.divf %424, %425 : vector<2x1xf32>
    %427 = vector.broadcast %426 : vector<2x1xf32> to vector<2x32xf32>
    %428 = arith.subf %418, %427 : vector<2x32xf32>
    %429 = arith.mulf %428, %428 : vector<2x32xf32>
    %cst_171 = arith.constant dense<0.000000e+00> : vector<2xf32>
    %430 = vector.multi_reduction <add>, %429, %cst_171 [1] : vector<2x32xf32> to vector<2xf32>
    %431 = vector.shape_cast %430 : vector<2xf32> to vector<2x1xf32>
    %cst_172 = arith.constant 3.200000e+01 : f32
    %432 = vector.broadcast %cst_172 : f32 to vector<2x1xf32>
    %433 = arith.divf %431, %432 : vector<2x1xf32>
    %434 = vector.broadcast %426 : vector<2x1xf32> to vector<2x32xf32>
    %435 = arith.subf %418, %434 : vector<2x32xf32>
    %cst_173 = arith.constant 9.99999974E-6 : f32
    %436 = vector.broadcast %cst_173 : f32 to vector<2x1xf32>
    %437 = arith.addf %433, %436 : vector<2x1xf32>
    %438 = math.rsqrt %437 : vector<2x1xf32>
    %439 = vector.broadcast %438 : vector<2x1xf32> to vector<2x32xf32>
    %440 = arith.mulf %435, %439 : vector<2x32xf32>
    %441 = vector.broadcast %420 : vector<1x32xf32> to vector<2x32xf32>
    %442 = arith.mulf %440, %441 : vector<2x32xf32>
    %443 = vector.broadcast %422 : vector<1x32xf32> to vector<2x32xf32>
    %444 = arith.addf %442, %443 : vector<2x32xf32>
    %c1_174 = arith.constant 1 : index
    %c0_175 = arith.constant 0 : index
    %c0_176 = arith.constant 0 : index
    %445 = vector.load %arg8[%c1_174, %c0_175, %c0_176] : memref<6x32x128xf32, #tpu.memory_space<vmem>>, vector<1x32x128xf32>
    %446 = vector.shape_cast %445 : vector<1x32x128xf32> to vector<32x128xf32>
    %cst_177 = arith.constant dense<0.000000e+00> : vector<2x128xf32>
    %447 = tpu.matmul %444, %446, %cst_177 {dimension_numbers = #tpu.dot_dimension_numbers<[1], [0], [0], [1], [0, 0, 1, 1], [], []>} : vector<2x32xf32>, vector<32x128xf32>, vector<2x128xf32> -> vector<2x128xf32>
    %c1_178 = arith.constant 1 : index
    %c0_179 = arith.constant 0 : index
    %c0_180 = arith.constant 0 : index
    %448 = vector.load %arg9[%c1_178, %c0_179, %c0_180] : memref<6x1x128xf32, #tpu.memory_space<vmem>>, vector<1x1x128xf32>
    %449 = vector.shape_cast %448 : vector<1x1x128xf32> to vector<1x128xf32>
    %450 = vector.broadcast %449 : vector<1x128xf32> to vector<2x128xf32>
    %451 = arith.addf %447, %450 : vector<2x128xf32>
    %cst_181 = arith.constant 0.000000e+00 : f32
    %452 = vector.broadcast %cst_181 : f32 to vector<2x128xf32>
    %453 = arith.maximumf %451, %452 : vector<2x128xf32>
    %c1_182 = arith.constant 1 : index
    %c0_183 = arith.constant 0 : index
    %c0_184 = arith.constant 0 : index
    %454 = vector.load %arg10[%c1_182, %c0_183, %c0_184] : memref<6x128x32xf32, #tpu.memory_space<vmem>>, vector<1x128x32xf32>
    %455 = vector.shape_cast %454 : vector<1x128x32xf32> to vector<128x32xf32>
    %cst_185 = arith.constant dense<0.000000e+00> : vector<2x32xf32>
    %456 = tpu.matmul %453, %455, %cst_185 {dimension_numbers = #tpu.dot_dimension_numbers<[1], [0], [0], [1], [0, 0, 1, 1], [], []>} : vector<2x128xf32>, vector<128x32xf32>, vector<2x32xf32> -> vector<2x32xf32>
    %c1_186 = arith.constant 1 : index
    %c0_187 = arith.constant 0 : index
    %c0_188 = arith.constant 0 : index
    %457 = vector.load %arg11[%c1_186, %c0_187, %c0_188] : memref<6x1x32xf32, #tpu.memory_space<vmem>>, vector<1x1x32xf32>
    %458 = vector.shape_cast %457 : vector<1x1x32xf32> to vector<1x32xf32>
    %459 = vector.broadcast %458 : vector<1x32xf32> to vector<2x32xf32>
    %460 = arith.addf %456, %459 : vector<2x32xf32>
    %461 = arith.addf %444, %460 : vector<2x32xf32>
    %c1_189 = arith.constant 1 : index
    %c0_190 = arith.constant 0 : index
    %c0_191 = arith.constant 0 : index
    %462 = vector.load %arg14[%c1_189, %c0_190, %c0_191] : memref<6x1x32xf32, #tpu.memory_space<vmem>>, vector<1x1x32xf32>
    %463 = vector.shape_cast %462 : vector<1x1x32xf32> to vector<1x32xf32>
    %c1_192 = arith.constant 1 : index
    %c0_193 = arith.constant 0 : index
    %c0_194 = arith.constant 0 : index
    %464 = vector.load %arg15[%c1_192, %c0_193, %c0_194] : memref<6x1x32xf32, #tpu.memory_space<vmem>>, vector<1x1x32xf32>
    %465 = vector.shape_cast %464 : vector<1x1x32xf32> to vector<1x32xf32>
    %cst_195 = arith.constant dense<0.000000e+00> : vector<2xf32>
    %466 = vector.multi_reduction <add>, %461, %cst_195 [1] : vector<2x32xf32> to vector<2xf32>
    %467 = vector.shape_cast %466 : vector<2xf32> to vector<2x1xf32>
    %cst_196 = arith.constant 3.200000e+01 : f32
    %468 = vector.broadcast %cst_196 : f32 to vector<2x1xf32>
    %469 = arith.divf %467, %468 : vector<2x1xf32>
    %470 = vector.broadcast %469 : vector<2x1xf32> to vector<2x32xf32>
    %471 = arith.subf %461, %470 : vector<2x32xf32>
    %472 = arith.mulf %471, %471 : vector<2x32xf32>
    %cst_197 = arith.constant dense<0.000000e+00> : vector<2xf32>
    %473 = vector.multi_reduction <add>, %472, %cst_197 [1] : vector<2x32xf32> to vector<2xf32>
    %474 = vector.shape_cast %473 : vector<2xf32> to vector<2x1xf32>
    %cst_198 = arith.constant 3.200000e+01 : f32
    %475 = vector.broadcast %cst_198 : f32 to vector<2x1xf32>
    %476 = arith.divf %474, %475 : vector<2x1xf32>
    %477 = vector.broadcast %469 : vector<2x1xf32> to vector<2x32xf32>
    %478 = arith.subf %461, %477 : vector<2x32xf32>
    %cst_199 = arith.constant 9.99999974E-6 : f32
    %479 = vector.broadcast %cst_199 : f32 to vector<2x1xf32>
    %480 = arith.addf %476, %479 : vector<2x1xf32>
    %481 = math.rsqrt %480 : vector<2x1xf32>
    %482 = vector.broadcast %481 : vector<2x1xf32> to vector<2x32xf32>
    %483 = arith.mulf %478, %482 : vector<2x32xf32>
    %484 = vector.broadcast %463 : vector<1x32xf32> to vector<2x32xf32>
    %485 = arith.mulf %483, %484 : vector<2x32xf32>
    %486 = vector.broadcast %465 : vector<1x32xf32> to vector<2x32xf32>
    %487 = arith.addf %485, %486 : vector<2x32xf32>
    %c2 = arith.constant 2 : index
    %c0_200 = arith.constant 0 : index
    %c0_201 = arith.constant 0 : index
    %488 = vector.load %arg4[%c2, %c0_200, %c0_201] : memref<6x32x96xf32, #tpu.memory_space<vmem>>, vector<1x32x96xf32>
    %489 = vector.shape_cast %488 : vector<1x32x96xf32> to vector<32x96xf32>
    %cst_202 = arith.constant dense<0.000000e+00> : vector<2x96xf32>
    %490 = tpu.matmul %487, %489, %cst_202 {dimension_numbers = #tpu.dot_dimension_numbers<[1], [0], [0], [1], [0, 0, 1, 1], [], []>} : vector<2x32xf32>, vector<32x96xf32>, vector<2x96xf32> -> vector<2x96xf32>
    %c2_203 = arith.constant 2 : index
    %c0_204 = arith.constant 0 : index
    %c0_205 = arith.constant 0 : index
    %491 = vector.load %arg5[%c2_203, %c0_204, %c0_205] : memref<6x1x96xf32, #tpu.memory_space<vmem>>, vector<1x1x96xf32>
    %492 = vector.shape_cast %491 : vector<1x1x96xf32> to vector<1x96xf32>
    %493 = vector.broadcast %492 : vector<1x96xf32> to vector<2x96xf32>
    %494 = arith.addf %490, %493 : vector<2x96xf32>
    %495 = vector.extract_strided_slice %494 {offsets = [0, 0], sizes = [2, 32], strides = [1, 1]} : vector<2x96xf32> to vector<2x32xf32>
    %496 = vector.extract_strided_slice %494 {offsets = [0, 32], sizes = [2, 32], strides = [1, 1]} : vector<2x96xf32> to vector<2x32xf32>
    %497 = vector.extract_strided_slice %494 {offsets = [0, 64], sizes = [2, 32], strides = [1, 1]} : vector<2x96xf32> to vector<2x32xf32>
    %498 = vector.extract_strided_slice %495 {offsets = [0, 0], sizes = [2, 4], strides = [1, 1]} : vector<2x32xf32> to vector<2x4xf32>
    %499 = vector.extract_strided_slice %496 {offsets = [0, 0], sizes = [2, 4], strides = [1, 1]} : vector<2x32xf32> to vector<2x4xf32>
    %500 = vector.extract_strided_slice %497 {offsets = [0, 0], sizes = [2, 4], strides = [1, 1]} : vector<2x32xf32> to vector<2x4xf32>
    %cst_206 = arith.constant dense<0.000000e+00> : vector<2x2xf32>
    %501 = tpu.matmul %498, %499, %cst_206 {dimension_numbers = #tpu.dot_dimension_numbers<[1], [1], [0], [0], [0, 0, 1, 0], [], []>} : vector<2x4xf32>, vector<2x4xf32>, vector<2x2xf32> -> vector<2x2xf32>
    %cst_207 = arith.constant 5.000000e-01 : f32
    %502 = vector.broadcast %cst_207 : f32 to vector<2x2xf32>
    %503 = arith.mulf %501, %502 : vector<2x2xf32>
    %cst_208 = arith.constant dense<0xFF800000> : vector<2xf32>
    %504 = vector.multi_reduction <maximumf>, %503, %cst_208 [1] : vector<2x2xf32> to vector<2xf32>
    %505 = vector.shape_cast %504 : vector<2xf32> to vector<2x1xf32>
    %506 = vector.broadcast %505 : vector<2x1xf32> to vector<2x2xf32>
    %507 = arith.subf %503, %506 : vector<2x2xf32>
    %508 = math.exp %507 : vector<2x2xf32>
    %cst_209 = arith.constant dense<0.000000e+00> : vector<2xf32>
    %509 = vector.multi_reduction <add>, %508, %cst_209 [1] : vector<2x2xf32> to vector<2xf32>
    %510 = vector.shape_cast %509 : vector<2xf32> to vector<2x1xf32>
    %511 = tpu.reciprocal %510 {approx = true} : vector<2x1xf32> -> vector<2x1xf32>
    %512 = vector.broadcast %511 : vector<2x1xf32> to vector<2x2xf32>
    %513 = arith.mulf %508, %512 : vector<2x2xf32>
    %cst_210 = arith.constant dense<0.000000e+00> : vector<2x4xf32>
    %514 = tpu.matmul %513, %500, %cst_210 {dimension_numbers = #tpu.dot_dimension_numbers<[1], [0], [0], [1], [0, 0, 1, 1], [], []>} : vector<2x2xf32>, vector<2x4xf32>, vector<2x4xf32> -> vector<2x4xf32>
    %515 = vector.extract_strided_slice %495 {offsets = [0, 4], sizes = [2, 4], strides = [1, 1]} : vector<2x32xf32> to vector<2x4xf32>
    %516 = vector.extract_strided_slice %496 {offsets = [0, 4], sizes = [2, 4], strides = [1, 1]} : vector<2x32xf32> to vector<2x4xf32>
    %517 = vector.extract_strided_slice %497 {offsets = [0, 4], sizes = [2, 4], strides = [1, 1]} : vector<2x32xf32> to vector<2x4xf32>
    %cst_211 = arith.constant dense<0.000000e+00> : vector<2x2xf32>
    %518 = tpu.matmul %515, %516, %cst_211 {dimension_numbers = #tpu.dot_dimension_numbers<[1], [1], [0], [0], [0, 0, 1, 0], [], []>} : vector<2x4xf32>, vector<2x4xf32>, vector<2x2xf32> -> vector<2x2xf32>
    %cst_212 = arith.constant 5.000000e-01 : f32
    %519 = vector.broadcast %cst_212 : f32 to vector<2x2xf32>
    %520 = arith.mulf %518, %519 : vector<2x2xf32>
    %cst_213 = arith.constant dense<0xFF800000> : vector<2xf32>
    %521 = vector.multi_reduction <maximumf>, %520, %cst_213 [1] : vector<2x2xf32> to vector<2xf32>
    %522 = vector.shape_cast %521 : vector<2xf32> to vector<2x1xf32>
    %523 = vector.broadcast %522 : vector<2x1xf32> to vector<2x2xf32>
    %524 = arith.subf %520, %523 : vector<2x2xf32>
    %525 = math.exp %524 : vector<2x2xf32>
    %cst_214 = arith.constant dense<0.000000e+00> : vector<2xf32>
    %526 = vector.multi_reduction <add>, %525, %cst_214 [1] : vector<2x2xf32> to vector<2xf32>
    %527 = vector.shape_cast %526 : vector<2xf32> to vector<2x1xf32>
    %528 = tpu.reciprocal %527 {approx = true} : vector<2x1xf32> -> vector<2x1xf32>
    %529 = vector.broadcast %528 : vector<2x1xf32> to vector<2x2xf32>
    %530 = arith.mulf %525, %529 : vector<2x2xf32>
    %cst_215 = arith.constant dense<0.000000e+00> : vector<2x4xf32>
    %531 = tpu.matmul %530, %517, %cst_215 {dimension_numbers = #tpu.dot_dimension_numbers<[1], [0], [0], [1], [0, 0, 1, 1], [], []>} : vector<2x2xf32>, vector<2x4xf32>, vector<2x4xf32> -> vector<2x4xf32>
    %532 = vector.extract_strided_slice %495 {offsets = [0, 8], sizes = [2, 4], strides = [1, 1]} : vector<2x32xf32> to vector<2x4xf32>
    %533 = vector.extract_strided_slice %496 {offsets = [0, 8], sizes = [2, 4], strides = [1, 1]} : vector<2x32xf32> to vector<2x4xf32>
    %534 = vector.extract_strided_slice %497 {offsets = [0, 8], sizes = [2, 4], strides = [1, 1]} : vector<2x32xf32> to vector<2x4xf32>
    %cst_216 = arith.constant dense<0.000000e+00> : vector<2x2xf32>
    %535 = tpu.matmul %532, %533, %cst_216 {dimension_numbers = #tpu.dot_dimension_numbers<[1], [1], [0], [0], [0, 0, 1, 0], [], []>} : vector<2x4xf32>, vector<2x4xf32>, vector<2x2xf32> -> vector<2x2xf32>
    %cst_217 = arith.constant 5.000000e-01 : f32
    %536 = vector.broadcast %cst_217 : f32 to vector<2x2xf32>
    %537 = arith.mulf %535, %536 : vector<2x2xf32>
    %cst_218 = arith.constant dense<0xFF800000> : vector<2xf32>
    %538 = vector.multi_reduction <maximumf>, %537, %cst_218 [1] : vector<2x2xf32> to vector<2xf32>
    %539 = vector.shape_cast %538 : vector<2xf32> to vector<2x1xf32>
    %540 = vector.broadcast %539 : vector<2x1xf32> to vector<2x2xf32>
    %541 = arith.subf %537, %540 : vector<2x2xf32>
    %542 = math.exp %541 : vector<2x2xf32>
    %cst_219 = arith.constant dense<0.000000e+00> : vector<2xf32>
    %543 = vector.multi_reduction <add>, %542, %cst_219 [1] : vector<2x2xf32> to vector<2xf32>
    %544 = vector.shape_cast %543 : vector<2xf32> to vector<2x1xf32>
    %545 = tpu.reciprocal %544 {approx = true} : vector<2x1xf32> -> vector<2x1xf32>
    %546 = vector.broadcast %545 : vector<2x1xf32> to vector<2x2xf32>
    %547 = arith.mulf %542, %546 : vector<2x2xf32>
    %cst_220 = arith.constant dense<0.000000e+00> : vector<2x4xf32>
    %548 = tpu.matmul %547, %534, %cst_220 {dimension_numbers = #tpu.dot_dimension_numbers<[1], [0], [0], [1], [0, 0, 1, 1], [], []>} : vector<2x2xf32>, vector<2x4xf32>, vector<2x4xf32> -> vector<2x4xf32>
    %549 = vector.extract_strided_slice %495 {offsets = [0, 12], sizes = [2, 4], strides = [1, 1]} : vector<2x32xf32> to vector<2x4xf32>
    %550 = vector.extract_strided_slice %496 {offsets = [0, 12], sizes = [2, 4], strides = [1, 1]} : vector<2x32xf32> to vector<2x4xf32>
    %551 = vector.extract_strided_slice %497 {offsets = [0, 12], sizes = [2, 4], strides = [1, 1]} : vector<2x32xf32> to vector<2x4xf32>
    %cst_221 = arith.constant dense<0.000000e+00> : vector<2x2xf32>
    %552 = tpu.matmul %549, %550, %cst_221 {dimension_numbers = #tpu.dot_dimension_numbers<[1], [1], [0], [0], [0, 0, 1, 0], [], []>} : vector<2x4xf32>, vector<2x4xf32>, vector<2x2xf32> -> vector<2x2xf32>
    %cst_222 = arith.constant 5.000000e-01 : f32
    %553 = vector.broadcast %cst_222 : f32 to vector<2x2xf32>
    %554 = arith.mulf %552, %553 : vector<2x2xf32>
    %cst_223 = arith.constant dense<0xFF800000> : vector<2xf32>
    %555 = vector.multi_reduction <maximumf>, %554, %cst_223 [1] : vector<2x2xf32> to vector<2xf32>
    %556 = vector.shape_cast %555 : vector<2xf32> to vector<2x1xf32>
    %557 = vector.broadcast %556 : vector<2x1xf32> to vector<2x2xf32>
    %558 = arith.subf %554, %557 : vector<2x2xf32>
    %559 = math.exp %558 : vector<2x2xf32>
    %cst_224 = arith.constant dense<0.000000e+00> : vector<2xf32>
    %560 = vector.multi_reduction <add>, %559, %cst_224 [1] : vector<2x2xf32> to vector<2xf32>
    %561 = vector.shape_cast %560 : vector<2xf32> to vector<2x1xf32>
    %562 = tpu.reciprocal %561 {approx = true} : vector<2x1xf32> -> vector<2x1xf32>
    %563 = vector.broadcast %562 : vector<2x1xf32> to vector<2x2xf32>
    %564 = arith.mulf %559, %563 : vector<2x2xf32>
    %cst_225 = arith.constant dense<0.000000e+00> : vector<2x4xf32>
    %565 = tpu.matmul %564, %551, %cst_225 {dimension_numbers = #tpu.dot_dimension_numbers<[1], [0], [0], [1], [0, 0, 1, 1], [], []>} : vector<2x2xf32>, vector<2x4xf32>, vector<2x4xf32> -> vector<2x4xf32>
    %566 = vector.extract_strided_slice %495 {offsets = [0, 16], sizes = [2, 4], strides = [1, 1]} : vector<2x32xf32> to vector<2x4xf32>
    %567 = vector.extract_strided_slice %496 {offsets = [0, 16], sizes = [2, 4], strides = [1, 1]} : vector<2x32xf32> to vector<2x4xf32>
    %568 = vector.extract_strided_slice %497 {offsets = [0, 16], sizes = [2, 4], strides = [1, 1]} : vector<2x32xf32> to vector<2x4xf32>
    %cst_226 = arith.constant dense<0.000000e+00> : vector<2x2xf32>
    %569 = tpu.matmul %566, %567, %cst_226 {dimension_numbers = #tpu.dot_dimension_numbers<[1], [1], [0], [0], [0, 0, 1, 0], [], []>} : vector<2x4xf32>, vector<2x4xf32>, vector<2x2xf32> -> vector<2x2xf32>
    %cst_227 = arith.constant 5.000000e-01 : f32
    %570 = vector.broadcast %cst_227 : f32 to vector<2x2xf32>
    %571 = arith.mulf %569, %570 : vector<2x2xf32>
    %cst_228 = arith.constant dense<0xFF800000> : vector<2xf32>
    %572 = vector.multi_reduction <maximumf>, %571, %cst_228 [1] : vector<2x2xf32> to vector<2xf32>
    %573 = vector.shape_cast %572 : vector<2xf32> to vector<2x1xf32>
    %574 = vector.broadcast %573 : vector<2x1xf32> to vector<2x2xf32>
    %575 = arith.subf %571, %574 : vector<2x2xf32>
    %576 = math.exp %575 : vector<2x2xf32>
    %cst_229 = arith.constant dense<0.000000e+00> : vector<2xf32>
    %577 = vector.multi_reduction <add>, %576, %cst_229 [1] : vector<2x2xf32> to vector<2xf32>
    %578 = vector.shape_cast %577 : vector<2xf32> to vector<2x1xf32>
    %579 = tpu.reciprocal %578 {approx = true} : vector<2x1xf32> -> vector<2x1xf32>
    %580 = vector.broadcast %579 : vector<2x1xf32> to vector<2x2xf32>
    %581 = arith.mulf %576, %580 : vector<2x2xf32>
    %cst_230 = arith.constant dense<0.000000e+00> : vector<2x4xf32>
    %582 = tpu.matmul %581, %568, %cst_230 {dimension_numbers = #tpu.dot_dimension_numbers<[1], [0], [0], [1], [0, 0, 1, 1], [], []>} : vector<2x2xf32>, vector<2x4xf32>, vector<2x4xf32> -> vector<2x4xf32>
    %583 = vector.extract_strided_slice %495 {offsets = [0, 20], sizes = [2, 4], strides = [1, 1]} : vector<2x32xf32> to vector<2x4xf32>
    %584 = vector.extract_strided_slice %496 {offsets = [0, 20], sizes = [2, 4], strides = [1, 1]} : vector<2x32xf32> to vector<2x4xf32>
    %585 = vector.extract_strided_slice %497 {offsets = [0, 20], sizes = [2, 4], strides = [1, 1]} : vector<2x32xf32> to vector<2x4xf32>
    %cst_231 = arith.constant dense<0.000000e+00> : vector<2x2xf32>
    %586 = tpu.matmul %583, %584, %cst_231 {dimension_numbers = #tpu.dot_dimension_numbers<[1], [1], [0], [0], [0, 0, 1, 0], [], []>} : vector<2x4xf32>, vector<2x4xf32>, vector<2x2xf32> -> vector<2x2xf32>
    %cst_232 = arith.constant 5.000000e-01 : f32
    %587 = vector.broadcast %cst_232 : f32 to vector<2x2xf32>
    %588 = arith.mulf %586, %587 : vector<2x2xf32>
    %cst_233 = arith.constant dense<0xFF800000> : vector<2xf32>
    %589 = vector.multi_reduction <maximumf>, %588, %cst_233 [1] : vector<2x2xf32> to vector<2xf32>
    %590 = vector.shape_cast %589 : vector<2xf32> to vector<2x1xf32>
    %591 = vector.broadcast %590 : vector<2x1xf32> to vector<2x2xf32>
    %592 = arith.subf %588, %591 : vector<2x2xf32>
    %593 = math.exp %592 : vector<2x2xf32>
    %cst_234 = arith.constant dense<0.000000e+00> : vector<2xf32>
    %594 = vector.multi_reduction <add>, %593, %cst_234 [1] : vector<2x2xf32> to vector<2xf32>
    %595 = vector.shape_cast %594 : vector<2xf32> to vector<2x1xf32>
    %596 = tpu.reciprocal %595 {approx = true} : vector<2x1xf32> -> vector<2x1xf32>
    %597 = vector.broadcast %596 : vector<2x1xf32> to vector<2x2xf32>
    %598 = arith.mulf %593, %597 : vector<2x2xf32>
    %cst_235 = arith.constant dense<0.000000e+00> : vector<2x4xf32>
    %599 = tpu.matmul %598, %585, %cst_235 {dimension_numbers = #tpu.dot_dimension_numbers<[1], [0], [0], [1], [0, 0, 1, 1], [], []>} : vector<2x2xf32>, vector<2x4xf32>, vector<2x4xf32> -> vector<2x4xf32>
    %600 = vector.extract_strided_slice %495 {offsets = [0, 24], sizes = [2, 4], strides = [1, 1]} : vector<2x32xf32> to vector<2x4xf32>
    %601 = vector.extract_strided_slice %496 {offsets = [0, 24], sizes = [2, 4], strides = [1, 1]} : vector<2x32xf32> to vector<2x4xf32>
    %602 = vector.extract_strided_slice %497 {offsets = [0, 24], sizes = [2, 4], strides = [1, 1]} : vector<2x32xf32> to vector<2x4xf32>
    %cst_236 = arith.constant dense<0.000000e+00> : vector<2x2xf32>
    %603 = tpu.matmul %600, %601, %cst_236 {dimension_numbers = #tpu.dot_dimension_numbers<[1], [1], [0], [0], [0, 0, 1, 0], [], []>} : vector<2x4xf32>, vector<2x4xf32>, vector<2x2xf32> -> vector<2x2xf32>
    %cst_237 = arith.constant 5.000000e-01 : f32
    %604 = vector.broadcast %cst_237 : f32 to vector<2x2xf32>
    %605 = arith.mulf %603, %604 : vector<2x2xf32>
    %cst_238 = arith.constant dense<0xFF800000> : vector<2xf32>
    %606 = vector.multi_reduction <maximumf>, %605, %cst_238 [1] : vector<2x2xf32> to vector<2xf32>
    %607 = vector.shape_cast %606 : vector<2xf32> to vector<2x1xf32>
    %608 = vector.broadcast %607 : vector<2x1xf32> to vector<2x2xf32>
    %609 = arith.subf %605, %608 : vector<2x2xf32>
    %610 = math.exp %609 : vector<2x2xf32>
    %cst_239 = arith.constant dense<0.000000e+00> : vector<2xf32>
    %611 = vector.multi_reduction <add>, %610, %cst_239 [1] : vector<2x2xf32> to vector<2xf32>
    %612 = vector.shape_cast %611 : vector<2xf32> to vector<2x1xf32>
    %613 = tpu.reciprocal %612 {approx = true} : vector<2x1xf32> -> vector<2x1xf32>
    %614 = vector.broadcast %613 : vector<2x1xf32> to vector<2x2xf32>
    %615 = arith.mulf %610, %614 : vector<2x2xf32>
    %cst_240 = arith.constant dense<0.000000e+00> : vector<2x4xf32>
    %616 = tpu.matmul %615, %602, %cst_240 {dimension_numbers = #tpu.dot_dimension_numbers<[1], [0], [0], [1], [0, 0, 1, 1], [], []>} : vector<2x2xf32>, vector<2x4xf32>, vector<2x4xf32> -> vector<2x4xf32>
    %617 = vector.extract_strided_slice %495 {offsets = [0, 28], sizes = [2, 4], strides = [1, 1]} : vector<2x32xf32> to vector<2x4xf32>
    %618 = vector.extract_strided_slice %496 {offsets = [0, 28], sizes = [2, 4], strides = [1, 1]} : vector<2x32xf32> to vector<2x4xf32>
    %619 = vector.extract_strided_slice %497 {offsets = [0, 28], sizes = [2, 4], strides = [1, 1]} : vector<2x32xf32> to vector<2x4xf32>
    %cst_241 = arith.constant dense<0.000000e+00> : vector<2x2xf32>
    %620 = tpu.matmul %617, %618, %cst_241 {dimension_numbers = #tpu.dot_dimension_numbers<[1], [1], [0], [0], [0, 0, 1, 0], [], []>} : vector<2x4xf32>, vector<2x4xf32>, vector<2x2xf32> -> vector<2x2xf32>
    %cst_242 = arith.constant 5.000000e-01 : f32
    %621 = vector.broadcast %cst_242 : f32 to vector<2x2xf32>
    %622 = arith.mulf %620, %621 : vector<2x2xf32>
    %cst_243 = arith.constant dense<0xFF800000> : vector<2xf32>
    %623 = vector.multi_reduction <maximumf>, %622, %cst_243 [1] : vector<2x2xf32> to vector<2xf32>
    %624 = vector.shape_cast %623 : vector<2xf32> to vector<2x1xf32>
    %625 = vector.broadcast %624 : vector<2x1xf32> to vector<2x2xf32>
    %626 = arith.subf %622, %625 : vector<2x2xf32>
    %627 = math.exp %626 : vector<2x2xf32>
    %cst_244 = arith.constant dense<0.000000e+00> : vector<2xf32>
    %628 = vector.multi_reduction <add>, %627, %cst_244 [1] : vector<2x2xf32> to vector<2xf32>
    %629 = vector.shape_cast %628 : vector<2xf32> to vector<2x1xf32>
    %630 = tpu.reciprocal %629 {approx = true} : vector<2x1xf32> -> vector<2x1xf32>
    %631 = vector.broadcast %630 : vector<2x1xf32> to vector<2x2xf32>
    %632 = arith.mulf %627, %631 : vector<2x2xf32>
    %cst_245 = arith.constant dense<0.000000e+00> : vector<2x4xf32>
    %633 = tpu.matmul %632, %619, %cst_245 {dimension_numbers = #tpu.dot_dimension_numbers<[1], [0], [0], [1], [0, 0, 1, 1], [], []>} : vector<2x2xf32>, vector<2x4xf32>, vector<2x4xf32> -> vector<2x4xf32>
    %634 = tpu.concatenate %514, %531, %548, %565, %582, %599, %616, %633 in 1 : vector<2x4xf32>, vector<2x4xf32>, vector<2x4xf32>, vector<2x4xf32>, vector<2x4xf32>, vector<2x4xf32>, vector<2x4xf32>, vector<2x4xf32> -> vector<2x32xf32>
    %c2_246 = arith.constant 2 : index
    %c0_247 = arith.constant 0 : index
    %c0_248 = arith.constant 0 : index
    %635 = vector.load %arg6[%c2_246, %c0_247, %c0_248] : memref<6x32x32xf32, #tpu.memory_space<vmem>>, vector<1x32x32xf32>
    %636 = vector.shape_cast %635 : vector<1x32x32xf32> to vector<32x32xf32>
    %cst_249 = arith.constant dense<0.000000e+00> : vector<2x32xf32>
    %637 = tpu.matmul %634, %636, %cst_249 {dimension_numbers = #tpu.dot_dimension_numbers<[1], [0], [0], [1], [0, 0, 1, 1], [], []>} : vector<2x32xf32>, vector<32x32xf32>, vector<2x32xf32> -> vector<2x32xf32>
    %c2_250 = arith.constant 2 : index
    %c0_251 = arith.constant 0 : index
    %c0_252 = arith.constant 0 : index
    %638 = vector.load %arg7[%c2_250, %c0_251, %c0_252] : memref<6x1x32xf32, #tpu.memory_space<vmem>>, vector<1x1x32xf32>
    %639 = vector.shape_cast %638 : vector<1x1x32xf32> to vector<1x32xf32>
    %640 = vector.broadcast %639 : vector<1x32xf32> to vector<2x32xf32>
    %641 = arith.addf %637, %640 : vector<2x32xf32>
    %642 = arith.addf %487, %641 : vector<2x32xf32>
    %c2_253 = arith.constant 2 : index
    %c0_254 = arith.constant 0 : index
    %c0_255 = arith.constant 0 : index
    %643 = vector.load %arg12[%c2_253, %c0_254, %c0_255] : memref<6x1x32xf32, #tpu.memory_space<vmem>>, vector<1x1x32xf32>
    %644 = vector.shape_cast %643 : vector<1x1x32xf32> to vector<1x32xf32>
    %c2_256 = arith.constant 2 : index
    %c0_257 = arith.constant 0 : index
    %c0_258 = arith.constant 0 : index
    %645 = vector.load %arg13[%c2_256, %c0_257, %c0_258] : memref<6x1x32xf32, #tpu.memory_space<vmem>>, vector<1x1x32xf32>
    %646 = vector.shape_cast %645 : vector<1x1x32xf32> to vector<1x32xf32>
    %cst_259 = arith.constant dense<0.000000e+00> : vector<2xf32>
    %647 = vector.multi_reduction <add>, %642, %cst_259 [1] : vector<2x32xf32> to vector<2xf32>
    %648 = vector.shape_cast %647 : vector<2xf32> to vector<2x1xf32>
    %cst_260 = arith.constant 3.200000e+01 : f32
    %649 = vector.broadcast %cst_260 : f32 to vector<2x1xf32>
    %650 = arith.divf %648, %649 : vector<2x1xf32>
    %651 = vector.broadcast %650 : vector<2x1xf32> to vector<2x32xf32>
    %652 = arith.subf %642, %651 : vector<2x32xf32>
    %653 = arith.mulf %652, %652 : vector<2x32xf32>
    %cst_261 = arith.constant dense<0.000000e+00> : vector<2xf32>
    %654 = vector.multi_reduction <add>, %653, %cst_261 [1] : vector<2x32xf32> to vector<2xf32>
    %655 = vector.shape_cast %654 : vector<2xf32> to vector<2x1xf32>
    %cst_262 = arith.constant 3.200000e+01 : f32
    %656 = vector.broadcast %cst_262 : f32 to vector<2x1xf32>
    %657 = arith.divf %655, %656 : vector<2x1xf32>
    %658 = vector.broadcast %650 : vector<2x1xf32> to vector<2x32xf32>
    %659 = arith.subf %642, %658 : vector<2x32xf32>
    %cst_263 = arith.constant 9.99999974E-6 : f32
    %660 = vector.broadcast %cst_263 : f32 to vector<2x1xf32>
    %661 = arith.addf %657, %660 : vector<2x1xf32>
    %662 = math.rsqrt %661 : vector<2x1xf32>
    %663 = vector.broadcast %662 : vector<2x1xf32> to vector<2x32xf32>
    %664 = arith.mulf %659, %663 : vector<2x32xf32>
    %665 = vector.broadcast %644 : vector<1x32xf32> to vector<2x32xf32>
    %666 = arith.mulf %664, %665 : vector<2x32xf32>
    %667 = vector.broadcast %646 : vector<1x32xf32> to vector<2x32xf32>
    %668 = arith.addf %666, %667 : vector<2x32xf32>
    %c2_264 = arith.constant 2 : index
    %c0_265 = arith.constant 0 : index
    %c0_266 = arith.constant 0 : index
    %669 = vector.load %arg8[%c2_264, %c0_265, %c0_266] : memref<6x32x128xf32, #tpu.memory_space<vmem>>, vector<1x32x128xf32>
    %670 = vector.shape_cast %669 : vector<1x32x128xf32> to vector<32x128xf32>
    %cst_267 = arith.constant dense<0.000000e+00> : vector<2x128xf32>
    %671 = tpu.matmul %668, %670, %cst_267 {dimension_numbers = #tpu.dot_dimension_numbers<[1], [0], [0], [1], [0, 0, 1, 1], [], []>} : vector<2x32xf32>, vector<32x128xf32>, vector<2x128xf32> -> vector<2x128xf32>
    %c2_268 = arith.constant 2 : index
    %c0_269 = arith.constant 0 : index
    %c0_270 = arith.constant 0 : index
    %672 = vector.load %arg9[%c2_268, %c0_269, %c0_270] : memref<6x1x128xf32, #tpu.memory_space<vmem>>, vector<1x1x128xf32>
    %673 = vector.shape_cast %672 : vector<1x1x128xf32> to vector<1x128xf32>
    %674 = vector.broadcast %673 : vector<1x128xf32> to vector<2x128xf32>
    %675 = arith.addf %671, %674 : vector<2x128xf32>
    %cst_271 = arith.constant 0.000000e+00 : f32
    %676 = vector.broadcast %cst_271 : f32 to vector<2x128xf32>
    %677 = arith.maximumf %675, %676 : vector<2x128xf32>
    %c2_272 = arith.constant 2 : index
    %c0_273 = arith.constant 0 : index
    %c0_274 = arith.constant 0 : index
    %678 = vector.load %arg10[%c2_272, %c0_273, %c0_274] : memref<6x128x32xf32, #tpu.memory_space<vmem>>, vector<1x128x32xf32>
    %679 = vector.shape_cast %678 : vector<1x128x32xf32> to vector<128x32xf32>
    %cst_275 = arith.constant dense<0.000000e+00> : vector<2x32xf32>
    %680 = tpu.matmul %677, %679, %cst_275 {dimension_numbers = #tpu.dot_dimension_numbers<[1], [0], [0], [1], [0, 0, 1, 1], [], []>} : vector<2x128xf32>, vector<128x32xf32>, vector<2x32xf32> -> vector<2x32xf32>
    %c2_276 = arith.constant 2 : index
    %c0_277 = arith.constant 0 : index
    %c0_278 = arith.constant 0 : index
    %681 = vector.load %arg11[%c2_276, %c0_277, %c0_278] : memref<6x1x32xf32, #tpu.memory_space<vmem>>, vector<1x1x32xf32>
    %682 = vector.shape_cast %681 : vector<1x1x32xf32> to vector<1x32xf32>
    %683 = vector.broadcast %682 : vector<1x32xf32> to vector<2x32xf32>
    %684 = arith.addf %680, %683 : vector<2x32xf32>
    %685 = arith.addf %668, %684 : vector<2x32xf32>
    %c2_279 = arith.constant 2 : index
    %c0_280 = arith.constant 0 : index
    %c0_281 = arith.constant 0 : index
    %686 = vector.load %arg14[%c2_279, %c0_280, %c0_281] : memref<6x1x32xf32, #tpu.memory_space<vmem>>, vector<1x1x32xf32>
    %687 = vector.shape_cast %686 : vector<1x1x32xf32> to vector<1x32xf32>
    %c2_282 = arith.constant 2 : index
    %c0_283 = arith.constant 0 : index
    %c0_284 = arith.constant 0 : index
    %688 = vector.load %arg15[%c2_282, %c0_283, %c0_284] : memref<6x1x32xf32, #tpu.memory_space<vmem>>, vector<1x1x32xf32>
    %689 = vector.shape_cast %688 : vector<1x1x32xf32> to vector<1x32xf32>
    %cst_285 = arith.constant dense<0.000000e+00> : vector<2xf32>
    %690 = vector.multi_reduction <add>, %685, %cst_285 [1] : vector<2x32xf32> to vector<2xf32>
    %691 = vector.shape_cast %690 : vector<2xf32> to vector<2x1xf32>
    %cst_286 = arith.constant 3.200000e+01 : f32
    %692 = vector.broadcast %cst_286 : f32 to vector<2x1xf32>
    %693 = arith.divf %691, %692 : vector<2x1xf32>
    %694 = vector.broadcast %693 : vector<2x1xf32> to vector<2x32xf32>
    %695 = arith.subf %685, %694 : vector<2x32xf32>
    %696 = arith.mulf %695, %695 : vector<2x32xf32>
    %cst_287 = arith.constant dense<0.000000e+00> : vector<2xf32>
    %697 = vector.multi_reduction <add>, %696, %cst_287 [1] : vector<2x32xf32> to vector<2xf32>
    %698 = vector.shape_cast %697 : vector<2xf32> to vector<2x1xf32>
    %cst_288 = arith.constant 3.200000e+01 : f32
    %699 = vector.broadcast %cst_288 : f32 to vector<2x1xf32>
    %700 = arith.divf %698, %699 : vector<2x1xf32>
    %701 = vector.broadcast %693 : vector<2x1xf32> to vector<2x32xf32>
    %702 = arith.subf %685, %701 : vector<2x32xf32>
    %cst_289 = arith.constant 9.99999974E-6 : f32
    %703 = vector.broadcast %cst_289 : f32 to vector<2x1xf32>
    %704 = arith.addf %700, %703 : vector<2x1xf32>
    %705 = math.rsqrt %704 : vector<2x1xf32>
    %706 = vector.broadcast %705 : vector<2x1xf32> to vector<2x32xf32>
    %707 = arith.mulf %702, %706 : vector<2x32xf32>
    %708 = vector.broadcast %687 : vector<1x32xf32> to vector<2x32xf32>
    %709 = arith.mulf %707, %708 : vector<2x32xf32>
    %710 = vector.broadcast %689 : vector<1x32xf32> to vector<2x32xf32>
    %711 = arith.addf %709, %710 : vector<2x32xf32>
    %c3 = arith.constant 3 : index
    %c0_290 = arith.constant 0 : index
    %c0_291 = arith.constant 0 : index
    %712 = vector.load %arg4[%c3, %c0_290, %c0_291] : memref<6x32x96xf32, #tpu.memory_space<vmem>>, vector<1x32x96xf32>
    %713 = vector.shape_cast %712 : vector<1x32x96xf32> to vector<32x96xf32>
    %cst_292 = arith.constant dense<0.000000e+00> : vector<2x96xf32>
    %714 = tpu.matmul %711, %713, %cst_292 {dimension_numbers = #tpu.dot_dimension_numbers<[1], [0], [0], [1], [0, 0, 1, 1], [], []>} : vector<2x32xf32>, vector<32x96xf32>, vector<2x96xf32> -> vector<2x96xf32>
    %c3_293 = arith.constant 3 : index
    %c0_294 = arith.constant 0 : index
    %c0_295 = arith.constant 0 : index
    %715 = vector.load %arg5[%c3_293, %c0_294, %c0_295] : memref<6x1x96xf32, #tpu.memory_space<vmem>>, vector<1x1x96xf32>
    %716 = vector.shape_cast %715 : vector<1x1x96xf32> to vector<1x96xf32>
    %717 = vector.broadcast %716 : vector<1x96xf32> to vector<2x96xf32>
    %718 = arith.addf %714, %717 : vector<2x96xf32>
    %719 = vector.extract_strided_slice %718 {offsets = [0, 0], sizes = [2, 32], strides = [1, 1]} : vector<2x96xf32> to vector<2x32xf32>
    %720 = vector.extract_strided_slice %718 {offsets = [0, 32], sizes = [2, 32], strides = [1, 1]} : vector<2x96xf32> to vector<2x32xf32>
    %721 = vector.extract_strided_slice %718 {offsets = [0, 64], sizes = [2, 32], strides = [1, 1]} : vector<2x96xf32> to vector<2x32xf32>
    %722 = vector.extract_strided_slice %719 {offsets = [0, 0], sizes = [2, 4], strides = [1, 1]} : vector<2x32xf32> to vector<2x4xf32>
    %723 = vector.extract_strided_slice %720 {offsets = [0, 0], sizes = [2, 4], strides = [1, 1]} : vector<2x32xf32> to vector<2x4xf32>
    %724 = vector.extract_strided_slice %721 {offsets = [0, 0], sizes = [2, 4], strides = [1, 1]} : vector<2x32xf32> to vector<2x4xf32>
    %cst_296 = arith.constant dense<0.000000e+00> : vector<2x2xf32>
    %725 = tpu.matmul %722, %723, %cst_296 {dimension_numbers = #tpu.dot_dimension_numbers<[1], [1], [0], [0], [0, 0, 1, 0], [], []>} : vector<2x4xf32>, vector<2x4xf32>, vector<2x2xf32> -> vector<2x2xf32>
    %cst_297 = arith.constant 5.000000e-01 : f32
    %726 = vector.broadcast %cst_297 : f32 to vector<2x2xf32>
    %727 = arith.mulf %725, %726 : vector<2x2xf32>
    %cst_298 = arith.constant dense<0xFF800000> : vector<2xf32>
    %728 = vector.multi_reduction <maximumf>, %727, %cst_298 [1] : vector<2x2xf32> to vector<2xf32>
    %729 = vector.shape_cast %728 : vector<2xf32> to vector<2x1xf32>
    %730 = vector.broadcast %729 : vector<2x1xf32> to vector<2x2xf32>
    %731 = arith.subf %727, %730 : vector<2x2xf32>
    %732 = math.exp %731 : vector<2x2xf32>
    %cst_299 = arith.constant dense<0.000000e+00> : vector<2xf32>
    %733 = vector.multi_reduction <add>, %732, %cst_299 [1] : vector<2x2xf32> to vector<2xf32>
    %734 = vector.shape_cast %733 : vector<2xf32> to vector<2x1xf32>
    %735 = tpu.reciprocal %734 {approx = true} : vector<2x1xf32> -> vector<2x1xf32>
    %736 = vector.broadcast %735 : vector<2x1xf32> to vector<2x2xf32>
    %737 = arith.mulf %732, %736 : vector<2x2xf32>
    %cst_300 = arith.constant dense<0.000000e+00> : vector<2x4xf32>
    %738 = tpu.matmul %737, %724, %cst_300 {dimension_numbers = #tpu.dot_dimension_numbers<[1], [0], [0], [1], [0, 0, 1, 1], [], []>} : vector<2x2xf32>, vector<2x4xf32>, vector<2x4xf32> -> vector<2x4xf32>
    %739 = vector.extract_strided_slice %719 {offsets = [0, 4], sizes = [2, 4], strides = [1, 1]} : vector<2x32xf32> to vector<2x4xf32>
    %740 = vector.extract_strided_slice %720 {offsets = [0, 4], sizes = [2, 4], strides = [1, 1]} : vector<2x32xf32> to vector<2x4xf32>
    %741 = vector.extract_strided_slice %721 {offsets = [0, 4], sizes = [2, 4], strides = [1, 1]} : vector<2x32xf32> to vector<2x4xf32>
    %cst_301 = arith.constant dense<0.000000e+00> : vector<2x2xf32>
    %742 = tpu.matmul %739, %740, %cst_301 {dimension_numbers = #tpu.dot_dimension_numbers<[1], [1], [0], [0], [0, 0, 1, 0], [], []>} : vector<2x4xf32>, vector<2x4xf32>, vector<2x2xf32> -> vector<2x2xf32>
    %cst_302 = arith.constant 5.000000e-01 : f32
    %743 = vector.broadcast %cst_302 : f32 to vector<2x2xf32>
    %744 = arith.mulf %742, %743 : vector<2x2xf32>
    %cst_303 = arith.constant dense<0xFF800000> : vector<2xf32>
    %745 = vector.multi_reduction <maximumf>, %744, %cst_303 [1] : vector<2x2xf32> to vector<2xf32>
    %746 = vector.shape_cast %745 : vector<2xf32> to vector<2x1xf32>
    %747 = vector.broadcast %746 : vector<2x1xf32> to vector<2x2xf32>
    %748 = arith.subf %744, %747 : vector<2x2xf32>
    %749 = math.exp %748 : vector<2x2xf32>
    %cst_304 = arith.constant dense<0.000000e+00> : vector<2xf32>
    %750 = vector.multi_reduction <add>, %749, %cst_304 [1] : vector<2x2xf32> to vector<2xf32>
    %751 = vector.shape_cast %750 : vector<2xf32> to vector<2x1xf32>
    %752 = tpu.reciprocal %751 {approx = true} : vector<2x1xf32> -> vector<2x1xf32>
    %753 = vector.broadcast %752 : vector<2x1xf32> to vector<2x2xf32>
    %754 = arith.mulf %749, %753 : vector<2x2xf32>
    %cst_305 = arith.constant dense<0.000000e+00> : vector<2x4xf32>
    %755 = tpu.matmul %754, %741, %cst_305 {dimension_numbers = #tpu.dot_dimension_numbers<[1], [0], [0], [1], [0, 0, 1, 1], [], []>} : vector<2x2xf32>, vector<2x4xf32>, vector<2x4xf32> -> vector<2x4xf32>
    %756 = vector.extract_strided_slice %719 {offsets = [0, 8], sizes = [2, 4], strides = [1, 1]} : vector<2x32xf32> to vector<2x4xf32>
    %757 = vector.extract_strided_slice %720 {offsets = [0, 8], sizes = [2, 4], strides = [1, 1]} : vector<2x32xf32> to vector<2x4xf32>
    %758 = vector.extract_strided_slice %721 {offsets = [0, 8], sizes = [2, 4], strides = [1, 1]} : vector<2x32xf32> to vector<2x4xf32>
    %cst_306 = arith.constant dense<0.000000e+00> : vector<2x2xf32>
    %759 = tpu.matmul %756, %757, %cst_306 {dimension_numbers = #tpu.dot_dimension_numbers<[1], [1], [0], [0], [0, 0, 1, 0], [], []>} : vector<2x4xf32>, vector<2x4xf32>, vector<2x2xf32> -> vector<2x2xf32>
    %cst_307 = arith.constant 5.000000e-01 : f32
    %760 = vector.broadcast %cst_307 : f32 to vector<2x2xf32>
    %761 = arith.mulf %759, %760 : vector<2x2xf32>
    %cst_308 = arith.constant dense<0xFF800000> : vector<2xf32>
    %762 = vector.multi_reduction <maximumf>, %761, %cst_308 [1] : vector<2x2xf32> to vector<2xf32>
    %763 = vector.shape_cast %762 : vector<2xf32> to vector<2x1xf32>
    %764 = vector.broadcast %763 : vector<2x1xf32> to vector<2x2xf32>
    %765 = arith.subf %761, %764 : vector<2x2xf32>
    %766 = math.exp %765 : vector<2x2xf32>
    %cst_309 = arith.constant dense<0.000000e+00> : vector<2xf32>
    %767 = vector.multi_reduction <add>, %766, %cst_309 [1] : vector<2x2xf32> to vector<2xf32>
    %768 = vector.shape_cast %767 : vector<2xf32> to vector<2x1xf32>
    %769 = tpu.reciprocal %768 {approx = true} : vector<2x1xf32> -> vector<2x1xf32>
    %770 = vector.broadcast %769 : vector<2x1xf32> to vector<2x2xf32>
    %771 = arith.mulf %766, %770 : vector<2x2xf32>
    %cst_310 = arith.constant dense<0.000000e+00> : vector<2x4xf32>
    %772 = tpu.matmul %771, %758, %cst_310 {dimension_numbers = #tpu.dot_dimension_numbers<[1], [0], [0], [1], [0, 0, 1, 1], [], []>} : vector<2x2xf32>, vector<2x4xf32>, vector<2x4xf32> -> vector<2x4xf32>
    %773 = vector.extract_strided_slice %719 {offsets = [0, 12], sizes = [2, 4], strides = [1, 1]} : vector<2x32xf32> to vector<2x4xf32>
    %774 = vector.extract_strided_slice %720 {offsets = [0, 12], sizes = [2, 4], strides = [1, 1]} : vector<2x32xf32> to vector<2x4xf32>
    %775 = vector.extract_strided_slice %721 {offsets = [0, 12], sizes = [2, 4], strides = [1, 1]} : vector<2x32xf32> to vector<2x4xf32>
    %cst_311 = arith.constant dense<0.000000e+00> : vector<2x2xf32>
    %776 = tpu.matmul %773, %774, %cst_311 {dimension_numbers = #tpu.dot_dimension_numbers<[1], [1], [0], [0], [0, 0, 1, 0], [], []>} : vector<2x4xf32>, vector<2x4xf32>, vector<2x2xf32> -> vector<2x2xf32>
    %cst_312 = arith.constant 5.000000e-01 : f32
    %777 = vector.broadcast %cst_312 : f32 to vector<2x2xf32>
    %778 = arith.mulf %776, %777 : vector<2x2xf32>
    %cst_313 = arith.constant dense<0xFF800000> : vector<2xf32>
    %779 = vector.multi_reduction <maximumf>, %778, %cst_313 [1] : vector<2x2xf32> to vector<2xf32>
    %780 = vector.shape_cast %779 : vector<2xf32> to vector<2x1xf32>
    %781 = vector.broadcast %780 : vector<2x1xf32> to vector<2x2xf32>
    %782 = arith.subf %778, %781 : vector<2x2xf32>
    %783 = math.exp %782 : vector<2x2xf32>
    %cst_314 = arith.constant dense<0.000000e+00> : vector<2xf32>
    %784 = vector.multi_reduction <add>, %783, %cst_314 [1] : vector<2x2xf32> to vector<2xf32>
    %785 = vector.shape_cast %784 : vector<2xf32> to vector<2x1xf32>
    %786 = tpu.reciprocal %785 {approx = true} : vector<2x1xf32> -> vector<2x1xf32>
    %787 = vector.broadcast %786 : vector<2x1xf32> to vector<2x2xf32>
    %788 = arith.mulf %783, %787 : vector<2x2xf32>
    %cst_315 = arith.constant dense<0.000000e+00> : vector<2x4xf32>
    %789 = tpu.matmul %788, %775, %cst_315 {dimension_numbers = #tpu.dot_dimension_numbers<[1], [0], [0], [1], [0, 0, 1, 1], [], []>} : vector<2x2xf32>, vector<2x4xf32>, vector<2x4xf32> -> vector<2x4xf32>
    %790 = vector.extract_strided_slice %719 {offsets = [0, 16], sizes = [2, 4], strides = [1, 1]} : vector<2x32xf32> to vector<2x4xf32>
    %791 = vector.extract_strided_slice %720 {offsets = [0, 16], sizes = [2, 4], strides = [1, 1]} : vector<2x32xf32> to vector<2x4xf32>
    %792 = vector.extract_strided_slice %721 {offsets = [0, 16], sizes = [2, 4], strides = [1, 1]} : vector<2x32xf32> to vector<2x4xf32>
    %cst_316 = arith.constant dense<0.000000e+00> : vector<2x2xf32>
    %793 = tpu.matmul %790, %791, %cst_316 {dimension_numbers = #tpu.dot_dimension_numbers<[1], [1], [0], [0], [0, 0, 1, 0], [], []>} : vector<2x4xf32>, vector<2x4xf32>, vector<2x2xf32> -> vector<2x2xf32>
    %cst_317 = arith.constant 5.000000e-01 : f32
    %794 = vector.broadcast %cst_317 : f32 to vector<2x2xf32>
    %795 = arith.mulf %793, %794 : vector<2x2xf32>
    %cst_318 = arith.constant dense<0xFF800000> : vector<2xf32>
    %796 = vector.multi_reduction <maximumf>, %795, %cst_318 [1] : vector<2x2xf32> to vector<2xf32>
    %797 = vector.shape_cast %796 : vector<2xf32> to vector<2x1xf32>
    %798 = vector.broadcast %797 : vector<2x1xf32> to vector<2x2xf32>
    %799 = arith.subf %795, %798 : vector<2x2xf32>
    %800 = math.exp %799 : vector<2x2xf32>
    %cst_319 = arith.constant dense<0.000000e+00> : vector<2xf32>
    %801 = vector.multi_reduction <add>, %800, %cst_319 [1] : vector<2x2xf32> to vector<2xf32>
    %802 = vector.shape_cast %801 : vector<2xf32> to vector<2x1xf32>
    %803 = tpu.reciprocal %802 {approx = true} : vector<2x1xf32> -> vector<2x1xf32>
    %804 = vector.broadcast %803 : vector<2x1xf32> to vector<2x2xf32>
    %805 = arith.mulf %800, %804 : vector<2x2xf32>
    %cst_320 = arith.constant dense<0.000000e+00> : vector<2x4xf32>
    %806 = tpu.matmul %805, %792, %cst_320 {dimension_numbers = #tpu.dot_dimension_numbers<[1], [0], [0], [1], [0, 0, 1, 1], [], []>} : vector<2x2xf32>, vector<2x4xf32>, vector<2x4xf32> -> vector<2x4xf32>
    %807 = vector.extract_strided_slice %719 {offsets = [0, 20], sizes = [2, 4], strides = [1, 1]} : vector<2x32xf32> to vector<2x4xf32>
    %808 = vector.extract_strided_slice %720 {offsets = [0, 20], sizes = [2, 4], strides = [1, 1]} : vector<2x32xf32> to vector<2x4xf32>
    %809 = vector.extract_strided_slice %721 {offsets = [0, 20], sizes = [2, 4], strides = [1, 1]} : vector<2x32xf32> to vector<2x4xf32>
    %cst_321 = arith.constant dense<0.000000e+00> : vector<2x2xf32>
    %810 = tpu.matmul %807, %808, %cst_321 {dimension_numbers = #tpu.dot_dimension_numbers<[1], [1], [0], [0], [0, 0, 1, 0], [], []>} : vector<2x4xf32>, vector<2x4xf32>, vector<2x2xf32> -> vector<2x2xf32>
    %cst_322 = arith.constant 5.000000e-01 : f32
    %811 = vector.broadcast %cst_322 : f32 to vector<2x2xf32>
    %812 = arith.mulf %810, %811 : vector<2x2xf32>
    %cst_323 = arith.constant dense<0xFF800000> : vector<2xf32>
    %813 = vector.multi_reduction <maximumf>, %812, %cst_323 [1] : vector<2x2xf32> to vector<2xf32>
    %814 = vector.shape_cast %813 : vector<2xf32> to vector<2x1xf32>
    %815 = vector.broadcast %814 : vector<2x1xf32> to vector<2x2xf32>
    %816 = arith.subf %812, %815 : vector<2x2xf32>
    %817 = math.exp %816 : vector<2x2xf32>
    %cst_324 = arith.constant dense<0.000000e+00> : vector<2xf32>
    %818 = vector.multi_reduction <add>, %817, %cst_324 [1] : vector<2x2xf32> to vector<2xf32>
    %819 = vector.shape_cast %818 : vector<2xf32> to vector<2x1xf32>
    %820 = tpu.reciprocal %819 {approx = true} : vector<2x1xf32> -> vector<2x1xf32>
    %821 = vector.broadcast %820 : vector<2x1xf32> to vector<2x2xf32>
    %822 = arith.mulf %817, %821 : vector<2x2xf32>
    %cst_325 = arith.constant dense<0.000000e+00> : vector<2x4xf32>
    %823 = tpu.matmul %822, %809, %cst_325 {dimension_numbers = #tpu.dot_dimension_numbers<[1], [0], [0], [1], [0, 0, 1, 1], [], []>} : vector<2x2xf32>, vector<2x4xf32>, vector<2x4xf32> -> vector<2x4xf32>
    %824 = vector.extract_strided_slice %719 {offsets = [0, 24], sizes = [2, 4], strides = [1, 1]} : vector<2x32xf32> to vector<2x4xf32>
    %825 = vector.extract_strided_slice %720 {offsets = [0, 24], sizes = [2, 4], strides = [1, 1]} : vector<2x32xf32> to vector<2x4xf32>
    %826 = vector.extract_strided_slice %721 {offsets = [0, 24], sizes = [2, 4], strides = [1, 1]} : vector<2x32xf32> to vector<2x4xf32>
    %cst_326 = arith.constant dense<0.000000e+00> : vector<2x2xf32>
    %827 = tpu.matmul %824, %825, %cst_326 {dimension_numbers = #tpu.dot_dimension_numbers<[1], [1], [0], [0], [0, 0, 1, 0], [], []>} : vector<2x4xf32>, vector<2x4xf32>, vector<2x2xf32> -> vector<2x2xf32>
    %cst_327 = arith.constant 5.000000e-01 : f32
    %828 = vector.broadcast %cst_327 : f32 to vector<2x2xf32>
    %829 = arith.mulf %827, %828 : vector<2x2xf32>
    %cst_328 = arith.constant dense<0xFF800000> : vector<2xf32>
    %830 = vector.multi_reduction <maximumf>, %829, %cst_328 [1] : vector<2x2xf32> to vector<2xf32>
    %831 = vector.shape_cast %830 : vector<2xf32> to vector<2x1xf32>
    %832 = vector.broadcast %831 : vector<2x1xf32> to vector<2x2xf32>
    %833 = arith.subf %829, %832 : vector<2x2xf32>
    %834 = math.exp %833 : vector<2x2xf32>
    %cst_329 = arith.constant dense<0.000000e+00> : vector<2xf32>
    %835 = vector.multi_reduction <add>, %834, %cst_329 [1] : vector<2x2xf32> to vector<2xf32>
    %836 = vector.shape_cast %835 : vector<2xf32> to vector<2x1xf32>
    %837 = tpu.reciprocal %836 {approx = true} : vector<2x1xf32> -> vector<2x1xf32>
    %838 = vector.broadcast %837 : vector<2x1xf32> to vector<2x2xf32>
    %839 = arith.mulf %834, %838 : vector<2x2xf32>
    %cst_330 = arith.constant dense<0.000000e+00> : vector<2x4xf32>
    %840 = tpu.matmul %839, %826, %cst_330 {dimension_numbers = #tpu.dot_dimension_numbers<[1], [0], [0], [1], [0, 0, 1, 1], [], []>} : vector<2x2xf32>, vector<2x4xf32>, vector<2x4xf32> -> vector<2x4xf32>
    %841 = vector.extract_strided_slice %719 {offsets = [0, 28], sizes = [2, 4], strides = [1, 1]} : vector<2x32xf32> to vector<2x4xf32>
    %842 = vector.extract_strided_slice %720 {offsets = [0, 28], sizes = [2, 4], strides = [1, 1]} : vector<2x32xf32> to vector<2x4xf32>
    %843 = vector.extract_strided_slice %721 {offsets = [0, 28], sizes = [2, 4], strides = [1, 1]} : vector<2x32xf32> to vector<2x4xf32>
    %cst_331 = arith.constant dense<0.000000e+00> : vector<2x2xf32>
    %844 = tpu.matmul %841, %842, %cst_331 {dimension_numbers = #tpu.dot_dimension_numbers<[1], [1], [0], [0], [0, 0, 1, 0], [], []>} : vector<2x4xf32>, vector<2x4xf32>, vector<2x2xf32> -> vector<2x2xf32>
    %cst_332 = arith.constant 5.000000e-01 : f32
    %845 = vector.broadcast %cst_332 : f32 to vector<2x2xf32>
    %846 = arith.mulf %844, %845 : vector<2x2xf32>
    %cst_333 = arith.constant dense<0xFF800000> : vector<2xf32>
    %847 = vector.multi_reduction <maximumf>, %846, %cst_333 [1] : vector<2x2xf32> to vector<2xf32>
    %848 = vector.shape_cast %847 : vector<2xf32> to vector<2x1xf32>
    %849 = vector.broadcast %848 : vector<2x1xf32> to vector<2x2xf32>
    %850 = arith.subf %846, %849 : vector<2x2xf32>
    %851 = math.exp %850 : vector<2x2xf32>
    %cst_334 = arith.constant dense<0.000000e+00> : vector<2xf32>
    %852 = vector.multi_reduction <add>, %851, %cst_334 [1] : vector<2x2xf32> to vector<2xf32>
    %853 = vector.shape_cast %852 : vector<2xf32> to vector<2x1xf32>
    %854 = tpu.reciprocal %853 {approx = true} : vector<2x1xf32> -> vector<2x1xf32>
    %855 = vector.broadcast %854 : vector<2x1xf32> to vector<2x2xf32>
    %856 = arith.mulf %851, %855 : vector<2x2xf32>
    %cst_335 = arith.constant dense<0.000000e+00> : vector<2x4xf32>
    %857 = tpu.matmul %856, %843, %cst_335 {dimension_numbers = #tpu.dot_dimension_numbers<[1], [0], [0], [1], [0, 0, 1, 1], [], []>} : vector<2x2xf32>, vector<2x4xf32>, vector<2x4xf32> -> vector<2x4xf32>
    %858 = tpu.concatenate %738, %755, %772, %789, %806, %823, %840, %857 in 1 : vector<2x4xf32>, vector<2x4xf32>, vector<2x4xf32>, vector<2x4xf32>, vector<2x4xf32>, vector<2x4xf32>, vector<2x4xf32>, vector<2x4xf32> -> vector<2x32xf32>
    %c3_336 = arith.constant 3 : index
    %c0_337 = arith.constant 0 : index
    %c0_338 = arith.constant 0 : index
    %859 = vector.load %arg6[%c3_336, %c0_337, %c0_338] : memref<6x32x32xf32, #tpu.memory_space<vmem>>, vector<1x32x32xf32>
    %860 = vector.shape_cast %859 : vector<1x32x32xf32> to vector<32x32xf32>
    %cst_339 = arith.constant dense<0.000000e+00> : vector<2x32xf32>
    %861 = tpu.matmul %858, %860, %cst_339 {dimension_numbers = #tpu.dot_dimension_numbers<[1], [0], [0], [1], [0, 0, 1, 1], [], []>} : vector<2x32xf32>, vector<32x32xf32>, vector<2x32xf32> -> vector<2x32xf32>
    %c3_340 = arith.constant 3 : index
    %c0_341 = arith.constant 0 : index
    %c0_342 = arith.constant 0 : index
    %862 = vector.load %arg7[%c3_340, %c0_341, %c0_342] : memref<6x1x32xf32, #tpu.memory_space<vmem>>, vector<1x1x32xf32>
    %863 = vector.shape_cast %862 : vector<1x1x32xf32> to vector<1x32xf32>
    %864 = vector.broadcast %863 : vector<1x32xf32> to vector<2x32xf32>
    %865 = arith.addf %861, %864 : vector<2x32xf32>
    %866 = arith.addf %711, %865 : vector<2x32xf32>
    %c3_343 = arith.constant 3 : index
    %c0_344 = arith.constant 0 : index
    %c0_345 = arith.constant 0 : index
    %867 = vector.load %arg12[%c3_343, %c0_344, %c0_345] : memref<6x1x32xf32, #tpu.memory_space<vmem>>, vector<1x1x32xf32>
    %868 = vector.shape_cast %867 : vector<1x1x32xf32> to vector<1x32xf32>
    %c3_346 = arith.constant 3 : index
    %c0_347 = arith.constant 0 : index
    %c0_348 = arith.constant 0 : index
    %869 = vector.load %arg13[%c3_346, %c0_347, %c0_348] : memref<6x1x32xf32, #tpu.memory_space<vmem>>, vector<1x1x32xf32>
    %870 = vector.shape_cast %869 : vector<1x1x32xf32> to vector<1x32xf32>
    %cst_349 = arith.constant dense<0.000000e+00> : vector<2xf32>
    %871 = vector.multi_reduction <add>, %866, %cst_349 [1] : vector<2x32xf32> to vector<2xf32>
    %872 = vector.shape_cast %871 : vector<2xf32> to vector<2x1xf32>
    %cst_350 = arith.constant 3.200000e+01 : f32
    %873 = vector.broadcast %cst_350 : f32 to vector<2x1xf32>
    %874 = arith.divf %872, %873 : vector<2x1xf32>
    %875 = vector.broadcast %874 : vector<2x1xf32> to vector<2x32xf32>
    %876 = arith.subf %866, %875 : vector<2x32xf32>
    %877 = arith.mulf %876, %876 : vector<2x32xf32>
    %cst_351 = arith.constant dense<0.000000e+00> : vector<2xf32>
    %878 = vector.multi_reduction <add>, %877, %cst_351 [1] : vector<2x32xf32> to vector<2xf32>
    %879 = vector.shape_cast %878 : vector<2xf32> to vector<2x1xf32>
    %cst_352 = arith.constant 3.200000e+01 : f32
    %880 = vector.broadcast %cst_352 : f32 to vector<2x1xf32>
    %881 = arith.divf %879, %880 : vector<2x1xf32>
    %882 = vector.broadcast %874 : vector<2x1xf32> to vector<2x32xf32>
    %883 = arith.subf %866, %882 : vector<2x32xf32>
    %cst_353 = arith.constant 9.99999974E-6 : f32
    %884 = vector.broadcast %cst_353 : f32 to vector<2x1xf32>
    %885 = arith.addf %881, %884 : vector<2x1xf32>
    %886 = math.rsqrt %885 : vector<2x1xf32>
    %887 = vector.broadcast %886 : vector<2x1xf32> to vector<2x32xf32>
    %888 = arith.mulf %883, %887 : vector<2x32xf32>
    %889 = vector.broadcast %868 : vector<1x32xf32> to vector<2x32xf32>
    %890 = arith.mulf %888, %889 : vector<2x32xf32>
    %891 = vector.broadcast %870 : vector<1x32xf32> to vector<2x32xf32>
    %892 = arith.addf %890, %891 : vector<2x32xf32>
    %c3_354 = arith.constant 3 : index
    %c0_355 = arith.constant 0 : index
    %c0_356 = arith.constant 0 : index
    %893 = vector.load %arg8[%c3_354, %c0_355, %c0_356] : memref<6x32x128xf32, #tpu.memory_space<vmem>>, vector<1x32x128xf32>
    %894 = vector.shape_cast %893 : vector<1x32x128xf32> to vector<32x128xf32>
    %cst_357 = arith.constant dense<0.000000e+00> : vector<2x128xf32>
    %895 = tpu.matmul %892, %894, %cst_357 {dimension_numbers = #tpu.dot_dimension_numbers<[1], [0], [0], [1], [0, 0, 1, 1], [], []>} : vector<2x32xf32>, vector<32x128xf32>, vector<2x128xf32> -> vector<2x128xf32>
    %c3_358 = arith.constant 3 : index
    %c0_359 = arith.constant 0 : index
    %c0_360 = arith.constant 0 : index
    %896 = vector.load %arg9[%c3_358, %c0_359, %c0_360] : memref<6x1x128xf32, #tpu.memory_space<vmem>>, vector<1x1x128xf32>
    %897 = vector.shape_cast %896 : vector<1x1x128xf32> to vector<1x128xf32>
    %898 = vector.broadcast %897 : vector<1x128xf32> to vector<2x128xf32>
    %899 = arith.addf %895, %898 : vector<2x128xf32>
    %cst_361 = arith.constant 0.000000e+00 : f32
    %900 = vector.broadcast %cst_361 : f32 to vector<2x128xf32>
    %901 = arith.maximumf %899, %900 : vector<2x128xf32>
    %c3_362 = arith.constant 3 : index
    %c0_363 = arith.constant 0 : index
    %c0_364 = arith.constant 0 : index
    %902 = vector.load %arg10[%c3_362, %c0_363, %c0_364] : memref<6x128x32xf32, #tpu.memory_space<vmem>>, vector<1x128x32xf32>
    %903 = vector.shape_cast %902 : vector<1x128x32xf32> to vector<128x32xf32>
    %cst_365 = arith.constant dense<0.000000e+00> : vector<2x32xf32>
    %904 = tpu.matmul %901, %903, %cst_365 {dimension_numbers = #tpu.dot_dimension_numbers<[1], [0], [0], [1], [0, 0, 1, 1], [], []>} : vector<2x128xf32>, vector<128x32xf32>, vector<2x32xf32> -> vector<2x32xf32>
    %c3_366 = arith.constant 3 : index
    %c0_367 = arith.constant 0 : index
    %c0_368 = arith.constant 0 : index
    %905 = vector.load %arg11[%c3_366, %c0_367, %c0_368] : memref<6x1x32xf32, #tpu.memory_space<vmem>>, vector<1x1x32xf32>
    %906 = vector.shape_cast %905 : vector<1x1x32xf32> to vector<1x32xf32>
    %907 = vector.broadcast %906 : vector<1x32xf32> to vector<2x32xf32>
    %908 = arith.addf %904, %907 : vector<2x32xf32>
    %909 = arith.addf %892, %908 : vector<2x32xf32>
    %c3_369 = arith.constant 3 : index
    %c0_370 = arith.constant 0 : index
    %c0_371 = arith.constant 0 : index
    %910 = vector.load %arg14[%c3_369, %c0_370, %c0_371] : memref<6x1x32xf32, #tpu.memory_space<vmem>>, vector<1x1x32xf32>
    %911 = vector.shape_cast %910 : vector<1x1x32xf32> to vector<1x32xf32>
    %c3_372 = arith.constant 3 : index
    %c0_373 = arith.constant 0 : index
    %c0_374 = arith.constant 0 : index
    %912 = vector.load %arg15[%c3_372, %c0_373, %c0_374] : memref<6x1x32xf32, #tpu.memory_space<vmem>>, vector<1x1x32xf32>
    %913 = vector.shape_cast %912 : vector<1x1x32xf32> to vector<1x32xf32>
    %cst_375 = arith.constant dense<0.000000e+00> : vector<2xf32>
    %914 = vector.multi_reduction <add>, %909, %cst_375 [1] : vector<2x32xf32> to vector<2xf32>
    %915 = vector.shape_cast %914 : vector<2xf32> to vector<2x1xf32>
    %cst_376 = arith.constant 3.200000e+01 : f32
    %916 = vector.broadcast %cst_376 : f32 to vector<2x1xf32>
    %917 = arith.divf %915, %916 : vector<2x1xf32>
    %918 = vector.broadcast %917 : vector<2x1xf32> to vector<2x32xf32>
    %919 = arith.subf %909, %918 : vector<2x32xf32>
    %920 = arith.mulf %919, %919 : vector<2x32xf32>
    %cst_377 = arith.constant dense<0.000000e+00> : vector<2xf32>
    %921 = vector.multi_reduction <add>, %920, %cst_377 [1] : vector<2x32xf32> to vector<2xf32>
    %922 = vector.shape_cast %921 : vector<2xf32> to vector<2x1xf32>
    %cst_378 = arith.constant 3.200000e+01 : f32
    %923 = vector.broadcast %cst_378 : f32 to vector<2x1xf32>
    %924 = arith.divf %922, %923 : vector<2x1xf32>
    %925 = vector.broadcast %917 : vector<2x1xf32> to vector<2x32xf32>
    %926 = arith.subf %909, %925 : vector<2x32xf32>
    %cst_379 = arith.constant 9.99999974E-6 : f32
    %927 = vector.broadcast %cst_379 : f32 to vector<2x1xf32>
    %928 = arith.addf %924, %927 : vector<2x1xf32>
    %929 = math.rsqrt %928 : vector<2x1xf32>
    %930 = vector.broadcast %929 : vector<2x1xf32> to vector<2x32xf32>
    %931 = arith.mulf %926, %930 : vector<2x32xf32>
    %932 = vector.broadcast %911 : vector<1x32xf32> to vector<2x32xf32>
    %933 = arith.mulf %931, %932 : vector<2x32xf32>
    %934 = vector.broadcast %913 : vector<1x32xf32> to vector<2x32xf32>
    %935 = arith.addf %933, %934 : vector<2x32xf32>
    %c4 = arith.constant 4 : index
    %c0_380 = arith.constant 0 : index
    %c0_381 = arith.constant 0 : index
    %936 = vector.load %arg4[%c4, %c0_380, %c0_381] : memref<6x32x96xf32, #tpu.memory_space<vmem>>, vector<1x32x96xf32>
    %937 = vector.shape_cast %936 : vector<1x32x96xf32> to vector<32x96xf32>
    %cst_382 = arith.constant dense<0.000000e+00> : vector<2x96xf32>
    %938 = tpu.matmul %935, %937, %cst_382 {dimension_numbers = #tpu.dot_dimension_numbers<[1], [0], [0], [1], [0, 0, 1, 1], [], []>} : vector<2x32xf32>, vector<32x96xf32>, vector<2x96xf32> -> vector<2x96xf32>
    %c4_383 = arith.constant 4 : index
    %c0_384 = arith.constant 0 : index
    %c0_385 = arith.constant 0 : index
    %939 = vector.load %arg5[%c4_383, %c0_384, %c0_385] : memref<6x1x96xf32, #tpu.memory_space<vmem>>, vector<1x1x96xf32>
    %940 = vector.shape_cast %939 : vector<1x1x96xf32> to vector<1x96xf32>
    %941 = vector.broadcast %940 : vector<1x96xf32> to vector<2x96xf32>
    %942 = arith.addf %938, %941 : vector<2x96xf32>
    %943 = vector.extract_strided_slice %942 {offsets = [0, 0], sizes = [2, 32], strides = [1, 1]} : vector<2x96xf32> to vector<2x32xf32>
    %944 = vector.extract_strided_slice %942 {offsets = [0, 32], sizes = [2, 32], strides = [1, 1]} : vector<2x96xf32> to vector<2x32xf32>
    %945 = vector.extract_strided_slice %942 {offsets = [0, 64], sizes = [2, 32], strides = [1, 1]} : vector<2x96xf32> to vector<2x32xf32>
    %946 = vector.extract_strided_slice %943 {offsets = [0, 0], sizes = [2, 4], strides = [1, 1]} : vector<2x32xf32> to vector<2x4xf32>
    %947 = vector.extract_strided_slice %944 {offsets = [0, 0], sizes = [2, 4], strides = [1, 1]} : vector<2x32xf32> to vector<2x4xf32>
    %948 = vector.extract_strided_slice %945 {offsets = [0, 0], sizes = [2, 4], strides = [1, 1]} : vector<2x32xf32> to vector<2x4xf32>
    %cst_386 = arith.constant dense<0.000000e+00> : vector<2x2xf32>
    %949 = tpu.matmul %946, %947, %cst_386 {dimension_numbers = #tpu.dot_dimension_numbers<[1], [1], [0], [0], [0, 0, 1, 0], [], []>} : vector<2x4xf32>, vector<2x4xf32>, vector<2x2xf32> -> vector<2x2xf32>
    %cst_387 = arith.constant 5.000000e-01 : f32
    %950 = vector.broadcast %cst_387 : f32 to vector<2x2xf32>
    %951 = arith.mulf %949, %950 : vector<2x2xf32>
    %cst_388 = arith.constant dense<0xFF800000> : vector<2xf32>
    %952 = vector.multi_reduction <maximumf>, %951, %cst_388 [1] : vector<2x2xf32> to vector<2xf32>
    %953 = vector.shape_cast %952 : vector<2xf32> to vector<2x1xf32>
    %954 = vector.broadcast %953 : vector<2x1xf32> to vector<2x2xf32>
    %955 = arith.subf %951, %954 : vector<2x2xf32>
    %956 = math.exp %955 : vector<2x2xf32>
    %cst_389 = arith.constant dense<0.000000e+00> : vector<2xf32>
    %957 = vector.multi_reduction <add>, %956, %cst_389 [1] : vector<2x2xf32> to vector<2xf32>
    %958 = vector.shape_cast %957 : vector<2xf32> to vector<2x1xf32>
    %959 = tpu.reciprocal %958 {approx = true} : vector<2x1xf32> -> vector<2x1xf32>
    %960 = vector.broadcast %959 : vector<2x1xf32> to vector<2x2xf32>
    %961 = arith.mulf %956, %960 : vector<2x2xf32>
    %cst_390 = arith.constant dense<0.000000e+00> : vector<2x4xf32>
    %962 = tpu.matmul %961, %948, %cst_390 {dimension_numbers = #tpu.dot_dimension_numbers<[1], [0], [0], [1], [0, 0, 1, 1], [], []>} : vector<2x2xf32>, vector<2x4xf32>, vector<2x4xf32> -> vector<2x4xf32>
    %963 = vector.extract_strided_slice %943 {offsets = [0, 4], sizes = [2, 4], strides = [1, 1]} : vector<2x32xf32> to vector<2x4xf32>
    %964 = vector.extract_strided_slice %944 {offsets = [0, 4], sizes = [2, 4], strides = [1, 1]} : vector<2x32xf32> to vector<2x4xf32>
    %965 = vector.extract_strided_slice %945 {offsets = [0, 4], sizes = [2, 4], strides = [1, 1]} : vector<2x32xf32> to vector<2x4xf32>
    %cst_391 = arith.constant dense<0.000000e+00> : vector<2x2xf32>
    %966 = tpu.matmul %963, %964, %cst_391 {dimension_numbers = #tpu.dot_dimension_numbers<[1], [1], [0], [0], [0, 0, 1, 0], [], []>} : vector<2x4xf32>, vector<2x4xf32>, vector<2x2xf32> -> vector<2x2xf32>
    %cst_392 = arith.constant 5.000000e-01 : f32
    %967 = vector.broadcast %cst_392 : f32 to vector<2x2xf32>
    %968 = arith.mulf %966, %967 : vector<2x2xf32>
    %cst_393 = arith.constant dense<0xFF800000> : vector<2xf32>
    %969 = vector.multi_reduction <maximumf>, %968, %cst_393 [1] : vector<2x2xf32> to vector<2xf32>
    %970 = vector.shape_cast %969 : vector<2xf32> to vector<2x1xf32>
    %971 = vector.broadcast %970 : vector<2x1xf32> to vector<2x2xf32>
    %972 = arith.subf %968, %971 : vector<2x2xf32>
    %973 = math.exp %972 : vector<2x2xf32>
    %cst_394 = arith.constant dense<0.000000e+00> : vector<2xf32>
    %974 = vector.multi_reduction <add>, %973, %cst_394 [1] : vector<2x2xf32> to vector<2xf32>
    %975 = vector.shape_cast %974 : vector<2xf32> to vector<2x1xf32>
    %976 = tpu.reciprocal %975 {approx = true} : vector<2x1xf32> -> vector<2x1xf32>
    %977 = vector.broadcast %976 : vector<2x1xf32> to vector<2x2xf32>
    %978 = arith.mulf %973, %977 : vector<2x2xf32>
    %cst_395 = arith.constant dense<0.000000e+00> : vector<2x4xf32>
    %979 = tpu.matmul %978, %965, %cst_395 {dimension_numbers = #tpu.dot_dimension_numbers<[1], [0], [0], [1], [0, 0, 1, 1], [], []>} : vector<2x2xf32>, vector<2x4xf32>, vector<2x4xf32> -> vector<2x4xf32>
    %980 = vector.extract_strided_slice %943 {offsets = [0, 8], sizes = [2, 4], strides = [1, 1]} : vector<2x32xf32> to vector<2x4xf32>
    %981 = vector.extract_strided_slice %944 {offsets = [0, 8], sizes = [2, 4], strides = [1, 1]} : vector<2x32xf32> to vector<2x4xf32>
    %982 = vector.extract_strided_slice %945 {offsets = [0, 8], sizes = [2, 4], strides = [1, 1]} : vector<2x32xf32> to vector<2x4xf32>
    %cst_396 = arith.constant dense<0.000000e+00> : vector<2x2xf32>
    %983 = tpu.matmul %980, %981, %cst_396 {dimension_numbers = #tpu.dot_dimension_numbers<[1], [1], [0], [0], [0, 0, 1, 0], [], []>} : vector<2x4xf32>, vector<2x4xf32>, vector<2x2xf32> -> vector<2x2xf32>
    %cst_397 = arith.constant 5.000000e-01 : f32
    %984 = vector.broadcast %cst_397 : f32 to vector<2x2xf32>
    %985 = arith.mulf %983, %984 : vector<2x2xf32>
    %cst_398 = arith.constant dense<0xFF800000> : vector<2xf32>
    %986 = vector.multi_reduction <maximumf>, %985, %cst_398 [1] : vector<2x2xf32> to vector<2xf32>
    %987 = vector.shape_cast %986 : vector<2xf32> to vector<2x1xf32>
    %988 = vector.broadcast %987 : vector<2x1xf32> to vector<2x2xf32>
    %989 = arith.subf %985, %988 : vector<2x2xf32>
    %990 = math.exp %989 : vector<2x2xf32>
    %cst_399 = arith.constant dense<0.000000e+00> : vector<2xf32>
    %991 = vector.multi_reduction <add>, %990, %cst_399 [1] : vector<2x2xf32> to vector<2xf32>
    %992 = vector.shape_cast %991 : vector<2xf32> to vector<2x1xf32>
    %993 = tpu.reciprocal %992 {approx = true} : vector<2x1xf32> -> vector<2x1xf32>
    %994 = vector.broadcast %993 : vector<2x1xf32> to vector<2x2xf32>
    %995 = arith.mulf %990, %994 : vector<2x2xf32>
    %cst_400 = arith.constant dense<0.000000e+00> : vector<2x4xf32>
    %996 = tpu.matmul %995, %982, %cst_400 {dimension_numbers = #tpu.dot_dimension_numbers<[1], [0], [0], [1], [0, 0, 1, 1], [], []>} : vector<2x2xf32>, vector<2x4xf32>, vector<2x4xf32> -> vector<2x4xf32>
    %997 = vector.extract_strided_slice %943 {offsets = [0, 12], sizes = [2, 4], strides = [1, 1]} : vector<2x32xf32> to vector<2x4xf32>
    %998 = vector.extract_strided_slice %944 {offsets = [0, 12], sizes = [2, 4], strides = [1, 1]} : vector<2x32xf32> to vector<2x4xf32>
    %999 = vector.extract_strided_slice %945 {offsets = [0, 12], sizes = [2, 4], strides = [1, 1]} : vector<2x32xf32> to vector<2x4xf32>
    %cst_401 = arith.constant dense<0.000000e+00> : vector<2x2xf32>
    %1000 = tpu.matmul %997, %998, %cst_401 {dimension_numbers = #tpu.dot_dimension_numbers<[1], [1], [0], [0], [0, 0, 1, 0], [], []>} : vector<2x4xf32>, vector<2x4xf32>, vector<2x2xf32> -> vector<2x2xf32>
    %cst_402 = arith.constant 5.000000e-01 : f32
    %1001 = vector.broadcast %cst_402 : f32 to vector<2x2xf32>
    %1002 = arith.mulf %1000, %1001 : vector<2x2xf32>
    %cst_403 = arith.constant dense<0xFF800000> : vector<2xf32>
    %1003 = vector.multi_reduction <maximumf>, %1002, %cst_403 [1] : vector<2x2xf32> to vector<2xf32>
    %1004 = vector.shape_cast %1003 : vector<2xf32> to vector<2x1xf32>
    %1005 = vector.broadcast %1004 : vector<2x1xf32> to vector<2x2xf32>
    %1006 = arith.subf %1002, %1005 : vector<2x2xf32>
    %1007 = math.exp %1006 : vector<2x2xf32>
    %cst_404 = arith.constant dense<0.000000e+00> : vector<2xf32>
    %1008 = vector.multi_reduction <add>, %1007, %cst_404 [1] : vector<2x2xf32> to vector<2xf32>
    %1009 = vector.shape_cast %1008 : vector<2xf32> to vector<2x1xf32>
    %1010 = tpu.reciprocal %1009 {approx = true} : vector<2x1xf32> -> vector<2x1xf32>
    %1011 = vector.broadcast %1010 : vector<2x1xf32> to vector<2x2xf32>
    %1012 = arith.mulf %1007, %1011 : vector<2x2xf32>
    %cst_405 = arith.constant dense<0.000000e+00> : vector<2x4xf32>
    %1013 = tpu.matmul %1012, %999, %cst_405 {dimension_numbers = #tpu.dot_dimension_numbers<[1], [0], [0], [1], [0, 0, 1, 1], [], []>} : vector<2x2xf32>, vector<2x4xf32>, vector<2x4xf32> -> vector<2x4xf32>
    %1014 = vector.extract_strided_slice %943 {offsets = [0, 16], sizes = [2, 4], strides = [1, 1]} : vector<2x32xf32> to vector<2x4xf32>
    %1015 = vector.extract_strided_slice %944 {offsets = [0, 16], sizes = [2, 4], strides = [1, 1]} : vector<2x32xf32> to vector<2x4xf32>
    %1016 = vector.extract_strided_slice %945 {offsets = [0, 16], sizes = [2, 4], strides = [1, 1]} : vector<2x32xf32> to vector<2x4xf32>
    %cst_406 = arith.constant dense<0.000000e+00> : vector<2x2xf32>
    %1017 = tpu.matmul %1014, %1015, %cst_406 {dimension_numbers = #tpu.dot_dimension_numbers<[1], [1], [0], [0], [0, 0, 1, 0], [], []>} : vector<2x4xf32>, vector<2x4xf32>, vector<2x2xf32> -> vector<2x2xf32>
    %cst_407 = arith.constant 5.000000e-01 : f32
    %1018 = vector.broadcast %cst_407 : f32 to vector<2x2xf32>
    %1019 = arith.mulf %1017, %1018 : vector<2x2xf32>
    %cst_408 = arith.constant dense<0xFF800000> : vector<2xf32>
    %1020 = vector.multi_reduction <maximumf>, %1019, %cst_408 [1] : vector<2x2xf32> to vector<2xf32>
    %1021 = vector.shape_cast %1020 : vector<2xf32> to vector<2x1xf32>
    %1022 = vector.broadcast %1021 : vector<2x1xf32> to vector<2x2xf32>
    %1023 = arith.subf %1019, %1022 : vector<2x2xf32>
    %1024 = math.exp %1023 : vector<2x2xf32>
    %cst_409 = arith.constant dense<0.000000e+00> : vector<2xf32>
    %1025 = vector.multi_reduction <add>, %1024, %cst_409 [1] : vector<2x2xf32> to vector<2xf32>
    %1026 = vector.shape_cast %1025 : vector<2xf32> to vector<2x1xf32>
    %1027 = tpu.reciprocal %1026 {approx = true} : vector<2x1xf32> -> vector<2x1xf32>
    %1028 = vector.broadcast %1027 : vector<2x1xf32> to vector<2x2xf32>
    %1029 = arith.mulf %1024, %1028 : vector<2x2xf32>
    %cst_410 = arith.constant dense<0.000000e+00> : vector<2x4xf32>
    %1030 = tpu.matmul %1029, %1016, %cst_410 {dimension_numbers = #tpu.dot_dimension_numbers<[1], [0], [0], [1], [0, 0, 1, 1], [], []>} : vector<2x2xf32>, vector<2x4xf32>, vector<2x4xf32> -> vector<2x4xf32>
    %1031 = vector.extract_strided_slice %943 {offsets = [0, 20], sizes = [2, 4], strides = [1, 1]} : vector<2x32xf32> to vector<2x4xf32>
    %1032 = vector.extract_strided_slice %944 {offsets = [0, 20], sizes = [2, 4], strides = [1, 1]} : vector<2x32xf32> to vector<2x4xf32>
    %1033 = vector.extract_strided_slice %945 {offsets = [0, 20], sizes = [2, 4], strides = [1, 1]} : vector<2x32xf32> to vector<2x4xf32>
    %cst_411 = arith.constant dense<0.000000e+00> : vector<2x2xf32>
    %1034 = tpu.matmul %1031, %1032, %cst_411 {dimension_numbers = #tpu.dot_dimension_numbers<[1], [1], [0], [0], [0, 0, 1, 0], [], []>} : vector<2x4xf32>, vector<2x4xf32>, vector<2x2xf32> -> vector<2x2xf32>
    %cst_412 = arith.constant 5.000000e-01 : f32
    %1035 = vector.broadcast %cst_412 : f32 to vector<2x2xf32>
    %1036 = arith.mulf %1034, %1035 : vector<2x2xf32>
    %cst_413 = arith.constant dense<0xFF800000> : vector<2xf32>
    %1037 = vector.multi_reduction <maximumf>, %1036, %cst_413 [1] : vector<2x2xf32> to vector<2xf32>
    %1038 = vector.shape_cast %1037 : vector<2xf32> to vector<2x1xf32>
    %1039 = vector.broadcast %1038 : vector<2x1xf32> to vector<2x2xf32>
    %1040 = arith.subf %1036, %1039 : vector<2x2xf32>
    %1041 = math.exp %1040 : vector<2x2xf32>
    %cst_414 = arith.constant dense<0.000000e+00> : vector<2xf32>
    %1042 = vector.multi_reduction <add>, %1041, %cst_414 [1] : vector<2x2xf32> to vector<2xf32>
    %1043 = vector.shape_cast %1042 : vector<2xf32> to vector<2x1xf32>
    %1044 = tpu.reciprocal %1043 {approx = true} : vector<2x1xf32> -> vector<2x1xf32>
    %1045 = vector.broadcast %1044 : vector<2x1xf32> to vector<2x2xf32>
    %1046 = arith.mulf %1041, %1045 : vector<2x2xf32>
    %cst_415 = arith.constant dense<0.000000e+00> : vector<2x4xf32>
    %1047 = tpu.matmul %1046, %1033, %cst_415 {dimension_numbers = #tpu.dot_dimension_numbers<[1], [0], [0], [1], [0, 0, 1, 1], [], []>} : vector<2x2xf32>, vector<2x4xf32>, vector<2x4xf32> -> vector<2x4xf32>
    %1048 = vector.extract_strided_slice %943 {offsets = [0, 24], sizes = [2, 4], strides = [1, 1]} : vector<2x32xf32> to vector<2x4xf32>
    %1049 = vector.extract_strided_slice %944 {offsets = [0, 24], sizes = [2, 4], strides = [1, 1]} : vector<2x32xf32> to vector<2x4xf32>
    %1050 = vector.extract_strided_slice %945 {offsets = [0, 24], sizes = [2, 4], strides = [1, 1]} : vector<2x32xf32> to vector<2x4xf32>
    %cst_416 = arith.constant dense<0.000000e+00> : vector<2x2xf32>
    %1051 = tpu.matmul %1048, %1049, %cst_416 {dimension_numbers = #tpu.dot_dimension_numbers<[1], [1], [0], [0], [0, 0, 1, 0], [], []>} : vector<2x4xf32>, vector<2x4xf32>, vector<2x2xf32> -> vector<2x2xf32>
    %cst_417 = arith.constant 5.000000e-01 : f32
    %1052 = vector.broadcast %cst_417 : f32 to vector<2x2xf32>
    %1053 = arith.mulf %1051, %1052 : vector<2x2xf32>
    %cst_418 = arith.constant dense<0xFF800000> : vector<2xf32>
    %1054 = vector.multi_reduction <maximumf>, %1053, %cst_418 [1] : vector<2x2xf32> to vector<2xf32>
    %1055 = vector.shape_cast %1054 : vector<2xf32> to vector<2x1xf32>
    %1056 = vector.broadcast %1055 : vector<2x1xf32> to vector<2x2xf32>
    %1057 = arith.subf %1053, %1056 : vector<2x2xf32>
    %1058 = math.exp %1057 : vector<2x2xf32>
    %cst_419 = arith.constant dense<0.000000e+00> : vector<2xf32>
    %1059 = vector.multi_reduction <add>, %1058, %cst_419 [1] : vector<2x2xf32> to vector<2xf32>
    %1060 = vector.shape_cast %1059 : vector<2xf32> to vector<2x1xf32>
    %1061 = tpu.reciprocal %1060 {approx = true} : vector<2x1xf32> -> vector<2x1xf32>
    %1062 = vector.broadcast %1061 : vector<2x1xf32> to vector<2x2xf32>
    %1063 = arith.mulf %1058, %1062 : vector<2x2xf32>
    %cst_420 = arith.constant dense<0.000000e+00> : vector<2x4xf32>
    %1064 = tpu.matmul %1063, %1050, %cst_420 {dimension_numbers = #tpu.dot_dimension_numbers<[1], [0], [0], [1], [0, 0, 1, 1], [], []>} : vector<2x2xf32>, vector<2x4xf32>, vector<2x4xf32> -> vector<2x4xf32>
    %1065 = vector.extract_strided_slice %943 {offsets = [0, 28], sizes = [2, 4], strides = [1, 1]} : vector<2x32xf32> to vector<2x4xf32>
    %1066 = vector.extract_strided_slice %944 {offsets = [0, 28], sizes = [2, 4], strides = [1, 1]} : vector<2x32xf32> to vector<2x4xf32>
    %1067 = vector.extract_strided_slice %945 {offsets = [0, 28], sizes = [2, 4], strides = [1, 1]} : vector<2x32xf32> to vector<2x4xf32>
    %cst_421 = arith.constant dense<0.000000e+00> : vector<2x2xf32>
    %1068 = tpu.matmul %1065, %1066, %cst_421 {dimension_numbers = #tpu.dot_dimension_numbers<[1], [1], [0], [0], [0, 0, 1, 0], [], []>} : vector<2x4xf32>, vector<2x4xf32>, vector<2x2xf32> -> vector<2x2xf32>
    %cst_422 = arith.constant 5.000000e-01 : f32
    %1069 = vector.broadcast %cst_422 : f32 to vector<2x2xf32>
    %1070 = arith.mulf %1068, %1069 : vector<2x2xf32>
    %cst_423 = arith.constant dense<0xFF800000> : vector<2xf32>
    %1071 = vector.multi_reduction <maximumf>, %1070, %cst_423 [1] : vector<2x2xf32> to vector<2xf32>
    %1072 = vector.shape_cast %1071 : vector<2xf32> to vector<2x1xf32>
    %1073 = vector.broadcast %1072 : vector<2x1xf32> to vector<2x2xf32>
    %1074 = arith.subf %1070, %1073 : vector<2x2xf32>
    %1075 = math.exp %1074 : vector<2x2xf32>
    %cst_424 = arith.constant dense<0.000000e+00> : vector<2xf32>
    %1076 = vector.multi_reduction <add>, %1075, %cst_424 [1] : vector<2x2xf32> to vector<2xf32>
    %1077 = vector.shape_cast %1076 : vector<2xf32> to vector<2x1xf32>
    %1078 = tpu.reciprocal %1077 {approx = true} : vector<2x1xf32> -> vector<2x1xf32>
    %1079 = vector.broadcast %1078 : vector<2x1xf32> to vector<2x2xf32>
    %1080 = arith.mulf %1075, %1079 : vector<2x2xf32>
    %cst_425 = arith.constant dense<0.000000e+00> : vector<2x4xf32>
    %1081 = tpu.matmul %1080, %1067, %cst_425 {dimension_numbers = #tpu.dot_dimension_numbers<[1], [0], [0], [1], [0, 0, 1, 1], [], []>} : vector<2x2xf32>, vector<2x4xf32>, vector<2x4xf32> -> vector<2x4xf32>
    %1082 = tpu.concatenate %962, %979, %996, %1013, %1030, %1047, %1064, %1081 in 1 : vector<2x4xf32>, vector<2x4xf32>, vector<2x4xf32>, vector<2x4xf32>, vector<2x4xf32>, vector<2x4xf32>, vector<2x4xf32>, vector<2x4xf32> -> vector<2x32xf32>
    %c4_426 = arith.constant 4 : index
    %c0_427 = arith.constant 0 : index
    %c0_428 = arith.constant 0 : index
    %1083 = vector.load %arg6[%c4_426, %c0_427, %c0_428] : memref<6x32x32xf32, #tpu.memory_space<vmem>>, vector<1x32x32xf32>
    %1084 = vector.shape_cast %1083 : vector<1x32x32xf32> to vector<32x32xf32>
    %cst_429 = arith.constant dense<0.000000e+00> : vector<2x32xf32>
    %1085 = tpu.matmul %1082, %1084, %cst_429 {dimension_numbers = #tpu.dot_dimension_numbers<[1], [0], [0], [1], [0, 0, 1, 1], [], []>} : vector<2x32xf32>, vector<32x32xf32>, vector<2x32xf32> -> vector<2x32xf32>
    %c4_430 = arith.constant 4 : index
    %c0_431 = arith.constant 0 : index
    %c0_432 = arith.constant 0 : index
    %1086 = vector.load %arg7[%c4_430, %c0_431, %c0_432] : memref<6x1x32xf32, #tpu.memory_space<vmem>>, vector<1x1x32xf32>
    %1087 = vector.shape_cast %1086 : vector<1x1x32xf32> to vector<1x32xf32>
    %1088 = vector.broadcast %1087 : vector<1x32xf32> to vector<2x32xf32>
    %1089 = arith.addf %1085, %1088 : vector<2x32xf32>
    %1090 = arith.addf %935, %1089 : vector<2x32xf32>
    %c4_433 = arith.constant 4 : index
    %c0_434 = arith.constant 0 : index
    %c0_435 = arith.constant 0 : index
    %1091 = vector.load %arg12[%c4_433, %c0_434, %c0_435] : memref<6x1x32xf32, #tpu.memory_space<vmem>>, vector<1x1x32xf32>
    %1092 = vector.shape_cast %1091 : vector<1x1x32xf32> to vector<1x32xf32>
    %c4_436 = arith.constant 4 : index
    %c0_437 = arith.constant 0 : index
    %c0_438 = arith.constant 0 : index
    %1093 = vector.load %arg13[%c4_436, %c0_437, %c0_438] : memref<6x1x32xf32, #tpu.memory_space<vmem>>, vector<1x1x32xf32>
    %1094 = vector.shape_cast %1093 : vector<1x1x32xf32> to vector<1x32xf32>
    %cst_439 = arith.constant dense<0.000000e+00> : vector<2xf32>
    %1095 = vector.multi_reduction <add>, %1090, %cst_439 [1] : vector<2x32xf32> to vector<2xf32>
    %1096 = vector.shape_cast %1095 : vector<2xf32> to vector<2x1xf32>
    %cst_440 = arith.constant 3.200000e+01 : f32
    %1097 = vector.broadcast %cst_440 : f32 to vector<2x1xf32>
    %1098 = arith.divf %1096, %1097 : vector<2x1xf32>
    %1099 = vector.broadcast %1098 : vector<2x1xf32> to vector<2x32xf32>
    %1100 = arith.subf %1090, %1099 : vector<2x32xf32>
    %1101 = arith.mulf %1100, %1100 : vector<2x32xf32>
    %cst_441 = arith.constant dense<0.000000e+00> : vector<2xf32>
    %1102 = vector.multi_reduction <add>, %1101, %cst_441 [1] : vector<2x32xf32> to vector<2xf32>
    %1103 = vector.shape_cast %1102 : vector<2xf32> to vector<2x1xf32>
    %cst_442 = arith.constant 3.200000e+01 : f32
    %1104 = vector.broadcast %cst_442 : f32 to vector<2x1xf32>
    %1105 = arith.divf %1103, %1104 : vector<2x1xf32>
    %1106 = vector.broadcast %1098 : vector<2x1xf32> to vector<2x32xf32>
    %1107 = arith.subf %1090, %1106 : vector<2x32xf32>
    %cst_443 = arith.constant 9.99999974E-6 : f32
    %1108 = vector.broadcast %cst_443 : f32 to vector<2x1xf32>
    %1109 = arith.addf %1105, %1108 : vector<2x1xf32>
    %1110 = math.rsqrt %1109 : vector<2x1xf32>
    %1111 = vector.broadcast %1110 : vector<2x1xf32> to vector<2x32xf32>
    %1112 = arith.mulf %1107, %1111 : vector<2x32xf32>
    %1113 = vector.broadcast %1092 : vector<1x32xf32> to vector<2x32xf32>
    %1114 = arith.mulf %1112, %1113 : vector<2x32xf32>
    %1115 = vector.broadcast %1094 : vector<1x32xf32> to vector<2x32xf32>
    %1116 = arith.addf %1114, %1115 : vector<2x32xf32>
    %c4_444 = arith.constant 4 : index
    %c0_445 = arith.constant 0 : index
    %c0_446 = arith.constant 0 : index
    %1117 = vector.load %arg8[%c4_444, %c0_445, %c0_446] : memref<6x32x128xf32, #tpu.memory_space<vmem>>, vector<1x32x128xf32>
    %1118 = vector.shape_cast %1117 : vector<1x32x128xf32> to vector<32x128xf32>
    %cst_447 = arith.constant dense<0.000000e+00> : vector<2x128xf32>
    %1119 = tpu.matmul %1116, %1118, %cst_447 {dimension_numbers = #tpu.dot_dimension_numbers<[1], [0], [0], [1], [0, 0, 1, 1], [], []>} : vector<2x32xf32>, vector<32x128xf32>, vector<2x128xf32> -> vector<2x128xf32>
    %c4_448 = arith.constant 4 : index
    %c0_449 = arith.constant 0 : index
    %c0_450 = arith.constant 0 : index
    %1120 = vector.load %arg9[%c4_448, %c0_449, %c0_450] : memref<6x1x128xf32, #tpu.memory_space<vmem>>, vector<1x1x128xf32>
    %1121 = vector.shape_cast %1120 : vector<1x1x128xf32> to vector<1x128xf32>
    %1122 = vector.broadcast %1121 : vector<1x128xf32> to vector<2x128xf32>
    %1123 = arith.addf %1119, %1122 : vector<2x128xf32>
    %cst_451 = arith.constant 0.000000e+00 : f32
    %1124 = vector.broadcast %cst_451 : f32 to vector<2x128xf32>
    %1125 = arith.maximumf %1123, %1124 : vector<2x128xf32>
    %c4_452 = arith.constant 4 : index
    %c0_453 = arith.constant 0 : index
    %c0_454 = arith.constant 0 : index
    %1126 = vector.load %arg10[%c4_452, %c0_453, %c0_454] : memref<6x128x32xf32, #tpu.memory_space<vmem>>, vector<1x128x32xf32>
    %1127 = vector.shape_cast %1126 : vector<1x128x32xf32> to vector<128x32xf32>
    %cst_455 = arith.constant dense<0.000000e+00> : vector<2x32xf32>
    %1128 = tpu.matmul %1125, %1127, %cst_455 {dimension_numbers = #tpu.dot_dimension_numbers<[1], [0], [0], [1], [0, 0, 1, 1], [], []>} : vector<2x128xf32>, vector<128x32xf32>, vector<2x32xf32> -> vector<2x32xf32>
    %c4_456 = arith.constant 4 : index
    %c0_457 = arith.constant 0 : index
    %c0_458 = arith.constant 0 : index
    %1129 = vector.load %arg11[%c4_456, %c0_457, %c0_458] : memref<6x1x32xf32, #tpu.memory_space<vmem>>, vector<1x1x32xf32>
    %1130 = vector.shape_cast %1129 : vector<1x1x32xf32> to vector<1x32xf32>
    %1131 = vector.broadcast %1130 : vector<1x32xf32> to vector<2x32xf32>
    %1132 = arith.addf %1128, %1131 : vector<2x32xf32>
    %1133 = arith.addf %1116, %1132 : vector<2x32xf32>
    %c4_459 = arith.constant 4 : index
    %c0_460 = arith.constant 0 : index
    %c0_461 = arith.constant 0 : index
    %1134 = vector.load %arg14[%c4_459, %c0_460, %c0_461] : memref<6x1x32xf32, #tpu.memory_space<vmem>>, vector<1x1x32xf32>
    %1135 = vector.shape_cast %1134 : vector<1x1x32xf32> to vector<1x32xf32>
    %c4_462 = arith.constant 4 : index
    %c0_463 = arith.constant 0 : index
    %c0_464 = arith.constant 0 : index
    %1136 = vector.load %arg15[%c4_462, %c0_463, %c0_464] : memref<6x1x32xf32, #tpu.memory_space<vmem>>, vector<1x1x32xf32>
    %1137 = vector.shape_cast %1136 : vector<1x1x32xf32> to vector<1x32xf32>
    %cst_465 = arith.constant dense<0.000000e+00> : vector<2xf32>
    %1138 = vector.multi_reduction <add>, %1133, %cst_465 [1] : vector<2x32xf32> to vector<2xf32>
    %1139 = vector.shape_cast %1138 : vector<2xf32> to vector<2x1xf32>
    %cst_466 = arith.constant 3.200000e+01 : f32
    %1140 = vector.broadcast %cst_466 : f32 to vector<2x1xf32>
    %1141 = arith.divf %1139, %1140 : vector<2x1xf32>
    %1142 = vector.broadcast %1141 : vector<2x1xf32> to vector<2x32xf32>
    %1143 = arith.subf %1133, %1142 : vector<2x32xf32>
    %1144 = arith.mulf %1143, %1143 : vector<2x32xf32>
    %cst_467 = arith.constant dense<0.000000e+00> : vector<2xf32>
    %1145 = vector.multi_reduction <add>, %1144, %cst_467 [1] : vector<2x32xf32> to vector<2xf32>
    %1146 = vector.shape_cast %1145 : vector<2xf32> to vector<2x1xf32>
    %cst_468 = arith.constant 3.200000e+01 : f32
    %1147 = vector.broadcast %cst_468 : f32 to vector<2x1xf32>
    %1148 = arith.divf %1146, %1147 : vector<2x1xf32>
    %1149 = vector.broadcast %1141 : vector<2x1xf32> to vector<2x32xf32>
    %1150 = arith.subf %1133, %1149 : vector<2x32xf32>
    %cst_469 = arith.constant 9.99999974E-6 : f32
    %1151 = vector.broadcast %cst_469 : f32 to vector<2x1xf32>
    %1152 = arith.addf %1148, %1151 : vector<2x1xf32>
    %1153 = math.rsqrt %1152 : vector<2x1xf32>
    %1154 = vector.broadcast %1153 : vector<2x1xf32> to vector<2x32xf32>
    %1155 = arith.mulf %1150, %1154 : vector<2x32xf32>
    %1156 = vector.broadcast %1135 : vector<1x32xf32> to vector<2x32xf32>
    %1157 = arith.mulf %1155, %1156 : vector<2x32xf32>
    %1158 = vector.broadcast %1137 : vector<1x32xf32> to vector<2x32xf32>
    %1159 = arith.addf %1157, %1158 : vector<2x32xf32>
    %c5 = arith.constant 5 : index
    %c0_470 = arith.constant 0 : index
    %c0_471 = arith.constant 0 : index
    %1160 = vector.load %arg4[%c5, %c0_470, %c0_471] : memref<6x32x96xf32, #tpu.memory_space<vmem>>, vector<1x32x96xf32>
    %1161 = vector.shape_cast %1160 : vector<1x32x96xf32> to vector<32x96xf32>
    %cst_472 = arith.constant dense<0.000000e+00> : vector<2x96xf32>
    %1162 = tpu.matmul %1159, %1161, %cst_472 {dimension_numbers = #tpu.dot_dimension_numbers<[1], [0], [0], [1], [0, 0, 1, 1], [], []>} : vector<2x32xf32>, vector<32x96xf32>, vector<2x96xf32> -> vector<2x96xf32>
    %c5_473 = arith.constant 5 : index
    %c0_474 = arith.constant 0 : index
    %c0_475 = arith.constant 0 : index
    %1163 = vector.load %arg5[%c5_473, %c0_474, %c0_475] : memref<6x1x96xf32, #tpu.memory_space<vmem>>, vector<1x1x96xf32>
    %1164 = vector.shape_cast %1163 : vector<1x1x96xf32> to vector<1x96xf32>
    %1165 = vector.broadcast %1164 : vector<1x96xf32> to vector<2x96xf32>
    %1166 = arith.addf %1162, %1165 : vector<2x96xf32>
    %1167 = vector.extract_strided_slice %1166 {offsets = [0, 0], sizes = [2, 32], strides = [1, 1]} : vector<2x96xf32> to vector<2x32xf32>
    %1168 = vector.extract_strided_slice %1166 {offsets = [0, 32], sizes = [2, 32], strides = [1, 1]} : vector<2x96xf32> to vector<2x32xf32>
    %1169 = vector.extract_strided_slice %1166 {offsets = [0, 64], sizes = [2, 32], strides = [1, 1]} : vector<2x96xf32> to vector<2x32xf32>
    %1170 = vector.extract_strided_slice %1167 {offsets = [0, 0], sizes = [2, 4], strides = [1, 1]} : vector<2x32xf32> to vector<2x4xf32>
    %1171 = vector.extract_strided_slice %1168 {offsets = [0, 0], sizes = [2, 4], strides = [1, 1]} : vector<2x32xf32> to vector<2x4xf32>
    %1172 = vector.extract_strided_slice %1169 {offsets = [0, 0], sizes = [2, 4], strides = [1, 1]} : vector<2x32xf32> to vector<2x4xf32>
    %cst_476 = arith.constant dense<0.000000e+00> : vector<2x2xf32>
    %1173 = tpu.matmul %1170, %1171, %cst_476 {dimension_numbers = #tpu.dot_dimension_numbers<[1], [1], [0], [0], [0, 0, 1, 0], [], []>} : vector<2x4xf32>, vector<2x4xf32>, vector<2x2xf32> -> vector<2x2xf32>
    %cst_477 = arith.constant 5.000000e-01 : f32
    %1174 = vector.broadcast %cst_477 : f32 to vector<2x2xf32>
    %1175 = arith.mulf %1173, %1174 : vector<2x2xf32>
    %cst_478 = arith.constant dense<0xFF800000> : vector<2xf32>
    %1176 = vector.multi_reduction <maximumf>, %1175, %cst_478 [1] : vector<2x2xf32> to vector<2xf32>
    %1177 = vector.shape_cast %1176 : vector<2xf32> to vector<2x1xf32>
    %1178 = vector.broadcast %1177 : vector<2x1xf32> to vector<2x2xf32>
    %1179 = arith.subf %1175, %1178 : vector<2x2xf32>
    %1180 = math.exp %1179 : vector<2x2xf32>
    %cst_479 = arith.constant dense<0.000000e+00> : vector<2xf32>
    %1181 = vector.multi_reduction <add>, %1180, %cst_479 [1] : vector<2x2xf32> to vector<2xf32>
    %1182 = vector.shape_cast %1181 : vector<2xf32> to vector<2x1xf32>
    %1183 = tpu.reciprocal %1182 {approx = true} : vector<2x1xf32> -> vector<2x1xf32>
    %1184 = vector.broadcast %1183 : vector<2x1xf32> to vector<2x2xf32>
    %1185 = arith.mulf %1180, %1184 : vector<2x2xf32>
    %cst_480 = arith.constant dense<0.000000e+00> : vector<2x4xf32>
    %1186 = tpu.matmul %1185, %1172, %cst_480 {dimension_numbers = #tpu.dot_dimension_numbers<[1], [0], [0], [1], [0, 0, 1, 1], [], []>} : vector<2x2xf32>, vector<2x4xf32>, vector<2x4xf32> -> vector<2x4xf32>
    %1187 = vector.extract_strided_slice %1167 {offsets = [0, 4], sizes = [2, 4], strides = [1, 1]} : vector<2x32xf32> to vector<2x4xf32>
    %1188 = vector.extract_strided_slice %1168 {offsets = [0, 4], sizes = [2, 4], strides = [1, 1]} : vector<2x32xf32> to vector<2x4xf32>
    %1189 = vector.extract_strided_slice %1169 {offsets = [0, 4], sizes = [2, 4], strides = [1, 1]} : vector<2x32xf32> to vector<2x4xf32>
    %cst_481 = arith.constant dense<0.000000e+00> : vector<2x2xf32>
    %1190 = tpu.matmul %1187, %1188, %cst_481 {dimension_numbers = #tpu.dot_dimension_numbers<[1], [1], [0], [0], [0, 0, 1, 0], [], []>} : vector<2x4xf32>, vector<2x4xf32>, vector<2x2xf32> -> vector<2x2xf32>
    %cst_482 = arith.constant 5.000000e-01 : f32
    %1191 = vector.broadcast %cst_482 : f32 to vector<2x2xf32>
    %1192 = arith.mulf %1190, %1191 : vector<2x2xf32>
    %cst_483 = arith.constant dense<0xFF800000> : vector<2xf32>
    %1193 = vector.multi_reduction <maximumf>, %1192, %cst_483 [1] : vector<2x2xf32> to vector<2xf32>
    %1194 = vector.shape_cast %1193 : vector<2xf32> to vector<2x1xf32>
    %1195 = vector.broadcast %1194 : vector<2x1xf32> to vector<2x2xf32>
    %1196 = arith.subf %1192, %1195 : vector<2x2xf32>
    %1197 = math.exp %1196 : vector<2x2xf32>
    %cst_484 = arith.constant dense<0.000000e+00> : vector<2xf32>
    %1198 = vector.multi_reduction <add>, %1197, %cst_484 [1] : vector<2x2xf32> to vector<2xf32>
    %1199 = vector.shape_cast %1198 : vector<2xf32> to vector<2x1xf32>
    %1200 = tpu.reciprocal %1199 {approx = true} : vector<2x1xf32> -> vector<2x1xf32>
    %1201 = vector.broadcast %1200 : vector<2x1xf32> to vector<2x2xf32>
    %1202 = arith.mulf %1197, %1201 : vector<2x2xf32>
    %cst_485 = arith.constant dense<0.000000e+00> : vector<2x4xf32>
    %1203 = tpu.matmul %1202, %1189, %cst_485 {dimension_numbers = #tpu.dot_dimension_numbers<[1], [0], [0], [1], [0, 0, 1, 1], [], []>} : vector<2x2xf32>, vector<2x4xf32>, vector<2x4xf32> -> vector<2x4xf32>
    %1204 = vector.extract_strided_slice %1167 {offsets = [0, 8], sizes = [2, 4], strides = [1, 1]} : vector<2x32xf32> to vector<2x4xf32>
    %1205 = vector.extract_strided_slice %1168 {offsets = [0, 8], sizes = [2, 4], strides = [1, 1]} : vector<2x32xf32> to vector<2x4xf32>
    %1206 = vector.extract_strided_slice %1169 {offsets = [0, 8], sizes = [2, 4], strides = [1, 1]} : vector<2x32xf32> to vector<2x4xf32>
    %cst_486 = arith.constant dense<0.000000e+00> : vector<2x2xf32>
    %1207 = tpu.matmul %1204, %1205, %cst_486 {dimension_numbers = #tpu.dot_dimension_numbers<[1], [1], [0], [0], [0, 0, 1, 0], [], []>} : vector<2x4xf32>, vector<2x4xf32>, vector<2x2xf32> -> vector<2x2xf32>
    %cst_487 = arith.constant 5.000000e-01 : f32
    %1208 = vector.broadcast %cst_487 : f32 to vector<2x2xf32>
    %1209 = arith.mulf %1207, %1208 : vector<2x2xf32>
    %cst_488 = arith.constant dense<0xFF800000> : vector<2xf32>
    %1210 = vector.multi_reduction <maximumf>, %1209, %cst_488 [1] : vector<2x2xf32> to vector<2xf32>
    %1211 = vector.shape_cast %1210 : vector<2xf32> to vector<2x1xf32>
    %1212 = vector.broadcast %1211 : vector<2x1xf32> to vector<2x2xf32>
    %1213 = arith.subf %1209, %1212 : vector<2x2xf32>
    %1214 = math.exp %1213 : vector<2x2xf32>
    %cst_489 = arith.constant dense<0.000000e+00> : vector<2xf32>
    %1215 = vector.multi_reduction <add>, %1214, %cst_489 [1] : vector<2x2xf32> to vector<2xf32>
    %1216 = vector.shape_cast %1215 : vector<2xf32> to vector<2x1xf32>
    %1217 = tpu.reciprocal %1216 {approx = true} : vector<2x1xf32> -> vector<2x1xf32>
    %1218 = vector.broadcast %1217 : vector<2x1xf32> to vector<2x2xf32>
    %1219 = arith.mulf %1214, %1218 : vector<2x2xf32>
    %cst_490 = arith.constant dense<0.000000e+00> : vector<2x4xf32>
    %1220 = tpu.matmul %1219, %1206, %cst_490 {dimension_numbers = #tpu.dot_dimension_numbers<[1], [0], [0], [1], [0, 0, 1, 1], [], []>} : vector<2x2xf32>, vector<2x4xf32>, vector<2x4xf32> -> vector<2x4xf32>
    %1221 = vector.extract_strided_slice %1167 {offsets = [0, 12], sizes = [2, 4], strides = [1, 1]} : vector<2x32xf32> to vector<2x4xf32>
    %1222 = vector.extract_strided_slice %1168 {offsets = [0, 12], sizes = [2, 4], strides = [1, 1]} : vector<2x32xf32> to vector<2x4xf32>
    %1223 = vector.extract_strided_slice %1169 {offsets = [0, 12], sizes = [2, 4], strides = [1, 1]} : vector<2x32xf32> to vector<2x4xf32>
    %cst_491 = arith.constant dense<0.000000e+00> : vector<2x2xf32>
    %1224 = tpu.matmul %1221, %1222, %cst_491 {dimension_numbers = #tpu.dot_dimension_numbers<[1], [1], [0], [0], [0, 0, 1, 0], [], []>} : vector<2x4xf32>, vector<2x4xf32>, vector<2x2xf32> -> vector<2x2xf32>
    %cst_492 = arith.constant 5.000000e-01 : f32
    %1225 = vector.broadcast %cst_492 : f32 to vector<2x2xf32>
    %1226 = arith.mulf %1224, %1225 : vector<2x2xf32>
    %cst_493 = arith.constant dense<0xFF800000> : vector<2xf32>
    %1227 = vector.multi_reduction <maximumf>, %1226, %cst_493 [1] : vector<2x2xf32> to vector<2xf32>
    %1228 = vector.shape_cast %1227 : vector<2xf32> to vector<2x1xf32>
    %1229 = vector.broadcast %1228 : vector<2x1xf32> to vector<2x2xf32>
    %1230 = arith.subf %1226, %1229 : vector<2x2xf32>
    %1231 = math.exp %1230 : vector<2x2xf32>
    %cst_494 = arith.constant dense<0.000000e+00> : vector<2xf32>
    %1232 = vector.multi_reduction <add>, %1231, %cst_494 [1] : vector<2x2xf32> to vector<2xf32>
    %1233 = vector.shape_cast %1232 : vector<2xf32> to vector<2x1xf32>
    %1234 = tpu.reciprocal %1233 {approx = true} : vector<2x1xf32> -> vector<2x1xf32>
    %1235 = vector.broadcast %1234 : vector<2x1xf32> to vector<2x2xf32>
    %1236 = arith.mulf %1231, %1235 : vector<2x2xf32>
    %cst_495 = arith.constant dense<0.000000e+00> : vector<2x4xf32>
    %1237 = tpu.matmul %1236, %1223, %cst_495 {dimension_numbers = #tpu.dot_dimension_numbers<[1], [0], [0], [1], [0, 0, 1, 1], [], []>} : vector<2x2xf32>, vector<2x4xf32>, vector<2x4xf32> -> vector<2x4xf32>
    %1238 = vector.extract_strided_slice %1167 {offsets = [0, 16], sizes = [2, 4], strides = [1, 1]} : vector<2x32xf32> to vector<2x4xf32>
    %1239 = vector.extract_strided_slice %1168 {offsets = [0, 16], sizes = [2, 4], strides = [1, 1]} : vector<2x32xf32> to vector<2x4xf32>
    %1240 = vector.extract_strided_slice %1169 {offsets = [0, 16], sizes = [2, 4], strides = [1, 1]} : vector<2x32xf32> to vector<2x4xf32>
    %cst_496 = arith.constant dense<0.000000e+00> : vector<2x2xf32>
    %1241 = tpu.matmul %1238, %1239, %cst_496 {dimension_numbers = #tpu.dot_dimension_numbers<[1], [1], [0], [0], [0, 0, 1, 0], [], []>} : vector<2x4xf32>, vector<2x4xf32>, vector<2x2xf32> -> vector<2x2xf32>
    %cst_497 = arith.constant 5.000000e-01 : f32
    %1242 = vector.broadcast %cst_497 : f32 to vector<2x2xf32>
    %1243 = arith.mulf %1241, %1242 : vector<2x2xf32>
    %cst_498 = arith.constant dense<0xFF800000> : vector<2xf32>
    %1244 = vector.multi_reduction <maximumf>, %1243, %cst_498 [1] : vector<2x2xf32> to vector<2xf32>
    %1245 = vector.shape_cast %1244 : vector<2xf32> to vector<2x1xf32>
    %1246 = vector.broadcast %1245 : vector<2x1xf32> to vector<2x2xf32>
    %1247 = arith.subf %1243, %1246 : vector<2x2xf32>
    %1248 = math.exp %1247 : vector<2x2xf32>
    %cst_499 = arith.constant dense<0.000000e+00> : vector<2xf32>
    %1249 = vector.multi_reduction <add>, %1248, %cst_499 [1] : vector<2x2xf32> to vector<2xf32>
    %1250 = vector.shape_cast %1249 : vector<2xf32> to vector<2x1xf32>
    %1251 = tpu.reciprocal %1250 {approx = true} : vector<2x1xf32> -> vector<2x1xf32>
    %1252 = vector.broadcast %1251 : vector<2x1xf32> to vector<2x2xf32>
    %1253 = arith.mulf %1248, %1252 : vector<2x2xf32>
    %cst_500 = arith.constant dense<0.000000e+00> : vector<2x4xf32>
    %1254 = tpu.matmul %1253, %1240, %cst_500 {dimension_numbers = #tpu.dot_dimension_numbers<[1], [0], [0], [1], [0, 0, 1, 1], [], []>} : vector<2x2xf32>, vector<2x4xf32>, vector<2x4xf32> -> vector<2x4xf32>
    %1255 = vector.extract_strided_slice %1167 {offsets = [0, 20], sizes = [2, 4], strides = [1, 1]} : vector<2x32xf32> to vector<2x4xf32>
    %1256 = vector.extract_strided_slice %1168 {offsets = [0, 20], sizes = [2, 4], strides = [1, 1]} : vector<2x32xf32> to vector<2x4xf32>
    %1257 = vector.extract_strided_slice %1169 {offsets = [0, 20], sizes = [2, 4], strides = [1, 1]} : vector<2x32xf32> to vector<2x4xf32>
    %cst_501 = arith.constant dense<0.000000e+00> : vector<2x2xf32>
    %1258 = tpu.matmul %1255, %1256, %cst_501 {dimension_numbers = #tpu.dot_dimension_numbers<[1], [1], [0], [0], [0, 0, 1, 0], [], []>} : vector<2x4xf32>, vector<2x4xf32>, vector<2x2xf32> -> vector<2x2xf32>
    %cst_502 = arith.constant 5.000000e-01 : f32
    %1259 = vector.broadcast %cst_502 : f32 to vector<2x2xf32>
    %1260 = arith.mulf %1258, %1259 : vector<2x2xf32>
    %cst_503 = arith.constant dense<0xFF800000> : vector<2xf32>
    %1261 = vector.multi_reduction <maximumf>, %1260, %cst_503 [1] : vector<2x2xf32> to vector<2xf32>
    %1262 = vector.shape_cast %1261 : vector<2xf32> to vector<2x1xf32>
    %1263 = vector.broadcast %1262 : vector<2x1xf32> to vector<2x2xf32>
    %1264 = arith.subf %1260, %1263 : vector<2x2xf32>
    %1265 = math.exp %1264 : vector<2x2xf32>
    %cst_504 = arith.constant dense<0.000000e+00> : vector<2xf32>
    %1266 = vector.multi_reduction <add>, %1265, %cst_504 [1] : vector<2x2xf32> to vector<2xf32>
    %1267 = vector.shape_cast %1266 : vector<2xf32> to vector<2x1xf32>
    %1268 = tpu.reciprocal %1267 {approx = true} : vector<2x1xf32> -> vector<2x1xf32>
    %1269 = vector.broadcast %1268 : vector<2x1xf32> to vector<2x2xf32>
    %1270 = arith.mulf %1265, %1269 : vector<2x2xf32>
    %cst_505 = arith.constant dense<0.000000e+00> : vector<2x4xf32>
    %1271 = tpu.matmul %1270, %1257, %cst_505 {dimension_numbers = #tpu.dot_dimension_numbers<[1], [0], [0], [1], [0, 0, 1, 1], [], []>} : vector<2x2xf32>, vector<2x4xf32>, vector<2x4xf32> -> vector<2x4xf32>
    %1272 = vector.extract_strided_slice %1167 {offsets = [0, 24], sizes = [2, 4], strides = [1, 1]} : vector<2x32xf32> to vector<2x4xf32>
    %1273 = vector.extract_strided_slice %1168 {offsets = [0, 24], sizes = [2, 4], strides = [1, 1]} : vector<2x32xf32> to vector<2x4xf32>
    %1274 = vector.extract_strided_slice %1169 {offsets = [0, 24], sizes = [2, 4], strides = [1, 1]} : vector<2x32xf32> to vector<2x4xf32>
    %cst_506 = arith.constant dense<0.000000e+00> : vector<2x2xf32>
    %1275 = tpu.matmul %1272, %1273, %cst_506 {dimension_numbers = #tpu.dot_dimension_numbers<[1], [1], [0], [0], [0, 0, 1, 0], [], []>} : vector<2x4xf32>, vector<2x4xf32>, vector<2x2xf32> -> vector<2x2xf32>
    %cst_507 = arith.constant 5.000000e-01 : f32
    %1276 = vector.broadcast %cst_507 : f32 to vector<2x2xf32>
    %1277 = arith.mulf %1275, %1276 : vector<2x2xf32>
    %cst_508 = arith.constant dense<0xFF800000> : vector<2xf32>
    %1278 = vector.multi_reduction <maximumf>, %1277, %cst_508 [1] : vector<2x2xf32> to vector<2xf32>
    %1279 = vector.shape_cast %1278 : vector<2xf32> to vector<2x1xf32>
    %1280 = vector.broadcast %1279 : vector<2x1xf32> to vector<2x2xf32>
    %1281 = arith.subf %1277, %1280 : vector<2x2xf32>
    %1282 = math.exp %1281 : vector<2x2xf32>
    %cst_509 = arith.constant dense<0.000000e+00> : vector<2xf32>
    %1283 = vector.multi_reduction <add>, %1282, %cst_509 [1] : vector<2x2xf32> to vector<2xf32>
    %1284 = vector.shape_cast %1283 : vector<2xf32> to vector<2x1xf32>
    %1285 = tpu.reciprocal %1284 {approx = true} : vector<2x1xf32> -> vector<2x1xf32>
    %1286 = vector.broadcast %1285 : vector<2x1xf32> to vector<2x2xf32>
    %1287 = arith.mulf %1282, %1286 : vector<2x2xf32>
    %cst_510 = arith.constant dense<0.000000e+00> : vector<2x4xf32>
    %1288 = tpu.matmul %1287, %1274, %cst_510 {dimension_numbers = #tpu.dot_dimension_numbers<[1], [0], [0], [1], [0, 0, 1, 1], [], []>} : vector<2x2xf32>, vector<2x4xf32>, vector<2x4xf32> -> vector<2x4xf32>
    %1289 = vector.extract_strided_slice %1167 {offsets = [0, 28], sizes = [2, 4], strides = [1, 1]} : vector<2x32xf32> to vector<2x4xf32>
    %1290 = vector.extract_strided_slice %1168 {offsets = [0, 28], sizes = [2, 4], strides = [1, 1]} : vector<2x32xf32> to vector<2x4xf32>
    %1291 = vector.extract_strided_slice %1169 {offsets = [0, 28], sizes = [2, 4], strides = [1, 1]} : vector<2x32xf32> to vector<2x4xf32>
    %cst_511 = arith.constant dense<0.000000e+00> : vector<2x2xf32>
    %1292 = tpu.matmul %1289, %1290, %cst_511 {dimension_numbers = #tpu.dot_dimension_numbers<[1], [1], [0], [0], [0, 0, 1, 0], [], []>} : vector<2x4xf32>, vector<2x4xf32>, vector<2x2xf32> -> vector<2x2xf32>
    %cst_512 = arith.constant 5.000000e-01 : f32
    %1293 = vector.broadcast %cst_512 : f32 to vector<2x2xf32>
    %1294 = arith.mulf %1292, %1293 : vector<2x2xf32>
    %cst_513 = arith.constant dense<0xFF800000> : vector<2xf32>
    %1295 = vector.multi_reduction <maximumf>, %1294, %cst_513 [1] : vector<2x2xf32> to vector<2xf32>
    %1296 = vector.shape_cast %1295 : vector<2xf32> to vector<2x1xf32>
    %1297 = vector.broadcast %1296 : vector<2x1xf32> to vector<2x2xf32>
    %1298 = arith.subf %1294, %1297 : vector<2x2xf32>
    %1299 = math.exp %1298 : vector<2x2xf32>
    %cst_514 = arith.constant dense<0.000000e+00> : vector<2xf32>
    %1300 = vector.multi_reduction <add>, %1299, %cst_514 [1] : vector<2x2xf32> to vector<2xf32>
    %1301 = vector.shape_cast %1300 : vector<2xf32> to vector<2x1xf32>
    %1302 = tpu.reciprocal %1301 {approx = true} : vector<2x1xf32> -> vector<2x1xf32>
    %1303 = vector.broadcast %1302 : vector<2x1xf32> to vector<2x2xf32>
    %1304 = arith.mulf %1299, %1303 : vector<2x2xf32>
    %cst_515 = arith.constant dense<0.000000e+00> : vector<2x4xf32>
    %1305 = tpu.matmul %1304, %1291, %cst_515 {dimension_numbers = #tpu.dot_dimension_numbers<[1], [0], [0], [1], [0, 0, 1, 1], [], []>} : vector<2x2xf32>, vector<2x4xf32>, vector<2x4xf32> -> vector<2x4xf32>
    %1306 = tpu.concatenate %1186, %1203, %1220, %1237, %1254, %1271, %1288, %1305 in 1 : vector<2x4xf32>, vector<2x4xf32>, vector<2x4xf32>, vector<2x4xf32>, vector<2x4xf32>, vector<2x4xf32>, vector<2x4xf32>, vector<2x4xf32> -> vector<2x32xf32>
    %c5_516 = arith.constant 5 : index
    %c0_517 = arith.constant 0 : index
    %c0_518 = arith.constant 0 : index
    %1307 = vector.load %arg6[%c5_516, %c0_517, %c0_518] : memref<6x32x32xf32, #tpu.memory_space<vmem>>, vector<1x32x32xf32>
    %1308 = vector.shape_cast %1307 : vector<1x32x32xf32> to vector<32x32xf32>
    %cst_519 = arith.constant dense<0.000000e+00> : vector<2x32xf32>
    %1309 = tpu.matmul %1306, %1308, %cst_519 {dimension_numbers = #tpu.dot_dimension_numbers<[1], [0], [0], [1], [0, 0, 1, 1], [], []>} : vector<2x32xf32>, vector<32x32xf32>, vector<2x32xf32> -> vector<2x32xf32>
    %c5_520 = arith.constant 5 : index
    %c0_521 = arith.constant 0 : index
    %c0_522 = arith.constant 0 : index
    %1310 = vector.load %arg7[%c5_520, %c0_521, %c0_522] : memref<6x1x32xf32, #tpu.memory_space<vmem>>, vector<1x1x32xf32>
    %1311 = vector.shape_cast %1310 : vector<1x1x32xf32> to vector<1x32xf32>
    %1312 = vector.broadcast %1311 : vector<1x32xf32> to vector<2x32xf32>
    %1313 = arith.addf %1309, %1312 : vector<2x32xf32>
    %1314 = arith.addf %1159, %1313 : vector<2x32xf32>
    %c5_523 = arith.constant 5 : index
    %c0_524 = arith.constant 0 : index
    %c0_525 = arith.constant 0 : index
    %1315 = vector.load %arg12[%c5_523, %c0_524, %c0_525] : memref<6x1x32xf32, #tpu.memory_space<vmem>>, vector<1x1x32xf32>
    %1316 = vector.shape_cast %1315 : vector<1x1x32xf32> to vector<1x32xf32>
    %c5_526 = arith.constant 5 : index
    %c0_527 = arith.constant 0 : index
    %c0_528 = arith.constant 0 : index
    %1317 = vector.load %arg13[%c5_526, %c0_527, %c0_528] : memref<6x1x32xf32, #tpu.memory_space<vmem>>, vector<1x1x32xf32>
    %1318 = vector.shape_cast %1317 : vector<1x1x32xf32> to vector<1x32xf32>
    %cst_529 = arith.constant dense<0.000000e+00> : vector<2xf32>
    %1319 = vector.multi_reduction <add>, %1314, %cst_529 [1] : vector<2x32xf32> to vector<2xf32>
    %1320 = vector.shape_cast %1319 : vector<2xf32> to vector<2x1xf32>
    %cst_530 = arith.constant 3.200000e+01 : f32
    %1321 = vector.broadcast %cst_530 : f32 to vector<2x1xf32>
    %1322 = arith.divf %1320, %1321 : vector<2x1xf32>
    %1323 = vector.broadcast %1322 : vector<2x1xf32> to vector<2x32xf32>
    %1324 = arith.subf %1314, %1323 : vector<2x32xf32>
    %1325 = arith.mulf %1324, %1324 : vector<2x32xf32>
    %cst_531 = arith.constant dense<0.000000e+00> : vector<2xf32>
    %1326 = vector.multi_reduction <add>, %1325, %cst_531 [1] : vector<2x32xf32> to vector<2xf32>
    %1327 = vector.shape_cast %1326 : vector<2xf32> to vector<2x1xf32>
    %cst_532 = arith.constant 3.200000e+01 : f32
    %1328 = vector.broadcast %cst_532 : f32 to vector<2x1xf32>
    %1329 = arith.divf %1327, %1328 : vector<2x1xf32>
    %1330 = vector.broadcast %1322 : vector<2x1xf32> to vector<2x32xf32>
    %1331 = arith.subf %1314, %1330 : vector<2x32xf32>
    %cst_533 = arith.constant 9.99999974E-6 : f32
    %1332 = vector.broadcast %cst_533 : f32 to vector<2x1xf32>
    %1333 = arith.addf %1329, %1332 : vector<2x1xf32>
    %1334 = math.rsqrt %1333 : vector<2x1xf32>
    %1335 = vector.broadcast %1334 : vector<2x1xf32> to vector<2x32xf32>
    %1336 = arith.mulf %1331, %1335 : vector<2x32xf32>
    %1337 = vector.broadcast %1316 : vector<1x32xf32> to vector<2x32xf32>
    %1338 = arith.mulf %1336, %1337 : vector<2x32xf32>
    %1339 = vector.broadcast %1318 : vector<1x32xf32> to vector<2x32xf32>
    %1340 = arith.addf %1338, %1339 : vector<2x32xf32>
    %c5_534 = arith.constant 5 : index
    %c0_535 = arith.constant 0 : index
    %c0_536 = arith.constant 0 : index
    %1341 = vector.load %arg8[%c5_534, %c0_535, %c0_536] : memref<6x32x128xf32, #tpu.memory_space<vmem>>, vector<1x32x128xf32>
    %1342 = vector.shape_cast %1341 : vector<1x32x128xf32> to vector<32x128xf32>
    %cst_537 = arith.constant dense<0.000000e+00> : vector<2x128xf32>
    %1343 = tpu.matmul %1340, %1342, %cst_537 {dimension_numbers = #tpu.dot_dimension_numbers<[1], [0], [0], [1], [0, 0, 1, 1], [], []>} : vector<2x32xf32>, vector<32x128xf32>, vector<2x128xf32> -> vector<2x128xf32>
    %c5_538 = arith.constant 5 : index
    %c0_539 = arith.constant 0 : index
    %c0_540 = arith.constant 0 : index
    %1344 = vector.load %arg9[%c5_538, %c0_539, %c0_540] : memref<6x1x128xf32, #tpu.memory_space<vmem>>, vector<1x1x128xf32>
    %1345 = vector.shape_cast %1344 : vector<1x1x128xf32> to vector<1x128xf32>
    %1346 = vector.broadcast %1345 : vector<1x128xf32> to vector<2x128xf32>
    %1347 = arith.addf %1343, %1346 : vector<2x128xf32>
    %cst_541 = arith.constant 0.000000e+00 : f32
    %1348 = vector.broadcast %cst_541 : f32 to vector<2x128xf32>
    %1349 = arith.maximumf %1347, %1348 : vector<2x128xf32>
    %c5_542 = arith.constant 5 : index
    %c0_543 = arith.constant 0 : index
    %c0_544 = arith.constant 0 : index
    %1350 = vector.load %arg10[%c5_542, %c0_543, %c0_544] : memref<6x128x32xf32, #tpu.memory_space<vmem>>, vector<1x128x32xf32>
    %1351 = vector.shape_cast %1350 : vector<1x128x32xf32> to vector<128x32xf32>
    %cst_545 = arith.constant dense<0.000000e+00> : vector<2x32xf32>
    %1352 = tpu.matmul %1349, %1351, %cst_545 {dimension_numbers = #tpu.dot_dimension_numbers<[1], [0], [0], [1], [0, 0, 1, 1], [], []>} : vector<2x128xf32>, vector<128x32xf32>, vector<2x32xf32> -> vector<2x32xf32>
    %c5_546 = arith.constant 5 : index
    %c0_547 = arith.constant 0 : index
    %c0_548 = arith.constant 0 : index
    %1353 = vector.load %arg11[%c5_546, %c0_547, %c0_548] : memref<6x1x32xf32, #tpu.memory_space<vmem>>, vector<1x1x32xf32>
    %1354 = vector.shape_cast %1353 : vector<1x1x32xf32> to vector<1x32xf32>
    %1355 = vector.broadcast %1354 : vector<1x32xf32> to vector<2x32xf32>
    %1356 = arith.addf %1352, %1355 : vector<2x32xf32>
    %1357 = arith.addf %1340, %1356 : vector<2x32xf32>
    %c5_549 = arith.constant 5 : index
    %c0_550 = arith.constant 0 : index
    %c0_551 = arith.constant 0 : index
    %1358 = vector.load %arg14[%c5_549, %c0_550, %c0_551] : memref<6x1x32xf32, #tpu.memory_space<vmem>>, vector<1x1x32xf32>
    %1359 = vector.shape_cast %1358 : vector<1x1x32xf32> to vector<1x32xf32>
    %c5_552 = arith.constant 5 : index
    %c0_553 = arith.constant 0 : index
    %c0_554 = arith.constant 0 : index
    %1360 = vector.load %arg15[%c5_552, %c0_553, %c0_554] : memref<6x1x32xf32, #tpu.memory_space<vmem>>, vector<1x1x32xf32>
    %1361 = vector.shape_cast %1360 : vector<1x1x32xf32> to vector<1x32xf32>
    %cst_555 = arith.constant dense<0.000000e+00> : vector<2xf32>
    %1362 = vector.multi_reduction <add>, %1357, %cst_555 [1] : vector<2x32xf32> to vector<2xf32>
    %1363 = vector.shape_cast %1362 : vector<2xf32> to vector<2x1xf32>
    %cst_556 = arith.constant 3.200000e+01 : f32
    %1364 = vector.broadcast %cst_556 : f32 to vector<2x1xf32>
    %1365 = arith.divf %1363, %1364 : vector<2x1xf32>
    %1366 = vector.broadcast %1365 : vector<2x1xf32> to vector<2x32xf32>
    %1367 = arith.subf %1357, %1366 : vector<2x32xf32>
    %1368 = arith.mulf %1367, %1367 : vector<2x32xf32>
    %cst_557 = arith.constant dense<0.000000e+00> : vector<2xf32>
    %1369 = vector.multi_reduction <add>, %1368, %cst_557 [1] : vector<2x32xf32> to vector<2xf32>
    %1370 = vector.shape_cast %1369 : vector<2xf32> to vector<2x1xf32>
    %cst_558 = arith.constant 3.200000e+01 : f32
    %1371 = vector.broadcast %cst_558 : f32 to vector<2x1xf32>
    %1372 = arith.divf %1370, %1371 : vector<2x1xf32>
    %1373 = vector.broadcast %1365 : vector<2x1xf32> to vector<2x32xf32>
    %1374 = arith.subf %1357, %1373 : vector<2x32xf32>
    %cst_559 = arith.constant 9.99999974E-6 : f32
    %1375 = vector.broadcast %cst_559 : f32 to vector<2x1xf32>
    %1376 = arith.addf %1372, %1375 : vector<2x1xf32>
    %1377 = math.rsqrt %1376 : vector<2x1xf32>
    %1378 = vector.broadcast %1377 : vector<2x1xf32> to vector<2x32xf32>
    %1379 = arith.mulf %1374, %1378 : vector<2x32xf32>
    %1380 = vector.broadcast %1359 : vector<1x32xf32> to vector<2x32xf32>
    %1381 = arith.mulf %1379, %1380 : vector<2x32xf32>
    %1382 = vector.broadcast %1361 : vector<1x32xf32> to vector<2x32xf32>
    %1383 = arith.addf %1381, %1382 : vector<2x32xf32>
    %c0_560 = arith.constant 0 : index
    %c0_561 = arith.constant 0 : index
    %c0_562 = arith.constant 0 : index
    %1384 = vector.load %arg16[%c0_560, %c0_561, %c0_562] : memref<1x2x32xf32, #tpu.memory_space<vmem>>, vector<1x2x32xf32>
    %1385 = vector.shape_cast %1384 : vector<1x2x32xf32> to vector<2x32xf32>
    %1386 = vector.shape_cast %1383 : vector<2x32xf32> to vector<1x2x32xf32>
    tpu.vector_store %arg16[%c0_560, %c0_561, %c0_562], %1386 {strides = array<i32>} : memref<1x2x32xf32, #tpu.memory_space<vmem>>, vector<1x2x32xf32>,
    return
  }
  func.func @transform_0(%arg0: i32) -> (i32, i32, i32, i32) {
    %c0_i32 = arith.constant 0 : i32
    %c0_i32_0 = arith.constant 0 : i32
    %c0_i32_1 = arith.constant 0 : i32
    %c0_i32_2 = arith.constant 0 : i32
    return %arg0, %c0_i32, %c0_i32_0, %c0_i32_1 : i32, i32, i32, i32
  }
  func.func @transform_1(%arg0: i32) -> (i32, i32) {
    %c0_i32 = arith.constant 0 : i32
    %c0_i32_0 = arith.constant 0 : i32
    %c0_i32_1 = arith.constant 0 : i32
    return %c0_i32, %c0_i32_0 : i32, i32
  }
  func.func @transform_2(%arg0: i32) -> (i32, i32) {
    %c0_i32 = arith.constant 0 : i32
    %c0_i32_0 = arith.constant 0 : i32
    %c0_i32_1 = arith.constant 0 : i32
    return %c0_i32, %c0_i32_0 : i32, i32
  }
  func.func @transform_3(%arg0: i32) -> (i32, i32, i32) {
    %c0_i32 = arith.constant 0 : i32
    %c0_i32_0 = arith.constant 0 : i32
    %c0_i32_1 = arith.constant 0 : i32
    %c0_i32_2 = arith.constant 0 : i32
    return %c0_i32, %c0_i32_0, %c0_i32_1 : i32, i32, i32
  }
  func.func @transform_4(%arg0: i32) -> (i32, i32, i32) {
    %c0_i32 = arith.constant 0 : i32
    %c0_i32_0 = arith.constant 0 : i32
    %c0_i32_1 = arith.constant 0 : i32
    %c0_i32_2 = arith.constant 0 : i32
    return %c0_i32, %c0_i32_0, %c0_i32_1 : i32, i32, i32
  }
  func.func @transform_5(%arg0: i32) -> (i32, i32, i32) {
    %c0_i32 = arith.constant 0 : i32
    %c0_i32_0 = arith.constant 0 : i32
    %c0_i32_1 = arith.constant 0 : i32
    %c0_i32_2 = arith.constant 0 : i32
    return %c0_i32, %c0_i32_0, %c0_i32_1 : i32, i32, i32
  }
  func.func @transform_6(%arg0: i32) -> (i32, i32, i32) {
    %c0_i32 = arith.constant 0 : i32
    %c0_i32_0 = arith.constant 0 : i32
    %c0_i32_1 = arith.constant 0 : i32
    %c0_i32_2 = arith.constant 0 : i32
    return %c0_i32, %c0_i32_0, %c0_i32_1 : i32, i32, i32
  }
  func.func @transform_7(%arg0: i32) -> (i32, i32, i32) {
    %c0_i32 = arith.constant 0 : i32
    %c0_i32_0 = arith.constant 0 : i32
    %c0_i32_1 = arith.constant 0 : i32
    %c0_i32_2 = arith.constant 0 : i32
    return %c0_i32, %c0_i32_0, %c0_i32_1 : i32, i32, i32
  }
  func.func @transform_8(%arg0: i32) -> (i32, i32, i32) {
    %c0_i32 = arith.constant 0 : i32
    %c0_i32_0 = arith.constant 0 : i32
    %c0_i32_1 = arith.constant 0 : i32
    %c0_i32_2 = arith.constant 0 : i32
    return %c0_i32, %c0_i32_0, %c0_i32_1 : i32, i32, i32
  }
  func.func @transform_9(%arg0: i32) -> (i32, i32, i32) {
    %c0_i32 = arith.constant 0 : i32
    %c0_i32_0 = arith.constant 0 : i32
    %c0_i32_1 = arith.constant 0 : i32
    %c0_i32_2 = arith.constant 0 : i32
    return %c0_i32, %c0_i32_0, %c0_i32_1 : i32, i32, i32
  }
  func.func @transform_10(%arg0: i32) -> (i32, i32, i32) {
    %c0_i32 = arith.constant 0 : i32
    %c0_i32_0 = arith.constant 0 : i32
    %c0_i32_1 = arith.constant 0 : i32
    %c0_i32_2 = arith.constant 0 : i32
    return %c0_i32, %c0_i32_0, %c0_i32_1 : i32, i32, i32
  }
  func.func @transform_11(%arg0: i32) -> (i32, i32, i32) {
    %c0_i32 = arith.constant 0 : i32
    %c0_i32_0 = arith.constant 0 : i32
    %c0_i32_1 = arith.constant 0 : i32
    %c0_i32_2 = arith.constant 0 : i32
    return %c0_i32, %c0_i32_0, %c0_i32_1 : i32, i32, i32
  }
  func.func @transform_12(%arg0: i32) -> (i32, i32, i32) {
    %c0_i32 = arith.constant 0 : i32
    %c0_i32_0 = arith.constant 0 : i32
    %c0_i32_1 = arith.constant 0 : i32
    %c0_i32_2 = arith.constant 0 : i32
    return %c0_i32, %c0_i32_0, %c0_i32_1 : i32, i32, i32
  }
  func.func @transform_13(%arg0: i32) -> (i32, i32, i32) {
    %c0_i32 = arith.constant 0 : i32
    %c0_i32_0 = arith.constant 0 : i32
    %c0_i32_1 = arith.constant 0 : i32
    %c0_i32_2 = arith.constant 0 : i32
    return %c0_i32, %c0_i32_0, %c0_i32_1 : i32, i32, i32
  }
  func.func @transform_14(%arg0: i32) -> (i32, i32, i32) {
    %c0_i32 = arith.constant 0 : i32
    %c0_i32_0 = arith.constant 0 : i32
    %c0_i32_1 = arith.constant 0 : i32
    %c0_i32_2 = arith.constant 0 : i32
    return %c0_i32, %c0_i32_0, %c0_i32_1 : i32, i32, i32
  }
  func.func @transform_15(%arg0: i32) -> (i32, i32, i32) {
    %c0_i32 = arith.constant 0 : i32
    %c0_i32_0 = arith.constant 0 : i32
    %c0_i32_1 = arith.constant 0 : i32
    return %arg0, %c0_i32, %c0_i32_0 : i32, i32, i32
  }
}

</mosaic_0001>

<llo_original>
// kernel: forward.1
$region0: #{forward.1}
  #allocation0 [shape = 'u32[]', space=smem, size = 0x4, offset = 0x4, fixed_abs, tag = 'smem constant byte address 0x4 - core index']
  #allocation1 [shape = 'u32[72,128]{1,0:T(1,128)}', space=vmem, size = 0x9000, scoped, tag = 'internal scratch']
  %s0 = inlined_call_operand.vmem [shape: f32[2,2,50,32], index: 0, kind: input, shape index: {}]
  %s1 = inlined_call_operand.vmem [shape: f32[96,32], index: 1, kind: input, shape index: {}]
  %s2 = inlined_call_operand.vmem [shape: f32[1,32], index: 2, kind: input, shape index: {}]
  %s3 = inlined_call_operand.vmem [shape: f32[6,32,96], index: 3, kind: input, shape index: {}]
  %s4 = inlined_call_operand.vmem [shape: f32[6,1,96], index: 4, kind: input, shape index: {}]
  %s5 = inlined_call_operand.vmem [shape: f32[6,32,32], index: 5, kind: input, shape index: {}]
  %s6 = inlined_call_operand.vmem [shape: f32[6,1,32], index: 6, kind: input, shape index: {}]
  %s7 = inlined_call_operand.vmem [shape: f32[6,32,128], index: 7, kind: input, shape index: {}]
  %s8 = inlined_call_operand.vmem [shape: f32[6,1,128], index: 8, kind: input, shape index: {}]
  %s9 = inlined_call_operand.vmem [shape: f32[6,128,32], index: 9, kind: input, shape index: {}]
  %s10 = inlined_call_operand.vmem [shape: f32[6,1,32], index: 10, kind: input, shape index: {}]
  %s11 = inlined_call_operand.vmem [shape: f32[6,1,32], index: 11, kind: input, shape index: {}]
  %s12 = inlined_call_operand.vmem [shape: f32[6,1,32], index: 12, kind: input, shape index: {}]
  %s13 = inlined_call_operand.vmem [shape: f32[6,1,32], index: 13, kind: input, shape index: {}]
  %s14 = inlined_call_operand.vmem [shape: f32[6,1,32], index: 14, kind: input, shape index: {}]
  %s15 = inlined_call_operand.hbm [shape: f32[2,2,32], index: 15, kind: output, shape index: {}]
  %s16 = sld [smem:[#allocation0]]
  $region93: #{forward.1} parent=0
    _
  %s18 = ssub.s32 1, %s16
  %s19 = scalar_select 0, %s18, %s16
  $region1: #{forward.1} parent=0
    #allocation2 [shape = 'u8[2048]{0}', space=vmem, size = 0x800, scoped, tag = 'output window, operand 0']
    #allocation3 [shape = 's32[2]{0}', space=sflag, size = 0x8, scoped, tag = 'scoped memory for forward.1']
    %20 = vsyncpa [#allocation3], 0
    %s21 = scalar_lea.sflag [#allocation3], 1
    %22 = vsyncpa %s21, 0
    loop: start=0, step=1, limit=4
    $region2: #{forward.1} parent=1 // loop_pre_header
      _
    $region3: #{forward.1} parent=1 // loop_header
      %s24 = sphi 0, %s28
      %p25 = scmp.ge.s32.totalorder %s24, 4
      %s34 = sphi 0, %s36
      %s37 = sphi 0, %s34
      %s38 = sphi 0, %s37
      %s54 = sphi 0, %s38
      %s58 = sphi 0, %s58
      %s60 = sphi 0, %s58
      %s61 = sphi 0, %s60
      %s75 = sphi 0, %s61
      %s79 = sphi 0, %s79
      %s81 = sphi 0, %s79
      %s82 = sphi 0, %s81
      %s96 = sphi 0, %s82
      %s100 = sphi 0, %s100
      %s102 = sphi 0, %s100
      %s103 = sphi 0, %s102
      %s117 = sphi 0, %s103
      %s121 = sphi 0, %s121
      %s123 = sphi 0, %s121
      %s124 = sphi 0, %s123
      %s138 = sphi 0, %s124
      %s142 = sphi 0, %s142
      %s144 = sphi 0, %s142
      %s145 = sphi 0, %s144
      %s159 = sphi 0, %s145
      %s163 = sphi 0, %s163
      %s165 = sphi 0, %s163
      %s166 = sphi 0, %s165
      %s180 = sphi 0, %s166
      %s184 = sphi 0, %s184
      %s186 = sphi 0, %s184
      %s187 = sphi 0, %s186
      %s201 = sphi 0, %s187
      %s205 = sphi 0, %s205
      %s207 = sphi 0, %s205
      %s208 = sphi 0, %s207
      %s222 = sphi 0, %s208
      %s226 = sphi 0, %s226
      %s228 = sphi 0, %s226
      %s229 = sphi 0, %s228
      %s243 = sphi 0, %s229
      %s247 = sphi 0, %s247
      %s249 = sphi 0, %s247
      %s250 = sphi 0, %s249
      %s264 = sphi 0, %s250
      %s268 = sphi 0, %s268
      %s270 = sphi 0, %s268
      %s271 = sphi 0, %s270
      %s285 = sphi 0, %s271
      %s289 = sphi 0, %s289
      %s291 = sphi 0, %s289
      %s292 = sphi 0, %s291
      %s306 = sphi 0, %s292
      %s310 = sphi 0, %s310
      %s312 = sphi 0, %s310
      %s313 = sphi 0, %s312
      %s327 = sphi 0, %s313
      %s331 = sphi 0, %s331
      %s333 = sphi 0, %s331
      %s334 = sphi 0, %s333
      %s348 = sphi 0, %s334
      %s354 = sphi 0, %s356
      %s357 = sphi 0, %s354
      %s358 = sphi 0, %s357
      %s374 = sphi 0, %s358
    $region4: #{forward.1} parent=1 // loop_header_branch
      %27 = sbr.rel (%p25) target = $region8
    $region5: #{forward.1} parent=1 // loop_body
      %s29 = ssub.s32 %s24, 1
      %s30 = ssub.s32 %s24, 2
      %s31 = sadd.s32 %s24, 1
      %s32 = ssub.s32 %s24, %s31
      %p33 = scmp.eq.s32.totalorder %s32, 0
      %s35 = sadd.s32 %s34, 1
      %s36 = scalar_select %p33, %s34, %s35
      %p39 = pneg %p33
      %p40 = scmp.eq.s32.totalorder %s24, 1
      %p41 = por %p39, %p40
      %p42 = scmp.ne.s32.totalorder %s34, %s37
      %p43 = scmp.eq.s32.totalorder %s24, 0
      %p44 = por %p42, %p43
      %p45 = scmp.ne.s32.totalorder %s34, %s37
      %p46 = scmp.eq.s32.totalorder %s29, 1
      %p47 = por %p45, %p46
      %p48 = scmp.ne.s32.totalorder %s37, %s38
      %p49 = scmp.eq.s32.totalorder %s29, 0
      %p50 = por %p48, %p49
      %p51 = scmp.ne.s32.totalorder %s37, %s38
      %p52 = scmp.eq.s32.totalorder %s30, 1
      %p53 = por %p51, %p52
      %p55 = scmp.ne.s32.totalorder %s38, %s54
      %p56 = scmp.eq.s32.totalorder %s30, 0
      %p57 = por %p55, %p56
      %s59 = sadd.s32 %s58, 1
      %p62 = scmp.eq.s32.totalorder %s24, 1
      %p63 = scmp.ne.s32.totalorder %s58, %s60
      %p64 = scmp.eq.s32.totalorder %s24, 0
      %p65 = por %p63, %p64
      %p66 = scmp.ne.s32.totalorder %s58, %s60
      %p67 = scmp.eq.s32.totalorder %s29, 1
      %p68 = por %p66, %p67
      %p69 = scmp.ne.s32.totalorder %s60, %s61
      %p70 = scmp.eq.s32.totalorder %s29, 0
      %p71 = por %p69, %p70
      %p72 = scmp.ne.s32.totalorder %s60, %s61
      %p73 = scmp.eq.s32.totalorder %s30, 1
      %p74 = por %p72, %p73
      %p76 = scmp.ne.s32.totalorder %s61, %s75
      %p77 = scmp.eq.s32.totalorder %s30, 0
      %p78 = por %p76, %p77
      %s80 = sadd.s32 %s79, 1
      %p83 = scmp.eq.s32.totalorder %s24, 1
      %p84 = scmp.ne.s32.totalorder %s79, %s81
      %p85 = scmp.eq.s32.totalorder %s24, 0
      %p86 = por %p84, %p85
      %p87 = scmp.ne.s32.totalorder %s79, %s81
      %p88 = scmp.eq.s32.totalorder %s29, 1
      %p89 = por %p87, %p88
      %p90 = scmp.ne.s32.totalorder %s81, %s82
      %p91 = scmp.eq.s32.totalorder %s29, 0
      %p92 = por %p90, %p91
      %p93 = scmp.ne.s32.totalorder %s81, %s82
      %p94 = scmp.eq.s32.totalorder %s30, 1
      %p95 = por %p93, %p94
      %p97 = scmp.ne.s32.totalorder %s82, %s96
      %p98 = scmp.eq.s32.totalorder %s30, 0
      %p99 = por %p97, %p98
      %s101 = sadd.s32 %s100, 1
      %p104 = scmp.eq.s32.totalorder %s24, 1
      %p105 = scmp.ne.s32.totalorder %s100, %s102
      %p106 = scmp.eq.s32.totalorder %s24, 0
      %p107 = por %p105, %p106
      %p108 = scmp.ne.s32.totalorder %s100, %s102
      %p109 = scmp.eq.s32.totalorder %s29, 1
      %p110 = por %p108, %p109
      %p111 = scmp.ne.s32.totalorder %s102, %s103
      %p112 = scmp.eq.s32.totalorder %s29, 0
      %p113 = por %p111, %p112
      %p114 = scmp.ne.s32.totalorder %s102, %s103
      %p115 = scmp.eq.s32.totalorder %s30, 1
      %p116 = por %p114, %p115
      %p118 = scmp.ne.s32.totalorder %s103, %s117
      %p119 = scmp.eq.s32.totalorder %s30, 0
      %p120 = por %p118, %p119
      %s122 = sadd.s32 %s121, 1
      %p125 = scmp.eq.s32.totalorder %s24, 1
      %p126 = scmp.ne.s32.totalorder %s121, %s123
      %p127 = scmp.eq.s32.totalorder %s24, 0
      %p128 = por %p126, %p127
      %p129 = scmp.ne.s32.totalorder %s121, %s123
      %p130 = scmp.eq.s32.totalorder %s29, 1
      %p131 = por %p129, %p130
      %p132 = scmp.ne.s32.totalorder %s123, %s124
      %p133 = scmp.eq.s32.totalorder %s29, 0
      %p134 = por %p132, %p133
      %p135 = scmp.ne.s32.totalorder %s123, %s124
      %p136 = scmp.eq.s32.totalorder %s30, 1
      %p137 = por %p135, %p136
      %p139 = scmp.ne.s32.totalorder %s124, %s138
      %p140 = scmp.eq.s32.totalorder %s30, 0
      %p141 = por %p139, %p140
      %s143 = sadd.s32 %s142, 1
      %p146 = scmp.eq.s32.totalorder %s24, 1
      %p147 = scmp.ne.s32.totalorder %s142, %s144
      %p148 = scmp.eq.s32.totalorder %s24, 0
      %p149 = por %p147, %p148
      %p150 = scmp.ne.s32.totalorder %s142, %s144
      %p151 = scmp.eq.s32.totalorder %s29, 1
      %p152 = por %p150, %p151
      %p153 = scmp.ne.s32.totalorder %s144, %s145
      %p154 = scmp.eq.s32.totalorder %s29, 0
      %p155 = por %p153, %p154
      %p156 = scmp.ne.s32.totalorder %s144, %s145
      %p157 = scmp.eq.s32.totalorder %s30, 1
      %p158 = por %p156, %p157
      %p160 = scmp.ne.s32.totalorder %s145, %s159
      %p161 = scmp.eq.s32.totalorder %s30, 0
      %p162 = por %p160, %p161
      %s164 = sadd.s32 %s163, 1
      %p167 = scmp.eq.s32.totalorder %s24, 1
      %p168 = scmp.ne.s32.totalorder %s163, %s165
      %p169 = scmp.eq.s32.totalorder %s24, 0
      %p170 = por %p168, %p169
      %p171 = scmp.ne.s32.totalorder %s163, %s165
      %p172 = scmp.eq.s32.totalorder %s29, 1
      %p173 = por %p171, %p172
      %p174 = scmp.ne.s32.totalorder %s165, %s166
      %p175 = scmp.eq.s32.totalorder %s29, 0
      %p176 = por %p174, %p175
      %p177 = scmp.ne.s32.totalorder %s165, %s166
      %p178 = scmp.eq.s32.totalorder %s30, 1
      %p179 = por %p177, %p178
      %p181 = scmp.ne.s32.totalorder %s166, %s180
      %p182 = scmp.eq.s32.totalorder %s30, 0
      %p183 = por %p181, %p182
      %s185 = sadd.s32 %s184, 1
      %p188 = scmp.eq.s32.totalorder %s24, 1
      %p189 = scmp.ne.s32.totalorder %s184, %s186
      %p190 = scmp.eq.s32.totalorder %s24, 0
      %p191 = por %p189, %p190
      %p192 = scmp.ne.s32.totalorder %s184, %s186
      %p193 = scmp.eq.s32.totalorder %s29, 1
      %p194 = por %p192, %p193
      %p195 = scmp.ne.s32.totalorder %s186, %s187
      %p196 = scmp.eq.s32.totalorder %s29, 0
      %p197 = por %p195, %p196
      %p198 = scmp.ne.s32.totalorder %s186, %s187
      %p199 = scmp.eq.s32.totalorder %s30, 1
      %p200 = por %p198, %p199
      %p202 = scmp.ne.s32.totalorder %s187, %s201
      %p203 = scmp.eq.s32.totalorder %s30, 0
      %p204 = por %p202, %p203
      %s206 = sadd.s32 %s205, 1
      %p209 = scmp.eq.s32.totalorder %s24, 1
      %p210 = scmp.ne.s32.totalorder %s205, %s207
      %p211 = scmp.eq.s32.totalorder %s24, 0
      %p212 = por %p210, %p211
      %p213 = scmp.ne.s32.totalorder %s205, %s207
      %p214 = scmp.eq.s32.totalorder %s29, 1
      %p215 = por %p213, %p214
      %p216 = scmp.ne.s32.totalorder %s207, %s208
      %p217 = scmp.eq.s32.totalorder %s29, 0
      %p218 = por %p216, %p217
      %p219 = scmp.ne.s32.totalorder %s207, %s208
      %p220 = scmp.eq.s32.totalorder %s30, 1
      %p221 = por %p219, %p220
      %p223 = scmp.ne.s32.totalorder %s208, %s222
      %p224 = scmp.eq.s32.totalorder %s30, 0
      %p225 = por %p223, %p224
      %s227 = sadd.s32 %s226, 1
      %p230 = scmp.eq.s32.totalorder %s24, 1
      %p231 = scmp.ne.s32.totalorder %s226, %s228
      %p232 = scmp.eq.s32.totalorder %s24, 0
      %p233 = por %p231, %p232
      %p234 = scmp.ne.s32.totalorder %s226, %s228
      %p235 = scmp.eq.s32.totalorder %s29, 1
      %p236 = por %p234, %p235
      %p237 = scmp.ne.s32.totalorder %s228, %s229
      %p238 = scmp.eq.s32.totalorder %s29, 0
      %p239 = por %p237, %p238
      %p240 = scmp.ne.s32.totalorder %s228, %s229
      %p241 = scmp.eq.s32.totalorder %s30, 1
      %p242 = por %p240, %p241
      %p244 = scmp.ne.s32.totalorder %s229, %s243
      %p245 = scmp.eq.s32.totalorder %s30, 0
      %p246 = por %p244, %p245
      %s248 = sadd.s32 %s247, 1
      %p251 = scmp.eq.s32.totalorder %s24, 1
      %p252 = scmp.ne.s32.totalorder %s247, %s249
      %p253 = scmp.eq.s32.totalorder %s24, 0
      %p254 = por %p252, %p253
      %p255 = scmp.ne.s32.totalorder %s247, %s249
      %p256 = scmp.eq.s32.totalorder %s29, 1
      %p257 = por %p255, %p256
      %p258 = scmp.ne.s32.totalorder %s249, %s250
      %p259 = scmp.eq.s32.totalorder %s29, 0
      %p260 = por %p258, %p259
      %p261 = scmp.ne.s32.totalorder %s249, %s250
      %p262 = scmp.eq.s32.totalorder %s30, 1
      %p263 = por %p261, %p262
      %p265 = scmp.ne.s32.totalorder %s250, %s264
      %p266 = scmp.eq.s32.totalorder %s30, 0
      %p267 = por %p265, %p266
      %s269 = sadd.s32 %s268, 1
      %p272 = scmp.eq.s32.totalorder %s24, 1
      %p273 = scmp.ne.s32.totalorder %s268, %s270
      %p274 = scmp.eq.s32.totalorder %s24, 0
      %p275 = por %p273, %p274
      %p276 = scmp.ne.s32.totalorder %s268, %s270
      %p277 = scmp.eq.s32.totalorder %s29, 1
      %p278 = por %p276, %p277
      %p279 = scmp.ne.s32.totalorder %s270, %s271
      %p280 = scmp.eq.s32.totalorder %s29, 0
      %p281 = por %p279, %p280
      %p282 = scmp.ne.s32.totalorder %s270, %s271
      %p283 = scmp.eq.s32.totalorder %s30, 1
      %p284 = por %p282, %p283
      %p286 = scmp.ne.s32.totalorder %s271, %s285
      %p287 = scmp.eq.s32.totalorder %s30, 0
      %p288 = por %p286, %p287
      %s290 = sadd.s32 %s289, 1
      %p293 = scmp.eq.s32.totalorder %s24, 1
      %p294 = scmp.ne.s32.totalorder %s289, %s291
      %p295 = scmp.eq.s32.totalorder %s24, 0
      %p296 = por %p294, %p295
      %p297 = scmp.ne.s32.totalorder %s289, %s291
      %p298 = scmp.eq.s32.totalorder %s29, 1
      %p299 = por %p297, %p298
      %p300 = scmp.ne.s32.totalorder %s291, %s292
      %p301 = scmp.eq.s32.totalorder %s29, 0
      %p302 = por %p300, %p301
      %p303 = scmp.ne.s32.totalorder %s291, %s292
      %p304 = scmp.eq.s32.totalorder %s30, 1
      %p305 = por %p303, %p304
      %p307 = scmp.ne.s32.totalorder %s292, %s306
      %p308 = scmp.eq.s32.totalorder %s30, 0
      %p309 = por %p307, %p308
      %s311 = sadd.s32 %s310, 1
      %p314 = scmp.eq.s32.totalorder %s24, 1
      %p315 = scmp.ne.s32.totalorder %s310, %s312
      %p316 = scmp.eq.s32.totalorder %s24, 0
      %p317 = por %p315, %p316
      %p318 = scmp.ne.s32.totalorder %s310, %s312
      %p319 = scmp.eq.s32.totalorder %s29, 1
      %p320 = por %p318, %p319
      %p321 = scmp.ne.s32.totalorder %s312, %s313
      %p322 = scmp.eq.s32.totalorder %s29, 0
      %p323 = por %p321, %p322
      %p324 = scmp.ne.s32.totalorder %s312, %s313
      %p325 = scmp.eq.s32.totalorder %s30, 1
      %p326 = por %p324, %p325
      %p328 = scmp.ne.s32.totalorder %s313, %s327
      %p329 = scmp.eq.s32.totalorder %s30, 0
      %p330 = por %p328, %p329
      %s332 = sadd.s32 %s331, 1
      %p335 = scmp.eq.s32.totalorder %s24, 1
      %p336 = scmp.ne.s32.totalorder %s331, %s333
      %p337 = scmp.eq.s32.totalorder %s24, 0
      %p338 = por %p336, %p337
      %p339 = scmp.ne.s32.totalorder %s331, %s333
      %p340 = scmp.eq.s32.totalorder %s29, 1
      %p341 = por %p339, %p340
      %p342 = scmp.ne.s32.totalorder %s333, %s334
      %p343 = scmp.eq.s32.totalorder %s29, 0
      %p344 = por %p342, %p343
      %p345 = scmp.ne.s32.totalorder %s333, %s334
      %p346 = scmp.eq.s32.totalorder %s30, 1
      %p347 = por %p345, %p346
      %p349 = scmp.ne.s32.totalorder %s334, %s348
      %p350 = scmp.eq.s32.totalorder %s30, 0
      %p351 = por %p349, %p350
      %s352 = ssub.s32 %s24, %s31
      %p353 = scmp.eq.s32.totalorder %s352, 0
      %s355 = sadd.s32 %s354, 1
      %s356 = scalar_select %p353, %s354, %s355
      %p359 = pneg %p353
      %p360 = scmp.eq.s32.totalorder %s24, 1
      %p361 = por %p359, %p360
      %p362 = scmp.ne.s32.totalorder %s354, %s357
      %p363 = scmp.eq.s32.totalorder %s24, 0
      %p364 = por %p362, %p363
      %p365 = scmp.ne.s32.totalorder %s354, %s357
      %p366 = scmp.eq.s32.totalorder %s29, 1
      %p367 = por %p365, %p366
      %p368 = scmp.ne.s32.totalorder %s357, %s358
      %p369 = scmp.eq.s32.totalorder %s29, 0
      %p370 = por %p368, %p369
      %p371 = scmp.ne.s32.totalorder %s357, %s358
      %p372 = scmp.eq.s32.totalorder %s30, 1
      %p373 = por %p371, %p372
      %p375 = scmp.ne.s32.totalorder %s358, %s374
      %p376 = scmp.eq.s32.totalorder %s30, 0
      %p377 = por %p375, %p376
      %p378 = scmp.le.s32.totalorder 1, %s24
      %p379 = scmp.lt.s32.totalorder %s24, 3
      %p380 = pnand %p378, %p379
      %p381 = pneg %p380
      // Predicated region
      $region9: #{forward.1} parent=5 // pred_check
        _
      $region10: #{forward.1} parent=5 // pred_check_branch
        %383 = sbr.rel (%p380) target = $region12
      $region11: #{forward.1} parent=5 // pred_region
        %s384 = ssub.s32 %s24, 1
        // Predicated region
        $region13: #{forward.1} parent=11 // pred_check
          %p385 = pneg %p71
        $region14: #{forward.1} parent=11 // pred_check_branch
          %387 = sbr.rel (%p385) target = $region16
        $region15: #{forward.1} parent=11 // pred_region
          _
        $region16: #{forward.1} parent=11 // pred_fallthru
          _
        // Predicated region
        $region17: #{forward.1} parent=11 // pred_check
          %p388 = pneg %p92
        $region18: #{forward.1} parent=11 // pred_check_branch
          %390 = sbr.rel (%p388) target = $region20
        $region19: #{forward.1} parent=11 // pred_region
          _
        $region20: #{forward.1} parent=11 // pred_fallthru
          _
        // Predicated region
        $region21: #{forward.1} parent=11 // pred_check
          %p391 = pneg %p113
        $region22: #{forward.1} parent=11 // pred_check_branch
          %393 = sbr.rel (%p391) target = $region24
        $region23: #{forward.1} parent=11 // pred_region
          _
        $region24: #{forward.1} parent=11 // pred_fallthru
          _
        // Predicated region
        $region25: #{forward.1} parent=11 // pred_check
          %p394 = pneg %p134
        $region26: #{forward.1} parent=11 // pred_check_branch
          %396 = sbr.rel (%p394) target = $region28
        $region27: #{forward.1} parent=11 // pred_region
          _
        $region28: #{forward.1} parent=11 // pred_fallthru
          _
        // Predicated region
        $region29: #{forward.1} parent=11 // pred_check
          %p397 = pneg %p155
        $region30: #{forward.1} parent=11 // pred_check_branch
          %399 = sbr.rel (%p397) target = $region32
        $region31: #{forward.1} parent=11 // pred_region
          _
        $region32: #{forward.1} parent=11 // pred_fallthru
          _
        // Predicated region
        $region33: #{forward.1} parent=11 // pred_check
          %p400 = pneg %p176
        $region34: #{forward.1} parent=11 // pred_check_branch
          %402 = sbr.rel (%p400) target = $region36
        $region35: #{forward.1} parent=11 // pred_region
          _
        $region36: #{forward.1} parent=11 // pred_fallthru
          _
        // Predicated region
        $region37: #{forward.1} parent=11 // pred_check
          %p403 = pneg %p197
        $region38: #{forward.1} parent=11 // pred_check_branch
          %405 = sbr.rel (%p403) target = $region40
        $region39: #{forward.1} parent=11 // pred_region
          _
        $region40: #{forward.1} parent=11 // pred_fallthru
          _
        // Predicated region
        $region41: #{forward.1} parent=11 // pred_check
          %p406 = pneg %p218
        $region42: #{forward.1} parent=11 // pred_check_branch
          %408 = sbr.rel (%p406) target = $region44
        $region43: #{forward.1} parent=11 // pred_region
          _
        $region44: #{forward.1} parent=11 // pred_fallthru
          _
        // Predicated region
        $region45: #{forward.1} parent=11 // pred_check
          %p409 = pneg %p239
        $region46: #{forward.1} parent=11 // pred_check_branch
          %411 = sbr.rel (%p409) target = $region48
        $region47: #{forward.1} parent=11 // pred_region
          _
        $region48: #{forward.1} parent=11 // pred_fallthru
          _
        // Predicated region
        $region49: #{forward.1} parent=11 // pred_check
          %p412 = pneg %p260
        $region50: #{forward.1} parent=11 // pred_check_branch
          %414 = sbr.rel (%p412) target = $region52
        $region51: #{forward.1} parent=11 // pred_region
          _
        $region52: #{forward.1} parent=11 // pred_fallthru
          _
        // Predicated region
        $region53: #{forward.1} parent=11 // pred_check
          %p415 = pneg %p281
        $region54: #{forward.1} parent=11 // pred_check_branch
          %417 = sbr.rel (%p415) target = $region56
        $region55: #{forward.1} parent=11 // pred_region
          _
        $region56: #{forward.1} parent=11 // pred_fallthru
          _
        // Predicated region
        $region57: #{forward.1} parent=11 // pred_check
          %p418 = pneg %p302
        $region58: #{forward.1} parent=11 // pred_check_branch
          %420 = sbr.rel (%p418) target = $region60
        $region59: #{forward.1} parent=11 // pred_region
          _
        $region60: #{forward.1} parent=11 // pred_fallthru
          _
        // Predicated region
        $region61: #{forward.1} parent=11 // pred_check
          %p421 = pneg %p323
        $region62: #{forward.1} parent=11 // pred_check_branch
          %423 = sbr.rel (%p421) target = $region64
        $region63: #{forward.1} parent=11 // pred_region
          _
        $region64: #{forward.1} parent=11 // pred_fallthru
          _
        // Predicated region
        $region65: #{forward.1} parent=11 // pred_check
          %p424 = pneg %p344
        $region66: #{forward.1} parent=11 // pred_check_branch
          %426 = sbr.rel (%p424) target = $region68
        $region67: #{forward.1} parent=11 // pred_region
          _
        $region68: #{forward.1} parent=11 // pred_fallthru
          _
      $region12: #{forward.1} parent=5 // pred_fallthru
        _
      %p427 = scmp.lt.s32.totalorder %s24, 2
      // Predicated region
      $region69: #{forward.1} parent=5 // pred_check
        %p428 = pneg %p427
      $region70: #{forward.1} parent=5 // pred_check_branch
        %430 = sbr.rel (%p428) target = $region72
      $region71: #{forward.1} parent=5 // pred_region
        // Predicated region
        $region73: #{forward.1} parent=71 // pred_check
          %p431 = pneg %p44
        $region74: #{forward.1} parent=71 // pred_check_branch
          %433 = sbr.rel (%p431) target = $region76
        $region75: #{forward.1} parent=71 // pred_region
          %p434 = scmp.lt.s32.totalorder %s24, 1
          %s435 = scalar_select %p434, %s24, 1
          %s436 = smul.addr %s435, 14
          %s437 = smul.addr %s436, 8
          %s438 = scalar_lea.vmem %s0, %s437
        $region76: #{forward.1} parent=71 // pred_fallthru
          _
      $region72: #{forward.1} parent=5 // pred_fallthru
        _
      %p439 = scmp.le.s32.totalorder 1, %s24
      %p440 = scmp.lt.s32.totalorder %s24, 3
      %p441 = pnand %p439, %p440
      %p442 = pneg %p441
      // Predicated region
      $region77: #{forward.1} parent=5 // pred_check
        _
      $region78: #{forward.1} parent=5 // pred_check_branch
        %444 = sbr.rel (%p441) target = $region80
      $region79: #{forward.1} parent=5 // pred_region
        %s445 = ssub.s32 %s24, 1
        %p446 = scmp.lt.s32.totalorder %s29, 1
        %s447 = scalar_select %p446, %s29, 1
        %s448 = smul.addr %s447, 14
        %s449 = smul.addr %s448, 8
        %s450 = scalar_lea.vmem %s0, %s449
        %p451 = pneg %p50
        %p452 = pneg %p47
        %p453 = pneg %p71
        %p454 = pneg %p68
        %p455 = pneg %p92
        %p456 = pneg %p89
        %p457 = pneg %p113
        %p458 = pneg %p110
        %p459 = pneg %p134
        %p460 = pneg %p131
        %p461 = pneg %p155
        %p462 = pneg %p152
        %p463 = pneg %p176
        %p464 = pneg %p173
        %p465 = pneg %p197
        %p466 = pneg %p194
        %p467 = pneg %p218
        %p468 = pneg %p215
        %p469 = pneg %p239
        %p470 = pneg %p236
        %p471 = pneg %p260
        %p472 = pneg %p257
        %p473 = pneg %p281
        %p474 = pneg %p278
        %p475 = pneg %p302
        %p476 = pneg %p299
        %p477 = pneg %p323
        %p478 = pneg %p320
        %p479 = pneg %p344
        %p480 = pneg %p341
        %p481 = pneg %p370
        %p482 = pneg %p367
        %s483 = sand.u32 %s357, 1
        %s484 = scalar_lea.sflag [#allocation3], %s483
        %s485 = sand.u32 %s357, 1
        %s486 = smul.addr %s485, 2
        %s487 = scalar_lea.vmem [#allocation2], %s486
        %p488 = scmp.lt.s32.totalorder %s29, 1
        %s489 = scalar_select %p488, %s29, 1
        %s490 = smul.addr %s489, 14
        %s491 = smul.addr %s490, 8
        %s492 = scalar_lea.vmem %s0, %s491
        %v493 = vld [vmem:[%s492] sm:$0xff]
        %v494 = vld [vmem:[%s492 + $0x8] sm:$0xff]
        %v495 = vld [vmem:[%s492 + $0x10] sm:$0xff]
        %v496 = vld [vmem:[%s492 + $0x18] sm:$0xff]
        %v497 = vld [vmem:[%s492 + $0x20] sm:$0xff]
        %v498 = vld [vmem:[%s492 + $0x28] sm:$0xff]
        %v499 = vld [vmem:[%s492 + $0x30] sm:$0x3]
        %v500 = vld [vmem:[%s492 + $0x38] sm:$0xff]
        %v501 = vld [vmem:[%s492 + $0x40] sm:$0xff]
        %v502 = vld [vmem:[%s492 + $0x48] sm:$0xff]
        %v503 = vld [vmem:[%s492 + $0x50] sm:$0xff]
        %v504 = vld [vmem:[%s492 + $0x58] sm:$0xff]
        %v505 = vld [vmem:[%s492 + $0x60] sm:$0xff]
        %v506 = vld [vmem:[%s492 + $0x68] sm:$0x3]
        %vm514 = vcmask 1040384
        %v515 = vrot.slane %v493, 7
        %v516 = vrot.slane %v494, 7
        %v517 = vsel %vm514, %v515, %v516
        %v518 = vrot.slane %v495, 7
        %v519 = vsel %vm514, %v516, %v518
        %v520 = vrot.slane %v496, 7
        %v521 = vsel %vm514, %v518, %v520
        %v522 = vrot.slane %v497, 7
        %v523 = vsel %vm514, %v520, %v522
        %v524 = vrot.slane %v498, 7
        %v525 = vsel %vm514, %v522, %v524
        %v526 = vrot.slane %v499, 7
        %v527 = vsel %vm514, %v524, %v526
        %v535 = vsel %vm514, 0.0, %v515
        %vm536 = vcmask 1046528
        %v537 = vrot.slane %v493, 1
        %v538 = vrot.slane %v494, 1
        %v539 = vsel %vm536, %v537, %v538
        %v540 = vrot.slane %v495, 1
        %v541 = vsel %vm536, %v538, %v540
        %v542 = vrot.slane %v496, 1
        %v543 = vsel %vm536, %v540, %v542
        %v544 = vrot.slane %v497, 1
        %v545 = vsel %vm536, %v542, %v544
        %v546 = vrot.slane %v498, 1
        %v547 = vsel %vm536, %v544, %v546
        %v548 = vrot.slane %v499, 1
        %v549 = vsel %vm536, %v546, %v548
        %v551 = vsel %vm514, %v548, 0.0
        %552 = vrot.lane.b32.xlu0 %v493, 32
        %v553 = vpop.permute.xlu0 %552
        %554 = vrot.lane.b32.xlu0 %v494, 32
        %v555 = vpop.permute.xlu0 %554
        %556 = vrot.lane.b32.xlu0 %v495, 32
        %v557 = vpop.permute.xlu0 %556
        %558 = vrot.lane.b32.xlu0 %v496, 32
        %v559 = vpop.permute.xlu0 %558
        %560 = vrot.lane.b32.xlu0 %v497, 32
        %v561 = vpop.permute.xlu0 %560
        %562 = vrot.lane.b32.xlu0 %v498, 32
        %v563 = vpop.permute.xlu0 %562
        %564 = vrot.lane.b32.xlu0 %v499, 32
        %v565 = vpop.permute.xlu0 %564
        %574 = vrot.lane.b32.xlu0 %v539, 64
        %v575 = vpop.permute.xlu0 %574
        %576 = vrot.lane.b32.xlu0 %v541, 64
        %v577 = vpop.permute.xlu0 %576
        %578 = vrot.lane.b32.xlu0 %v543, 64
        %v579 = vpop.permute.xlu0 %578
        %580 = vrot.lane.b32.xlu0 %v545, 64
        %v581 = vpop.permute.xlu0 %580
        %582 = vrot.lane.b32.xlu0 %v547, 64
        %v583 = vpop.permute.xlu0 %582
        %584 = vrot.lane.b32.xlu0 %v549, 64
        %v585 = vpop.permute.xlu0 %584
        %586 = vrot.lane.b32.xlu0 %v551, 64
        %v587 = vpop.permute.xlu0 %586
        %vm595 = vcmask 261120
        %v596 = vsel %vm595, %v535, %v553
        %v597 = vsel %vm595, %v517, %v555
        %v598 = vsel %vm595, %v519, %v557
        %v599 = vsel %vm595, %v521, %v559
        %v600 = vsel %vm595, %v523, %v561
        %v601 = vsel %vm595, %v525, %v563
        %v602 = vsel %vm595, %v527, %v565
        %vm603 = vcmask 523264
        %v604 = vsel %vm603, %v596, %v575
        %v605 = vsel %vm603, %v597, %v577
        %v606 = vsel %vm603, %v598, %v579
        %v607 = vsel %vm603, %v599, %v581
        %v608 = vsel %vm603, %v600, %v583
        %v609 = vsel %vm603, %v601, %v585
        %v610 = vsel %vm603, %v602, %v587
        %v611 = vld [vmem:[%s1] sm:$0xff]
        %v612 = vld [vmem:[%s1 + $0x8] sm:$0xff]
        %v613 = vld [vmem:[%s1 + $0x10] sm:$0xff]
        %v614 = vld [vmem:[%s1 + $0x18] sm:$0xff]
        %v615 = vld [vmem:[%s1 + $0x20] sm:$0xff]
        %v616 = vld [vmem:[%s1 + $0x28] sm:$0xff]
        %v617 = vld [vmem:[%s1 + $0x30] sm:$0xff]
        %v618 = vld [vmem:[%s1 + $0x38] sm:$0xff]
        %v619 = vld [vmem:[%s1 + $0x40] sm:$0xff]
        %v620 = vld [vmem:[%s1 + $0x48] sm:$0xff]
        %v621 = vld [vmem:[%s1 + $0x50] sm:$0xff]
        %v622 = vld [vmem:[%s1 + $0x58] sm:$0xff]
        %v623 = vld [vmem:[%s2] sm:$0x1]
        %v625 = vperm.slane %v623, 0
        %vm627 = vcmask 785408
        %v629 = vsel %vm627, %v604, 0
        %v632 = vsel %vm627, %v605, 0
        %v635 = vsel %vm627, %v606, 0
        %v638 = vsel %vm627, %v607, 0
        %v641 = vsel %vm627, %v608, 0
        %v644 = vsel %vm627, %v609, 0
        %v647 = vsel %vm627, %v610, 0
        %649 = vmatpush.msra.mxu0 0.0
        %650 = vmatpush.msra.mxu0 0.0
        %651 = vmatpush.msra.mxu0 0.0
        %652 = vmatpush.msra.mxu0 0.0
        %653 = vmatpush.msra.mxu0 %v622
        %654 = vmatpush.msra.mxu0 %v621
        %655 = vmatpush.msra.mxu0 %v620
        %656 = vmatpush.msra.mxu0 %v619
        %657 = vmatpush.msra.mxu0 %v618
        %658 = vmatpush.msra.mxu0 %v617
        %659 = vmatpush.msra.mxu0 %v616
        %660 = vmatpush.msra.mxu0 %v615
        %661 = vmatpush.msra.mxu0 %v614
        %662 = vmatpush.msra.mxu0 %v613
        %663 = vmatpush.msra.mxu0 %v612
        %664 = vmatpush.msra.mxu0 %v611
        %665 = vmatmul.f32.gmra.mxu0 %v629
        %v666 = vpop.f32.mrf.mxu0
        %v667 = vadd.f32 %v625, %v666
        %668 = vmatmul.f32.gmra.mxu0 %v632
        %v669 = vpop.f32.mrf.mxu0
        %v670 = vadd.f32 %v625, %v669
        %671 = vmatmul.f32.gmra.mxu0 %v635
        %v672 = vpop.f32.mrf.mxu0
        %v673 = vadd.f32 %v625, %v672
        %674 = vmatmul.f32.gmra.mxu0 %v638
        %v675 = vpop.f32.mrf.mxu0
        %v676 = vadd.f32 %v625, %v675
        %677 = vmatmul.f32.gmra.mxu0 %v641
        %v678 = vpop.f32.mrf.mxu0
        %v679 = vadd.f32 %v625, %v678
        %680 = vmatmul.f32.gmra.mxu0 %v644
        %v681 = vpop.f32.mrf.mxu0
        %v682 = vadd.f32 %v625, %v681
        %683 = vmatmul.f32.gmra.mxu0 %v647
        %v684 = vpop.f32.mrf.mxu0
        %v685 = vadd.f32 %v625, %v684
        %686 = vdwg.mxu0
        %v687 = vmax.f32 %v667, 0.0
        %v688 = vmax.f32 %v670, 0.0
        %v689 = vmax.f32 %v673, 0.0
        %v690 = vmax.f32 %v676, 0.0
        %v691 = vmax.f32 %v679, 0.0
        %v692 = vmax.f32 %v682, 0.0
        %v693 = vmax.f32 %v685, 0.0
        %v694 = vsel %vm595, %v687, 0.0
        %v695 = vsel %vm595, %v688, 0.0
        %v696 = vadd.f32 %v694, %v695
        %v697 = vsel %vm595, %v689, 0.0
        %v698 = vadd.f32 %v696, %v697
        %v699 = vsel %vm595, %v690, 0.0
        %v700 = vadd.f32 %v698, %v699
        %v701 = vsel %vm595, %v691, 0.0
        %v702 = vadd.f32 %v700, %v701
        %v703 = vsel %vm595, %v692, 0.0
        %v704 = vadd.f32 %v702, %v703
        %vm705 = vcmask 254976
        %v706 = vsel %vm705, %v693, 0.0
        %v707 = vadd.f32 %v704, %v706
        %v708 = vrot.slane %v707, 4
        %v709 = vadd.f32 %v707, %v708
        %v710 = vrot.slane %v709, 2
        %v711 = vadd.f32 %v709, %v710
        %v712 = vrot.slane %v711, 1
        %v713 = vadd.f32 %v711, %v712
        %v714 = vmul.f32 %v713, 0.02
        %v722 = vrot.slane %v500, 7
        %v723 = vrot.slane %v501, 7
        %v724 = vsel %vm514, %v722, %v723
        %v725 = vrot.slane %v502, 7
        %v726 = vsel %vm514, %v723, %v725
        %v727 = vrot.slane %v503, 7
        %v728 = vsel %vm514, %v725, %v727
        %v729 = vrot.slane %v504, 7
        %v730 = vsel %vm514, %v727, %v729
        %v731 = vrot.slane %v505, 7
        %v732 = vsel %vm514, %v729, %v731
        %v733 = vrot.slane %v506, 7
        %v734 = vsel %vm514, %v731, %v733
        %v742 = vsel %vm514, 0.0, %v722
        %v743 = vrot.slane %v500, 1
        %v744 = vrot.slane %v501, 1
        %v745 = vsel %vm536, %v743, %v744
        %v746 = vrot.slane %v502, 1
        %v747 = vsel %vm536, %v744, %v746
        %v748 = vrot.slane %v503, 1
        %v749 = vsel %vm536, %v746, %v748
        %v750 = vrot.slane %v504, 1
        %v751 = vsel %vm536, %v748, %v750
        %v752 = vrot.slane %v505, 1
        %v753 = vsel %vm536, %v750, %v752
        %v754 = vrot.slane %v506, 1
        %v755 = vsel %vm536, %v752, %v754
        %v757 = vsel %vm514, %v754, 0.0
        %758 = vrot.lane.b32.xlu0 %v500, 32
        %v759 = vpop.permute.xlu0 %758
        %760 = vrot.lane.b32.xlu0 %v501, 32
        %v761 = vpop.permute.xlu0 %760
        %762 = vrot.lane.b32.xlu0 %v502, 32
        %v763 = vpop.permute.xlu0 %762
        %764 = vrot.lane.b32.xlu0 %v503, 32
        %v765 = vpop.permute.xlu0 %764
        %766 = vrot.lane.b32.xlu0 %v504, 32
        %v767 = vpop.permute.xlu0 %766
        %768 = vrot.lane.b32.xlu0 %v505, 32
        %v769 = vpop.permute.xlu0 %768
        %770 = vrot.lane.b32.xlu0 %v506, 32
        %v771 = vpop.permute.xlu0 %770
        %780 = vrot.lane.b32.xlu0 %v745, 64
        %v781 = vpop.permute.xlu0 %780
        %782 = vrot.lane.b32.xlu0 %v747, 64
        %v783 = vpop.permute.xlu0 %782
        %784 = vrot.lane.b32.xlu0 %v749, 64
        %v785 = vpop.permute.xlu0 %784
        %786 = vrot.lane.b32.xlu0 %v751, 64
        %v787 = vpop.permute.xlu0 %786
        %788 = vrot.lane.b32.xlu0 %v753, 64
        %v789 = vpop.permute.xlu0 %788
        %790 = vrot.lane.b32.xlu0 %v755, 64
        %v791 = vpop.permute.xlu0 %790
        %792 = vrot.lane.b32.xlu0 %v757, 64
        %v793 = vpop.permute.xlu0 %792
        %v801 = vsel %vm595, %v742, %v759
        %v802 = vsel %vm595, %v724, %v761
        %v803 = vsel %vm595, %v726, %v763
        %v804 = vsel %vm595, %v728, %v765
        %v805 = vsel %vm595, %v730, %v767
        %v806 = vsel %vm595, %v732, %v769
        %v807 = vsel %vm595, %v734, %v771
        %v808 = vsel %vm603, %v801, %v781
        %v809 = vsel %vm603, %v802, %v783
        %v810 = vsel %vm603, %v803, %v785
        %v811 = vsel %vm603, %v804, %v787
        %v812 = vsel %vm603, %v805, %v789
        %v813 = vsel %vm603, %v806, %v791
        %v814 = vsel %vm603, %v807, %v793
        %v816 = vsel %vm627, %v808, 0
        %v819 = vsel %vm627, %v809, 0
        %v822 = vsel %vm627, %v810, 0
        %v825 = vsel %vm627, %v811, 0
        %v828 = vsel %vm627, %v812, 0
        %v831 = vsel %vm627, %v813, 0
        %v834 = vsel %vm627, %v814, 0
        %836 = vmatpush.msra.mxu0 0.0
        %837 = vmatpush.msra.mxu0 0.0
        %838 = vmatpush.msra.mxu0 0.0
        %839 = vmatpush.msra.mxu0 0.0
        %840 = vmatpush.msra.mxu0 %v622
        %841 = vmatpush.msra.mxu0 %v621
        %842 = vmatpush.msra.mxu0 %v620
        %843 = vmatpush.msra.mxu0 %v619
        %844 = vmatpush.msra.mxu0 %v618
        %845 = vmatpush.msra.mxu0 %v617
        %846 = vmatpush.msra.mxu0 %v616
        %847 = vmatpush.msra.mxu0 %v615
        %848 = vmatpush.msra.mxu0 %v614
        %849 = vmatpush.msra.mxu0 %v613
        %850 = vmatpush.msra.mxu0 %v612
        %851 = vmatpush.msra.mxu0 %v611
        %852 = vmatmul.f32.gmra.mxu0 %v816
        %v853 = vpop.f32.mrf.mxu0
        %v854 = vadd.f32 %v625, %v853
        %855 = vmatmul.f32.gmra.mxu0 %v819
        %v856 = vpop.f32.mrf.mxu0
        %v857 = vadd.f32 %v625, %v856
        %858 = vmatmul.f32.gmra.mxu0 %v822
        %v859 = vpop.f32.mrf.mxu0
        %v860 = vadd.f32 %v625, %v859
        %861 = vmatmul.f32.gmra.mxu0 %v825
        %v862 = vpop.f32.mrf.mxu0
        %v863 = vadd.f32 %v625, %v862
        %864 = vmatmul.f32.gmra.mxu0 %v828
        %v865 = vpop.f32.mrf.mxu0
        %v866 = vadd.f32 %v625, %v865
        %867 = vmatmul.f32.gmra.mxu0 %v831
        %v868 = vpop.f32.mrf.mxu0
        %v869 = vadd.f32 %v625, %v868
        %870 = vmatmul.f32.gmra.mxu0 %v834
        %v871 = vpop.f32.mrf.mxu0
        %v872 = vadd.f32 %v625, %v871
        %873 = vdwg.mxu0
        %v874 = vmax.f32 %v854, 0.0
        %v875 = vmax.f32 %v857, 0.0
        %v876 = vmax.f32 %v860, 0.0
        %v877 = vmax.f32 %v863, 0.0
        %v878 = vmax.f32 %v866, 0.0
        %v879 = vmax.f32 %v869, 0.0
        %v880 = vmax.f32 %v872, 0.0
        %v881 = vsel %vm595, %v874, 0.0
        %v882 = vsel %vm595, %v875, 0.0
        %v883 = vadd.f32 %v881, %v882
        %v884 = vsel %vm595, %v876, 0.0
        %v885 = vadd.f32 %v883, %v884
        %v886 = vsel %vm595, %v877, 0.0
        %v887 = vadd.f32 %v885, %v886
        %v888 = vsel %vm595, %v878, 0.0
        %v889 = vadd.f32 %v887, %v888
        %v890 = vsel %vm595, %v879, 0.0
        %v891 = vadd.f32 %v889, %v890
        %v892 = vsel %vm705, %v880, 0.0
        %v893 = vadd.f32 %v891, %v892
        %v894 = vrot.slane %v893, 4
        %v895 = vadd.f32 %v893, %v894
        %v896 = vrot.slane %v895, 2
        %v897 = vadd.f32 %v895, %v896
        %v898 = vrot.slane %v897, 1
        %v899 = vadd.f32 %v897, %v898
        %v900 = vmul.f32 %v899, 0.02
        %v901 = vsel %vm514, %v714, %v900
        %v902 = vld [vmem:[%s3] sm:$0xff]
        %v903 = vld [vmem:[%s3 + $0x8] sm:$0xff]
        %v904 = vld [vmem:[%s3 + $0x10] sm:$0xff]
        %v905 = vld [vmem:[%s3 + $0x18] sm:$0xff]
        %v906 = vld [vmem:[%s4] sm:$0x1]
        %v908 = vperm.slane %v906, 0
        %v911 = vsel %vm595, %v901, 0
        %913 = vmatpush.msra.mxu0 0.0
        %914 = vmatpush.msra.mxu0 0.0
        %915 = vmatpush.msra.mxu0 0.0
        %916 = vmatpush.msra.mxu0 0.0
        %917 = vmatpush.msra.mxu0 0.0
        %918 = vmatpush.msra.mxu0 0.0
        %919 = vmatpush.msra.mxu0 0.0
        %920 = vmatpush.msra.mxu0 0.0
        %921 = vmatpush.msra.mxu0 0.0
        %922 = vmatpush.msra.mxu0 0.0
        %923 = vmatpush.msra.mxu0 0.0
        %924 = vmatpush.msra.mxu0 0.0
        %925 = vmatpush.msra.mxu0 %v905
        %926 = vmatpush.msra.mxu0 %v904
        %927 = vmatpush.msra.mxu0 %v903
        %928 = vmatpush.msra.mxu0 %v902
        %929 = vmatmul.f32.gmra.mxu0 %v911
        %v930 = vpop.f32.mrf.mxu0
        %v931 = vadd.f32 %v908, %v930
        %932 = vdwg.mxu0
        %934 = vrot.lane.b32.xlu0 %v931, 96
        %v935 = vpop.permute.xlu0 %934
        %vm936 = vcmask 31744
        %v937 = vsel %vm936, %v931, 0
        %v939 = vsel %vm936, %v935, 0
        %941 = vmatpush.xpose.msra.mxu0 0.0
        %942 = vmatpush.xpose.msra.mxu0 0.0
        %943 = vmatpush.xpose.msra.mxu0 0.0
        %944 = vmatpush.xpose.msra.mxu0 0.0
        %945 = vmatpush.xpose.msra.mxu0 0.0
        %946 = vmatpush.xpose.msra.mxu0 0.0
        %947 = vmatpush.xpose.msra.mxu0 0.0
        %948 = vmatpush.xpose.msra.mxu0 0.0
        %949 = vmatpush.xpose.msra.mxu0 0.0
        %950 = vmatpush.xpose.msra.mxu0 0.0
        %951 = vmatpush.xpose.msra.mxu0 0.0
        %952 = vmatpush.xpose.msra.mxu0 0.0
        %953 = vmatpush.xpose.msra.mxu0 0.0
        %954 = vmatpush.xpose.msra.mxu0 0.0
        %955 = vmatpush.xpose.msra.mxu0 0.0
        %956 = vmatpush.xpose.msra.mxu0 %v939
        %957 = vmatmul.f32.gmra.mxu0 %v937
        %v958 = vpop.f32.mrf.mxu0
        %v959 = vadd.f32 0.0, %v958
        %960 = vdwg.mxu0
        %v961 = vmul.f32 %v959, 0.5
        %vm962 = vcmask 9216
        %v963 = vsel %vm962, %v961, -inf
        %964 = vmax.xlane.f32.xlu0 %v963
        %v965 = vpop.xlane.xlu0 %964
        %v966 = vsub.f32 %v961, %v965
        %v967 = vmul.f32 %v966, 1.442695
        %v968 = vpow.pop %v967
        %v969 = vsel %vm962, %v968, 0.0
        %970 = vadd.xlane.f32.xlu0 %v969
        %v971 = vpop.xlane.xlu0 %970
        %v972 = vrcp.pop %v971
        %v973 = vmul.f32 %v968, %v972
        %974 = vrot.lane.b32.xlu0 %v931, 64
        %v975 = vpop.permute.xlu0 %974
        %vm976 = vcmask 15360
        %v978 = vsel %vm976, %v973, 0
        %vm980 = vcmask 1041408
        %v981 = vsel %vm980, %v975, 0
        %983 = vmatpush.msra.mxu0 0.0
        %984 = vmatpush.msra.mxu0 0.0
        %985 = vmatpush.msra.mxu0 0.0
        %986 = vmatpush.msra.mxu0 0.0
        %987 = vmatpush.msra.mxu0 0.0
        %988 = vmatpush.msra.mxu0 0.0
        %989 = vmatpush.msra.mxu0 0.0
        %990 = vmatpush.msra.mxu0 0.0
        %991 = vmatpush.msra.mxu0 0.0
        %992 = vmatpush.msra.mxu0 0.0
        %993 = vmatpush.msra.mxu0 0.0
        %994 = vmatpush.msra.mxu0 0.0
        %995 = vmatpush.msra.mxu0 0.0
        %996 = vmatpush.msra.mxu0 0.0
        %997 = vmatpush.msra.mxu0 0.0
        %998 = vmatpush.msra.mxu0 %v981
        %999 = vmatmul.f32.gmra.mxu0 %v978
        %v1000 = vpop.f32.mrf.mxu0
        %v1001 = vadd.f32 0.0, %v1000
        %1002 = vdwg.mxu0
        %1003 = vrot.lane.b32.xlu0 %v931, 124
        %v1004 = vpop.permute.xlu0 %1003
        %1005 = vrot.lane.b32.xlu0 %v931, 92
        %v1006 = vpop.permute.xlu0 %1005
        %v1007 = vsel %vm936, %v1004, 0
        %v1009 = vsel %vm936, %v1006, 0
        %1011 = vmatpush.xpose.msra.mxu0 0.0
        %1012 = vmatpush.xpose.msra.mxu0 0.0
        %1013 = vmatpush.xpose.msra.mxu0 0.0
        %1014 = vmatpush.xpose.msra.mxu0 0.0
        %1015 = vmatpush.xpose.msra.mxu0 0.0
        %1016 = vmatpush.xpose.msra.mxu0 0.0
        %1017 = vmatpush.xpose.msra.mxu0 0.0
        %1018 = vmatpush.xpose.msra.mxu0 0.0
        %1019 = vmatpush.xpose.msra.mxu0 0.0
        %1020 = vmatpush.xpose.msra.mxu0 0.0
        %1021 = vmatpush.xpose.msra.mxu0 0.0
        %1022 = vmatpush.xpose.msra.mxu0 0.0
        %1023 = vmatpush.xpose.msra.mxu0 0.0
        %1024 = vmatpush.xpose.msra.mxu0 0.0
        %1025 = vmatpush.xpose.msra.mxu0 0.0
        %1026 = vmatpush.xpose.msra.mxu0 %v1009
        %1027 = vmatmul.f32.gmra.mxu0 %v1007
        %v1028 = vpop.f32.mrf.mxu0
        %v1029 = vadd.f32 0.0, %v1028
        %1030 = vdwg.mxu0
        %v1031 = vmul.f32 %v1029, 0.5
        %v1032 = vsel %vm962, %v1031, -inf
        %1033 = vmax.xlane.f32.xlu0 %v1032
        %v1034 = vpop.xlane.xlu0 %1033
        %v1035 = vsub.f32 %v1031, %v1034
        %v1036 = vmul.f32 %v1035, 1.442695
        %v1037 = vpow.pop %v1036
        %v1038 = vsel %vm962, %v1037, 0.0
        %1039 = vadd.xlane.f32.xlu0 %v1038
        %v1040 = vpop.xlane.xlu0 %1039
        %v1041 = vrcp.pop %v1040
        %v1042 = vmul.f32 %v1037, %v1041
        %1043 = vrot.lane.b32.xlu0 %v931, 60
        %v1044 = vpop.permute.xlu0 %1043
        %v1046 = vsel %vm976, %v1042, 0
        %v1048 = vsel %vm980, %v1044, 0
        %1050 = vmatpush.msra.mxu0 0.0
        %1051 = vmatpush.msra.mxu0 0.0
        %1052 = vmatpush.msra.mxu0 0.0
        %1053 = vmatpush.msra.mxu0 0.0
        %1054 = vmatpush.msra.mxu0 0.0
        %1055 = vmatpush.msra.mxu0 0.0
        %1056 = vmatpush.msra.mxu0 0.0
        %1057 = vmatpush.msra.mxu0 0.0
        %1058 = vmatpush.msra.mxu0 0.0
        %1059 = vmatpush.msra.mxu0 0.0
        %1060 = vmatpush.msra.mxu0 0.0
        %1061 = vmatpush.msra.mxu0 0.0
        %1062 = vmatpush.msra.mxu0 0.0
        %1063 = vmatpush.msra.mxu0 0.0
        %1064 = vmatpush.msra.mxu0 0.0
        %1065 = vmatpush.msra.mxu0 %v1048
        %1066 = vmatmul.f32.gmra.mxu0 %v1046
        %v1067 = vpop.f32.mrf.mxu0
        %v1068 = vadd.f32 0.0, %v1067
        %1069 = vdwg.mxu0
        %1070 = vrot.lane.b32.xlu0 %v931, 120
        %v1071 = vpop.permute.xlu0 %1070
        %1072 = vrot.lane.b32.xlu0 %v931, 88
        %v1073 = vpop.permute.xlu0 %1072
        %v1074 = vsel %vm936, %v1071, 0
        %v1076 = vsel %vm936, %v1073, 0
        %1078 = vmatpush.xpose.msra.mxu0 0.0
        %1079 = vmatpush.xpose.msra.mxu0 0.0
        %1080 = vmatpush.xpose.msra.mxu0 0.0
        %1081 = vmatpush.xpose.msra.mxu0 0.0
        %1082 = vmatpush.xpose.msra.mxu0 0.0
        %1083 = vmatpush.xpose.msra.mxu0 0.0
        %1084 = vmatpush.xpose.msra.mxu0 0.0
        %1085 = vmatpush.xpose.msra.mxu0 0.0
        %1086 = vmatpush.xpose.msra.mxu0 0.0
        %1087 = vmatpush.xpose.msra.mxu0 0.0
        %1088 = vmatpush.xpose.msra.mxu0 0.0
        %1089 = vmatpush.xpose.msra.mxu0 0.0
        %1090 = vmatpush.xpose.msra.mxu0 0.0
        %1091 = vmatpush.xpose.msra.mxu0 0.0
        %1092 = vmatpush.xpose.msra.mxu0 0.0
        %1093 = vmatpush.xpose.msra.mxu0 %v1076
        %1094 = vmatmul.f32.gmra.mxu0 %v1074
        %v1095 = vpop.f32.mrf.mxu0
        %v1096 = vadd.f32 0.0, %v1095
        %1097 = vdwg.mxu0
        %v1098 = vmul.f32 %v1096, 0.5
        %v1099 = vsel %vm962, %v1098, -inf
        %1100 = vmax.xlane.f32.xlu0 %v1099
        %v1101 = vpop.xlane.xlu0 %1100
        %v1102 = vsub.f32 %v1098, %v1101
        %v1103 = vmul.f32 %v1102, 1.442695
        %v1104 = vpow.pop %v1103
        %v1105 = vsel %vm962, %v1104, 0.0
        %1106 = vadd.xlane.f32.xlu0 %v1105
        %v1107 = vpop.xlane.xlu0 %1106
        %v1108 = vrcp.pop %v1107
        %v1109 = vmul.f32 %v1104, %v1108
        %1110 = vrot.lane.b32.xlu0 %v931, 56
        %v1111 = vpop.permute.xlu0 %1110
        %v1113 = vsel %vm976, %v1109, 0
        %v1115 = vsel %vm980, %v1111, 0
        %1117 = vmatpush.msra.mxu0 0.0
        %1118 = vmatpush.msra.mxu0 0.0
        %1119 = vmatpush.msra.mxu0 0.0
        %1120 = vmatpush.msra.mxu0 0.0
        %1121 = vmatpush.msra.mxu0 0.0
        %1122 = vmatpush.msra.mxu0 0.0
        %1123 = vmatpush.msra.mxu0 0.0
        %1124 = vmatpush.msra.mxu0 0.0
        %1125 = vmatpush.msra.mxu0 0.0
        %1126 = vmatpush.msra.mxu0 0.0
        %1127 = vmatpush.msra.mxu0 0.0
        %1128 = vmatpush.msra.mxu0 0.0
        %1129 = vmatpush.msra.mxu0 0.0
        %1130 = vmatpush.msra.mxu0 0.0
        %1131 = vmatpush.msra.mxu0 0.0
        %1132 = vmatpush.msra.mxu0 %v1115
        %1133 = vmatmul.f32.gmra.mxu0 %v1113
        %v1134 = vpop.f32.mrf.mxu0
        %v1135 = vadd.f32 0.0, %v1134
        %1136 = vdwg.mxu0
        %1137 = vrot.lane.b32.xlu0 %v931, 116
        %v1138 = vpop.permute.xlu0 %1137
        %1139 = vrot.lane.b32.xlu0 %v931, 84
        %v1140 = vpop.permute.xlu0 %1139
        %v1141 = vsel %vm936, %v1138, 0
        %v1143 = vsel %vm936, %v1140, 0
        %1145 = vmatpush.xpose.msra.mxu0 0.0
        %1146 = vmatpush.xpose.msra.mxu0 0.0
        %1147 = vmatpush.xpose.msra.mxu0 0.0
        %1148 = vmatpush.xpose.msra.mxu0 0.0
        %1149 = vmatpush.xpose.msra.mxu0 0.0
        %1150 = vmatpush.xpose.msra.mxu0 0.0
        %1151 = vmatpush.xpose.msra.mxu0 0.0
        %1152 = vmatpush.xpose.msra.mxu0 0.0
        %1153 = vmatpush.xpose.msra.mxu0 0.0
        %1154 = vmatpush.xpose.msra.mxu0 0.0
        %1155 = vmatpush.xpose.msra.mxu0 0.0
        %1156 = vmatpush.xpose.msra.mxu0 0.0
        %1157 = vmatpush.xpose.msra.mxu0 0.0
        %1158 = vmatpush.xpose.msra.mxu0 0.0
        %1159 = vmatpush.xpose.msra.mxu0 0.0
        %1160 = vmatpush.xpose.msra.mxu0 %v1143
        %1161 = vmatmul.f32.gmra.mxu0 %v1141
        %v1162 = vpop.f32.mrf.mxu0
        %v1163 = vadd.f32 0.0, %v1162
        %1164 = vdwg.mxu0
        %v1165 = vmul.f32 %v1163, 0.5
        %v1166 = vsel %vm962, %v1165, -inf
        %1167 = vmax.xlane.f32.xlu0 %v1166
        %v1168 = vpop.xlane.xlu0 %1167
        %v1169 = vsub.f32 %v1165, %v1168
        %v1170 = vmul.f32 %v1169, 1.442695
        %v1171 = vpow.pop %v1170
        %v1172 = vsel %vm962, %v1171, 0.0
        %1173 = vadd.xlane.f32.xlu0 %v1172
        %v1174 = vpop.xlane.xlu0 %1173
        %v1175 = vrcp.pop %v1174
        %v1176 = vmul.f32 %v1171, %v1175
        %1177 = vrot.lane.b32.xlu0 %v931, 52
        %v1178 = vpop.permute.xlu0 %1177
        %v1180 = vsel %vm976, %v1176, 0
        %v1182 = vsel %vm980, %v1178, 0
        %1184 = vmatpush.msra.mxu0 0.0
        %1185 = vmatpush.msra.mxu0 0.0
        %1186 = vmatpush.msra.mxu0 0.0
        %1187 = vmatpush.msra.mxu0 0.0
        %1188 = vmatpush.msra.mxu0 0.0
        %1189 = vmatpush.msra.mxu0 0.0
        %1190 = vmatpush.msra.mxu0 0.0
        %1191 = vmatpush.msra.mxu0 0.0
        %1192 = vmatpush.msra.mxu0 0.0
        %1193 = vmatpush.msra.mxu0 0.0
        %1194 = vmatpush.msra.mxu0 0.0
        %1195 = vmatpush.msra.mxu0 0.0
        %1196 = vmatpush.msra.mxu0 0.0
        %1197 = vmatpush.msra.mxu0 0.0
        %1198 = vmatpush.msra.mxu0 0.0
        %1199 = vmatpush.msra.mxu0 %v1182
        %1200 = vmatmul.f32.gmra.mxu0 %v1180
        %v1201 = vpop.f32.mrf.mxu0
        %v1202 = vadd.f32 0.0, %v1201
        %1203 = vdwg.mxu0
        %1204 = vrot.lane.b32.xlu0 %v931, 112
        %v1205 = vpop.permute.xlu0 %1204
        %1206 = vrot.lane.b32.xlu0 %v931, 80
        %v1207 = vpop.permute.xlu0 %1206
        %v1208 = vsel %vm936, %v1205, 0
        %v1210 = vsel %vm936, %v1207, 0
        %1212 = vmatpush.xpose.msra.mxu0 0.0
        %1213 = vmatpush.xpose.msra.mxu0 0.0
        %1214 = vmatpush.xpose.msra.mxu0 0.0
        %1215 = vmatpush.xpose.msra.mxu0 0.0
        %1216 = vmatpush.xpose.msra.mxu0 0.0
        %1217 = vmatpush.xpose.msra.mxu0 0.0
        %1218 = vmatpush.xpose.msra.mxu0 0.0
        %1219 = vmatpush.xpose.msra.mxu0 0.0
        %1220 = vmatpush.xpose.msra.mxu0 0.0
        %1221 = vmatpush.xpose.msra.mxu0 0.0
        %1222 = vmatpush.xpose.msra.mxu0 0.0
        %1223 = vmatpush.xpose.msra.mxu0 0.0
        %1224 = vmatpush.xpose.msra.mxu0 0.0
        %1225 = vmatpush.xpose.msra.mxu0 0.0
        %1226 = vmatpush.xpose.msra.mxu0 0.0
        %1227 = vmatpush.xpose.msra.mxu0 %v1210
        %1228 = vmatmul.f32.gmra.mxu0 %v1208
        %v1229 = vpop.f32.mrf.mxu0
        %v1230 = vadd.f32 0.0, %v1229
        %1231 = vdwg.mxu0
        %v1232 = vmul.f32 %v1230, 0.5
        %v1233 = vsel %vm962, %v1232, -inf
        %1234 = vmax.xlane.f32.xlu0 %v1233
        %v1235 = vpop.xlane.xlu0 %1234
        %v1236 = vsub.f32 %v1232, %v1235
        %v1237 = vmul.f32 %v1236, 1.442695
        %v1238 = vpow.pop %v1237
        %v1239 = vsel %vm962, %v1238, 0.0
        %1240 = vadd.xlane.f32.xlu0 %v1239
        %v1241 = vpop.xlane.xlu0 %1240
        %v1242 = vrcp.pop %v1241
        %v1243 = vmul.f32 %v1238, %v1242
        %1244 = vrot.lane.b32.xlu0 %v931, 48
        %v1245 = vpop.permute.xlu0 %1244
        %v1247 = vsel %vm976, %v1243, 0
        %v1249 = vsel %vm980, %v1245, 0
        %1251 = vmatpush.msra.mxu0 0.0
        %1252 = vmatpush.msra.mxu0 0.0
        %1253 = vmatpush.msra.mxu0 0.0
        %1254 = vmatpush.msra.mxu0 0.0
        %1255 = vmatpush.msra.mxu0 0.0
        %1256 = vmatpush.msra.mxu0 0.0
        %1257 = vmatpush.msra.mxu0 0.0
        %1258 = vmatpush.msra.mxu0 0.0
        %1259 = vmatpush.msra.mxu0 0.0
        %1260 = vmatpush.msra.mxu0 0.0
        %1261 = vmatpush.msra.mxu0 0.0
        %1262 = vmatpush.msra.mxu0 0.0
        %1263 = vmatpush.msra.mxu0 0.0
        %1264 = vmatpush.msra.mxu0 0.0
        %1265 = vmatpush.msra.mxu0 0.0
        %1266 = vmatpush.msra.mxu0 %v1249
        %1267 = vmatmul.f32.gmra.mxu0 %v1247
        %v1268 = vpop.f32.mrf.mxu0
        %v1269 = vadd.f32 0.0, %v1268
        %1270 = vdwg.mxu0
        %1271 = vrot.lane.b32.xlu0 %v931, 108
        %v1272 = vpop.permute.xlu0 %1271
        %1273 = vrot.lane.b32.xlu0 %v931, 76
        %v1274 = vpop.permute.xlu0 %1273
        %v1275 = vsel %vm936, %v1272, 0
        %v1277 = vsel %vm936, %v1274, 0
        %1279 = vmatpush.xpose.msra.mxu0 0.0
        %1280 = vmatpush.xpose.msra.mxu0 0.0
        %1281 = vmatpush.xpose.msra.mxu0 0.0
        %1282 = vmatpush.xpose.msra.mxu0 0.0
        %1283 = vmatpush.xpose.msra.mxu0 0.0
        %1284 = vmatpush.xpose.msra.mxu0 0.0
        %1285 = vmatpush.xpose.msra.mxu0 0.0
        %1286 = vmatpush.xpose.msra.mxu0 0.0
        %1287 = vmatpush.xpose.msra.mxu0 0.0
        %1288 = vmatpush.xpose.msra.mxu0 0.0
        %1289 = vmatpush.xpose.msra.mxu0 0.0
        %1290 = vmatpush.xpose.msra.mxu0 0.0
        %1291 = vmatpush.xpose.msra.mxu0 0.0
        %1292 = vmatpush.xpose.msra.mxu0 0.0
        %1293 = vmatpush.xpose.msra.mxu0 0.0
        %1294 = vmatpush.xpose.msra.mxu0 %v1277
        %1295 = vmatmul.f32.gmra.mxu0 %v1275
        %v1296 = vpop.f32.mrf.mxu0
        %v1297 = vadd.f32 0.0, %v1296
        %1298 = vdwg.mxu0
        %v1299 = vmul.f32 %v1297, 0.5
        %v1300 = vsel %vm962, %v1299, -inf
        %1301 = vmax.xlane.f32.xlu0 %v1300
        %v1302 = vpop.xlane.xlu0 %1301
        %v1303 = vsub.f32 %v1299, %v1302
        %v1304 = vmul.f32 %v1303, 1.442695
        %v1305 = vpow.pop %v1304
        %v1306 = vsel %vm962, %v1305, 0.0
        %1307 = vadd.xlane.f32.xlu0 %v1306
        %v1308 = vpop.xlane.xlu0 %1307
        %v1309 = vrcp.pop %v1308
        %v1310 = vmul.f32 %v1305, %v1309
        %1311 = vrot.lane.b32.xlu0 %v931, 44
        %v1312 = vpop.permute.xlu0 %1311
        %v1314 = vsel %vm976, %v1310, 0
        %v1316 = vsel %vm980, %v1312, 0
        %1318 = vmatpush.msra.mxu0 0.0
        %1319 = vmatpush.msra.mxu0 0.0
        %1320 = vmatpush.msra.mxu0 0.0
        %1321 = vmatpush.msra.mxu0 0.0
        %1322 = vmatpush.msra.mxu0 0.0
        %1323 = vmatpush.msra.mxu0 0.0
        %1324 = vmatpush.msra.mxu0 0.0
        %1325 = vmatpush.msra.mxu0 0.0
        %1326 = vmatpush.msra.mxu0 0.0
        %1327 = vmatpush.msra.mxu0 0.0
        %1328 = vmatpush.msra.mxu0 0.0
        %1329 = vmatpush.msra.mxu0 0.0
        %1330 = vmatpush.msra.mxu0 0.0
        %1331 = vmatpush.msra.mxu0 0.0
        %1332 = vmatpush.msra.mxu0 0.0
        %1333 = vmatpush.msra.mxu0 %v1316
        %1334 = vmatmul.f32.gmra.mxu0 %v1314
        %v1335 = vpop.f32.mrf.mxu0
        %v1336 = vadd.f32 0.0, %v1335
        %1337 = vdwg.mxu0
        %1338 = vrot.lane.b32.xlu0 %v931, 104
        %v1339 = vpop.permute.xlu0 %1338
        %1340 = vrot.lane.b32.xlu0 %v931, 72
        %v1341 = vpop.permute.xlu0 %1340
        %v1342 = vsel %vm936, %v1339, 0
        %v1344 = vsel %vm936, %v1341, 0
        %1346 = vmatpush.xpose.msra.mxu0 0.0
        %1347 = vmatpush.xpose.msra.mxu0 0.0
        %1348 = vmatpush.xpose.msra.mxu0 0.0
        %1349 = vmatpush.xpose.msra.mxu0 0.0
        %1350 = vmatpush.xpose.msra.mxu0 0.0
        %1351 = vmatpush.xpose.msra.mxu0 0.0
        %1352 = vmatpush.xpose.msra.mxu0 0.0
        %1353 = vmatpush.xpose.msra.mxu0 0.0
        %1354 = vmatpush.xpose.msra.mxu0 0.0
        %1355 = vmatpush.xpose.msra.mxu0 0.0
        %1356 = vmatpush.xpose.msra.mxu0 0.0
        %1357 = vmatpush.xpose.msra.mxu0 0.0
        %1358 = vmatpush.xpose.msra.mxu0 0.0
        %1359 = vmatpush.xpose.msra.mxu0 0.0
        %1360 = vmatpush.xpose.msra.mxu0 0.0
        %1361 = vmatpush.xpose.msra.mxu0 %v1344
        %1362 = vmatmul.f32.gmra.mxu0 %v1342
        %v1363 = vpop.f32.mrf.mxu0
        %v1364 = vadd.f32 0.0, %v1363
        %1365 = vdwg.mxu0
        %v1366 = vmul.f32 %v1364, 0.5
        %v1367 = vsel %vm962, %v1366, -inf
        %1368 = vmax.xlane.f32.xlu0 %v1367
        %v1369 = vpop.xlane.xlu0 %1368
        %v1370 = vsub.f32 %v1366, %v1369
        %v1371 = vmul.f32 %v1370, 1.442695
        %v1372 = vpow.pop %v1371
        %v1373 = vsel %vm962, %v1372, 0.0
        %1374 = vadd.xlane.f32.xlu0 %v1373
        %v1375 = vpop.xlane.xlu0 %1374
        %v1376 = vrcp.pop %v1375
        %v1377 = vmul.f32 %v1372, %v1376
        %1378 = vrot.lane.b32.xlu0 %v931, 40
        %v1379 = vpop.permute.xlu0 %1378
        %v1381 = vsel %vm976, %v1377, 0
        %v1383 = vsel %vm980, %v1379, 0
        %1385 = vmatpush.msra.mxu0 0.0
        %1386 = vmatpush.msra.mxu0 0.0
        %1387 = vmatpush.msra.mxu0 0.0
        %1388 = vmatpush.msra.mxu0 0.0
        %1389 = vmatpush.msra.mxu0 0.0
        %1390 = vmatpush.msra.mxu0 0.0
        %1391 = vmatpush.msra.mxu0 0.0
        %1392 = vmatpush.msra.mxu0 0.0
        %1393 = vmatpush.msra.mxu0 0.0
        %1394 = vmatpush.msra.mxu0 0.0
        %1395 = vmatpush.msra.mxu0 0.0
        %1396 = vmatpush.msra.mxu0 0.0
        %1397 = vmatpush.msra.mxu0 0.0
        %1398 = vmatpush.msra.mxu0 0.0
        %1399 = vmatpush.msra.mxu0 0.0
        %1400 = vmatpush.msra.mxu0 %v1383
        %1401 = vmatmul.f32.gmra.mxu0 %v1381
        %v1402 = vpop.f32.mrf.mxu0
        %v1403 = vadd.f32 0.0, %v1402
        %1404 = vdwg.mxu0
        %1405 = vrot.lane.b32.xlu0 %v931, 100
        %v1406 = vpop.permute.xlu0 %1405
        %1407 = vrot.lane.b32.xlu0 %v931, 68
        %v1408 = vpop.permute.xlu0 %1407
        %v1409 = vsel %vm936, %v1406, 0
        %v1411 = vsel %vm936, %v1408, 0
        %1413 = vmatpush.xpose.msra.mxu0 0.0
        %1414 = vmatpush.xpose.msra.mxu0 0.0
        %1415 = vmatpush.xpose.msra.mxu0 0.0
        %1416 = vmatpush.xpose.msra.mxu0 0.0
        %1417 = vmatpush.xpose.msra.mxu0 0.0
        %1418 = vmatpush.xpose.msra.mxu0 0.0
        %1419 = vmatpush.xpose.msra.mxu0 0.0
        %1420 = vmatpush.xpose.msra.mxu0 0.0
        %1421 = vmatpush.xpose.msra.mxu0 0.0
        %1422 = vmatpush.xpose.msra.mxu0 0.0
        %1423 = vmatpush.xpose.msra.mxu0 0.0
        %1424 = vmatpush.xpose.msra.mxu0 0.0
        %1425 = vmatpush.xpose.msra.mxu0 0.0
        %1426 = vmatpush.xpose.msra.mxu0 0.0
        %1427 = vmatpush.xpose.msra.mxu0 0.0
        %1428 = vmatpush.xpose.msra.mxu0 %v1411
        %1429 = vmatmul.f32.gmra.mxu0 %v1409
        %v1430 = vpop.f32.mrf.mxu0
        %v1431 = vadd.f32 0.0, %v1430
        %1432 = vdwg.mxu0
        %v1433 = vmul.f32 %v1431, 0.5
        %v1434 = vsel %vm962, %v1433, -inf
        %1435 = vmax.xlane.f32.xlu0 %v1434
        %v1436 = vpop.xlane.xlu0 %1435
        %v1437 = vsub.f32 %v1433, %v1436
        %v1438 = vmul.f32 %v1437, 1.442695
        %v1439 = vpow.pop %v1438
        %v1440 = vsel %vm962, %v1439, 0.0
        %1441 = vadd.xlane.f32.xlu0 %v1440
        %v1442 = vpop.xlane.xlu0 %1441
        %v1443 = vrcp.pop %v1442
        %v1444 = vmul.f32 %v1439, %v1443
        %1445 = vrot.lane.b32.xlu0 %v931, 36
        %v1446 = vpop.permute.xlu0 %1445
        %v1448 = vsel %vm976, %v1444, 0
        %v1450 = vsel %vm980, %v1446, 0
        %1452 = vmatpush.msra.mxu0 0.0
        %1453 = vmatpush.msra.mxu0 0.0
        %1454 = vmatpush.msra.mxu0 0.0
        %1455 = vmatpush.msra.mxu0 0.0
        %1456 = vmatpush.msra.mxu0 0.0
        %1457 = vmatpush.msra.mxu0 0.0
        %1458 = vmatpush.msra.mxu0 0.0
        %1459 = vmatpush.msra.mxu0 0.0
        %1460 = vmatpush.msra.mxu0 0.0
        %1461 = vmatpush.msra.mxu0 0.0
        %1462 = vmatpush.msra.mxu0 0.0
        %1463 = vmatpush.msra.mxu0 0.0
        %1464 = vmatpush.msra.mxu0 0.0
        %1465 = vmatpush.msra.mxu0 0.0
        %1466 = vmatpush.msra.mxu0 0.0
        %1467 = vmatpush.msra.mxu0 %v1450
        %1468 = vmatmul.f32.gmra.mxu0 %v1448
        %v1469 = vpop.f32.mrf.mxu0
        %v1470 = vadd.f32 0.0, %v1469
        %1471 = vdwg.mxu0
        %1473 = vrot.lane.b32.xlu0 %v1068, 4
        %v1474 = vpop.permute.xlu0 %1473
        %1477 = vrot.lane.b32.xlu0 %v1135, 8
        %v1478 = vpop.permute.xlu0 %1477
        %1481 = vrot.lane.b32.xlu0 %v1202, 12
        %v1482 = vpop.permute.xlu0 %1481
        %1485 = vrot.lane.b32.xlu0 %v1269, 16
        %v1486 = vpop.permute.xlu0 %1485
        %1489 = vrot.lane.b32.xlu0 %v1336, 20
        %v1490 = vpop.permute.xlu0 %1489
        %1493 = vrot.lane.b32.xlu0 %v1403, 24
        %v1494 = vpop.permute.xlu0 %1493
        %1497 = vrot.lane.b32.xlu0 %v1470, 28
        %v1498 = vpop.permute.xlu0 %1497
        %v1500 = vsel %vm936, %v1001, %v1474
        %vm1501 = vcmask 64512
        %v1502 = vsel %vm1501, %v1500, %v1478
        %vm1503 = vcmask 97280
        %v1504 = vsel %vm1503, %v1502, %v1482
        %vm1505 = vcmask 130048
        %v1506 = vsel %vm1505, %v1504, %v1486
        %vm1507 = vcmask 162816
        %v1508 = vsel %vm1507, %v1506, %v1490
        %vm1509 = vcmask 195584
        %v1510 = vsel %vm1509, %v1508, %v1494
        %vm1511 = vcmask 228352
        %v1512 = vsel %vm1511, %v1510, %v1498
        %v1513 = vld [vmem:[%s5] sm:$0xff]
        %v1514 = vld [vmem:[%s5 + $0x8] sm:$0xff]
        %v1515 = vld [vmem:[%s5 + $0x10] sm:$0xff]
        %v1516 = vld [vmem:[%s5 + $0x18] sm:$0xff]
        %v1517 = vld [vmem:[%s6] sm:$0x1]
        %v1519 = vperm.slane %v1517, 0
        %v1522 = vsel %vm595, %v1512, 0
        %1524 = vmatpush.msra.mxu0 0.0
        %1525 = vmatpush.msra.mxu0 0.0
        %1526 = vmatpush.msra.mxu0 0.0
        %1527 = vmatpush.msra.mxu0 0.0
        %1528 = vmatpush.msra.mxu0 0.0
        %1529 = vmatpush.msra.mxu0 0.0
        %1530 = vmatpush.msra.mxu0 0.0
        %1531 = vmatpush.msra.mxu0 0.0
        %1532 = vmatpush.msra.mxu0 0.0
        %1533 = vmatpush.msra.mxu0 0.0
        %1534 = vmatpush.msra.mxu0 0.0
        %1535 = vmatpush.msra.mxu0 0.0
        %1536 = vmatpush.msra.mxu0 %v1516
        %1537 = vmatpush.msra.mxu0 %v1515
        %1538 = vmatpush.msra.mxu0 %v1514
        %1539 = vmatpush.msra.mxu0 %v1513
        %1540 = vmatmul.f32.gmra.mxu0 %v1522
        %v1541 = vpop.f32.mrf.mxu0
        %v1542 = vadd.f32 %v1519, %v1541
        %1543 = vdwg.mxu0
        %v1544 = vadd.f32 %v901, %v1542
        %v1545 = vld [vmem:[%s11] sm:$0x1]
        %v1546 = vld [vmem:[%s12] sm:$0x1]
        %v1547 = vsel %vm705, %v1544, 0.0
        %1548 = vadd.xlane.f32.xlu0 %v1547
        %v1549 = vpop.xlane.xlu0 %1548
        %v1550 = vrcp.pop 32.0
        %v1551 = vmul.f32 32.0, %v1550
        %v1552 = vsub.f32 1.0, %v1551
        %v1553 = vmul.f32 %v1550, %v1552
        %v1554 = vadd.f32 %v1550, %v1553
        %vm1555 = vweird.f32 %v1550
        %v1556 = vsel %vm1555, %v1550, %v1554
        %v1557 = vmul.f32 %v1549, %v1556
        %v1558 = vsub.f32 %v1544, %v1557
        %v1559 = vmul.f32 %v1558, %v1558
        %v1560 = vsel %vm705, %v1559, 0.0
        %1561 = vadd.xlane.f32.xlu0 %v1560
        %v1562 = vpop.xlane.xlu0 %1561
        %v1563 = vmul.f32 %v1562, %v1556
        %v1564 = vadd.f32 %v1563, 1e-05
        %v1565 = vrsqrt.pop %v1564
        %v1566 = vmul.f32 %v1565, %v1564
        %v1567 = vmul.f32 %v1566, %v1565
        %v1568 = vmul.f32 0.5, %v1567
        %v1569 = vsub.f32 1.5, %v1568
        %v1570 = vmul.f32 %v1565, %v1569
        %vm1571 = vweird.f32 %v1564
        %vm1572 = vweird.f32 %v1565
        %vm1573 = vmor %vm1571, %vm1572
        %v1574 = vsel %vm1573, %v1565, %v1570
        %v1575 = vmul.f32 %v1558, %v1574
        %v1577 = vperm.slane %v1545, 0
        %v1579 = vmul.f32 %v1575, %v1577
        %v1581 = vperm.slane %v1546, 0
        %v1583 = vadd.f32 %v1579, %v1581
        %v1584 = vld [vmem:[%s7] sm:$0xff]
        %v1585 = vld [vmem:[%s7 + $0x8] sm:$0xff]
        %v1586 = vld [vmem:[%s7 + $0x10] sm:$0xff]
        %v1587 = vld [vmem:[%s7 + $0x18] sm:$0xff]
        %v1588 = vld [vmem:[%s8] sm:$0x1]
        %v1590 = vperm.slane %v1588, 0
        %v1593 = vsel %vm595, %v1583, 0
        %1595 = vmatpush.msra.mxu0 0.0
        %1596 = vmatpush.msra.mxu0 0.0
        %1597 = vmatpush.msra.mxu0 0.0
        %1598 = vmatpush.msra.mxu0 0.0
        %1599 = vmatpush.msra.mxu0 0.0
        %1600 = vmatpush.msra.mxu0 0.0
        %1601 = vmatpush.msra.mxu0 0.0
        %1602 = vmatpush.msra.mxu0 0.0
        %1603 = vmatpush.msra.mxu0 0.0
        %1604 = vmatpush.msra.mxu0 0.0
        %1605 = vmatpush.msra.mxu0 0.0
        %1606 = vmatpush.msra.mxu0 0.0
        %1607 = vmatpush.msra.mxu0 %v1587
        %1608 = vmatpush.msra.mxu0 %v1586
        %1609 = vmatpush.msra.mxu0 %v1585
        %1610 = vmatpush.msra.mxu0 %v1584
        %1611 = vmatmul.f32.gmra.mxu0 %v1593
        %v1612 = vpop.f32.mrf.mxu0
        %v1613 = vadd.f32 %v1590, %v1612
        %1614 = vdwg.mxu0
        %v1615 = vmax.f32 %v1613, 0.0
        %v1616 = vld [vmem:[%s9] sm:$0xff]
        %v1617 = vld [vmem:[%s9 + $0x8] sm:$0xff]
        %v1618 = vld [vmem:[%s9 + $0x10] sm:$0xff]
        %v1619 = vld [vmem:[%s9 + $0x18] sm:$0xff]
        %v1620 = vld [vmem:[%s9 + $0x20] sm:$0xff]
        %v1621 = vld [vmem:[%s9 + $0x28] sm:$0xff]
        %v1622 = vld [vmem:[%s9 + $0x30] sm:$0xff]
        %v1623 = vld [vmem:[%s9 + $0x38] sm:$0xff]
        %v1624 = vld [vmem:[%s9 + $0x40] sm:$0xff]
        %v1625 = vld [vmem:[%s9 + $0x48] sm:$0xff]
        %v1626 = vld [vmem:[%s9 + $0x50] sm:$0xff]
        %v1627 = vld [vmem:[%s9 + $0x58] sm:$0xff]
        %v1628 = vld [vmem:[%s9 + $0x60] sm:$0xff]
        %v1629 = vld [vmem:[%s9 + $0x68] sm:$0xff]
        %v1630 = vld [vmem:[%s9 + $0x70] sm:$0xff]
        %v1631 = vld [vmem:[%s9 + $0x78] sm:$0xff]
        %v1632 = vld [vmem:[%s10] sm:$0x1]
        %v1634 = vperm.slane %v1632, 0
        %1636 = vmatpush.msra.mxu0 %v1631
        %1637 = vmatpush.msra.mxu0 %v1630
        %1638 = vmatpush.msra.mxu0 %v1629
        %1639 = vmatpush.msra.mxu0 %v1628
        %1640 = vmatpush.msra.mxu0 %v1627
        %1641 = vmatpush.msra.mxu0 %v1626
        %1642 = vmatpush.msra.mxu0 %v1625
        %1643 = vmatpush.msra.mxu0 %v1624
        %1644 = vmatpush.msra.mxu0 %v1623
        %1645 = vmatpush.msra.mxu0 %v1622
        %1646 = vmatpush.msra.mxu0 %v1621
        %1647 = vmatpush.msra.mxu0 %v1620
        %1648 = vmatpush.msra.mxu0 %v1619
        %1649 = vmatpush.msra.mxu0 %v1618
        %1650 = vmatpush.msra.mxu0 %v1617
        %1651 = vmatpush.msra.mxu0 %v1616
        %1652 = vmatmul.f32.gmra.mxu0 %v1615
        %v1653 = vpop.f32.mrf.mxu0
        %v1654 = vadd.f32 %v1634, %v1653
        %1655 = vdwg.mxu0
        %v1656 = vadd.f32 %v1583, %v1654
        %v1657 = vld [vmem:[%s13] sm:$0x1]
        %v1658 = vld [vmem:[%s14] sm:$0x1]
        %v1659 = vsel %vm705, %v1656, 0.0
        %1660 = vadd.xlane.f32.xlu0 %v1659
        %v1661 = vpop.xlane.xlu0 %1660
        %v1662 = vmul.f32 %v1661, %v1556
        %v1663 = vsub.f32 %v1656, %v1662
        %v1664 = vmul.f32 %v1663, %v1663
        %v1665 = vsel %vm705, %v1664, 0.0
        %1666 = vadd.xlane.f32.xlu0 %v1665
        %v1667 = vpop.xlane.xlu0 %1666
        %v1668 = vmul.f32 %v1667, %v1556
        %v1669 = vadd.f32 %v1668, 1e-05
        %v1670 = vrsqrt.pop %v1669
        %v1671 = vmul.f32 %v1670, %v1669
        %v1672 = vmul.f32 %v1671, %v1670
        %v1673 = vmul.f32 0.5, %v1672
        %v1674 = vsub.f32 1.5, %v1673
        %v1675 = vmul.f32 %v1670, %v1674
        %vm1676 = vweird.f32 %v1669
        %vm1677 = vweird.f32 %v1670
        %vm1678 = vmor %vm1676, %vm1677
        %v1679 = vsel %vm1678, %v1670, %v1675
        %v1680 = vmul.f32 %v1663, %v1679
        %v1682 = vperm.slane %v1657, 0
        %v1684 = vmul.f32 %v1680, %v1682
        %v1686 = vperm.slane %v1658, 0
        %v1688 = vadd.f32 %v1684, %v1686
        %s1689 = scalar_lea.vmem %s3, 32
        %v1690 = vld [vmem:[%s1689] sm:$0xff]
        %v1691 = vld [vmem:[%s1689 + $0x8] sm:$0xff]
        %v1692 = vld [vmem:[%s1689 + $0x10] sm:$0xff]
        %v1693 = vld [vmem:[%s1689 + $0x18] sm:$0xff]
        %s1694 = scalar_lea.vmem %s4, 1
        %v1695 = vld [vmem:[%s1694] sm:$0x1]
        %v1697 = vperm.slane %v1695, 0
        %v1700 = vsel %vm595, %v1688, 0
        %1702 = vmatpush.msra.mxu0 0.0
        %1703 = vmatpush.msra.mxu0 0.0
        %1704 = vmatpush.msra.mxu0 0.0
        %1705 = vmatpush.msra.mxu0 0.0
        %1706 = vmatpush.msra.mxu0 0.0
        %1707 = vmatpush.msra.mxu0 0.0
        %1708 = vmatpush.msra.mxu0 0.0
        %1709 = vmatpush.msra.mxu0 0.0
        %1710 = vmatpush.msra.mxu0 0.0
        %1711 = vmatpush.msra.mxu0 0.0
        %1712 = vmatpush.msra.mxu0 0.0
        %1713 = vmatpush.msra.mxu0 0.0
        %1714 = vmatpush.msra.mxu0 %v1693
        %1715 = vmatpush.msra.mxu0 %v1692
        %1716 = vmatpush.msra.mxu0 %v1691
        %1717 = vmatpush.msra.mxu0 %v1690
        %1718 = vmatmul.f32.gmra.mxu0 %v1700
        %v1719 = vpop.f32.mrf.mxu0
        %v1720 = vadd.f32 %v1697, %v1719
        %1721 = vdwg.mxu0
        %1723 = vrot.lane.b32.xlu0 %v1720, 96
        %v1724 = vpop.permute.xlu0 %1723
        %v1725 = vsel %vm936, %v1720, 0
        %v1727 = vsel %vm936, %v1724, 0
        %1729 = vmatpush.xpose.msra.mxu0 0.0
        %1730 = vmatpush.xpose.msra.mxu0 0.0
        %1731 = vmatpush.xpose.msra.mxu0 0.0
        %1732 = vmatpush.xpose.msra.mxu0 0.0
        %1733 = vmatpush.xpose.msra.mxu0 0.0
        %1734 = vmatpush.xpose.msra.mxu0 0.0
        %1735 = vmatpush.xpose.msra.mxu0 0.0
        %1736 = vmatpush.xpose.msra.mxu0 0.0
        %1737 = vmatpush.xpose.msra.mxu0 0.0
        %1738 = vmatpush.xpose.msra.mxu0 0.0
        %1739 = vmatpush.xpose.msra.mxu0 0.0
        %1740 = vmatpush.xpose.msra.mxu0 0.0
        %1741 = vmatpush.xpose.msra.mxu0 0.0
        %1742 = vmatpush.xpose.msra.mxu0 0.0
        %1743 = vmatpush.xpose.msra.mxu0 0.0
        %1744 = vmatpush.xpose.msra.mxu0 %v1727
        %1745 = vmatmul.f32.gmra.mxu0 %v1725
        %v1746 = vpop.f32.mrf.mxu0
        %v1747 = vadd.f32 0.0, %v1746
        %1748 = vdwg.mxu0
        %v1749 = vmul.f32 %v1747, 0.5
        %v1750 = vsel %vm962, %v1749, -inf
        %1751 = vmax.xlane.f32.xlu0 %v1750
        %v1752 = vpop.xlane.xlu0 %1751
        %v1753 = vsub.f32 %v1749, %v1752
        %v1754 = vmul.f32 %v1753, 1.442695
        %v1755 = vpow.pop %v1754
        %v1756 = vsel %vm962, %v1755, 0.0
        %1757 = vadd.xlane.f32.xlu0 %v1756
        %v1758 = vpop.xlane.xlu0 %1757
        %v1759 = vrcp.pop %v1758
        %v1760 = vmul.f32 %v1755, %v1759
        %1761 = vrot.lane.b32.xlu0 %v1720, 64
        %v1762 = vpop.permute.xlu0 %1761
        %v1764 = vsel %vm976, %v1760, 0
        %v1766 = vsel %vm980, %v1762, 0
        %1768 = vmatpush.msra.mxu0 0.0
        %1769 = vmatpush.msra.mxu0 0.0
        %1770 = vmatpush.msra.mxu0 0.0
        %1771 = vmatpush.msra.mxu0 0.0
        %1772 = vmatpush.msra.mxu0 0.0
        %1773 = vmatpush.msra.mxu0 0.0
        %1774 = vmatpush.msra.mxu0 0.0
        %1775 = vmatpush.msra.mxu0 0.0
        %1776 = vmatpush.msra.mxu0 0.0
        %1777 = vmatpush.msra.mxu0 0.0
        %1778 = vmatpush.msra.mxu0 0.0
        %1779 = vmatpush.msra.mxu0 0.0
        %1780 = vmatpush.msra.mxu0 0.0
        %1781 = vmatpush.msra.mxu0 0.0
        %1782 = vmatpush.msra.mxu0 0.0
        %1783 = vmatpush.msra.mxu0 %v1766
        %1784 = vmatmul.f32.gmra.mxu0 %v1764
        %v1785 = vpop.f32.mrf.mxu0
        %v1786 = vadd.f32 0.0, %v1785
        %1787 = vdwg.mxu0
        %1788 = vrot.lane.b32.xlu0 %v1720, 124
        %v1789 = vpop.permute.xlu0 %1788
        %1790 = vrot.lane.b32.xlu0 %v1720, 92
        %v1791 = vpop.permute.xlu0 %1790
        %v1792 = vsel %vm936, %v1789, 0
        %v1794 = vsel %vm936, %v1791, 0
        %1796 = vmatpush.xpose.msra.mxu0 0.0
        %1797 = vmatpush.xpose.msra.mxu0 0.0
        %1798 = vmatpush.xpose.msra.mxu0 0.0
        %1799 = vmatpush.xpose.msra.mxu0 0.0
        %1800 = vmatpush.xpose.msra.mxu0 0.0
        %1801 = vmatpush.xpose.msra.mxu0 0.0
        %1802 = vmatpush.xpose.msra.mxu0 0.0
        %1803 = vmatpush.xpose.msra.mxu0 0.0
        %1804 = vmatpush.xpose.msra.mxu0 0.0
        %1805 = vmatpush.xpose.msra.mxu0 0.0
        %1806 = vmatpush.xpose.msra.mxu0 0.0
        %1807 = vmatpush.xpose.msra.mxu0 0.0
        %1808 = vmatpush.xpose.msra.mxu0 0.0
        %1809 = vmatpush.xpose.msra.mxu0 0.0
        %1810 = vmatpush.xpose.msra.mxu0 0.0
        %1811 = vmatpush.xpose.msra.mxu0 %v1794
        %1812 = vmatmul.f32.gmra.mxu0 %v1792
        %v1813 = vpop.f32.mrf.mxu0
        %v1814 = vadd.f32 0.0, %v1813
        %1815 = vdwg.mxu0
        %v1816 = vmul.f32 %v1814, 0.5
        %v1817 = vsel %vm962, %v1816, -inf
        %1818 = vmax.xlane.f32.xlu0 %v1817
        %v1819 = vpop.xlane.xlu0 %1818
        %v1820 = vsub.f32 %v1816, %v1819
        %v1821 = vmul.f32 %v1820, 1.442695
        %v1822 = vpow.pop %v1821
        %v1823 = vsel %vm962, %v1822, 0.0
        %1824 = vadd.xlane.f32.xlu0 %v1823
        %v1825 = vpop.xlane.xlu0 %1824
        %v1826 = vrcp.pop %v1825
        %v1827 = vmul.f32 %v1822, %v1826
        %1828 = vrot.lane.b32.xlu0 %v1720, 60
        %v1829 = vpop.permute.xlu0 %1828
        %v1831 = vsel %vm976, %v1827, 0
        %v1833 = vsel %vm980, %v1829, 0
        %1835 = vmatpush.msra.mxu0 0.0
        %1836 = vmatpush.msra.mxu0 0.0
        %1837 = vmatpush.msra.mxu0 0.0
        %1838 = vmatpush.msra.mxu0 0.0
        %1839 = vmatpush.msra.mxu0 0.0
        %1840 = vmatpush.msra.mxu0 0.0
        %1841 = vmatpush.msra.mxu0 0.0
        %1842 = vmatpush.msra.mxu0 0.0
        %1843 = vmatpush.msra.mxu0 0.0
        %1844 = vmatpush.msra.mxu0 0.0
        %1845 = vmatpush.msra.mxu0 0.0
        %1846 = vmatpush.msra.mxu0 0.0
        %1847 = vmatpush.msra.mxu0 0.0
        %1848 = vmatpush.msra.mxu0 0.0
        %1849 = vmatpush.msra.mxu0 0.0
        %1850 = vmatpush.msra.mxu0 %v1833
        %1851 = vmatmul.f32.gmra.mxu0 %v1831
        %v1852 = vpop.f32.mrf.mxu0
        %v1853 = vadd.f32 0.0, %v1852
        %1854 = vdwg.mxu0
        %1855 = vrot.lane.b32.xlu0 %v1720, 120
        %v1856 = vpop.permute.xlu0 %1855
        %1857 = vrot.lane.b32.xlu0 %v1720, 88
        %v1858 = vpop.permute.xlu0 %1857
        %v1859 = vsel %vm936, %v1856, 0
        %v1861 = vsel %vm936, %v1858, 0
        %1863 = vmatpush.xpose.msra.mxu0 0.0
        %1864 = vmatpush.xpose.msra.mxu0 0.0
        %1865 = vmatpush.xpose.msra.mxu0 0.0
        %1866 = vmatpush.xpose.msra.mxu0 0.0
        %1867 = vmatpush.xpose.msra.mxu0 0.0
        %1868 = vmatpush.xpose.msra.mxu0 0.0
        %1869 = vmatpush.xpose.msra.mxu0 0.0
        %1870 = vmatpush.xpose.msra.mxu0 0.0
        %1871 = vmatpush.xpose.msra.mxu0 0.0
        %1872 = vmatpush.xpose.msra.mxu0 0.0
        %1873 = vmatpush.xpose.msra.mxu0 0.0
        %1874 = vmatpush.xpose.msra.mxu0 0.0
        %1875 = vmatpush.xpose.msra.mxu0 0.0
        %1876 = vmatpush.xpose.msra.mxu0 0.0
        %1877 = vmatpush.xpose.msra.mxu0 0.0
        %1878 = vmatpush.xpose.msra.mxu0 %v1861
        %1879 = vmatmul.f32.gmra.mxu0 %v1859
        %v1880 = vpop.f32.mrf.mxu0
        %v1881 = vadd.f32 0.0, %v1880
        %1882 = vdwg.mxu0
        %v1883 = vmul.f32 %v1881, 0.5
        %v1884 = vsel %vm962, %v1883, -inf
        %1885 = vmax.xlane.f32.xlu0 %v1884
        %v1886 = vpop.xlane.xlu0 %1885
        %v1887 = vsub.f32 %v1883, %v1886
        %v1888 = vmul.f32 %v1887, 1.442695
        %v1889 = vpow.pop %v1888
        %v1890 = vsel %vm962, %v1889, 0.0
        %1891 = vadd.xlane.f32.xlu0 %v1890
        %v1892 = vpop.xlane.xlu0 %1891
        %v1893 = vrcp.pop %v1892
        %v1894 = vmul.f32 %v1889, %v1893
        %1895 = vrot.lane.b32.xlu0 %v1720, 56
        %v1896 = vpop.permute.xlu0 %1895
        %v1898 = vsel %vm976, %v1894, 0
        %v1900 = vsel %vm980, %v1896, 0
        %1902 = vmatpush.msra.mxu0 0.0
        %1903 = vmatpush.msra.mxu0 0.0
        %1904 = vmatpush.msra.mxu0 0.0
        %1905 = vmatpush.msra.mxu0 0.0
        %1906 = vmatpush.msra.mxu0 0.0
        %1907 = vmatpush.msra.mxu0 0.0
        %1908 = vmatpush.msra.mxu0 0.0
        %1909 = vmatpush.msra.mxu0 0.0
        %1910 = vmatpush.msra.mxu0 0.0
        %1911 = vmatpush.msra.mxu0 0.0
        %1912 = vmatpush.msra.mxu0 0.0
        %1913 = vmatpush.msra.mxu0 0.0
        %1914 = vmatpush.msra.mxu0 0.0
        %1915 = vmatpush.msra.mxu0 0.0
        %1916 = vmatpush.msra.mxu0 0.0
        %1917 = vmatpush.msra.mxu0 %v1900
        %1918 = vmatmul.f32.gmra.mxu0 %v1898
        %v1919 = vpop.f32.mrf.mxu0
        %v1920 = vadd.f32 0.0, %v1919
        %1921 = vdwg.mxu0
        %1922 = vrot.lane.b32.xlu0 %v1720, 116
        %v1923 = vpop.permute.xlu0 %1922
        %1924 = vrot.lane.b32.xlu0 %v1720, 84
        %v1925 = vpop.permute.xlu0 %1924
        %v1926 = vsel %vm936, %v1923, 0
        %v1928 = vsel %vm936, %v1925, 0
        %1930 = vmatpush.xpose.msra.mxu0 0.0
        %1931 = vmatpush.xpose.msra.mxu0 0.0
        %1932 = vmatpush.xpose.msra.mxu0 0.0
        %1933 = vmatpush.xpose.msra.mxu0 0.0
        %1934 = vmatpush.xpose.msra.mxu0 0.0
        %1935 = vmatpush.xpose.msra.mxu0 0.0
        %1936 = vmatpush.xpose.msra.mxu0 0.0
        %1937 = vmatpush.xpose.msra.mxu0 0.0
        %1938 = vmatpush.xpose.msra.mxu0 0.0
        %1939 = vmatpush.xpose.msra.mxu0 0.0
        %1940 = vmatpush.xpose.msra.mxu0 0.0
        %1941 = vmatpush.xpose.msra.mxu0 0.0
        %1942 = vmatpush.xpose.msra.mxu0 0.0
        %1943 = vmatpush.xpose.msra.mxu0 0.0
        %1944 = vmatpush.xpose.msra.mxu0 0.0
        %1945 = vmatpush.xpose.msra.mxu0 %v1928
        %1946 = vmatmul.f32.gmra.mxu0 %v1926
        %v1947 = vpop.f32.mrf.mxu0
        %v1948 = vadd.f32 0.0, %v1947
        %1949 = vdwg.mxu0
        %v1950 = vmul.f32 %v1948, 0.5
        %v1951 = vsel %vm962, %v1950, -inf
        %1952 = vmax.xlane.f32.xlu0 %v1951
        %v1953 = vpop.xlane.xlu0 %1952
        %v1954 = vsub.f32 %v1950, %v1953
        %v1955 = vmul.f32 %v1954, 1.442695
        %v1956 = vpow.pop %v1955
        %v1957 = vsel %vm962, %v1956, 0.0
        %1958 = vadd.xlane.f32.xlu0 %v1957
        %v1959 = vpop.xlane.xlu0 %1958
        %v1960 = vrcp.pop %v1959
        %v1961 = vmul.f32 %v1956, %v1960
        %1962 = vrot.lane.b32.xlu0 %v1720, 52
        %v1963 = vpop.permute.xlu0 %1962
        %v1965 = vsel %vm976, %v1961, 0
        %v1967 = vsel %vm980, %v1963, 0
        %1969 = vmatpush.msra.mxu0 0.0
        %1970 = vmatpush.msra.mxu0 0.0
        %1971 = vmatpush.msra.mxu0 0.0
        %1972 = vmatpush.msra.mxu0 0.0
        %1973 = vmatpush.msra.mxu0 0.0
        %1974 = vmatpush.msra.mxu0 0.0
        %1975 = vmatpush.msra.mxu0 0.0
        %1976 = vmatpush.msra.mxu0 0.0
        %1977 = vmatpush.msra.mxu0 0.0
        %1978 = vmatpush.msra.mxu0 0.0
        %1979 = vmatpush.msra.mxu0 0.0
        %1980 = vmatpush.msra.mxu0 0.0
        %1981 = vmatpush.msra.mxu0 0.0
        %1982 = vmatpush.msra.mxu0 0.0
        %1983 = vmatpush.msra.mxu0 0.0
        %1984 = vmatpush.msra.mxu0 %v1967
        %1985 = vmatmul.f32.gmra.mxu0 %v1965
        %v1986 = vpop.f32.mrf.mxu0
        %v1987 = vadd.f32 0.0, %v1986
        %1988 = vdwg.mxu0
        %1989 = vrot.lane.b32.xlu0 %v1720, 112
        %v1990 = vpop.permute.xlu0 %1989
        %1991 = vrot.lane.b32.xlu0 %v1720, 80
        %v1992 = vpop.permute.xlu0 %1991
        %v1993 = vsel %vm936, %v1990, 0
        %v1995 = vsel %vm936, %v1992, 0
        %1997 = vmatpush.xpose.msra.mxu0 0.0
        %1998 = vmatpush.xpose.msra.mxu0 0.0
        %1999 = vmatpush.xpose.msra.mxu0 0.0
        %2000 = vmatpush.xpose.msra.mxu0 0.0
        %2001 = vmatpush.xpose.msra.mxu0 0.0
        %2002 = vmatpush.xpose.msra.mxu0 0.0
        %2003 = vmatpush.xpose.msra.mxu0 0.0
        %2004 = vmatpush.xpose.msra.mxu0 0.0
        %2005 = vmatpush.xpose.msra.mxu0 0.0
        %2006 = vmatpush.xpose.msra.mxu0 0.0
        %2007 = vmatpush.xpose.msra.mxu0 0.0
        %2008 = vmatpush.xpose.msra.mxu0 0.0
        %2009 = vmatpush.xpose.msra.mxu0 0.0
        %2010 = vmatpush.xpose.msra.mxu0 0.0
        %2011 = vmatpush.xpose.msra.mxu0 0.0
        %2012 = vmatpush.xpose.msra.mxu0 %v1995
        %2013 = vmatmul.f32.gmra.mxu0 %v1993
        %v2014 = vpop.f32.mrf.mxu0
        %v2015 = vadd.f32 0.0, %v2014
        %2016 = vdwg.mxu0
        %v2017 = vmul.f32 %v2015, 0.5
        %v2018 = vsel %vm962, %v2017, -inf
        %2019 = vmax.xlane.f32.xlu0 %v2018
        %v2020 = vpop.xlane.xlu0 %2019
        %v2021 = vsub.f32 %v2017, %v2020
        %v2022 = vmul.f32 %v2021, 1.442695
        %v2023 = vpow.pop %v2022
        %v2024 = vsel %vm962, %v2023, 0.0
        %2025 = vadd.xlane.f32.xlu0 %v2024
        %v2026 = vpop.xlane.xlu0 %2025
        %v2027 = vrcp.pop %v2026
        %v2028 = vmul.f32 %v2023, %v2027
        %2029 = vrot.lane.b32.xlu0 %v1720, 48
        %v2030 = vpop.permute.xlu0 %2029
        %v2032 = vsel %vm976, %v2028, 0
        %v2034 = vsel %vm980, %v2030, 0
        %2036 = vmatpush.msra.mxu0 0.0
        %2037 = vmatpush.msra.mxu0 0.0
        %2038 = vmatpush.msra.mxu0 0.0
        %2039 = vmatpush.msra.mxu0 0.0
        %2040 = vmatpush.msra.mxu0 0.0
        %2041 = vmatpush.msra.mxu0 0.0
        %2042 = vmatpush.msra.mxu0 0.0
        %2043 = vmatpush.msra.mxu0 0.0
        %2044 = vmatpush.msra.mxu0 0.0
        %2045 = vmatpush.msra.mxu0 0.0
        %2046 = vmatpush.msra.mxu0 0.0
        %2047 = vmatpush.msra.mxu0 0.0
        %2048 = vmatpush.msra.mxu0 0.0
        %2049 = vmatpush.msra.mxu0 0.0
        %2050 = vmatpush.msra.mxu0 0.0
        %2051 = vmatpush.msra.mxu0 %v2034
        %2052 = vmatmul.f32.gmra.mxu0 %v2032
        %v2053 = vpop.f32.mrf.mxu0
        %v2054 = vadd.f32 0.0, %v2053
        %2055 = vdwg.mxu0
        %2056 = vrot.lane.b32.xlu0 %v1720, 108
        %v2057 = vpop.permute.xlu0 %2056
        %2058 = vrot.lane.b32.xlu0 %v1720, 76
        %v2059 = vpop.permute.xlu0 %2058
        %v2060 = vsel %vm936, %v2057, 0
        %v2062 = vsel %vm936, %v2059, 0
        %2064 = vmatpush.xpose.msra.mxu0 0.0
        %2065 = vmatpush.xpose.msra.mxu0 0.0
        %2066 = vmatpush.xpose.msra.mxu0 0.0
        %2067 = vmatpush.xpose.msra.mxu0 0.0
        %2068 = vmatpush.xpose.msra.mxu0 0.0
        %2069 = vmatpush.xpose.msra.mxu0 0.0
        %2070 = vmatpush.xpose.msra.mxu0 0.0
        %2071 = vmatpush.xpose.msra.mxu0 0.0
        %2072 = vmatpush.xpose.msra.mxu0 0.0
        %2073 = vmatpush.xpose.msra.mxu0 0.0
        %2074 = vmatpush.xpose.msra.mxu0 0.0
        %2075 = vmatpush.xpose.msra.mxu0 0.0
        %2076 = vmatpush.xpose.msra.mxu0 0.0
        %2077 = vmatpush.xpose.msra.mxu0 0.0
        %2078 = vmatpush.xpose.msra.mxu0 0.0
        %2079 = vmatpush.xpose.msra.mxu0 %v2062
        %2080 = vmatmul.f32.gmra.mxu0 %v2060
        %v2081 = vpop.f32.mrf.mxu0
        %v2082 = vadd.f32 0.0, %v2081
        %2083 = vdwg.mxu0
        %v2084 = vmul.f32 %v2082, 0.5
        %v2085 = vsel %vm962, %v2084, -inf
        %2086 = vmax.xlane.f32.xlu0 %v2085
        %v2087 = vpop.xlane.xlu0 %2086
        %v2088 = vsub.f32 %v2084, %v2087
        %v2089 = vmul.f32 %v2088, 1.442695
        %v2090 = vpow.pop %v2089
        %v2091 = vsel %vm962, %v2090, 0.0
        %2092 = vadd.xlane.f32.xlu0 %v2091
        %v2093 = vpop.xlane.xlu0 %2092
        %v2094 = vrcp.pop %v2093
        %v2095 = vmul.f32 %v2090, %v2094
        %2096 = vrot.lane.b32.xlu0 %v1720, 44
        %v2097 = vpop.permute.xlu0 %2096
        %v2099 = vsel %vm976, %v2095, 0
        %v2101 = vsel %vm980, %v2097, 0
        %2103 = vmatpush.msra.mxu0 0.0
        %2104 = vmatpush.msra.mxu0 0.0
        %2105 = vmatpush.msra.mxu0 0.0
        %2106 = vmatpush.msra.mxu0 0.0
        %2107 = vmatpush.msra.mxu0 0.0
        %2108 = vmatpush.msra.mxu0 0.0
        %2109 = vmatpush.msra.mxu0 0.0
        %2110 = vmatpush.msra.mxu0 0.0
        %2111 = vmatpush.msra.mxu0 0.0
        %2112 = vmatpush.msra.mxu0 0.0
        %2113 = vmatpush.msra.mxu0 0.0
        %2114 = vmatpush.msra.mxu0 0.0
        %2115 = vmatpush.msra.mxu0 0.0
        %2116 = vmatpush.msra.mxu0 0.0
        %2117 = vmatpush.msra.mxu0 0.0
        %2118 = vmatpush.msra.mxu0 %v2101
        %2119 = vmatmul.f32.gmra.mxu0 %v2099
        %v2120 = vpop.f32.mrf.mxu0
        %v2121 = vadd.f32 0.0, %v2120
        %2122 = vdwg.mxu0
        %2123 = vrot.lane.b32.xlu0 %v1720, 104
        %v2124 = vpop.permute.xlu0 %2123
        %2125 = vrot.lane.b32.xlu0 %v1720, 72
        %v2126 = vpop.permute.xlu0 %2125
        %v2127 = vsel %vm936, %v2124, 0
        %v2129 = vsel %vm936, %v2126, 0
        %2131 = vmatpush.xpose.msra.mxu0 0.0
        %2132 = vmatpush.xpose.msra.mxu0 0.0
        %2133 = vmatpush.xpose.msra.mxu0 0.0
        %2134 = vmatpush.xpose.msra.mxu0 0.0
        %2135 = vmatpush.xpose.msra.mxu0 0.0
        %2136 = vmatpush.xpose.msra.mxu0 0.0
        %2137 = vmatpush.xpose.msra.mxu0 0.0
        %2138 = vmatpush.xpose.msra.mxu0 0.0
        %2139 = vmatpush.xpose.msra.mxu0 0.0
        %2140 = vmatpush.xpose.msra.mxu0 0.0
        %2141 = vmatpush.xpose.msra.mxu0 0.0
        %2142 = vmatpush.xpose.msra.mxu0 0.0
        %2143 = vmatpush.xpose.msra.mxu0 0.0
        %2144 = vmatpush.xpose.msra.mxu0 0.0
        %2145 = vmatpush.xpose.msra.mxu0 0.0
        %2146 = vmatpush.xpose.msra.mxu0 %v2129
        %2147 = vmatmul.f32.gmra.mxu0 %v2127
        %v2148 = vpop.f32.mrf.mxu0
        %v2149 = vadd.f32 0.0, %v2148
        %2150 = vdwg.mxu0
        %v2151 = vmul.f32 %v2149, 0.5
        %v2152 = vsel %vm962, %v2151, -inf
        %2153 = vmax.xlane.f32.xlu0 %v2152
        %v2154 = vpop.xlane.xlu0 %2153
        %v2155 = vsub.f32 %v2151, %v2154
        %v2156 = vmul.f32 %v2155, 1.442695
        %v2157 = vpow.pop %v2156
        %v2158 = vsel %vm962, %v2157, 0.0
        %2159 = vadd.xlane.f32.xlu0 %v2158
        %v2160 = vpop.xlane.xlu0 %2159
        %v2161 = vrcp.pop %v2160
        %v2162 = vmul.f32 %v2157, %v2161
        %2163 = vrot.lane.b32.xlu0 %v1720, 40
        %v2164 = vpop.permute.xlu0 %2163
        %v2166 = vsel %vm976, %v2162, 0
        %v2168 = vsel %vm980, %v2164, 0
        %2170 = vmatpush.msra.mxu0 0.0
        %2171 = vmatpush.msra.mxu0 0.0
        %2172 = vmatpush.msra.mxu0 0.0
        %2173 = vmatpush.msra.mxu0 0.0
        %2174 = vmatpush.msra.mxu0 0.0
        %2175 = vmatpush.msra.mxu0 0.0
        %2176 = vmatpush.msra.mxu0 0.0
        %2177 = vmatpush.msra.mxu0 0.0
        %2178 = vmatpush.msra.mxu0 0.0
        %2179 = vmatpush.msra.mxu0 0.0
        %2180 = vmatpush.msra.mxu0 0.0
        %2181 = vmatpush.msra.mxu0 0.0
        %2182 = vmatpush.msra.mxu0 0.0
        %2183 = vmatpush.msra.mxu0 0.0
        %2184 = vmatpush.msra.mxu0 0.0
        %2185 = vmatpush.msra.mxu0 %v2168
        %2186 = vmatmul.f32.gmra.mxu0 %v2166
        %v2187 = vpop.f32.mrf.mxu0
        %v2188 = vadd.f32 0.0, %v2187
        %2189 = vdwg.mxu0
        %2190 = vrot.lane.b32.xlu0 %v1720, 100
        %v2191 = vpop.permute.xlu0 %2190
        %2192 = vrot.lane.b32.xlu0 %v1720, 68
        %v2193 = vpop.permute.xlu0 %2192
        %v2194 = vsel %vm936, %v2191, 0
        %v2196 = vsel %vm936, %v2193, 0
        %2198 = vmatpush.xpose.msra.mxu0 0.0
        %2199 = vmatpush.xpose.msra.mxu0 0.0
        %2200 = vmatpush.xpose.msra.mxu0 0.0
        %2201 = vmatpush.xpose.msra.mxu0 0.0
        %2202 = vmatpush.xpose.msra.mxu0 0.0
        %2203 = vmatpush.xpose.msra.mxu0 0.0
        %2204 = vmatpush.xpose.msra.mxu0 0.0
        %2205 = vmatpush.xpose.msra.mxu0 0.0
        %2206 = vmatpush.xpose.msra.mxu0 0.0
        %2207 = vmatpush.xpose.msra.mxu0 0.0
        %2208 = vmatpush.xpose.msra.mxu0 0.0
        %2209 = vmatpush.xpose.msra.mxu0 0.0
        %2210 = vmatpush.xpose.msra.mxu0 0.0
        %2211 = vmatpush.xpose.msra.mxu0 0.0
        %2212 = vmatpush.xpose.msra.mxu0 0.0
        %2213 = vmatpush.xpose.msra.mxu0 %v2196
        %2214 = vmatmul.f32.gmra.mxu0 %v2194
        %v2215 = vpop.f32.mrf.mxu0
        %v2216 = vadd.f32 0.0, %v2215
        %2217 = vdwg.mxu0
        %v2218 = vmul.f32 %v2216, 0.5
        %v2219 = vsel %vm962, %v2218, -inf
        %2220 = vmax.xlane.f32.xlu0 %v2219
        %v2221 = vpop.xlane.xlu0 %2220
        %v2222 = vsub.f32 %v2218, %v2221
        %v2223 = vmul.f32 %v2222, 1.442695
        %v2224 = vpow.pop %v2223
        %v2225 = vsel %vm962, %v2224, 0.0
        %2226 = vadd.xlane.f32.xlu0 %v2225
        %v2227 = vpop.xlane.xlu0 %2226
        %v2228 = vrcp.pop %v2227
        %v2229 = vmul.f32 %v2224, %v2228
        %2230 = vrot.lane.b32.xlu0 %v1720, 36
        %v2231 = vpop.permute.xlu0 %2230
        %v2233 = vsel %vm976, %v2229, 0
        %v2235 = vsel %vm980, %v2231, 0
        %2237 = vmatpush.msra.mxu0 0.0
        %2238 = vmatpush.msra.mxu0 0.0
        %2239 = vmatpush.msra.mxu0 0.0
        %2240 = vmatpush.msra.mxu0 0.0
        %2241 = vmatpush.msra.mxu0 0.0
        %2242 = vmatpush.msra.mxu0 0.0
        %2243 = vmatpush.msra.mxu0 0.0
        %2244 = vmatpush.msra.mxu0 0.0
        %2245 = vmatpush.msra.mxu0 0.0
        %2246 = vmatpush.msra.mxu0 0.0
        %2247 = vmatpush.msra.mxu0 0.0
        %2248 = vmatpush.msra.mxu0 0.0
        %2249 = vmatpush.msra.mxu0 0.0
        %2250 = vmatpush.msra.mxu0 0.0
        %2251 = vmatpush.msra.mxu0 0.0
        %2252 = vmatpush.msra.mxu0 %v2235
        %2253 = vmatmul.f32.gmra.mxu0 %v2233
        %v2254 = vpop.f32.mrf.mxu0
        %v2255 = vadd.f32 0.0, %v2254
        %2256 = vdwg.mxu0
        %2258 = vrot.lane.b32.xlu0 %v1853, 4
        %v2259 = vpop.permute.xlu0 %2258
        %2262 = vrot.lane.b32.xlu0 %v1920, 8
        %v2263 = vpop.permute.xlu0 %2262
        %2266 = vrot.lane.b32.xlu0 %v1987, 12
        %v2267 = vpop.permute.xlu0 %2266
        %2270 = vrot.lane.b32.xlu0 %v2054, 16
        %v2271 = vpop.permute.xlu0 %2270
        %2274 = vrot.lane.b32.xlu0 %v2121, 20
        %v2275 = vpop.permute.xlu0 %2274
        %2278 = vrot.lane.b32.xlu0 %v2188, 24
        %v2279 = vpop.permute.xlu0 %2278
        %2282 = vrot.lane.b32.xlu0 %v2255, 28
        %v2283 = vpop.permute.xlu0 %2282
        %v2285 = vsel %vm936, %v1786, %v2259
        %v2286 = vsel %vm1501, %v2285, %v2263
        %v2287 = vsel %vm1503, %v2286, %v2267
        %v2288 = vsel %vm1505, %v2287, %v2271
        %v2289 = vsel %vm1507, %v2288, %v2275
        %v2290 = vsel %vm1509, %v2289, %v2279
        %v2291 = vsel %vm1511, %v2290, %v2283
        %s2292 = scalar_lea.vmem %s5, 32
        %v2293 = vld [vmem:[%s2292] sm:$0xff]
        %v2294 = vld [vmem:[%s2292 + $0x8] sm:$0xff]
        %v2295 = vld [vmem:[%s2292 + $0x10] sm:$0xff]
        %v2296 = vld [vmem:[%s2292 + $0x18] sm:$0xff]
        %s2297 = scalar_lea.vmem %s6, 1
        %v2298 = vld [vmem:[%s2297] sm:$0x1]
        %v2300 = vperm.slane %v2298, 0
        %v2303 = vsel %vm595, %v2291, 0
        %2305 = vmatpush.msra.mxu0 0.0
        %2306 = vmatpush.msra.mxu0 0.0
        %2307 = vmatpush.msra.mxu0 0.0
        %2308 = vmatpush.msra.mxu0 0.0
        %2309 = vmatpush.msra.mxu0 0.0
        %2310 = vmatpush.msra.mxu0 0.0
        %2311 = vmatpush.msra.mxu0 0.0
        %2312 = vmatpush.msra.mxu0 0.0
        %2313 = vmatpush.msra.mxu0 0.0
        %2314 = vmatpush.msra.mxu0 0.0
        %2315 = vmatpush.msra.mxu0 0.0
        %2316 = vmatpush.msra.mxu0 0.0
        %2317 = vmatpush.msra.mxu0 %v2296
        %2318 = vmatpush.msra.mxu0 %v2295
        %2319 = vmatpush.msra.mxu0 %v2294
        %2320 = vmatpush.msra.mxu0 %v2293
        %2321 = vmatmul.f32.gmra.mxu0 %v2303
        %v2322 = vpop.f32.mrf.mxu0
        %v2323 = vadd.f32 %v2300, %v2322
        %2324 = vdwg.mxu0
        %v2325 = vadd.f32 %v1688, %v2323
        %s2326 = scalar_lea.vmem %s11, 1
        %v2327 = vld [vmem:[%s2326] sm:$0x1]
        %s2328 = scalar_lea.vmem %s12, 1
        %v2329 = vld [vmem:[%s2328] sm:$0x1]
        %v2330 = vsel %vm705, %v2325, 0.0
        %2331 = vadd.xlane.f32.xlu0 %v2330
        %v2332 = vpop.xlane.xlu0 %2331
        %v2333 = vmul.f32 %v2332, %v1556
        %v2334 = vsub.f32 %v2325, %v2333
        %v2335 = vmul.f32 %v2334, %v2334
        %v2336 = vsel %vm705, %v2335, 0.0
        %2337 = vadd.xlane.f32.xlu0 %v2336
        %v2338 = vpop.xlane.xlu0 %2337
        %v2339 = vmul.f32 %v2338, %v1556
        %v2340 = vadd.f32 %v2339, 1e-05
        %v2341 = vrsqrt.pop %v2340
        %v2342 = vmul.f32 %v2341, %v2340
        %v2343 = vmul.f32 %v2342, %v2341
        %v2344 = vmul.f32 0.5, %v2343
        %v2345 = vsub.f32 1.5, %v2344
        %v2346 = vmul.f32 %v2341, %v2345
        %vm2347 = vweird.f32 %v2340
        %vm2348 = vweird.f32 %v2341
        %vm2349 = vmor %vm2347, %vm2348
        %v2350 = vsel %vm2349, %v2341, %v2346
        %v2351 = vmul.f32 %v2334, %v2350
        %v2353 = vperm.slane %v2327, 0
        %v2355 = vmul.f32 %v2351, %v2353
        %v2357 = vperm.slane %v2329, 0
        %v2359 = vadd.f32 %v2355, %v2357
        %s2360 = scalar_lea.vmem %s7, 32
        %v2361 = vld [vmem:[%s2360] sm:$0xff]
        %v2362 = vld [vmem:[%s2360 + $0x8] sm:$0xff]
        %v2363 = vld [vmem:[%s2360 + $0x10] sm:$0xff]
        %v2364 = vld [vmem:[%s2360 + $0x18] sm:$0xff]
        %s2365 = scalar_lea.vmem %s8, 1
        %v2366 = vld [vmem:[%s2365] sm:$0x1]
        %v2368 = vperm.slane %v2366, 0
        %v2371 = vsel %vm595, %v2359, 0
        %2373 = vmatpush.msra.mxu0 0.0
        %2374 = vmatpush.msra.mxu0 0.0
        %2375 = vmatpush.msra.mxu0 0.0
        %2376 = vmatpush.msra.mxu0 0.0
        %2377 = vmatpush.msra.mxu0 0.0
        %2378 = vmatpush.msra.mxu0 0.0
        %2379 = vmatpush.msra.mxu0 0.0
        %2380 = vmatpush.msra.mxu0 0.0
        %2381 = vmatpush.msra.mxu0 0.0
        %2382 = vmatpush.msra.mxu0 0.0
        %2383 = vmatpush.msra.mxu0 0.0
        %2384 = vmatpush.msra.mxu0 0.0
        %2385 = vmatpush.msra.mxu0 %v2364
        %2386 = vmatpush.msra.mxu0 %v2363
        %2387 = vmatpush.msra.mxu0 %v2362
        %2388 = vmatpush.msra.mxu0 %v2361
        %2389 = vmatmul.f32.gmra.mxu0 %v2371
        %v2390 = vpop.f32.mrf.mxu0
        %v2391 = vadd.f32 %v2368, %v2390
        %2392 = vdwg.mxu0
        %v2393 = vmax.f32 %v2391, 0.0
        %s2394 = scalar_lea.vmem %s9, 128
        %v2395 = vld [vmem:[%s2394] sm:$0xff]
        %v2396 = vld [vmem:[%s2394 + $0x8] sm:$0xff]
        %v2397 = vld [vmem:[%s2394 + $0x10] sm:$0xff]
        %v2398 = vld [vmem:[%s2394 + $0x18] sm:$0xff]
        %v2399 = vld [vmem:[%s2394 + $0x20] sm:$0xff]
        %v2400 = vld [vmem:[%s2394 + $0x28] sm:$0xff]
        %v2401 = vld [vmem:[%s2394 + $0x30] sm:$0xff]
        %v2402 = vld [vmem:[%s2394 + $0x38] sm:$0xff]
        %v2403 = vld [vmem:[%s2394 + $0x40] sm:$0xff]
        %v2404 = vld [vmem:[%s2394 + $0x48] sm:$0xff]
        %v2405 = vld [vmem:[%s2394 + $0x50] sm:$0xff]
        %v2406 = vld [vmem:[%s2394 + $0x58] sm:$0xff]
        %v2407 = vld [vmem:[%s2394 + $0x60] sm:$0xff]
        %v2408 = vld [vmem:[%s2394 + $0x68] sm:$0xff]
        %v2409 = vld [vmem:[%s2394 + $0x70] sm:$0xff]
        %v2410 = vld [vmem:[%s2394 + $0x78] sm:$0xff]
        %s2411 = scalar_lea.vmem %s10, 1
        %v2412 = vld [vmem:[%s2411] sm:$0x1]
        %v2414 = vperm.slane %v2412, 0
        %2416 = vmatpush.msra.mxu0 %v2410
        %2417 = vmatpush.msra.mxu0 %v2409
        %2418 = vmatpush.msra.mxu0 %v2408
        %2419 = vmatpush.msra.mxu0 %v2407
        %2420 = vmatpush.msra.mxu0 %v2406
        %2421 = vmatpush.msra.mxu0 %v2405
        %2422 = vmatpush.msra.mxu0 %v2404
        %2423 = vmatpush.msra.mxu0 %v2403
        %2424 = vmatpush.msra.mxu0 %v2402
        %2425 = vmatpush.msra.mxu0 %v2401
        %2426 = vmatpush.msra.mxu0 %v2400
        %2427 = vmatpush.msra.mxu0 %v2399
        %2428 = vmatpush.msra.mxu0 %v2398
        %2429 = vmatpush.msra.mxu0 %v2397
        %2430 = vmatpush.msra.mxu0 %v2396
        %2431 = vmatpush.msra.mxu0 %v2395
        %2432 = vmatmul.f32.gmra.mxu0 %v2393
        %v2433 = vpop.f32.mrf.mxu0
        %v2434 = vadd.f32 %v2414, %v2433
        %2435 = vdwg.mxu0
        %v2436 = vadd.f32 %v2359, %v2434
        %s2437 = scalar_lea.vmem %s13, 1
        %v2438 = vld [vmem:[%s2437] sm:$0x1]
        %s2439 = scalar_lea.vmem %s14, 1
        %v2440 = vld [vmem:[%s2439] sm:$0x1]
        %v2441 = vsel %vm705, %v2436, 0.0
        %2442 = vadd.xlane.f32.xlu0 %v2441
        %v2443 = vpop.xlane.xlu0 %2442
        %v2444 = vmul.f32 %v2443, %v1556
        %v2445 = vsub.f32 %v2436, %v2444
        %v2446 = vmul.f32 %v2445, %v2445
        %v2447 = vsel %vm705, %v2446, 0.0
        %2448 = vadd.xlane.f32.xlu0 %v2447
        %v2449 = vpop.xlane.xlu0 %2448
        %v2450 = vmul.f32 %v2449, %v1556
        %v2451 = vadd.f32 %v2450, 1e-05
        %v2452 = vrsqrt.pop %v2451
        %v2453 = vmul.f32 %v2452, %v2451
        %v2454 = vmul.f32 %v2453, %v2452
        %v2455 = vmul.f32 0.5, %v2454
        %v2456 = vsub.f32 1.5, %v2455
        %v2457 = vmul.f32 %v2452, %v2456
        %vm2458 = vweird.f32 %v2451
        %vm2459 = vweird.f32 %v2452
        %vm2460 = vmor %vm2458, %vm2459
        %v2461 = vsel %vm2460, %v2452, %v2457
        %v2462 = vmul.f32 %v2445, %v2461
        %v2464 = vperm.slane %v2438, 0
        %v2466 = vmul.f32 %v2462, %v2464
        %v2468 = vperm.slane %v2440, 0
        %v2470 = vadd.f32 %v2466, %v2468
        %s2471 = scalar_lea.vmem %s3, 64
        %v2472 = vld [vmem:[%s2471] sm:$0xff]
        %v2473 = vld [vmem:[%s2471 + $0x8] sm:$0xff]
        %v2474 = vld [vmem:[%s2471 + $0x10] sm:$0xff]
        %v2475 = vld [vmem:[%s2471 + $0x18] sm:$0xff]
        %s2476 = scalar_lea.vmem %s4, 2
        %v2477 = vld [vmem:[%s2476] sm:$0x1]
        %v2479 = vperm.slane %v2477, 0
        %v2482 = vsel %vm595, %v2470, 0
        %2484 = vmatpush.msra.mxu0 0.0
        %2485 = vmatpush.msra.mxu0 0.0
        %2486 = vmatpush.msra.mxu0 0.0
        %2487 = vmatpush.msra.mxu0 0.0
        %2488 = vmatpush.msra.mxu0 0.0
        %2489 = vmatpush.msra.mxu0 0.0
        %2490 = vmatpush.msra.mxu0 0.0
        %2491 = vmatpush.msra.mxu0 0.0
        %2492 = vmatpush.msra.mxu0 0.0
        %2493 = vmatpush.msra.mxu0 0.0
        %2494 = vmatpush.msra.mxu0 0.0
        %2495 = vmatpush.msra.mxu0 0.0
        %2496 = vmatpush.msra.mxu0 %v2475
        %2497 = vmatpush.msra.mxu0 %v2474
        %2498 = vmatpush.msra.mxu0 %v2473
        %2499 = vmatpush.msra.mxu0 %v2472
        %2500 = vmatmul.f32.gmra.mxu0 %v2482
        %v2501 = vpop.f32.mrf.mxu0
        %v2502 = vadd.f32 %v2479, %v2501
        %2503 = vdwg.mxu0
        %2505 = vrot.lane.b32.xlu0 %v2502, 96
        %v2506 = vpop.permute.xlu0 %2505
        %v2507 = vsel %vm936, %v2502, 0
        %v2509 = vsel %vm936, %v2506, 0
        %2511 = vmatpush.xpose.msra.mxu0 0.0
        %2512 = vmatpush.xpose.msra.mxu0 0.0
        %2513 = vmatpush.xpose.msra.mxu0 0.0
        %2514 = vmatpush.xpose.msra.mxu0 0.0
        %2515 = vmatpush.xpose.msra.mxu0 0.0
        %2516 = vmatpush.xpose.msra.mxu0 0.0
        %2517 = vmatpush.xpose.msra.mxu0 0.0
        %2518 = vmatpush.xpose.msra.mxu0 0.0
        %2519 = vmatpush.xpose.msra.mxu0 0.0
        %2520 = vmatpush.xpose.msra.mxu0 0.0
        %2521 = vmatpush.xpose.msra.mxu0 0.0
        %2522 = vmatpush.xpose.msra.mxu0 0.0
        %2523 = vmatpush.xpose.msra.mxu0 0.0
        %2524 = vmatpush.xpose.msra.mxu0 0.0
        %2525 = vmatpush.xpose.msra.mxu0 0.0
        %2526 = vmatpush.xpose.msra.mxu0 %v2509
        %2527 = vmatmul.f32.gmra.mxu0 %v2507
        %v2528 = vpop.f32.mrf.mxu0
        %v2529 = vadd.f32 0.0, %v2528
        %2530 = vdwg.mxu0
        %v2531 = vmul.f32 %v2529, 0.5
        %v2532 = vsel %vm962, %v2531, -inf
        %2533 = vmax.xlane.f32.xlu0 %v2532
        %v2534 = vpop.xlane.xlu0 %2533
        %v2535 = vsub.f32 %v2531, %v2534
        %v2536 = vmul.f32 %v2535, 1.442695
        %v2537 = vpow.pop %v2536
        %v2538 = vsel %vm962, %v2537, 0.0
        %2539 = vadd.xlane.f32.xlu0 %v2538
        %v2540 = vpop.xlane.xlu0 %2539
        %v2541 = vrcp.pop %v2540
        %v2542 = vmul.f32 %v2537, %v2541
        %2543 = vrot.lane.b32.xlu0 %v2502, 64
        %v2544 = vpop.permute.xlu0 %2543
        %v2546 = vsel %vm976, %v2542, 0
        %v2548 = vsel %vm980, %v2544, 0
        %2550 = vmatpush.msra.mxu0 0.0
        %2551 = vmatpush.msra.mxu0 0.0
        %2552 = vmatpush.msra.mxu0 0.0
        %2553 = vmatpush.msra.mxu0 0.0
        %2554 = vmatpush.msra.mxu0 0.0
        %2555 = vmatpush.msra.mxu0 0.0
        %2556 = vmatpush.msra.mxu0 0.0
        %2557 = vmatpush.msra.mxu0 0.0
        %2558 = vmatpush.msra.mxu0 0.0
        %2559 = vmatpush.msra.mxu0 0.0
        %2560 = vmatpush.msra.mxu0 0.0
        %2561 = vmatpush.msra.mxu0 0.0
        %2562 = vmatpush.msra.mxu0 0.0
        %2563 = vmatpush.msra.mxu0 0.0
        %2564 = vmatpush.msra.mxu0 0.0
        %2565 = vmatpush.msra.mxu0 %v2548
        %2566 = vmatmul.f32.gmra.mxu0 %v2546
        %v2567 = vpop.f32.mrf.mxu0
        %v2568 = vadd.f32 0.0, %v2567
        %2569 = vdwg.mxu0
        %2570 = vrot.lane.b32.xlu0 %v2502, 124
        %v2571 = vpop.permute.xlu0 %2570
        %2572 = vrot.lane.b32.xlu0 %v2502, 92
        %v2573 = vpop.permute.xlu0 %2572
        %v2574 = vsel %vm936, %v2571, 0
        %v2576 = vsel %vm936, %v2573, 0
        %2578 = vmatpush.xpose.msra.mxu0 0.0
        %2579 = vmatpush.xpose.msra.mxu0 0.0
        %2580 = vmatpush.xpose.msra.mxu0 0.0
        %2581 = vmatpush.xpose.msra.mxu0 0.0
        %2582 = vmatpush.xpose.msra.mxu0 0.0
        %2583 = vmatpush.xpose.msra.mxu0 0.0
        %2584 = vmatpush.xpose.msra.mxu0 0.0
        %2585 = vmatpush.xpose.msra.mxu0 0.0
        %2586 = vmatpush.xpose.msra.mxu0 0.0
        %2587 = vmatpush.xpose.msra.mxu0 0.0
        %2588 = vmatpush.xpose.msra.mxu0 0.0
        %2589 = vmatpush.xpose.msra.mxu0 0.0
        %2590 = vmatpush.xpose.msra.mxu0 0.0
        %2591 = vmatpush.xpose.msra.mxu0 0.0
        %2592 = vmatpush.xpose.msra.mxu0 0.0
        %2593 = vmatpush.xpose.msra.mxu0 %v2576
        %2594 = vmatmul.f32.gmra.mxu0 %v2574
        %v2595 = vpop.f32.mrf.mxu0
        %v2596 = vadd.f32 0.0, %v2595
        %2597 = vdwg.mxu0
        %v2598 = vmul.f32 %v2596, 0.5
        %v2599 = vsel %vm962, %v2598, -inf
        %2600 = vmax.xlane.f32.xlu0 %v2599
        %v2601 = vpop.xlane.xlu0 %2600
        %v2602 = vsub.f32 %v2598, %v2601
        %v2603 = vmul.f32 %v2602, 1.442695
        %v2604 = vpow.pop %v2603
        %v2605 = vsel %vm962, %v2604, 0.0
        %2606 = vadd.xlane.f32.xlu0 %v2605
        %v2607 = vpop.xlane.xlu0 %2606
        %v2608 = vrcp.pop %v2607
        %v2609 = vmul.f32 %v2604, %v2608
        %2610 = vrot.lane.b32.xlu0 %v2502, 60
        %v2611 = vpop.permute.xlu0 %2610
        %v2613 = vsel %vm976, %v2609, 0
        %v2615 = vsel %vm980, %v2611, 0
        %2617 = vmatpush.msra.mxu0 0.0
        %2618 = vmatpush.msra.mxu0 0.0
        %2619 = vmatpush.msra.mxu0 0.0
        %2620 = vmatpush.msra.mxu0 0.0
        %2621 = vmatpush.msra.mxu0 0.0
        %2622 = vmatpush.msra.mxu0 0.0
        %2623 = vmatpush.msra.mxu0 0.0
        %2624 = vmatpush.msra.mxu0 0.0
        %2625 = vmatpush.msra.mxu0 0.0
        %2626 = vmatpush.msra.mxu0 0.0
        %2627 = vmatpush.msra.mxu0 0.0
        %2628 = vmatpush.msra.mxu0 0.0
        %2629 = vmatpush.msra.mxu0 0.0
        %2630 = vmatpush.msra.mxu0 0.0
        %2631 = vmatpush.msra.mxu0 0.0
        %2632 = vmatpush.msra.mxu0 %v2615
        %2633 = vmatmul.f32.gmra.mxu0 %v2613
        %v2634 = vpop.f32.mrf.mxu0
        %v2635 = vadd.f32 0.0, %v2634
        %2636 = vdwg.mxu0
        %2637 = vrot.lane.b32.xlu0 %v2502, 120
        %v2638 = vpop.permute.xlu0 %2637
        %2639 = vrot.lane.b32.xlu0 %v2502, 88
        %v2640 = vpop.permute.xlu0 %2639
        %v2641 = vsel %vm936, %v2638, 0
        %v2643 = vsel %vm936, %v2640, 0
        %2645 = vmatpush.xpose.msra.mxu0 0.0
        %2646 = vmatpush.xpose.msra.mxu0 0.0
        %2647 = vmatpush.xpose.msra.mxu0 0.0
        %2648 = vmatpush.xpose.msra.mxu0 0.0
        %2649 = vmatpush.xpose.msra.mxu0 0.0
        %2650 = vmatpush.xpose.msra.mxu0 0.0
        %2651 = vmatpush.xpose.msra.mxu0 0.0
        %2652 = vmatpush.xpose.msra.mxu0 0.0
        %2653 = vmatpush.xpose.msra.mxu0 0.0
        %2654 = vmatpush.xpose.msra.mxu0 0.0
        %2655 = vmatpush.xpose.msra.mxu0 0.0
        %2656 = vmatpush.xpose.msra.mxu0 0.0
        %2657 = vmatpush.xpose.msra.mxu0 0.0
        %2658 = vmatpush.xpose.msra.mxu0 0.0
        %2659 = vmatpush.xpose.msra.mxu0 0.0
        %2660 = vmatpush.xpose.msra.mxu0 %v2643
        %2661 = vmatmul.f32.gmra.mxu0 %v2641
        %v2662 = vpop.f32.mrf.mxu0
        %v2663 = vadd.f32 0.0, %v2662
        %2664 = vdwg.mxu0
        %v2665 = vmul.f32 %v2663, 0.5
        %v2666 = vsel %vm962, %v2665, -inf
        %2667 = vmax.xlane.f32.xlu0 %v2666
        %v2668 = vpop.xlane.xlu0 %2667
        %v2669 = vsub.f32 %v2665, %v2668
        %v2670 = vmul.f32 %v2669, 1.442695
        %v2671 = vpow.pop %v2670
        %v2672 = vsel %vm962, %v2671, 0.0
        %2673 = vadd.xlane.f32.xlu0 %v2672
        %v2674 = vpop.xlane.xlu0 %2673
        %v2675 = vrcp.pop %v2674
        %v2676 = vmul.f32 %v2671, %v2675
        %2677 = vrot.lane.b32.xlu0 %v2502, 56
        %v2678 = vpop.permute.xlu0 %2677
        %v2680 = vsel %vm976, %v2676, 0
        %v2682 = vsel %vm980, %v2678, 0
        %2684 = vmatpush.msra.mxu0 0.0
        %2685 = vmatpush.msra.mxu0 0.0
        %2686 = vmatpush.msra.mxu0 0.0
        %2687 = vmatpush.msra.mxu0 0.0
        %2688 = vmatpush.msra.mxu0 0.0
        %2689 = vmatpush.msra.mxu0 0.0
        %2690 = vmatpush.msra.mxu0 0.0
        %2691 = vmatpush.msra.mxu0 0.0
        %2692 = vmatpush.msra.mxu0 0.0
        %2693 = vmatpush.msra.mxu0 0.0
        %2694 = vmatpush.msra.mxu0 0.0
        %2695 = vmatpush.msra.mxu0 0.0
        %2696 = vmatpush.msra.mxu0 0.0
        %2697 = vmatpush.msra.mxu0 0.0
        %2698 = vmatpush.msra.mxu0 0.0
        %2699 = vmatpush.msra.mxu0 %v2682
        %2700 = vmatmul.f32.gmra.mxu0 %v2680
        %v2701 = vpop.f32.mrf.mxu0
        %v2702 = vadd.f32 0.0, %v2701
        %2703 = vdwg.mxu0
        %2704 = vrot.lane.b32.xlu0 %v2502, 116
        %v2705 = vpop.permute.xlu0 %2704
        %2706 = vrot.lane.b32.xlu0 %v2502, 84
        %v2707 = vpop.permute.xlu0 %2706
        %v2708 = vsel %vm936, %v2705, 0
        %v2710 = vsel %vm936, %v2707, 0
        %2712 = vmatpush.xpose.msra.mxu0 0.0
        %2713 = vmatpush.xpose.msra.mxu0 0.0
        %2714 = vmatpush.xpose.msra.mxu0 0.0
        %2715 = vmatpush.xpose.msra.mxu0 0.0
        %2716 = vmatpush.xpose.msra.mxu0 0.0
        %2717 = vmatpush.xpose.msra.mxu0 0.0
        %2718 = vmatpush.xpose.msra.mxu0 0.0
        %2719 = vmatpush.xpose.msra.mxu0 0.0
        %2720 = vmatpush.xpose.msra.mxu0 0.0
        %2721 = vmatpush.xpose.msra.mxu0 0.0
        %2722 = vmatpush.xpose.msra.mxu0 0.0
        %2723 = vmatpush.xpose.msra.mxu0 0.0
        %2724 = vmatpush.xpose.msra.mxu0 0.0
        %2725 = vmatpush.xpose.msra.mxu0 0.0
        %2726 = vmatpush.xpose.msra.mxu0 0.0
        %2727 = vmatpush.xpose.msra.mxu0 %v2710
        %2728 = vmatmul.f32.gmra.mxu0 %v2708
        %v2729 = vpop.f32.mrf.mxu0
        %v2730 = vadd.f32 0.0, %v2729
        %2731 = vdwg.mxu0
        %v2732 = vmul.f32 %v2730, 0.5
        %v2733 = vsel %vm962, %v2732, -inf
        %2734 = vmax.xlane.f32.xlu0 %v2733
        %v2735 = vpop.xlane.xlu0 %2734
        %v2736 = vsub.f32 %v2732, %v2735
        %v2737 = vmul.f32 %v2736, 1.442695
        %v2738 = vpow.pop %v2737
        %v2739 = vsel %vm962, %v2738, 0.0
        %2740 = vadd.xlane.f32.xlu0 %v2739
        %v2741 = vpop.xlane.xlu0 %2740
        %v2742 = vrcp.pop %v2741
        %v2743 = vmul.f32 %v2738, %v2742
        %2744 = vrot.lane.b32.xlu0 %v2502, 52
        %v2745 = vpop.permute.xlu0 %2744
        %v2747 = vsel %vm976, %v2743, 0
        %v2749 = vsel %vm980, %v2745, 0
        %2751 = vmatpush.msra.mxu0 0.0
        %2752 = vmatpush.msra.mxu0 0.0
        %2753 = vmatpush.msra.mxu0 0.0
        %2754 = vmatpush.msra.mxu0 0.0
        %2755 = vmatpush.msra.mxu0 0.0
        %2756 = vmatpush.msra.mxu0 0.0
        %2757 = vmatpush.msra.mxu0 0.0
        %2758 = vmatpush.msra.mxu0 0.0
        %2759 = vmatpush.msra.mxu0 0.0
        %2760 = vmatpush.msra.mxu0 0.0
        %2761 = vmatpush.msra.mxu0 0.0
        %2762 = vmatpush.msra.mxu0 0.0
        %2763 = vmatpush.msra.mxu0 0.0
        %2764 = vmatpush.msra.mxu0 0.0
        %2765 = vmatpush.msra.mxu0 0.0
        %2766 = vmatpush.msra.mxu0 %v2749
        %2767 = vmatmul.f32.gmra.mxu0 %v2747
        %v2768 = vpop.f32.mrf.mxu0
        %v2769 = vadd.f32 0.0, %v2768
        %2770 = vdwg.mxu0
        %2771 = vrot.lane.b32.xlu0 %v2502, 112
        %v2772 = vpop.permute.xlu0 %2771
        %2773 = vrot.lane.b32.xlu0 %v2502, 80
        %v2774 = vpop.permute.xlu0 %2773
        %v2775 = vsel %vm936, %v2772, 0
        %v2777 = vsel %vm936, %v2774, 0
        %2779 = vmatpush.xpose.msra.mxu0 0.0
        %2780 = vmatpush.xpose.msra.mxu0 0.0
        %2781 = vmatpush.xpose.msra.mxu0 0.0
        %2782 = vmatpush.xpose.msra.mxu0 0.0
        %2783 = vmatpush.xpose.msra.mxu0 0.0
        %2784 = vmatpush.xpose.msra.mxu0 0.0
        %2785 = vmatpush.xpose.msra.mxu0 0.0
        %2786 = vmatpush.xpose.msra.mxu0 0.0
        %2787 = vmatpush.xpose.msra.mxu0 0.0
        %2788 = vmatpush.xpose.msra.mxu0 0.0
        %2789 = vmatpush.xpose.msra.mxu0 0.0
        %2790 = vmatpush.xpose.msra.mxu0 0.0
        %2791 = vmatpush.xpose.msra.mxu0 0.0
        %2792 = vmatpush.xpose.msra.mxu0 0.0
        %2793 = vmatpush.xpose.msra.mxu0 0.0
        %2794 = vmatpush.xpose.msra.mxu0 %v2777
        %2795 = vmatmul.f32.gmra.mxu0 %v2775
        %v2796 = vpop.f32.mrf.mxu0
        %v2797 = vadd.f32 0.0, %v2796
        %2798 = vdwg.mxu0
        %v2799 = vmul.f32 %v2797, 0.5
        %v2800 = vsel %vm962, %v2799, -inf
        %2801 = vmax.xlane.f32.xlu0 %v2800
        %v2802 = vpop.xlane.xlu0 %2801
        %v2803 = vsub.f32 %v2799, %v2802
        %v2804 = vmul.f32 %v2803, 1.442695
        %v2805 = vpow.pop %v2804
        %v2806 = vsel %vm962, %v2805, 0.0
        %2807 = vadd.xlane.f32.xlu0 %v2806
        %v2808 = vpop.xlane.xlu0 %2807
        %v2809 = vrcp.pop %v2808
        %v2810 = vmul.f32 %v2805, %v2809
        %2811 = vrot.lane.b32.xlu0 %v2502, 48
        %v2812 = vpop.permute.xlu0 %2811
        %v2814 = vsel %vm976, %v2810, 0
        %v2816 = vsel %vm980, %v2812, 0
        %2818 = vmatpush.msra.mxu0 0.0
        %2819 = vmatpush.msra.mxu0 0.0
        %2820 = vmatpush.msra.mxu0 0.0
        %2821 = vmatpush.msra.mxu0 0.0
        %2822 = vmatpush.msra.mxu0 0.0
        %2823 = vmatpush.msra.mxu0 0.0
        %2824 = vmatpush.msra.mxu0 0.0
        %2825 = vmatpush.msra.mxu0 0.0
        %2826 = vmatpush.msra.mxu0 0.0
        %2827 = vmatpush.msra.mxu0 0.0
        %2828 = vmatpush.msra.mxu0 0.0
        %2829 = vmatpush.msra.mxu0 0.0
        %2830 = vmatpush.msra.mxu0 0.0
        %2831 = vmatpush.msra.mxu0 0.0
        %2832 = vmatpush.msra.mxu0 0.0
        %2833 = vmatpush.msra.mxu0 %v2816
        %2834 = vmatmul.f32.gmra.mxu0 %v2814
        %v2835 = vpop.f32.mrf.mxu0
        %v2836 = vadd.f32 0.0, %v2835
        %2837 = vdwg.mxu0
        %2838 = vrot.lane.b32.xlu0 %v2502, 108
        %v2839 = vpop.permute.xlu0 %2838
        %2840 = vrot.lane.b32.xlu0 %v2502, 76
        %v2841 = vpop.permute.xlu0 %2840
        %v2842 = vsel %vm936, %v2839, 0
        %v2844 = vsel %vm936, %v2841, 0
        %2846 = vmatpush.xpose.msra.mxu0 0.0
        %2847 = vmatpush.xpose.msra.mxu0 0.0
        %2848 = vmatpush.xpose.msra.mxu0 0.0
        %2849 = vmatpush.xpose.msra.mxu0 0.0
        %2850 = vmatpush.xpose.msra.mxu0 0.0
        %2851 = vmatpush.xpose.msra.mxu0 0.0
        %2852 = vmatpush.xpose.msra.mxu0 0.0
        %2853 = vmatpush.xpose.msra.mxu0 0.0
        %2854 = vmatpush.xpose.msra.mxu0 0.0
        %2855 = vmatpush.xpose.msra.mxu0 0.0
        %2856 = vmatpush.xpose.msra.mxu0 0.0
        %2857 = vmatpush.xpose.msra.mxu0 0.0
        %2858 = vmatpush.xpose.msra.mxu0 0.0
        %2859 = vmatpush.xpose.msra.mxu0 0.0
        %2860 = vmatpush.xpose.msra.mxu0 0.0
        %2861 = vmatpush.xpose.msra.mxu0 %v2844
        %2862 = vmatmul.f32.gmra.mxu0 %v2842
        %v2863 = vpop.f32.mrf.mxu0
        %v2864 = vadd.f32 0.0, %v2863
        %2865 = vdwg.mxu0
        %v2866 = vmul.f32 %v2864, 0.5
        %v2867 = vsel %vm962, %v2866, -inf
        %2868 = vmax.xlane.f32.xlu0 %v2867
        %v2869 = vpop.xlane.xlu0 %2868
        %v2870 = vsub.f32 %v2866, %v2869
        %v2871 = vmul.f32 %v2870, 1.442695
        %v2872 = vpow.pop %v2871
        %v2873 = vsel %vm962, %v2872, 0.0
        %2874 = vadd.xlane.f32.xlu0 %v2873
        %v2875 = vpop.xlane.xlu0 %2874
        %v2876 = vrcp.pop %v2875
        %v2877 = vmul.f32 %v2872, %v2876
        %2878 = vrot.lane.b32.xlu0 %v2502, 44
        %v2879 = vpop.permute.xlu0 %2878
        %v2881 = vsel %vm976, %v2877, 0
        %v2883 = vsel %vm980, %v2879, 0
        %2885 = vmatpush.msra.mxu0 0.0
        %2886 = vmatpush.msra.mxu0 0.0
        %2887 = vmatpush.msra.mxu0 0.0
        %2888 = vmatpush.msra.mxu0 0.0
        %2889 = vmatpush.msra.mxu0 0.0
        %2890 = vmatpush.msra.mxu0 0.0
        %2891 = vmatpush.msra.mxu0 0.0
        %2892 = vmatpush.msra.mxu0 0.0
        %2893 = vmatpush.msra.mxu0 0.0
        %2894 = vmatpush.msra.mxu0 0.0
        %2895 = vmatpush.msra.mxu0 0.0
        %2896 = vmatpush.msra.mxu0 0.0
        %2897 = vmatpush.msra.mxu0 0.0
        %2898 = vmatpush.msra.mxu0 0.0
        %2899 = vmatpush.msra.mxu0 0.0
        %2900 = vmatpush.msra.mxu0 %v2883
        %2901 = vmatmul.f32.gmra.mxu0 %v2881
        %v2902 = vpop.f32.mrf.mxu0
        %v2903 = vadd.f32 0.0, %v2902
        %2904 = vdwg.mxu0
        %2905 = vrot.lane.b32.xlu0 %v2502, 104
        %v2906 = vpop.permute.xlu0 %2905
        %2907 = vrot.lane.b32.xlu0 %v2502, 72
        %v2908 = vpop.permute.xlu0 %2907
        %v2909 = vsel %vm936, %v2906, 0
        %v2911 = vsel %vm936, %v2908, 0
        %2913 = vmatpush.xpose.msra.mxu0 0.0
        %2914 = vmatpush.xpose.msra.mxu0 0.0
        %2915 = vmatpush.xpose.msra.mxu0 0.0
        %2916 = vmatpush.xpose.msra.mxu0 0.0
        %2917 = vmatpush.xpose.msra.mxu0 0.0
        %2918 = vmatpush.xpose.msra.mxu0 0.0
        %2919 = vmatpush.xpose.msra.mxu0 0.0
        %2920 = vmatpush.xpose.msra.mxu0 0.0
        %2921 = vmatpush.xpose.msra.mxu0 0.0
        %2922 = vmatpush.xpose.msra.mxu0 0.0
        %2923 = vmatpush.xpose.msra.mxu0 0.0
        %2924 = vmatpush.xpose.msra.mxu0 0.0
        %2925 = vmatpush.xpose.msra.mxu0 0.0
        %2926 = vmatpush.xpose.msra.mxu0 0.0
        %2927 = vmatpush.xpose.msra.mxu0 0.0
        %2928 = vmatpush.xpose.msra.mxu0 %v2911
        %2929 = vmatmul.f32.gmra.mxu0 %v2909
        %v2930 = vpop.f32.mrf.mxu0
        %v2931 = vadd.f32 0.0, %v2930
        %2932 = vdwg.mxu0
        %v2933 = vmul.f32 %v2931, 0.5
        %v2934 = vsel %vm962, %v2933, -inf
        %2935 = vmax.xlane.f32.xlu0 %v2934
        %v2936 = vpop.xlane.xlu0 %2935
        %v2937 = vsub.f32 %v2933, %v2936
        %v2938 = vmul.f32 %v2937, 1.442695
        %v2939 = vpow.pop %v2938
        %v2940 = vsel %vm962, %v2939, 0.0
        %2941 = vadd.xlane.f32.xlu0 %v2940
        %v2942 = vpop.xlane.xlu0 %2941
        %v2943 = vrcp.pop %v2942
        %v2944 = vmul.f32 %v2939, %v2943
        %2945 = vrot.lane.b32.xlu0 %v2502, 40
        %v2946 = vpop.permute.xlu0 %2945
        %v2948 = vsel %vm976, %v2944, 0
        %v2950 = vsel %vm980, %v2946, 0
        %2952 = vmatpush.msra.mxu0 0.0
        %2953 = vmatpush.msra.mxu0 0.0
        %2954 = vmatpush.msra.mxu0 0.0
        %2955 = vmatpush.msra.mxu0 0.0
        %2956 = vmatpush.msra.mxu0 0.0
        %2957 = vmatpush.msra.mxu0 0.0
        %2958 = vmatpush.msra.mxu0 0.0
        %2959 = vmatpush.msra.mxu0 0.0
        %2960 = vmatpush.msra.mxu0 0.0
        %2961 = vmatpush.msra.mxu0 0.0
        %2962 = vmatpush.msra.mxu0 0.0
        %2963 = vmatpush.msra.mxu0 0.0
        %2964 = vmatpush.msra.mxu0 0.0
        %2965 = vmatpush.msra.mxu0 0.0
        %2966 = vmatpush.msra.mxu0 0.0
        %2967 = vmatpush.msra.mxu0 %v2950
        %2968 = vmatmul.f32.gmra.mxu0 %v2948
        %v2969 = vpop.f32.mrf.mxu0
        %v2970 = vadd.f32 0.0, %v2969
        %2971 = vdwg.mxu0
        %2972 = vrot.lane.b32.xlu0 %v2502, 100
        %v2973 = vpop.permute.xlu0 %2972
        %2974 = vrot.lane.b32.xlu0 %v2502, 68
        %v2975 = vpop.permute.xlu0 %2974
        %v2976 = vsel %vm936, %v2973, 0
        %v2978 = vsel %vm936, %v2975, 0
        %2980 = vmatpush.xpose.msra.mxu0 0.0
        %2981 = vmatpush.xpose.msra.mxu0 0.0
        %2982 = vmatpush.xpose.msra.mxu0 0.0
        %2983 = vmatpush.xpose.msra.mxu0 0.0
        %2984 = vmatpush.xpose.msra.mxu0 0.0
        %2985 = vmatpush.xpose.msra.mxu0 0.0
        %2986 = vmatpush.xpose.msra.mxu0 0.0
        %2987 = vmatpush.xpose.msra.mxu0 0.0
        %2988 = vmatpush.xpose.msra.mxu0 0.0
        %2989 = vmatpush.xpose.msra.mxu0 0.0
        %2990 = vmatpush.xpose.msra.mxu0 0.0
        %2991 = vmatpush.xpose.msra.mxu0 0.0
        %2992 = vmatpush.xpose.msra.mxu0 0.0
        %2993 = vmatpush.xpose.msra.mxu0 0.0
        %2994 = vmatpush.xpose.msra.mxu0 0.0
        %2995 = vmatpush.xpose.msra.mxu0 %v2978
        %2996 = vmatmul.f32.gmra.mxu0 %v2976
        %v2997 = vpop.f32.mrf.mxu0
        %v2998 = vadd.f32 0.0, %v2997
        %2999 = vdwg.mxu0
        %v3000 = vmul.f32 %v2998, 0.5
        %v3001 = vsel %vm962, %v3000, -inf
        %3002 = vmax.xlane.f32.xlu0 %v3001
        %v3003 = vpop.xlane.xlu0 %3002
        %v3004 = vsub.f32 %v3000, %v3003
        %v3005 = vmul.f32 %v3004, 1.442695
        %v3006 = vpow.pop %v3005
        %v3007 = vsel %vm962, %v3006, 0.0
        %3008 = vadd.xlane.f32.xlu0 %v3007
        %v3009 = vpop.xlane.xlu0 %3008
        %v3010 = vrcp.pop %v3009
        %v3011 = vmul.f32 %v3006, %v3010
        %3012 = vrot.lane.b32.xlu0 %v2502, 36
        %v3013 = vpop.permute.xlu0 %3012
        %v3015 = vsel %vm976, %v3011, 0
        %v3017 = vsel %vm980, %v3013, 0
        %3019 = vmatpush.msra.mxu0 0.0
        %3020 = vmatpush.msra.mxu0 0.0
        %3021 = vmatpush.msra.mxu0 0.0
        %3022 = vmatpush.msra.mxu0 0.0
        %3023 = vmatpush.msra.mxu0 0.0
        %3024 = vmatpush.msra.mxu0 0.0
        %3025 = vmatpush.msra.mxu0 0.0
        %3026 = vmatpush.msra.mxu0 0.0
        %3027 = vmatpush.msra.mxu0 0.0
        %3028 = vmatpush.msra.mxu0 0.0
        %3029 = vmatpush.msra.mxu0 0.0
        %3030 = vmatpush.msra.mxu0 0.0
        %3031 = vmatpush.msra.mxu0 0.0
        %3032 = vmatpush.msra.mxu0 0.0
        %3033 = vmatpush.msra.mxu0 0.0
        %3034 = vmatpush.msra.mxu0 %v3017
        %3035 = vmatmul.f32.gmra.mxu0 %v3015
        %v3036 = vpop.f32.mrf.mxu0
        %v3037 = vadd.f32 0.0, %v3036
        %3038 = vdwg.mxu0
        %3040 = vrot.lane.b32.xlu0 %v2635, 4
        %v3041 = vpop.permute.xlu0 %3040
        %3044 = vrot.lane.b32.xlu0 %v2702, 8
        %v3045 = vpop.permute.xlu0 %3044
        %3048 = vrot.lane.b32.xlu0 %v2769, 12
        %v3049 = vpop.permute.xlu0 %3048
        %3052 = vrot.lane.b32.xlu0 %v2836, 16
        %v3053 = vpop.permute.xlu0 %3052
        %3056 = vrot.lane.b32.xlu0 %v2903, 20
        %v3057 = vpop.permute.xlu0 %3056
        %3060 = vrot.lane.b32.xlu0 %v2970, 24
        %v3061 = vpop.permute.xlu0 %3060
        %3064 = vrot.lane.b32.xlu0 %v3037, 28
        %v3065 = vpop.permute.xlu0 %3064
        %v3067 = vsel %vm936, %v2568, %v3041
        %v3068 = vsel %vm1501, %v3067, %v3045
        %v3069 = vsel %vm1503, %v3068, %v3049
        %v3070 = vsel %vm1505, %v3069, %v3053
        %v3071 = vsel %vm1507, %v3070, %v3057
        %v3072 = vsel %vm1509, %v3071, %v3061
        %v3073 = vsel %vm1511, %v3072, %v3065
        %s3074 = scalar_lea.vmem %s5, 64
        %v3075 = vld [vmem:[%s3074] sm:$0xff]
        %v3076 = vld [vmem:[%s3074 + $0x8] sm:$0xff]
        %v3077 = vld [vmem:[%s3074 + $0x10] sm:$0xff]
        %v3078 = vld [vmem:[%s3074 + $0x18] sm:$0xff]
        %s3079 = scalar_lea.vmem %s6, 2
        %v3080 = vld [vmem:[%s3079] sm:$0x1]
        %v3082 = vperm.slane %v3080, 0
        %v3085 = vsel %vm595, %v3073, 0
        %3087 = vmatpush.msra.mxu0 0.0
        %3088 = vmatpush.msra.mxu0 0.0
        %3089 = vmatpush.msra.mxu0 0.0
        %3090 = vmatpush.msra.mxu0 0.0
        %3091 = vmatpush.msra.mxu0 0.0
        %3092 = vmatpush.msra.mxu0 0.0
        %3093 = vmatpush.msra.mxu0 0.0
        %3094 = vmatpush.msra.mxu0 0.0
        %3095 = vmatpush.msra.mxu0 0.0
        %3096 = vmatpush.msra.mxu0 0.0
        %3097 = vmatpush.msra.mxu0 0.0
        %3098 = vmatpush.msra.mxu0 0.0
        %3099 = vmatpush.msra.mxu0 %v3078
        %3100 = vmatpush.msra.mxu0 %v3077
        %3101 = vmatpush.msra.mxu0 %v3076
        %3102 = vmatpush.msra.mxu0 %v3075
        %3103 = vmatmul.f32.gmra.mxu0 %v3085
        %v3104 = vpop.f32.mrf.mxu0
        %v3105 = vadd.f32 %v3082, %v3104
        %3106 = vdwg.mxu0
        %v3107 = vadd.f32 %v2470, %v3105
        %s3108 = scalar_lea.vmem %s11, 2
        %v3109 = vld [vmem:[%s3108] sm:$0x1]
        %s3110 = scalar_lea.vmem %s12, 2
        %v3111 = vld [vmem:[%s3110] sm:$0x1]
        %v3112 = vsel %vm705, %v3107, 0.0
        %3113 = vadd.xlane.f32.xlu0 %v3112
        %v3114 = vpop.xlane.xlu0 %3113
        %v3115 = vmul.f32 %v3114, %v1556
        %v3116 = vsub.f32 %v3107, %v3115
        %v3117 = vmul.f32 %v3116, %v3116
        %v3118 = vsel %vm705, %v3117, 0.0
        %3119 = vadd.xlane.f32.xlu0 %v3118
        %v3120 = vpop.xlane.xlu0 %3119
        %v3121 = vmul.f32 %v3120, %v1556
        %v3122 = vadd.f32 %v3121, 1e-05
        %v3123 = vrsqrt.pop %v3122
        %v3124 = vmul.f32 %v3123, %v3122
        %v3125 = vmul.f32 %v3124, %v3123
        %v3126 = vmul.f32 0.5, %v3125
        %v3127 = vsub.f32 1.5, %v3126
        %v3128 = vmul.f32 %v3123, %v3127
        %vm3129 = vweird.f32 %v3122
        %vm3130 = vweird.f32 %v3123
        %vm3131 = vmor %vm3129, %vm3130
        %v3132 = vsel %vm3131, %v3123, %v3128
        %v3133 = vmul.f32 %v3116, %v3132
        %v3135 = vperm.slane %v3109, 0
        %v3137 = vmul.f32 %v3133, %v3135
        %v3139 = vperm.slane %v3111, 0
        %v3141 = vadd.f32 %v3137, %v3139
        %s3142 = scalar_lea.vmem %s7, 64
        %v3143 = vld [vmem:[%s3142] sm:$0xff]
        %v3144 = vld [vmem:[%s3142 + $0x8] sm:$0xff]
        %v3145 = vld [vmem:[%s3142 + $0x10] sm:$0xff]
        %v3146 = vld [vmem:[%s3142 + $0x18] sm:$0xff]
        %s3147 = scalar_lea.vmem %s8, 2
        %v3148 = vld [vmem:[%s3147] sm:$0x1]
        %v3150 = vperm.slane %v3148, 0
        %v3153 = vsel %vm595, %v3141, 0
        %3155 = vmatpush.msra.mxu0 0.0
        %3156 = vmatpush.msra.mxu0 0.0
        %3157 = vmatpush.msra.mxu0 0.0
        %3158 = vmatpush.msra.mxu0 0.0
        %3159 = vmatpush.msra.mxu0 0.0
        %3160 = vmatpush.msra.mxu0 0.0
        %3161 = vmatpush.msra.mxu0 0.0
        %3162 = vmatpush.msra.mxu0 0.0
        %3163 = vmatpush.msra.mxu0 0.0
        %3164 = vmatpush.msra.mxu0 0.0
        %3165 = vmatpush.msra.mxu0 0.0
        %3166 = vmatpush.msra.mxu0 0.0
        %3167 = vmatpush.msra.mxu0 %v3146
        %3168 = vmatpush.msra.mxu0 %v3145
        %3169 = vmatpush.msra.mxu0 %v3144
        %3170 = vmatpush.msra.mxu0 %v3143
        %3171 = vmatmul.f32.gmra.mxu0 %v3153
        %v3172 = vpop.f32.mrf.mxu0
        %v3173 = vadd.f32 %v3150, %v3172
        %3174 = vdwg.mxu0
        %v3175 = vmax.f32 %v3173, 0.0
        %s3176 = scalar_lea.vmem %s9, 256
        %v3177 = vld [vmem:[%s3176] sm:$0xff]
        %v3178 = vld [vmem:[%s3176 + $0x8] sm:$0xff]
        %v3179 = vld [vmem:[%s3176 + $0x10] sm:$0xff]
        %v3180 = vld [vmem:[%s3176 + $0x18] sm:$0xff]
        %v3181 = vld [vmem:[%s3176 + $0x20] sm:$0xff]
        %v3182 = vld [vmem:[%s3176 + $0x28] sm:$0xff]
        %v3183 = vld [vmem:[%s3176 + $0x30] sm:$0xff]
        %v3184 = vld [vmem:[%s3176 + $0x38] sm:$0xff]
        %v3185 = vld [vmem:[%s3176 + $0x40] sm:$0xff]
        %v3186 = vld [vmem:[%s3176 + $0x48] sm:$0xff]
        %v3187 = vld [vmem:[%s3176 + $0x50] sm:$0xff]
        %v3188 = vld [vmem:[%s3176 + $0x58] sm:$0xff]
        %v3189 = vld [vmem:[%s3176 + $0x60] sm:$0xff]
        %v3190 = vld [vmem:[%s3176 + $0x68] sm:$0xff]
        %v3191 = vld [vmem:[%s3176 + $0x70] sm:$0xff]
        %v3192 = vld [vmem:[%s3176 + $0x78] sm:$0xff]
        %s3193 = scalar_lea.vmem %s10, 2
        %v3194 = vld [vmem:[%s3193] sm:$0x1]
        %v3196 = vperm.slane %v3194, 0
        %3198 = vmatpush.msra.mxu0 %v3192
        %3199 = vmatpush.msra.mxu0 %v3191
        %3200 = vmatpush.msra.mxu0 %v3190
        %3201 = vmatpush.msra.mxu0 %v3189
        %3202 = vmatpush.msra.mxu0 %v3188
        %3203 = vmatpush.msra.mxu0 %v3187
        %3204 = vmatpush.msra.mxu0 %v3186
        %3205 = vmatpush.msra.mxu0 %v3185
        %3206 = vmatpush.msra.mxu0 %v3184
        %3207 = vmatpush.msra.mxu0 %v3183
        %3208 = vmatpush.msra.mxu0 %v3182
        %3209 = vmatpush.msra.mxu0 %v3181
        %3210 = vmatpush.msra.mxu0 %v3180
        %3211 = vmatpush.msra.mxu0 %v3179
        %3212 = vmatpush.msra.mxu0 %v3178
        %3213 = vmatpush.msra.mxu0 %v3177
        %3214 = vmatmul.f32.gmra.mxu0 %v3175
        %v3215 = vpop.f32.mrf.mxu0
        %v3216 = vadd.f32 %v3196, %v3215
        %3217 = vdwg.mxu0
        %v3218 = vadd.f32 %v3141, %v3216
        %s3219 = scalar_lea.vmem %s13, 2
        %v3220 = vld [vmem:[%s3219] sm:$0x1]
        %s3221 = scalar_lea.vmem %s14, 2
        %v3222 = vld [vmem:[%s3221] sm:$0x1]
        %v3223 = vsel %vm705, %v3218, 0.0
        %3224 = vadd.xlane.f32.xlu0 %v3223
        %v3225 = vpop.xlane.xlu0 %3224
        %v3226 = vmul.f32 %v3225, %v1556
        %v3227 = vsub.f32 %v3218, %v3226
        %v3228 = vmul.f32 %v3227, %v3227
        %v3229 = vsel %vm705, %v3228, 0.0
        %3230 = vadd.xlane.f32.xlu0 %v3229
        %v3231 = vpop.xlane.xlu0 %3230
        %v3232 = vmul.f32 %v3231, %v1556
        %v3233 = vadd.f32 %v3232, 1e-05
        %v3234 = vrsqrt.pop %v3233
        %v3235 = vmul.f32 %v3234, %v3233
        %v3236 = vmul.f32 %v3235, %v3234
        %v3237 = vmul.f32 0.5, %v3236
        %v3238 = vsub.f32 1.5, %v3237
        %v3239 = vmul.f32 %v3234, %v3238
        %vm3240 = vweird.f32 %v3233
        %vm3241 = vweird.f32 %v3234
        %vm3242 = vmor %vm3240, %vm3241
        %v3243 = vsel %vm3242, %v3234, %v3239
        %v3244 = vmul.f32 %v3227, %v3243
        %v3246 = vperm.slane %v3220, 0
        %v3248 = vmul.f32 %v3244, %v3246
        %v3250 = vperm.slane %v3222, 0
        %v3252 = vadd.f32 %v3248, %v3250
        %s3253 = scalar_lea.vmem %s3, 96
        %v3254 = vld [vmem:[%s3253] sm:$0xff]
        %v3255 = vld [vmem:[%s3253 + $0x8] sm:$0xff]
        %v3256 = vld [vmem:[%s3253 + $0x10] sm:$0xff]
        %v3257 = vld [vmem:[%s3253 + $0x18] sm:$0xff]
        %s3258 = scalar_lea.vmem %s4, 3
        %v3259 = vld [vmem:[%s3258] sm:$0x1]
        %v3261 = vperm.slane %v3259, 0
        %v3264 = vsel %vm595, %v3252, 0
        %3266 = vmatpush.msra.mxu0 0.0
        %3267 = vmatpush.msra.mxu0 0.0
        %3268 = vmatpush.msra.mxu0 0.0
        %3269 = vmatpush.msra.mxu0 0.0
        %3270 = vmatpush.msra.mxu0 0.0
        %3271 = vmatpush.msra.mxu0 0.0
        %3272 = vmatpush.msra.mxu0 0.0
        %3273 = vmatpush.msra.mxu0 0.0
        %3274 = vmatpush.msra.mxu0 0.0
        %3275 = vmatpush.msra.mxu0 0.0
        %3276 = vmatpush.msra.mxu0 0.0
        %3277 = vmatpush.msra.mxu0 0.0
        %3278 = vmatpush.msra.mxu0 %v3257
        %3279 = vmatpush.msra.mxu0 %v3256
        %3280 = vmatpush.msra.mxu0 %v3255
        %3281 = vmatpush.msra.mxu0 %v3254
        %3282 = vmatmul.f32.gmra.mxu0 %v3264
        %v3283 = vpop.f32.mrf.mxu0
        %v3284 = vadd.f32 %v3261, %v3283
        %3285 = vdwg.mxu0
        %3287 = vrot.lane.b32.xlu0 %v3284, 96
        %v3288 = vpop.permute.xlu0 %3287
        %v3289 = vsel %vm936, %v3284, 0
        %v3291 = vsel %vm936, %v3288, 0
        %3293 = vmatpush.xpose.msra.mxu0 0.0
        %3294 = vmatpush.xpose.msra.mxu0 0.0
        %3295 = vmatpush.xpose.msra.mxu0 0.0
        %3296 = vmatpush.xpose.msra.mxu0 0.0
        %3297 = vmatpush.xpose.msra.mxu0 0.0
        %3298 = vmatpush.xpose.msra.mxu0 0.0
        %3299 = vmatpush.xpose.msra.mxu0 0.0
        %3300 = vmatpush.xpose.msra.mxu0 0.0
        %3301 = vmatpush.xpose.msra.mxu0 0.0
        %3302 = vmatpush.xpose.msra.mxu0 0.0
        %3303 = vmatpush.xpose.msra.mxu0 0.0
        %3304 = vmatpush.xpose.msra.mxu0 0.0
        %3305 = vmatpush.xpose.msra.mxu0 0.0
        %3306 = vmatpush.xpose.msra.mxu0 0.0
        %3307 = vmatpush.xpose.msra.mxu0 0.0
        %3308 = vmatpush.xpose.msra.mxu0 %v3291
        %3309 = vmatmul.f32.gmra.mxu0 %v3289
        %v3310 = vpop.f32.mrf.mxu0
        %v3311 = vadd.f32 0.0, %v3310
        %3312 = vdwg.mxu0
        %v3313 = vmul.f32 %v3311, 0.5
        %v3314 = vsel %vm962, %v3313, -inf
        %3315 = vmax.xlane.f32.xlu0 %v3314
        %v3316 = vpop.xlane.xlu0 %3315
        %v3317 = vsub.f32 %v3313, %v3316
        %v3318 = vmul.f32 %v3317, 1.442695
        %v3319 = vpow.pop %v3318
        %v3320 = vsel %vm962, %v3319, 0.0
        %3321 = vadd.xlane.f32.xlu0 %v3320
        %v3322 = vpop.xlane.xlu0 %3321
        %v3323 = vrcp.pop %v3322
        %v3324 = vmul.f32 %v3319, %v3323
        %3325 = vrot.lane.b32.xlu0 %v3284, 64
        %v3326 = vpop.permute.xlu0 %3325
        %v3328 = vsel %vm976, %v3324, 0
        %v3330 = vsel %vm980, %v3326, 0
        %3332 = vmatpush.msra.mxu0 0.0
        %3333 = vmatpush.msra.mxu0 0.0
        %3334 = vmatpush.msra.mxu0 0.0
        %3335 = vmatpush.msra.mxu0 0.0
        %3336 = vmatpush.msra.mxu0 0.0
        %3337 = vmatpush.msra.mxu0 0.0
        %3338 = vmatpush.msra.mxu0 0.0
        %3339 = vmatpush.msra.mxu0 0.0
        %3340 = vmatpush.msra.mxu0 0.0
        %3341 = vmatpush.msra.mxu0 0.0
        %3342 = vmatpush.msra.mxu0 0.0
        %3343 = vmatpush.msra.mxu0 0.0
        %3344 = vmatpush.msra.mxu0 0.0
        %3345 = vmatpush.msra.mxu0 0.0
        %3346 = vmatpush.msra.mxu0 0.0
        %3347 = vmatpush.msra.mxu0 %v3330
        %3348 = vmatmul.f32.gmra.mxu0 %v3328
        %v3349 = vpop.f32.mrf.mxu0
        %v3350 = vadd.f32 0.0, %v3349
        %3351 = vdwg.mxu0
        %3352 = vrot.lane.b32.xlu0 %v3284, 124
        %v3353 = vpop.permute.xlu0 %3352
        %3354 = vrot.lane.b32.xlu0 %v3284, 92
        %v3355 = vpop.permute.xlu0 %3354
        %v3356 = vsel %vm936, %v3353, 0
        %v3358 = vsel %vm936, %v3355, 0
        %3360 = vmatpush.xpose.msra.mxu0 0.0
        %3361 = vmatpush.xpose.msra.mxu0 0.0
        %3362 = vmatpush.xpose.msra.mxu0 0.0
        %3363 = vmatpush.xpose.msra.mxu0 0.0
        %3364 = vmatpush.xpose.msra.mxu0 0.0
        %3365 = vmatpush.xpose.msra.mxu0 0.0
        %3366 = vmatpush.xpose.msra.mxu0 0.0
        %3367 = vmatpush.xpose.msra.mxu0 0.0
        %3368 = vmatpush.xpose.msra.mxu0 0.0
        %3369 = vmatpush.xpose.msra.mxu0 0.0
        %3370 = vmatpush.xpose.msra.mxu0 0.0
        %3371 = vmatpush.xpose.msra.mxu0 0.0
        %3372 = vmatpush.xpose.msra.mxu0 0.0
        %3373 = vmatpush.xpose.msra.mxu0 0.0
        %3374 = vmatpush.xpose.msra.mxu0 0.0
        %3375 = vmatpush.xpose.msra.mxu0 %v3358
        %3376 = vmatmul.f32.gmra.mxu0 %v3356
        %v3377 = vpop.f32.mrf.mxu0
        %v3378 = vadd.f32 0.0, %v3377
        %3379 = vdwg.mxu0
        %v3380 = vmul.f32 %v3378, 0.5
        %v3381 = vsel %vm962, %v3380, -inf
        %3382 = vmax.xlane.f32.xlu0 %v3381
        %v3383 = vpop.xlane.xlu0 %3382
        %v3384 = vsub.f32 %v3380, %v3383
        %v3385 = vmul.f32 %v3384, 1.442695
        %v3386 = vpow.pop %v3385
        %v3387 = vsel %vm962, %v3386, 0.0
        %3388 = vadd.xlane.f32.xlu0 %v3387
        %v3389 = vpop.xlane.xlu0 %3388
        %v3390 = vrcp.pop %v3389
        %v3391 = vmul.f32 %v3386, %v3390
        %3392 = vrot.lane.b32.xlu0 %v3284, 60
        %v3393 = vpop.permute.xlu0 %3392
        %v3395 = vsel %vm976, %v3391, 0
        %v3397 = vsel %vm980, %v3393, 0
        %3399 = vmatpush.msra.mxu0 0.0
        %3400 = vmatpush.msra.mxu0 0.0
        %3401 = vmatpush.msra.mxu0 0.0
        %3402 = vmatpush.msra.mxu0 0.0
        %3403 = vmatpush.msra.mxu0 0.0
        %3404 = vmatpush.msra.mxu0 0.0
        %3405 = vmatpush.msra.mxu0 0.0
        %3406 = vmatpush.msra.mxu0 0.0
        %3407 = vmatpush.msra.mxu0 0.0
        %3408 = vmatpush.msra.mxu0 0.0
        %3409 = vmatpush.msra.mxu0 0.0
        %3410 = vmatpush.msra.mxu0 0.0
        %3411 = vmatpush.msra.mxu0 0.0
        %3412 = vmatpush.msra.mxu0 0.0
        %3413 = vmatpush.msra.mxu0 0.0
        %3414 = vmatpush.msra.mxu0 %v3397
        %3415 = vmatmul.f32.gmra.mxu0 %v3395
        %v3416 = vpop.f32.mrf.mxu0
        %v3417 = vadd.f32 0.0, %v3416
        %3418 = vdwg.mxu0
        %3419 = vrot.lane.b32.xlu0 %v3284, 120
        %v3420 = vpop.permute.xlu0 %3419
        %3421 = vrot.lane.b32.xlu0 %v3284, 88
        %v3422 = vpop.permute.xlu0 %3421
        %v3423 = vsel %vm936, %v3420, 0
        %v3425 = vsel %vm936, %v3422, 0
        %3427 = vmatpush.xpose.msra.mxu0 0.0
        %3428 = vmatpush.xpose.msra.mxu0 0.0
        %3429 = vmatpush.xpose.msra.mxu0 0.0
        %3430 = vmatpush.xpose.msra.mxu0 0.0
        %3431 = vmatpush.xpose.msra.mxu0 0.0
        %3432 = vmatpush.xpose.msra.mxu0 0.0
        %3433 = vmatpush.xpose.msra.mxu0 0.0
        %3434 = vmatpush.xpose.msra.mxu0 0.0
        %3435 = vmatpush.xpose.msra.mxu0 0.0
        %3436 = vmatpush.xpose.msra.mxu0 0.0
        %3437 = vmatpush.xpose.msra.mxu0 0.0
        %3438 = vmatpush.xpose.msra.mxu0 0.0
        %3439 = vmatpush.xpose.msra.mxu0 0.0
        %3440 = vmatpush.xpose.msra.mxu0 0.0
        %3441 = vmatpush.xpose.msra.mxu0 0.0
        %3442 = vmatpush.xpose.msra.mxu0 %v3425
        %3443 = vmatmul.f32.gmra.mxu0 %v3423
        %v3444 = vpop.f32.mrf.mxu0
        %v3445 = vadd.f32 0.0, %v3444
        %3446 = vdwg.mxu0
        %v3447 = vmul.f32 %v3445, 0.5
        %v3448 = vsel %vm962, %v3447, -inf
        %3449 = vmax.xlane.f32.xlu0 %v3448
        %v3450 = vpop.xlane.xlu0 %3449
        %v3451 = vsub.f32 %v3447, %v3450
        %v3452 = vmul.f32 %v3451, 1.442695
        %v3453 = vpow.pop %v3452
        %v3454 = vsel %vm962, %v3453, 0.0
        %3455 = vadd.xlane.f32.xlu0 %v3454
        %v3456 = vpop.xlane.xlu0 %3455
        %v3457 = vrcp.pop %v3456
        %v3458 = vmul.f32 %v3453, %v3457
        %3459 = vrot.lane.b32.xlu0 %v3284, 56
        %v3460 = vpop.permute.xlu0 %3459
        %v3462 = vsel %vm976, %v3458, 0
        %v3464 = vsel %vm980, %v3460, 0
        %3466 = vmatpush.msra.mxu0 0.0
        %3467 = vmatpush.msra.mxu0 0.0
        %3468 = vmatpush.msra.mxu0 0.0
        %3469 = vmatpush.msra.mxu0 0.0
        %3470 = vmatpush.msra.mxu0 0.0
        %3471 = vmatpush.msra.mxu0 0.0
        %3472 = vmatpush.msra.mxu0 0.0
        %3473 = vmatpush.msra.mxu0 0.0
        %3474 = vmatpush.msra.mxu0 0.0
        %3475 = vmatpush.msra.mxu0 0.0
        %3476 = vmatpush.msra.mxu0 0.0
        %3477 = vmatpush.msra.mxu0 0.0
        %3478 = vmatpush.msra.mxu0 0.0
        %3479 = vmatpush.msra.mxu0 0.0
        %3480 = vmatpush.msra.mxu0 0.0
        %3481 = vmatpush.msra.mxu0 %v3464
        %3482 = vmatmul.f32.gmra.mxu0 %v3462
        %v3483 = vpop.f32.mrf.mxu0
        %v3484 = vadd.f32 0.0, %v3483
        %3485 = vdwg.mxu0
        %3486 = vrot.lane.b32.xlu0 %v3284, 116
        %v3487 = vpop.permute.xlu0 %3486
        %3488 = vrot.lane.b32.xlu0 %v3284, 84
        %v3489 = vpop.permute.xlu0 %3488
        %v3490 = vsel %vm936, %v3487, 0
        %v3492 = vsel %vm936, %v3489, 0
        %3494 = vmatpush.xpose.msra.mxu0 0.0
        %3495 = vmatpush.xpose.msra.mxu0 0.0
        %3496 = vmatpush.xpose.msra.mxu0 0.0
        %3497 = vmatpush.xpose.msra.mxu0 0.0
        %3498 = vmatpush.xpose.msra.mxu0 0.0
        %3499 = vmatpush.xpose.msra.mxu0 0.0
        %3500 = vmatpush.xpose.msra.mxu0 0.0
        %3501 = vmatpush.xpose.msra.mxu0 0.0
        %3502 = vmatpush.xpose.msra.mxu0 0.0
        %3503 = vmatpush.xpose.msra.mxu0 0.0
        %3504 = vmatpush.xpose.msra.mxu0 0.0
        %3505 = vmatpush.xpose.msra.mxu0 0.0
        %3506 = vmatpush.xpose.msra.mxu0 0.0
        %3507 = vmatpush.xpose.msra.mxu0 0.0
        %3508 = vmatpush.xpose.msra.mxu0 0.0
        %3509 = vmatpush.xpose.msra.mxu0 %v3492
        %3510 = vmatmul.f32.gmra.mxu0 %v3490
        %v3511 = vpop.f32.mrf.mxu0
        %v3512 = vadd.f32 0.0, %v3511
        %3513 = vdwg.mxu0
        %v3514 = vmul.f32 %v3512, 0.5
        %v3515 = vsel %vm962, %v3514, -inf
        %3516 = vmax.xlane.f32.xlu0 %v3515
        %v3517 = vpop.xlane.xlu0 %3516
        %v3518 = vsub.f32 %v3514, %v3517
        %v3519 = vmul.f32 %v3518, 1.442695
        %v3520 = vpow.pop %v3519
        %v3521 = vsel %vm962, %v3520, 0.0
        %3522 = vadd.xlane.f32.xlu0 %v3521
        %v3523 = vpop.xlane.xlu0 %3522
        %v3524 = vrcp.pop %v3523
        %v3525 = vmul.f32 %v3520, %v3524
        %3526 = vrot.lane.b32.xlu0 %v3284, 52
        %v3527 = vpop.permute.xlu0 %3526
        %v3529 = vsel %vm976, %v3525, 0
        %v3531 = vsel %vm980, %v3527, 0
        %3533 = vmatpush.msra.mxu0 0.0
        %3534 = vmatpush.msra.mxu0 0.0
        %3535 = vmatpush.msra.mxu0 0.0
        %3536 = vmatpush.msra.mxu0 0.0
        %3537 = vmatpush.msra.mxu0 0.0
        %3538 = vmatpush.msra.mxu0 0.0
        %3539 = vmatpush.msra.mxu0 0.0
        %3540 = vmatpush.msra.mxu0 0.0
        %3541 = vmatpush.msra.mxu0 0.0
        %3542 = vmatpush.msra.mxu0 0.0
        %3543 = vmatpush.msra.mxu0 0.0
        %3544 = vmatpush.msra.mxu0 0.0
        %3545 = vmatpush.msra.mxu0 0.0
        %3546 = vmatpush.msra.mxu0 0.0
        %3547 = vmatpush.msra.mxu0 0.0
        %3548 = vmatpush.msra.mxu0 %v3531
        %3549 = vmatmul.f32.gmra.mxu0 %v3529
        %v3550 = vpop.f32.mrf.mxu0
        %v3551 = vadd.f32 0.0, %v3550
        %3552 = vdwg.mxu0
        %3553 = vrot.lane.b32.xlu0 %v3284, 112
        %v3554 = vpop.permute.xlu0 %3553
        %3555 = vrot.lane.b32.xlu0 %v3284, 80
        %v3556 = vpop.permute.xlu0 %3555
        %v3557 = vsel %vm936, %v3554, 0
        %v3559 = vsel %vm936, %v3556, 0
        %3561 = vmatpush.xpose.msra.mxu0 0.0
        %3562 = vmatpush.xpose.msra.mxu0 0.0
        %3563 = vmatpush.xpose.msra.mxu0 0.0
        %3564 = vmatpush.xpose.msra.mxu0 0.0
        %3565 = vmatpush.xpose.msra.mxu0 0.0
        %3566 = vmatpush.xpose.msra.mxu0 0.0
        %3567 = vmatpush.xpose.msra.mxu0 0.0
        %3568 = vmatpush.xpose.msra.mxu0 0.0
        %3569 = vmatpush.xpose.msra.mxu0 0.0
        %3570 = vmatpush.xpose.msra.mxu0 0.0
        %3571 = vmatpush.xpose.msra.mxu0 0.0
        %3572 = vmatpush.xpose.msra.mxu0 0.0
        %3573 = vmatpush.xpose.msra.mxu0 0.0
        %3574 = vmatpush.xpose.msra.mxu0 0.0
        %3575 = vmatpush.xpose.msra.mxu0 0.0
        %3576 = vmatpush.xpose.msra.mxu0 %v3559
        %3577 = vmatmul.f32.gmra.mxu0 %v3557
        %v3578 = vpop.f32.mrf.mxu0
        %v3579 = vadd.f32 0.0, %v3578
        %3580 = vdwg.mxu0
        %v3581 = vmul.f32 %v3579, 0.5
        %v3582 = vsel %vm962, %v3581, -inf
        %3583 = vmax.xlane.f32.xlu0 %v3582
        %v3584 = vpop.xlane.xlu0 %3583
        %v3585 = vsub.f32 %v3581, %v3584
        %v3586 = vmul.f32 %v3585, 1.442695
        %v3587 = vpow.pop %v3586
        %v3588 = vsel %vm962, %v3587, 0.0
        %3589 = vadd.xlane.f32.xlu0 %v3588
        %v3590 = vpop.xlane.xlu0 %3589
        %v3591 = vrcp.pop %v3590
        %v3592 = vmul.f32 %v3587, %v3591
        %3593 = vrot.lane.b32.xlu0 %v3284, 48
        %v3594 = vpop.permute.xlu0 %3593
        %v3596 = vsel %vm976, %v3592, 0
        %v3598 = vsel %vm980, %v3594, 0
        %3600 = vmatpush.msra.mxu0 0.0
        %3601 = vmatpush.msra.mxu0 0.0
        %3602 = vmatpush.msra.mxu0 0.0
        %3603 = vmatpush.msra.mxu0 0.0
        %3604 = vmatpush.msra.mxu0 0.0
        %3605 = vmatpush.msra.mxu0 0.0
        %3606 = vmatpush.msra.mxu0 0.0
        %3607 = vmatpush.msra.mxu0 0.0
        %3608 = vmatpush.msra.mxu0 0.0
        %3609 = vmatpush.msra.mxu0 0.0
        %3610 = vmatpush.msra.mxu0 0.0
        %3611 = vmatpush.msra.mxu0 0.0
        %3612 = vmatpush.msra.mxu0 0.0
        %3613 = vmatpush.msra.mxu0 0.0
        %3614 = vmatpush.msra.mxu0 0.0
        %3615 = vmatpush.msra.mxu0 %v3598
        %3616 = vmatmul.f32.gmra.mxu0 %v3596
        %v3617 = vpop.f32.mrf.mxu0
        %v3618 = vadd.f32 0.0, %v3617
        %3619 = vdwg.mxu0
        %3620 = vrot.lane.b32.xlu0 %v3284, 108
        %v3621 = vpop.permute.xlu0 %3620
        %3622 = vrot.lane.b32.xlu0 %v3284, 76
        %v3623 = vpop.permute.xlu0 %3622
        %v3624 = vsel %vm936, %v3621, 0
        %v3626 = vsel %vm936, %v3623, 0
        %3628 = vmatpush.xpose.msra.mxu0 0.0
        %3629 = vmatpush.xpose.msra.mxu0 0.0
        %3630 = vmatpush.xpose.msra.mxu0 0.0
        %3631 = vmatpush.xpose.msra.mxu0 0.0
        %3632 = vmatpush.xpose.msra.mxu0 0.0
        %3633 = vmatpush.xpose.msra.mxu0 0.0
        %3634 = vmatpush.xpose.msra.mxu0 0.0
        %3635 = vmatpush.xpose.msra.mxu0 0.0
        %3636 = vmatpush.xpose.msra.mxu0 0.0
        %3637 = vmatpush.xpose.msra.mxu0 0.0
        %3638 = vmatpush.xpose.msra.mxu0 0.0
        %3639 = vmatpush.xpose.msra.mxu0 0.0
        %3640 = vmatpush.xpose.msra.mxu0 0.0
        %3641 = vmatpush.xpose.msra.mxu0 0.0
        %3642 = vmatpush.xpose.msra.mxu0 0.0
        %3643 = vmatpush.xpose.msra.mxu0 %v3626
        %3644 = vmatmul.f32.gmra.mxu0 %v3624
        %v3645 = vpop.f32.mrf.mxu0
        %v3646 = vadd.f32 0.0, %v3645
        %3647 = vdwg.mxu0
        %v3648 = vmul.f32 %v3646, 0.5
        %v3649 = vsel %vm962, %v3648, -inf
        %3650 = vmax.xlane.f32.xlu0 %v3649
        %v3651 = vpop.xlane.xlu0 %3650
        %v3652 = vsub.f32 %v3648, %v3651
        %v3653 = vmul.f32 %v3652, 1.442695
        %v3654 = vpow.pop %v3653
        %v3655 = vsel %vm962, %v3654, 0.0
        %3656 = vadd.xlane.f32.xlu0 %v3655
        %v3657 = vpop.xlane.xlu0 %3656
        %v3658 = vrcp.pop %v3657
        %v3659 = vmul.f32 %v3654, %v3658
        %3660 = vrot.lane.b32.xlu0 %v3284, 44
        %v3661 = vpop.permute.xlu0 %3660
        %v3663 = vsel %vm976, %v3659, 0
        %v3665 = vsel %vm980, %v3661, 0
        %3667 = vmatpush.msra.mxu0 0.0
        %3668 = vmatpush.msra.mxu0 0.0
        %3669 = vmatpush.msra.mxu0 0.0
        %3670 = vmatpush.msra.mxu0 0.0
        %3671 = vmatpush.msra.mxu0 0.0
        %3672 = vmatpush.msra.mxu0 0.0
        %3673 = vmatpush.msra.mxu0 0.0
        %3674 = vmatpush.msra.mxu0 0.0
        %3675 = vmatpush.msra.mxu0 0.0
        %3676 = vmatpush.msra.mxu0 0.0
        %3677 = vmatpush.msra.mxu0 0.0
        %3678 = vmatpush.msra.mxu0 0.0
        %3679 = vmatpush.msra.mxu0 0.0
        %3680 = vmatpush.msra.mxu0 0.0
        %3681 = vmatpush.msra.mxu0 0.0
        %3682 = vmatpush.msra.mxu0 %v3665
        %3683 = vmatmul.f32.gmra.mxu0 %v3663
        %v3684 = vpop.f32.mrf.mxu0
        %v3685 = vadd.f32 0.0, %v3684
        %3686 = vdwg.mxu0
        %3687 = vrot.lane.b32.xlu0 %v3284, 104
        %v3688 = vpop.permute.xlu0 %3687
        %3689 = vrot.lane.b32.xlu0 %v3284, 72
        %v3690 = vpop.permute.xlu0 %3689
        %v3691 = vsel %vm936, %v3688, 0
        %v3693 = vsel %vm936, %v3690, 0
        %3695 = vmatpush.xpose.msra.mxu0 0.0
        %3696 = vmatpush.xpose.msra.mxu0 0.0
        %3697 = vmatpush.xpose.msra.mxu0 0.0
        %3698 = vmatpush.xpose.msra.mxu0 0.0
        %3699 = vmatpush.xpose.msra.mxu0 0.0
        %3700 = vmatpush.xpose.msra.mxu0 0.0
        %3701 = vmatpush.xpose.msra.mxu0 0.0
        %3702 = vmatpush.xpose.msra.mxu0 0.0
        %3703 = vmatpush.xpose.msra.mxu0 0.0
        %3704 = vmatpush.xpose.msra.mxu0 0.0
        %3705 = vmatpush.xpose.msra.mxu0 0.0
        %3706 = vmatpush.xpose.msra.mxu0 0.0
        %3707 = vmatpush.xpose.msra.mxu0 0.0
        %3708 = vmatpush.xpose.msra.mxu0 0.0
        %3709 = vmatpush.xpose.msra.mxu0 0.0
        %3710 = vmatpush.xpose.msra.mxu0 %v3693
        %3711 = vmatmul.f32.gmra.mxu0 %v3691
        %v3712 = vpop.f32.mrf.mxu0
        %v3713 = vadd.f32 0.0, %v3712
        %3714 = vdwg.mxu0
        %v3715 = vmul.f32 %v3713, 0.5
        %v3716 = vsel %vm962, %v3715, -inf
        %3717 = vmax.xlane.f32.xlu0 %v3716
        %v3718 = vpop.xlane.xlu0 %3717
        %v3719 = vsub.f32 %v3715, %v3718
        %v3720 = vmul.f32 %v3719, 1.442695
        %v3721 = vpow.pop %v3720
        %v3722 = vsel %vm962, %v3721, 0.0
        %3723 = vadd.xlane.f32.xlu0 %v3722
        %v3724 = vpop.xlane.xlu0 %3723
        %v3725 = vrcp.pop %v3724
        %v3726 = vmul.f32 %v3721, %v3725
        %3727 = vrot.lane.b32.xlu0 %v3284, 40
        %v3728 = vpop.permute.xlu0 %3727
        %v3730 = vsel %vm976, %v3726, 0
        %v3732 = vsel %vm980, %v3728, 0
        %3734 = vmatpush.msra.mxu0 0.0
        %3735 = vmatpush.msra.mxu0 0.0
        %3736 = vmatpush.msra.mxu0 0.0
        %3737 = vmatpush.msra.mxu0 0.0
        %3738 = vmatpush.msra.mxu0 0.0
        %3739 = vmatpush.msra.mxu0 0.0
        %3740 = vmatpush.msra.mxu0 0.0
        %3741 = vmatpush.msra.mxu0 0.0
        %3742 = vmatpush.msra.mxu0 0.0
        %3743 = vmatpush.msra.mxu0 0.0
        %3744 = vmatpush.msra.mxu0 0.0
        %3745 = vmatpush.msra.mxu0 0.0
        %3746 = vmatpush.msra.mxu0 0.0
        %3747 = vmatpush.msra.mxu0 0.0
        %3748 = vmatpush.msra.mxu0 0.0
        %3749 = vmatpush.msra.mxu0 %v3732
        %3750 = vmatmul.f32.gmra.mxu0 %v3730
        %v3751 = vpop.f32.mrf.mxu0
        %v3752 = vadd.f32 0.0, %v3751
        %3753 = vdwg.mxu0
        %3754 = vrot.lane.b32.xlu0 %v3284, 100
        %v3755 = vpop.permute.xlu0 %3754
        %3756 = vrot.lane.b32.xlu0 %v3284, 68
        %v3757 = vpop.permute.xlu0 %3756
        %v3758 = vsel %vm936, %v3755, 0
        %v3760 = vsel %vm936, %v3757, 0
        %3762 = vmatpush.xpose.msra.mxu0 0.0
        %3763 = vmatpush.xpose.msra.mxu0 0.0
        %3764 = vmatpush.xpose.msra.mxu0 0.0
        %3765 = vmatpush.xpose.msra.mxu0 0.0
        %3766 = vmatpush.xpose.msra.mxu0 0.0
        %3767 = vmatpush.xpose.msra.mxu0 0.0
        %3768 = vmatpush.xpose.msra.mxu0 0.0
        %3769 = vmatpush.xpose.msra.mxu0 0.0
        %3770 = vmatpush.xpose.msra.mxu0 0.0
        %3771 = vmatpush.xpose.msra.mxu0 0.0
        %3772 = vmatpush.xpose.msra.mxu0 0.0
        %3773 = vmatpush.xpose.msra.mxu0 0.0
        %3774 = vmatpush.xpose.msra.mxu0 0.0
        %3775 = vmatpush.xpose.msra.mxu0 0.0
        %3776 = vmatpush.xpose.msra.mxu0 0.0
        %3777 = vmatpush.xpose.msra.mxu0 %v3760
        %3778 = vmatmul.f32.gmra.mxu0 %v3758
        %v3779 = vpop.f32.mrf.mxu0
        %v3780 = vadd.f32 0.0, %v3779
        %3781 = vdwg.mxu0
        %v3782 = vmul.f32 %v3780, 0.5
        %v3783 = vsel %vm962, %v3782, -inf
        %3784 = vmax.xlane.f32.xlu0 %v3783
        %v3785 = vpop.xlane.xlu0 %3784
        %v3786 = vsub.f32 %v3782, %v3785
        %v3787 = vmul.f32 %v3786, 1.442695
        %v3788 = vpow.pop %v3787
        %v3789 = vsel %vm962, %v3788, 0.0
        %3790 = vadd.xlane.f32.xlu0 %v3789
        %v3791 = vpop.xlane.xlu0 %3790
        %v3792 = vrcp.pop %v3791
        %v3793 = vmul.f32 %v3788, %v3792
        %3794 = vrot.lane.b32.xlu0 %v3284, 36
        %v3795 = vpop.permute.xlu0 %3794
        %v3797 = vsel %vm976, %v3793, 0
        %v3799 = vsel %vm980, %v3795, 0
        %3801 = vmatpush.msra.mxu0 0.0
        %3802 = vmatpush.msra.mxu0 0.0
        %3803 = vmatpush.msra.mxu0 0.0
        %3804 = vmatpush.msra.mxu0 0.0
        %3805 = vmatpush.msra.mxu0 0.0
        %3806 = vmatpush.msra.mxu0 0.0
        %3807 = vmatpush.msra.mxu0 0.0
        %3808 = vmatpush.msra.mxu0 0.0
        %3809 = vmatpush.msra.mxu0 0.0
        %3810 = vmatpush.msra.mxu0 0.0
        %3811 = vmatpush.msra.mxu0 0.0
        %3812 = vmatpush.msra.mxu0 0.0
        %3813 = vmatpush.msra.mxu0 0.0
        %3814 = vmatpush.msra.mxu0 0.0
        %3815 = vmatpush.msra.mxu0 0.0
        %3816 = vmatpush.msra.mxu0 %v3799
        %3817 = vmatmul.f32.gmra.mxu0 %v3797
        %v3818 = vpop.f32.mrf.mxu0
        %v3819 = vadd.f32 0.0, %v3818
        %3820 = vdwg.mxu0
        %3822 = vrot.lane.b32.xlu0 %v3417, 4
        %v3823 = vpop.permute.xlu0 %3822
        %3826 = vrot.lane.b32.xlu0 %v3484, 8
        %v3827 = vpop.permute.xlu0 %3826
        %3830 = vrot.lane.b32.xlu0 %v3551, 12
        %v3831 = vpop.permute.xlu0 %3830
        %3834 = vrot.lane.b32.xlu0 %v3618, 16
        %v3835 = vpop.permute.xlu0 %3834
        %3838 = vrot.lane.b32.xlu0 %v3685, 20
        %v3839 = vpop.permute.xlu0 %3838
        %3842 = vrot.lane.b32.xlu0 %v3752, 24
        %v3843 = vpop.permute.xlu0 %3842
        %3846 = vrot.lane.b32.xlu0 %v3819, 28
        %v3847 = vpop.permute.xlu0 %3846
        %v3849 = vsel %vm936, %v3350, %v3823
        %v3850 = vsel %vm1501, %v3849, %v3827
        %v3851 = vsel %vm1503, %v3850, %v3831
        %v3852 = vsel %vm1505, %v3851, %v3835
        %v3853 = vsel %vm1507, %v3852, %v3839
        %v3854 = vsel %vm1509, %v3853, %v3843
        %v3855 = vsel %vm1511, %v3854, %v3847
        %s3856 = scalar_lea.vmem %s5, 96
        %v3857 = vld [vmem:[%s3856] sm:$0xff]
        %v3858 = vld [vmem:[%s3856 + $0x8] sm:$0xff]
        %v3859 = vld [vmem:[%s3856 + $0x10] sm:$0xff]
        %v3860 = vld [vmem:[%s3856 + $0x18] sm:$0xff]
        %s3861 = scalar_lea.vmem %s6, 3
        %v3862 = vld [vmem:[%s3861] sm:$0x1]
        %v3864 = vperm.slane %v3862, 0
        %v3867 = vsel %vm595, %v3855, 0
        %3869 = vmatpush.msra.mxu0 0.0
        %3870 = vmatpush.msra.mxu0 0.0
        %3871 = vmatpush.msra.mxu0 0.0
        %3872 = vmatpush.msra.mxu0 0.0
        %3873 = vmatpush.msra.mxu0 0.0
        %3874 = vmatpush.msra.mxu0 0.0
        %3875 = vmatpush.msra.mxu0 0.0
        %3876 = vmatpush.msra.mxu0 0.0
        %3877 = vmatpush.msra.mxu0 0.0
        %3878 = vmatpush.msra.mxu0 0.0
        %3879 = vmatpush.msra.mxu0 0.0
        %3880 = vmatpush.msra.mxu0 0.0
        %3881 = vmatpush.msra.mxu0 %v3860
        %3882 = vmatpush.msra.mxu0 %v3859
        %3883 = vmatpush.msra.mxu0 %v3858
        %3884 = vmatpush.msra.mxu0 %v3857
        %3885 = vmatmul.f32.gmra.mxu0 %v3867
        %v3886 = vpop.f32.mrf.mxu0
        %v3887 = vadd.f32 %v3864, %v3886
        %3888 = vdwg.mxu0
        %v3889 = vadd.f32 %v3252, %v3887
        %s3890 = scalar_lea.vmem %s11, 3
        %v3891 = vld [vmem:[%s3890] sm:$0x1]
        %s3892 = scalar_lea.vmem %s12, 3
        %v3893 = vld [vmem:[%s3892] sm:$0x1]
        %v3894 = vsel %vm705, %v3889, 0.0
        %3895 = vadd.xlane.f32.xlu0 %v3894
        %v3896 = vpop.xlane.xlu0 %3895
        %v3897 = vmul.f32 %v3896, %v1556
        %v3898 = vsub.f32 %v3889, %v3897
        %v3899 = vmul.f32 %v3898, %v3898
        %v3900 = vsel %vm705, %v3899, 0.0
        %3901 = vadd.xlane.f32.xlu0 %v3900
        %v3902 = vpop.xlane.xlu0 %3901
        %v3903 = vmul.f32 %v3902, %v1556
        %v3904 = vadd.f32 %v3903, 1e-05
        %v3905 = vrsqrt.pop %v3904
        %v3906 = vmul.f32 %v3905, %v3904
        %v3907 = vmul.f32 %v3906, %v3905
        %v3908 = vmul.f32 0.5, %v3907
        %v3909 = vsub.f32 1.5, %v3908
        %v3910 = vmul.f32 %v3905, %v3909
        %vm3911 = vweird.f32 %v3904
        %vm3912 = vweird.f32 %v3905
        %vm3913 = vmor %vm3911, %vm3912
        %v3914 = vsel %vm3913, %v3905, %v3910
        %v3915 = vmul.f32 %v3898, %v3914
        %v3917 = vperm.slane %v3891, 0
        %v3919 = vmul.f32 %v3915, %v3917
        %v3921 = vperm.slane %v3893, 0
        %v3923 = vadd.f32 %v3919, %v3921
        %s3924 = scalar_lea.vmem %s7, 96
        %v3925 = vld [vmem:[%s3924] sm:$0xff]
        %v3926 = vld [vmem:[%s3924 + $0x8] sm:$0xff]
        %v3927 = vld [vmem:[%s3924 + $0x10] sm:$0xff]
        %v3928 = vld [vmem:[%s3924 + $0x18] sm:$0xff]
        %s3929 = scalar_lea.vmem %s8, 3
        %v3930 = vld [vmem:[%s3929] sm:$0x1]
        %v3932 = vperm.slane %v3930, 0
        %v3935 = vsel %vm595, %v3923, 0
        %3937 = vmatpush.msra.mxu0 0.0
        %3938 = vmatpush.msra.mxu0 0.0
        %3939 = vmatpush.msra.mxu0 0.0
        %3940 = vmatpush.msra.mxu0 0.0
        %3941 = vmatpush.msra.mxu0 0.0
        %3942 = vmatpush.msra.mxu0 0.0
        %3943 = vmatpush.msra.mxu0 0.0
        %3944 = vmatpush.msra.mxu0 0.0
        %3945 = vmatpush.msra.mxu0 0.0
        %3946 = vmatpush.msra.mxu0 0.0
        %3947 = vmatpush.msra.mxu0 0.0
        %3948 = vmatpush.msra.mxu0 0.0
        %3949 = vmatpush.msra.mxu0 %v3928
        %3950 = vmatpush.msra.mxu0 %v3927
        %3951 = vmatpush.msra.mxu0 %v3926
        %3952 = vmatpush.msra.mxu0 %v3925
        %3953 = vmatmul.f32.gmra.mxu0 %v3935
        %v3954 = vpop.f32.mrf.mxu0
        %v3955 = vadd.f32 %v3932, %v3954
        %3956 = vdwg.mxu0
        %v3957 = vmax.f32 %v3955, 0.0
        %s3958 = scalar_lea.vmem %s9, 384
        %v3959 = vld [vmem:[%s3958] sm:$0xff]
        %v3960 = vld [vmem:[%s3958 + $0x8] sm:$0xff]
        %v3961 = vld [vmem:[%s3958 + $0x10] sm:$0xff]
        %v3962 = vld [vmem:[%s3958 + $0x18] sm:$0xff]
        %v3963 = vld [vmem:[%s3958 + $0x20] sm:$0xff]
        %v3964 = vld [vmem:[%s3958 + $0x28] sm:$0xff]
        %v3965 = vld [vmem:[%s3958 + $0x30] sm:$0xff]
        %v3966 = vld [vmem:[%s3958 + $0x38] sm:$0xff]
        %v3967 = vld [vmem:[%s3958 + $0x40] sm:$0xff]
        %v3968 = vld [vmem:[%s3958 + $0x48] sm:$0xff]
        %v3969 = vld [vmem:[%s3958 + $0x50] sm:$0xff]
        %v3970 = vld [vmem:[%s3958 + $0x58] sm:$0xff]
        %v3971 = vld [vmem:[%s3958 + $0x60] sm:$0xff]
        %v3972 = vld [vmem:[%s3958 + $0x68] sm:$0xff]
        %v3973 = vld [vmem:[%s3958 + $0x70] sm:$0xff]
        %v3974 = vld [vmem:[%s3958 + $0x78] sm:$0xff]
        %s3975 = scalar_lea.vmem %s10, 3
        %v3976 = vld [vmem:[%s3975] sm:$0x1]
        %v3978 = vperm.slane %v3976, 0
        %3980 = vmatpush.msra.mxu0 %v3974
        %3981 = vmatpush.msra.mxu0 %v3973
        %3982 = vmatpush.msra.mxu0 %v3972
        %3983 = vmatpush.msra.mxu0 %v3971
        %3984 = vmatpush.msra.mxu0 %v3970
        %3985 = vmatpush.msra.mxu0 %v3969
        %3986 = vmatpush.msra.mxu0 %v3968
        %3987 = vmatpush.msra.mxu0 %v3967
        %3988 = vmatpush.msra.mxu0 %v3966
        %3989 = vmatpush.msra.mxu0 %v3965
        %3990 = vmatpush.msra.mxu0 %v3964
        %3991 = vmatpush.msra.mxu0 %v3963
        %3992 = vmatpush.msra.mxu0 %v3962
        %3993 = vmatpush.msra.mxu0 %v3961
        %3994 = vmatpush.msra.mxu0 %v3960
        %3995 = vmatpush.msra.mxu0 %v3959
        %3996 = vmatmul.f32.gmra.mxu0 %v3957
        %v3997 = vpop.f32.mrf.mxu0
        %v3998 = vadd.f32 %v3978, %v3997
        %3999 = vdwg.mxu0
        %v4000 = vadd.f32 %v3923, %v3998
        %s4001 = scalar_lea.vmem %s13, 3
        %v4002 = vld [vmem:[%s4001] sm:$0x1]
        %s4003 = scalar_lea.vmem %s14, 3
        %v4004 = vld [vmem:[%s4003] sm:$0x1]
        %v4005 = vsel %vm705, %v4000, 0.0
        %4006 = vadd.xlane.f32.xlu0 %v4005
        %v4007 = vpop.xlane.xlu0 %4006
        %v4008 = vmul.f32 %v4007, %v1556
        %v4009 = vsub.f32 %v4000, %v4008
        %v4010 = vmul.f32 %v4009, %v4009
        %v4011 = vsel %vm705, %v4010, 0.0
        %4012 = vadd.xlane.f32.xlu0 %v4011
        %v4013 = vpop.xlane.xlu0 %4012
        %v4014 = vmul.f32 %v4013, %v1556
        %v4015 = vadd.f32 %v4014, 1e-05
        %v4016 = vrsqrt.pop %v4015
        %v4017 = vmul.f32 %v4016, %v4015
        %v4018 = vmul.f32 %v4017, %v4016
        %v4019 = vmul.f32 0.5, %v4018
        %v4020 = vsub.f32 1.5, %v4019
        %v4021 = vmul.f32 %v4016, %v4020
        %vm4022 = vweird.f32 %v4015
        %vm4023 = vweird.f32 %v4016
        %vm4024 = vmor %vm4022, %vm4023
        %v4025 = vsel %vm4024, %v4016, %v4021
        %v4026 = vmul.f32 %v4009, %v4025
        %v4028 = vperm.slane %v4002, 0
        %v4030 = vmul.f32 %v4026, %v4028
        %v4032 = vperm.slane %v4004, 0
        %v4034 = vadd.f32 %v4030, %v4032
        %s4035 = scalar_lea.vmem %s3, 128
        %v4036 = vld [vmem:[%s4035] sm:$0xff]
        %v4037 = vld [vmem:[%s4035 + $0x8] sm:$0xff]
        %v4038 = vld [vmem:[%s4035 + $0x10] sm:$0xff]
        %v4039 = vld [vmem:[%s4035 + $0x18] sm:$0xff]
        %s4040 = scalar_lea.vmem %s4, 4
        %v4041 = vld [vmem:[%s4040] sm:$0x1]
        %v4043 = vperm.slane %v4041, 0
        %v4046 = vsel %vm595, %v4034, 0
        %4048 = vmatpush.msra.mxu0 0.0
        %4049 = vmatpush.msra.mxu0 0.0
        %4050 = vmatpush.msra.mxu0 0.0
        %4051 = vmatpush.msra.mxu0 0.0
        %4052 = vmatpush.msra.mxu0 0.0
        %4053 = vmatpush.msra.mxu0 0.0
        %4054 = vmatpush.msra.mxu0 0.0
        %4055 = vmatpush.msra.mxu0 0.0
        %4056 = vmatpush.msra.mxu0 0.0
        %4057 = vmatpush.msra.mxu0 0.0
        %4058 = vmatpush.msra.mxu0 0.0
        %4059 = vmatpush.msra.mxu0 0.0
        %4060 = vmatpush.msra.mxu0 %v4039
        %4061 = vmatpush.msra.mxu0 %v4038
        %4062 = vmatpush.msra.mxu0 %v4037
        %4063 = vmatpush.msra.mxu0 %v4036
        %4064 = vmatmul.f32.gmra.mxu0 %v4046
        %v4065 = vpop.f32.mrf.mxu0
        %v4066 = vadd.f32 %v4043, %v4065
        %4067 = vdwg.mxu0
        %4069 = vrot.lane.b32.xlu0 %v4066, 96
        %v4070 = vpop.permute.xlu0 %4069
        %v4071 = vsel %vm936, %v4066, 0
        %v4073 = vsel %vm936, %v4070, 0
        %4075 = vmatpush.xpose.msra.mxu0 0.0
        %4076 = vmatpush.xpose.msra.mxu0 0.0
        %4077 = vmatpush.xpose.msra.mxu0 0.0
        %4078 = vmatpush.xpose.msra.mxu0 0.0
        %4079 = vmatpush.xpose.msra.mxu0 0.0
        %4080 = vmatpush.xpose.msra.mxu0 0.0
        %4081 = vmatpush.xpose.msra.mxu0 0.0
        %4082 = vmatpush.xpose.msra.mxu0 0.0
        %4083 = vmatpush.xpose.msra.mxu0 0.0
        %4084 = vmatpush.xpose.msra.mxu0 0.0
        %4085 = vmatpush.xpose.msra.mxu0 0.0
        %4086 = vmatpush.xpose.msra.mxu0 0.0
        %4087 = vmatpush.xpose.msra.mxu0 0.0
        %4088 = vmatpush.xpose.msra.mxu0 0.0
        %4089 = vmatpush.xpose.msra.mxu0 0.0
        %4090 = vmatpush.xpose.msra.mxu0 %v4073
        %4091 = vmatmul.f32.gmra.mxu0 %v4071
        %v4092 = vpop.f32.mrf.mxu0
        %v4093 = vadd.f32 0.0, %v4092
        %4094 = vdwg.mxu0
        %v4095 = vmul.f32 %v4093, 0.5
        %v4096 = vsel %vm962, %v4095, -inf
        %4097 = vmax.xlane.f32.xlu0 %v4096
        %v4098 = vpop.xlane.xlu0 %4097
        %v4099 = vsub.f32 %v4095, %v4098
        %v4100 = vmul.f32 %v4099, 1.442695
        %v4101 = vpow.pop %v4100
        %v4102 = vsel %vm962, %v4101, 0.0
        %4103 = vadd.xlane.f32.xlu0 %v4102
        %v4104 = vpop.xlane.xlu0 %4103
        %v4105 = vrcp.pop %v4104
        %v4106 = vmul.f32 %v4101, %v4105
        %4107 = vrot.lane.b32.xlu0 %v4066, 64
        %v4108 = vpop.permute.xlu0 %4107
        %v4110 = vsel %vm976, %v4106, 0
        %v4112 = vsel %vm980, %v4108, 0
        %4114 = vmatpush.msra.mxu0 0.0
        %4115 = vmatpush.msra.mxu0 0.0
        %4116 = vmatpush.msra.mxu0 0.0
        %4117 = vmatpush.msra.mxu0 0.0
        %4118 = vmatpush.msra.mxu0 0.0
        %4119 = vmatpush.msra.mxu0 0.0
        %4120 = vmatpush.msra.mxu0 0.0
        %4121 = vmatpush.msra.mxu0 0.0
        %4122 = vmatpush.msra.mxu0 0.0
        %4123 = vmatpush.msra.mxu0 0.0
        %4124 = vmatpush.msra.mxu0 0.0
        %4125 = vmatpush.msra.mxu0 0.0
        %4126 = vmatpush.msra.mxu0 0.0
        %4127 = vmatpush.msra.mxu0 0.0
        %4128 = vmatpush.msra.mxu0 0.0
        %4129 = vmatpush.msra.mxu0 %v4112
        %4130 = vmatmul.f32.gmra.mxu0 %v4110
        %v4131 = vpop.f32.mrf.mxu0
        %v4132 = vadd.f32 0.0, %v4131
        %4133 = vdwg.mxu0
        %4134 = vrot.lane.b32.xlu0 %v4066, 124
        %v4135 = vpop.permute.xlu0 %4134
        %4136 = vrot.lane.b32.xlu0 %v4066, 92
        %v4137 = vpop.permute.xlu0 %4136
        %v4138 = vsel %vm936, %v4135, 0
        %v4140 = vsel %vm936, %v4137, 0
        %4142 = vmatpush.xpose.msra.mxu0 0.0
        %4143 = vmatpush.xpose.msra.mxu0 0.0
        %4144 = vmatpush.xpose.msra.mxu0 0.0
        %4145 = vmatpush.xpose.msra.mxu0 0.0
        %4146 = vmatpush.xpose.msra.mxu0 0.0
        %4147 = vmatpush.xpose.msra.mxu0 0.0
        %4148 = vmatpush.xpose.msra.mxu0 0.0
        %4149 = vmatpush.xpose.msra.mxu0 0.0
        %4150 = vmatpush.xpose.msra.mxu0 0.0
        %4151 = vmatpush.xpose.msra.mxu0 0.0
        %4152 = vmatpush.xpose.msra.mxu0 0.0
        %4153 = vmatpush.xpose.msra.mxu0 0.0
        %4154 = vmatpush.xpose.msra.mxu0 0.0
        %4155 = vmatpush.xpose.msra.mxu0 0.0
        %4156 = vmatpush.xpose.msra.mxu0 0.0
        %4157 = vmatpush.xpose.msra.mxu0 %v4140
        %4158 = vmatmul.f32.gmra.mxu0 %v4138
        %v4159 = vpop.f32.mrf.mxu0
        %v4160 = vadd.f32 0.0, %v4159
        %4161 = vdwg.mxu0
        %v4162 = vmul.f32 %v4160, 0.5
        %v4163 = vsel %vm962, %v4162, -inf
        %4164 = vmax.xlane.f32.xlu0 %v4163
        %v4165 = vpop.xlane.xlu0 %4164
        %v4166 = vsub.f32 %v4162, %v4165
        %v4167 = vmul.f32 %v4166, 1.442695
        %v4168 = vpow.pop %v4167
        %v4169 = vsel %vm962, %v4168, 0.0
        %4170 = vadd.xlane.f32.xlu0 %v4169
        %v4171 = vpop.xlane.xlu0 %4170
        %v4172 = vrcp.pop %v4171
        %v4173 = vmul.f32 %v4168, %v4172
        %4174 = vrot.lane.b32.xlu0 %v4066, 60
        %v4175 = vpop.permute.xlu0 %4174
        %v4177 = vsel %vm976, %v4173, 0
        %v4179 = vsel %vm980, %v4175, 0
        %4181 = vmatpush.msra.mxu0 0.0
        %4182 = vmatpush.msra.mxu0 0.0
        %4183 = vmatpush.msra.mxu0 0.0
        %4184 = vmatpush.msra.mxu0 0.0
        %4185 = vmatpush.msra.mxu0 0.0
        %4186 = vmatpush.msra.mxu0 0.0
        %4187 = vmatpush.msra.mxu0 0.0
        %4188 = vmatpush.msra.mxu0 0.0
        %4189 = vmatpush.msra.mxu0 0.0
        %4190 = vmatpush.msra.mxu0 0.0
        %4191 = vmatpush.msra.mxu0 0.0
        %4192 = vmatpush.msra.mxu0 0.0
        %4193 = vmatpush.msra.mxu0 0.0
        %4194 = vmatpush.msra.mxu0 0.0
        %4195 = vmatpush.msra.mxu0 0.0
        %4196 = vmatpush.msra.mxu0 %v4179
        %4197 = vmatmul.f32.gmra.mxu0 %v4177
        %v4198 = vpop.f32.mrf.mxu0
        %v4199 = vadd.f32 0.0, %v4198
        %4200 = vdwg.mxu0
        %4201 = vrot.lane.b32.xlu0 %v4066, 120
        %v4202 = vpop.permute.xlu0 %4201
        %4203 = vrot.lane.b32.xlu0 %v4066, 88
        %v4204 = vpop.permute.xlu0 %4203
        %v4205 = vsel %vm936, %v4202, 0
        %v4207 = vsel %vm936, %v4204, 0
        %4209 = vmatpush.xpose.msra.mxu0 0.0
        %4210 = vmatpush.xpose.msra.mxu0 0.0
        %4211 = vmatpush.xpose.msra.mxu0 0.0
        %4212 = vmatpush.xpose.msra.mxu0 0.0
        %4213 = vmatpush.xpose.msra.mxu0 0.0
        %4214 = vmatpush.xpose.msra.mxu0 0.0
        %4215 = vmatpush.xpose.msra.mxu0 0.0
        %4216 = vmatpush.xpose.msra.mxu0 0.0
        %4217 = vmatpush.xpose.msra.mxu0 0.0
        %4218 = vmatpush.xpose.msra.mxu0 0.0
        %4219 = vmatpush.xpose.msra.mxu0 0.0
        %4220 = vmatpush.xpose.msra.mxu0 0.0
        %4221 = vmatpush.xpose.msra.mxu0 0.0
        %4222 = vmatpush.xpose.msra.mxu0 0.0
        %4223 = vmatpush.xpose.msra.mxu0 0.0
        %4224 = vmatpush.xpose.msra.mxu0 %v4207
        %4225 = vmatmul.f32.gmra.mxu0 %v4205
        %v4226 = vpop.f32.mrf.mxu0
        %v4227 = vadd.f32 0.0, %v4226
        %4228 = vdwg.mxu0
        %v4229 = vmul.f32 %v4227, 0.5
        %v4230 = vsel %vm962, %v4229, -inf
        %4231 = vmax.xlane.f32.xlu0 %v4230
        %v4232 = vpop.xlane.xlu0 %4231
        %v4233 = vsub.f32 %v4229, %v4232
        %v4234 = vmul.f32 %v4233, 1.442695
        %v4235 = vpow.pop %v4234
        %v4236 = vsel %vm962, %v4235, 0.0
        %4237 = vadd.xlane.f32.xlu0 %v4236
        %v4238 = vpop.xlane.xlu0 %4237
        %v4239 = vrcp.pop %v4238
        %v4240 = vmul.f32 %v4235, %v4239
        %4241 = vrot.lane.b32.xlu0 %v4066, 56
        %v4242 = vpop.permute.xlu0 %4241
        %v4244 = vsel %vm976, %v4240, 0
        %v4246 = vsel %vm980, %v4242, 0
        %4248 = vmatpush.msra.mxu0 0.0
        %4249 = vmatpush.msra.mxu0 0.0
        %4250 = vmatpush.msra.mxu0 0.0
        %4251 = vmatpush.msra.mxu0 0.0
        %4252 = vmatpush.msra.mxu0 0.0
        %4253 = vmatpush.msra.mxu0 0.0
        %4254 = vmatpush.msra.mxu0 0.0
        %4255 = vmatpush.msra.mxu0 0.0
        %4256 = vmatpush.msra.mxu0 0.0
        %4257 = vmatpush.msra.mxu0 0.0
        %4258 = vmatpush.msra.mxu0 0.0
        %4259 = vmatpush.msra.mxu0 0.0
        %4260 = vmatpush.msra.mxu0 0.0
        %4261 = vmatpush.msra.mxu0 0.0
        %4262 = vmatpush.msra.mxu0 0.0
        %4263 = vmatpush.msra.mxu0 %v4246
        %4264 = vmatmul.f32.gmra.mxu0 %v4244
        %v4265 = vpop.f32.mrf.mxu0
        %v4266 = vadd.f32 0.0, %v4265
        %4267 = vdwg.mxu0
        %4268 = vrot.lane.b32.xlu0 %v4066, 116
        %v4269 = vpop.permute.xlu0 %4268
        %4270 = vrot.lane.b32.xlu0 %v4066, 84
        %v4271 = vpop.permute.xlu0 %4270
        %v4272 = vsel %vm936, %v4269, 0
        %v4274 = vsel %vm936, %v4271, 0
        %4276 = vmatpush.xpose.msra.mxu0 0.0
        %4277 = vmatpush.xpose.msra.mxu0 0.0
        %4278 = vmatpush.xpose.msra.mxu0 0.0
        %4279 = vmatpush.xpose.msra.mxu0 0.0
        %4280 = vmatpush.xpose.msra.mxu0 0.0
        %4281 = vmatpush.xpose.msra.mxu0 0.0
        %4282 = vmatpush.xpose.msra.mxu0 0.0
        %4283 = vmatpush.xpose.msra.mxu0 0.0
        %4284 = vmatpush.xpose.msra.mxu0 0.0
        %4285 = vmatpush.xpose.msra.mxu0 0.0
        %4286 = vmatpush.xpose.msra.mxu0 0.0
        %4287 = vmatpush.xpose.msra.mxu0 0.0
        %4288 = vmatpush.xpose.msra.mxu0 0.0
        %4289 = vmatpush.xpose.msra.mxu0 0.0
        %4290 = vmatpush.xpose.msra.mxu0 0.0
        %4291 = vmatpush.xpose.msra.mxu0 %v4274
        %4292 = vmatmul.f32.gmra.mxu0 %v4272
        %v4293 = vpop.f32.mrf.mxu0
        %v4294 = vadd.f32 0.0, %v4293
        %4295 = vdwg.mxu0
        %v4296 = vmul.f32 %v4294, 0.5
        %v4297 = vsel %vm962, %v4296, -inf
        %4298 = vmax.xlane.f32.xlu0 %v4297
        %v4299 = vpop.xlane.xlu0 %4298
        %v4300 = vsub.f32 %v4296, %v4299
        %v4301 = vmul.f32 %v4300, 1.442695
        %v4302 = vpow.pop %v4301
        %v4303 = vsel %vm962, %v4302, 0.0
        %4304 = vadd.xlane.f32.xlu0 %v4303
        %v4305 = vpop.xlane.xlu0 %4304
        %v4306 = vrcp.pop %v4305
        %v4307 = vmul.f32 %v4302, %v4306
        %4308 = vrot.lane.b32.xlu0 %v4066, 52
        %v4309 = vpop.permute.xlu0 %4308
        %v4311 = vsel %vm976, %v4307, 0
        %v4313 = vsel %vm980, %v4309, 0
        %4315 = vmatpush.msra.mxu0 0.0
        %4316 = vmatpush.msra.mxu0 0.0
        %4317 = vmatpush.msra.mxu0 0.0
        %4318 = vmatpush.msra.mxu0 0.0
        %4319 = vmatpush.msra.mxu0 0.0
        %4320 = vmatpush.msra.mxu0 0.0
        %4321 = vmatpush.msra.mxu0 0.0
        %4322 = vmatpush.msra.mxu0 0.0
        %4323 = vmatpush.msra.mxu0 0.0
        %4324 = vmatpush.msra.mxu0 0.0
        %4325 = vmatpush.msra.mxu0 0.0
        %4326 = vmatpush.msra.mxu0 0.0
        %4327 = vmatpush.msra.mxu0 0.0
        %4328 = vmatpush.msra.mxu0 0.0
        %4329 = vmatpush.msra.mxu0 0.0
        %4330 = vmatpush.msra.mxu0 %v4313
        %4331 = vmatmul.f32.gmra.mxu0 %v4311
        %v4332 = vpop.f32.mrf.mxu0
        %v4333 = vadd.f32 0.0, %v4332
        %4334 = vdwg.mxu0
        %4335 = vrot.lane.b32.xlu0 %v4066, 112
        %v4336 = vpop.permute.xlu0 %4335
        %4337 = vrot.lane.b32.xlu0 %v4066, 80
        %v4338 = vpop.permute.xlu0 %4337
        %v4339 = vsel %vm936, %v4336, 0
        %v4341 = vsel %vm936, %v4338, 0
        %4343 = vmatpush.xpose.msra.mxu0 0.0
        %4344 = vmatpush.xpose.msra.mxu0 0.0
        %4345 = vmatpush.xpose.msra.mxu0 0.0
        %4346 = vmatpush.xpose.msra.mxu0 0.0
        %4347 = vmatpush.xpose.msra.mxu0 0.0
        %4348 = vmatpush.xpose.msra.mxu0 0.0
        %4349 = vmatpush.xpose.msra.mxu0 0.0
        %4350 = vmatpush.xpose.msra.mxu0 0.0
        %4351 = vmatpush.xpose.msra.mxu0 0.0
        %4352 = vmatpush.xpose.msra.mxu0 0.0
        %4353 = vmatpush.xpose.msra.mxu0 0.0
        %4354 = vmatpush.xpose.msra.mxu0 0.0
        %4355 = vmatpush.xpose.msra.mxu0 0.0
        %4356 = vmatpush.xpose.msra.mxu0 0.0
        %4357 = vmatpush.xpose.msra.mxu0 0.0
        %4358 = vmatpush.xpose.msra.mxu0 %v4341
        %4359 = vmatmul.f32.gmra.mxu0 %v4339
        %v4360 = vpop.f32.mrf.mxu0
        %v4361 = vadd.f32 0.0, %v4360
        %4362 = vdwg.mxu0
        %v4363 = vmul.f32 %v4361, 0.5
        %v4364 = vsel %vm962, %v4363, -inf
        %4365 = vmax.xlane.f32.xlu0 %v4364
        %v4366 = vpop.xlane.xlu0 %4365
        %v4367 = vsub.f32 %v4363, %v4366
        %v4368 = vmul.f32 %v4367, 1.442695
        %v4369 = vpow.pop %v4368
        %v4370 = vsel %vm962, %v4369, 0.0
        %4371 = vadd.xlane.f32.xlu0 %v4370
        %v4372 = vpop.xlane.xlu0 %4371
        %v4373 = vrcp.pop %v4372
        %v4374 = vmul.f32 %v4369, %v4373
        %4375 = vrot.lane.b32.xlu0 %v4066, 48
        %v4376 = vpop.permute.xlu0 %4375
        %v4378 = vsel %vm976, %v4374, 0
        %v4380 = vsel %vm980, %v4376, 0
        %4382 = vmatpush.msra.mxu0 0.0
        %4383 = vmatpush.msra.mxu0 0.0
        %4384 = vmatpush.msra.mxu0 0.0
        %4385 = vmatpush.msra.mxu0 0.0
        %4386 = vmatpush.msra.mxu0 0.0
        %4387 = vmatpush.msra.mxu0 0.0
        %4388 = vmatpush.msra.mxu0 0.0
        %4389 = vmatpush.msra.mxu0 0.0
        %4390 = vmatpush.msra.mxu0 0.0
        %4391 = vmatpush.msra.mxu0 0.0
        %4392 = vmatpush.msra.mxu0 0.0
        %4393 = vmatpush.msra.mxu0 0.0
        %4394 = vmatpush.msra.mxu0 0.0
        %4395 = vmatpush.msra.mxu0 0.0
        %4396 = vmatpush.msra.mxu0 0.0
        %4397 = vmatpush.msra.mxu0 %v4380
        %4398 = vmatmul.f32.gmra.mxu0 %v4378
        %v4399 = vpop.f32.mrf.mxu0
        %v4400 = vadd.f32 0.0, %v4399
        %4401 = vdwg.mxu0
        %4402 = vrot.lane.b32.xlu0 %v4066, 108
        %v4403 = vpop.permute.xlu0 %4402
        %4404 = vrot.lane.b32.xlu0 %v4066, 76
        %v4405 = vpop.permute.xlu0 %4404
        %v4406 = vsel %vm936, %v4403, 0
        %v4408 = vsel %vm936, %v4405, 0
        %4410 = vmatpush.xpose.msra.mxu0 0.0
        %4411 = vmatpush.xpose.msra.mxu0 0.0
        %4412 = vmatpush.xpose.msra.mxu0 0.0
        %4413 = vmatpush.xpose.msra.mxu0 0.0
        %4414 = vmatpush.xpose.msra.mxu0 0.0
        %4415 = vmatpush.xpose.msra.mxu0 0.0
        %4416 = vmatpush.xpose.msra.mxu0 0.0
        %4417 = vmatpush.xpose.msra.mxu0 0.0
        %4418 = vmatpush.xpose.msra.mxu0 0.0
        %4419 = vmatpush.xpose.msra.mxu0 0.0
        %4420 = vmatpush.xpose.msra.mxu0 0.0
        %4421 = vmatpush.xpose.msra.mxu0 0.0
        %4422 = vmatpush.xpose.msra.mxu0 0.0
        %4423 = vmatpush.xpose.msra.mxu0 0.0
        %4424 = vmatpush.xpose.msra.mxu0 0.0
        %4425 = vmatpush.xpose.msra.mxu0 %v4408
        %4426 = vmatmul.f32.gmra.mxu0 %v4406
        %v4427 = vpop.f32.mrf.mxu0
        %v4428 = vadd.f32 0.0, %v4427
        %4429 = vdwg.mxu0
        %v4430 = vmul.f32 %v4428, 0.5
        %v4431 = vsel %vm962, %v4430, -inf
        %4432 = vmax.xlane.f32.xlu0 %v4431
        %v4433 = vpop.xlane.xlu0 %4432
        %v4434 = vsub.f32 %v4430, %v4433
        %v4435 = vmul.f32 %v4434, 1.442695
        %v4436 = vpow.pop %v4435
        %v4437 = vsel %vm962, %v4436, 0.0
        %4438 = vadd.xlane.f32.xlu0 %v4437
        %v4439 = vpop.xlane.xlu0 %4438
        %v4440 = vrcp.pop %v4439
        %v4441 = vmul.f32 %v4436, %v4440
        %4442 = vrot.lane.b32.xlu0 %v4066, 44
        %v4443 = vpop.permute.xlu0 %4442
        %v4445 = vsel %vm976, %v4441, 0
        %v4447 = vsel %vm980, %v4443, 0
        %4449 = vmatpush.msra.mxu0 0.0
        %4450 = vmatpush.msra.mxu0 0.0
        %4451 = vmatpush.msra.mxu0 0.0
        %4452 = vmatpush.msra.mxu0 0.0
        %4453 = vmatpush.msra.mxu0 0.0
        %4454 = vmatpush.msra.mxu0 0.0
        %4455 = vmatpush.msra.mxu0 0.0
        %4456 = vmatpush.msra.mxu0 0.0
        %4457 = vmatpush.msra.mxu0 0.0
        %4458 = vmatpush.msra.mxu0 0.0
        %4459 = vmatpush.msra.mxu0 0.0
        %4460 = vmatpush.msra.mxu0 0.0
        %4461 = vmatpush.msra.mxu0 0.0
        %4462 = vmatpush.msra.mxu0 0.0
        %4463 = vmatpush.msra.mxu0 0.0
        %4464 = vmatpush.msra.mxu0 %v4447
        %4465 = vmatmul.f32.gmra.mxu0 %v4445
        %v4466 = vpop.f32.mrf.mxu0
        %v4467 = vadd.f32 0.0, %v4466
        %4468 = vdwg.mxu0
        %4469 = vrot.lane.b32.xlu0 %v4066, 104
        %v4470 = vpop.permute.xlu0 %4469
        %4471 = vrot.lane.b32.xlu0 %v4066, 72
        %v4472 = vpop.permute.xlu0 %4471
        %v4473 = vsel %vm936, %v4470, 0
        %v4475 = vsel %vm936, %v4472, 0
        %4477 = vmatpush.xpose.msra.mxu0 0.0
        %4478 = vmatpush.xpose.msra.mxu0 0.0
        %4479 = vmatpush.xpose.msra.mxu0 0.0
        %4480 = vmatpush.xpose.msra.mxu0 0.0
        %4481 = vmatpush.xpose.msra.mxu0 0.0
        %4482 = vmatpush.xpose.msra.mxu0 0.0
        %4483 = vmatpush.xpose.msra.mxu0 0.0
        %4484 = vmatpush.xpose.msra.mxu0 0.0
        %4485 = vmatpush.xpose.msra.mxu0 0.0
        %4486 = vmatpush.xpose.msra.mxu0 0.0
        %4487 = vmatpush.xpose.msra.mxu0 0.0
        %4488 = vmatpush.xpose.msra.mxu0 0.0
        %4489 = vmatpush.xpose.msra.mxu0 0.0
        %4490 = vmatpush.xpose.msra.mxu0 0.0
        %4491 = vmatpush.xpose.msra.mxu0 0.0
        %4492 = vmatpush.xpose.msra.mxu0 %v4475
        %4493 = vmatmul.f32.gmra.mxu0 %v4473
        %v4494 = vpop.f32.mrf.mxu0
        %v4495 = vadd.f32 0.0, %v4494
        %4496 = vdwg.mxu0
        %v4497 = vmul.f32 %v4495, 0.5
        %v4498 = vsel %vm962, %v4497, -inf
        %4499 = vmax.xlane.f32.xlu0 %v4498
        %v4500 = vpop.xlane.xlu0 %4499
        %v4501 = vsub.f32 %v4497, %v4500
        %v4502 = vmul.f32 %v4501, 1.442695
        %v4503 = vpow.pop %v4502
        %v4504 = vsel %vm962, %v4503, 0.0
        %4505 = vadd.xlane.f32.xlu0 %v4504
        %v4506 = vpop.xlane.xlu0 %4505
        %v4507 = vrcp.pop %v4506
        %v4508 = vmul.f32 %v4503, %v4507
        %4509 = vrot.lane.b32.xlu0 %v4066, 40
        %v4510 = vpop.permute.xlu0 %4509
        %v4512 = vsel %vm976, %v4508, 0
        %v4514 = vsel %vm980, %v4510, 0
        %4516 = vmatpush.msra.mxu0 0.0
        %4517 = vmatpush.msra.mxu0 0.0
        %4518 = vmatpush.msra.mxu0 0.0
        %4519 = vmatpush.msra.mxu0 0.0
        %4520 = vmatpush.msra.mxu0 0.0
        %4521 = vmatpush.msra.mxu0 0.0
        %4522 = vmatpush.msra.mxu0 0.0
        %4523 = vmatpush.msra.mxu0 0.0
        %4524 = vmatpush.msra.mxu0 0.0
        %4525 = vmatpush.msra.mxu0 0.0
        %4526 = vmatpush.msra.mxu0 0.0
        %4527 = vmatpush.msra.mxu0 0.0
        %4528 = vmatpush.msra.mxu0 0.0
        %4529 = vmatpush.msra.mxu0 0.0
        %4530 = vmatpush.msra.mxu0 0.0
        %4531 = vmatpush.msra.mxu0 %v4514
        %4532 = vmatmul.f32.gmra.mxu0 %v4512
        %v4533 = vpop.f32.mrf.mxu0
        %v4534 = vadd.f32 0.0, %v4533
        %4535 = vdwg.mxu0
        %4536 = vrot.lane.b32.xlu0 %v4066, 100
        %v4537 = vpop.permute.xlu0 %4536
        %4538 = vrot.lane.b32.xlu0 %v4066, 68
        %v4539 = vpop.permute.xlu0 %4538
        %v4540 = vsel %vm936, %v4537, 0
        %v4542 = vsel %vm936, %v4539, 0
        %4544 = vmatpush.xpose.msra.mxu0 0.0
        %4545 = vmatpush.xpose.msra.mxu0 0.0
        %4546 = vmatpush.xpose.msra.mxu0 0.0
        %4547 = vmatpush.xpose.msra.mxu0 0.0
        %4548 = vmatpush.xpose.msra.mxu0 0.0
        %4549 = vmatpush.xpose.msra.mxu0 0.0
        %4550 = vmatpush.xpose.msra.mxu0 0.0
        %4551 = vmatpush.xpose.msra.mxu0 0.0
        %4552 = vmatpush.xpose.msra.mxu0 0.0
        %4553 = vmatpush.xpose.msra.mxu0 0.0
        %4554 = vmatpush.xpose.msra.mxu0 0.0
        %4555 = vmatpush.xpose.msra.mxu0 0.0
        %4556 = vmatpush.xpose.msra.mxu0 0.0
        %4557 = vmatpush.xpose.msra.mxu0 0.0
        %4558 = vmatpush.xpose.msra.mxu0 0.0
        %4559 = vmatpush.xpose.msra.mxu0 %v4542
        %4560 = vmatmul.f32.gmra.mxu0 %v4540
        %v4561 = vpop.f32.mrf.mxu0
        %v4562 = vadd.f32 0.0, %v4561
        %4563 = vdwg.mxu0
        %v4564 = vmul.f32 %v4562, 0.5
        %v4565 = vsel %vm962, %v4564, -inf
        %4566 = vmax.xlane.f32.xlu0 %v4565
        %v4567 = vpop.xlane.xlu0 %4566
        %v4568 = vsub.f32 %v4564, %v4567
        %v4569 = vmul.f32 %v4568, 1.442695
        %v4570 = vpow.pop %v4569
        %v4571 = vsel %vm962, %v4570, 0.0
        %4572 = vadd.xlane.f32.xlu0 %v4571
        %v4573 = vpop.xlane.xlu0 %4572
        %v4574 = vrcp.pop %v4573
        %v4575 = vmul.f32 %v4570, %v4574
        %4576 = vrot.lane.b32.xlu0 %v4066, 36
        %v4577 = vpop.permute.xlu0 %4576
        %v4579 = vsel %vm976, %v4575, 0
        %v4581 = vsel %vm980, %v4577, 0
        %4583 = vmatpush.msra.mxu0 0.0
        %4584 = vmatpush.msra.mxu0 0.0
        %4585 = vmatpush.msra.mxu0 0.0
        %4586 = vmatpush.msra.mxu0 0.0
        %4587 = vmatpush.msra.mxu0 0.0
        %4588 = vmatpush.msra.mxu0 0.0
        %4589 = vmatpush.msra.mxu0 0.0
        %4590 = vmatpush.msra.mxu0 0.0
        %4591 = vmatpush.msra.mxu0 0.0
        %4592 = vmatpush.msra.mxu0 0.0
        %4593 = vmatpush.msra.mxu0 0.0
        %4594 = vmatpush.msra.mxu0 0.0
        %4595 = vmatpush.msra.mxu0 0.0
        %4596 = vmatpush.msra.mxu0 0.0
        %4597 = vmatpush.msra.mxu0 0.0
        %4598 = vmatpush.msra.mxu0 %v4581
        %4599 = vmatmul.f32.gmra.mxu0 %v4579
        %v4600 = vpop.f32.mrf.mxu0
        %v4601 = vadd.f32 0.0, %v4600
        %4602 = vdwg.mxu0
        %4604 = vrot.lane.b32.xlu0 %v4199, 4
        %v4605 = vpop.permute.xlu0 %4604
        %4608 = vrot.lane.b32.xlu0 %v4266, 8
        %v4609 = vpop.permute.xlu0 %4608
        %4612 = vrot.lane.b32.xlu0 %v4333, 12
        %v4613 = vpop.permute.xlu0 %4612
        %4616 = vrot.lane.b32.xlu0 %v4400, 16
        %v4617 = vpop.permute.xlu0 %4616
        %4620 = vrot.lane.b32.xlu0 %v4467, 20
        %v4621 = vpop.permute.xlu0 %4620
        %4624 = vrot.lane.b32.xlu0 %v4534, 24
        %v4625 = vpop.permute.xlu0 %4624
        %4628 = vrot.lane.b32.xlu0 %v4601, 28
        %v4629 = vpop.permute.xlu0 %4628
        %v4631 = vsel %vm936, %v4132, %v4605
        %v4632 = vsel %vm1501, %v4631, %v4609
        %v4633 = vsel %vm1503, %v4632, %v4613
        %v4634 = vsel %vm1505, %v4633, %v4617
        %v4635 = vsel %vm1507, %v4634, %v4621
        %v4636 = vsel %vm1509, %v4635, %v4625
        %v4637 = vsel %vm1511, %v4636, %v4629
        %s4638 = scalar_lea.vmem %s5, 128
        %v4639 = vld [vmem:[%s4638] sm:$0xff]
        %v4640 = vld [vmem:[%s4638 + $0x8] sm:$0xff]
        %v4641 = vld [vmem:[%s4638 + $0x10] sm:$0xff]
        %v4642 = vld [vmem:[%s4638 + $0x18] sm:$0xff]
        %s4643 = scalar_lea.vmem %s6, 4
        %v4644 = vld [vmem:[%s4643] sm:$0x1]
        %v4646 = vperm.slane %v4644, 0
        %v4649 = vsel %vm595, %v4637, 0
        %4651 = vmatpush.msra.mxu0 0.0
        %4652 = vmatpush.msra.mxu0 0.0
        %4653 = vmatpush.msra.mxu0 0.0
        %4654 = vmatpush.msra.mxu0 0.0
        %4655 = vmatpush.msra.mxu0 0.0
        %4656 = vmatpush.msra.mxu0 0.0
        %4657 = vmatpush.msra.mxu0 0.0
        %4658 = vmatpush.msra.mxu0 0.0
        %4659 = vmatpush.msra.mxu0 0.0
        %4660 = vmatpush.msra.mxu0 0.0
        %4661 = vmatpush.msra.mxu0 0.0
        %4662 = vmatpush.msra.mxu0 0.0
        %4663 = vmatpush.msra.mxu0 %v4642
        %4664 = vmatpush.msra.mxu0 %v4641
        %4665 = vmatpush.msra.mxu0 %v4640
        %4666 = vmatpush.msra.mxu0 %v4639
        %4667 = vmatmul.f32.gmra.mxu0 %v4649
        %v4668 = vpop.f32.mrf.mxu0
        %v4669 = vadd.f32 %v4646, %v4668
        %4670 = vdwg.mxu0
        %v4671 = vadd.f32 %v4034, %v4669
        %s4672 = scalar_lea.vmem %s11, 4
        %v4673 = vld [vmem:[%s4672] sm:$0x1]
        %s4674 = scalar_lea.vmem %s12, 4
        %v4675 = vld [vmem:[%s4674] sm:$0x1]
        %v4676 = vsel %vm705, %v4671, 0.0
        %4677 = vadd.xlane.f32.xlu0 %v4676
        %v4678 = vpop.xlane.xlu0 %4677
        %v4679 = vmul.f32 %v4678, %v1556
        %v4680 = vsub.f32 %v4671, %v4679
        %v4681 = vmul.f32 %v4680, %v4680
        %v4682 = vsel %vm705, %v4681, 0.0
        %4683 = vadd.xlane.f32.xlu0 %v4682
        %v4684 = vpop.xlane.xlu0 %4683
        %v4685 = vmul.f32 %v4684, %v1556
        %v4686 = vadd.f32 %v4685, 1e-05
        %v4687 = vrsqrt.pop %v4686
        %v4688 = vmul.f32 %v4687, %v4686
        %v4689 = vmul.f32 %v4688, %v4687
        %v4690 = vmul.f32 0.5, %v4689
        %v4691 = vsub.f32 1.5, %v4690
        %v4692 = vmul.f32 %v4687, %v4691
        %vm4693 = vweird.f32 %v4686
        %vm4694 = vweird.f32 %v4687
        %vm4695 = vmor %vm4693, %vm4694
        %v4696 = vsel %vm4695, %v4687, %v4692
        %v4697 = vmul.f32 %v4680, %v4696
        %v4699 = vperm.slane %v4673, 0
        %v4701 = vmul.f32 %v4697, %v4699
        %v4703 = vperm.slane %v4675, 0
        %v4705 = vadd.f32 %v4701, %v4703
        %s4706 = scalar_lea.vmem %s7, 128
        %v4707 = vld [vmem:[%s4706] sm:$0xff]
        %v4708 = vld [vmem:[%s4706 + $0x8] sm:$0xff]
        %v4709 = vld [vmem:[%s4706 + $0x10] sm:$0xff]
        %v4710 = vld [vmem:[%s4706 + $0x18] sm:$0xff]
        %s4711 = scalar_lea.vmem %s8, 4
        %v4712 = vld [vmem:[%s4711] sm:$0x1]
        %v4714 = vperm.slane %v4712, 0
        %v4717 = vsel %vm595, %v4705, 0
        %4719 = vmatpush.msra.mxu0 0.0
        %4720 = vmatpush.msra.mxu0 0.0
        %4721 = vmatpush.msra.mxu0 0.0
        %4722 = vmatpush.msra.mxu0 0.0
        %4723 = vmatpush.msra.mxu0 0.0
        %4724 = vmatpush.msra.mxu0 0.0
        %4725 = vmatpush.msra.mxu0 0.0
        %4726 = vmatpush.msra.mxu0 0.0
        %4727 = vmatpush.msra.mxu0 0.0
        %4728 = vmatpush.msra.mxu0 0.0
        %4729 = vmatpush.msra.mxu0 0.0
        %4730 = vmatpush.msra.mxu0 0.0
        %4731 = vmatpush.msra.mxu0 %v4710
        %4732 = vmatpush.msra.mxu0 %v4709
        %4733 = vmatpush.msra.mxu0 %v4708
        %4734 = vmatpush.msra.mxu0 %v4707
        %4735 = vmatmul.f32.gmra.mxu0 %v4717
        %v4736 = vpop.f32.mrf.mxu0
        %v4737 = vadd.f32 %v4714, %v4736
        %4738 = vdwg.mxu0
        %v4739 = vmax.f32 %v4737, 0.0
        %s4740 = scalar_lea.vmem %s9, 512
        %v4741 = vld [vmem:[%s4740] sm:$0xff]
        %v4742 = vld [vmem:[%s4740 + $0x8] sm:$0xff]
        %v4743 = vld [vmem:[%s4740 + $0x10] sm:$0xff]
        %v4744 = vld [vmem:[%s4740 + $0x18] sm:$0xff]
        %v4745 = vld [vmem:[%s4740 + $0x20] sm:$0xff]
        %v4746 = vld [vmem:[%s4740 + $0x28] sm:$0xff]
        %v4747 = vld [vmem:[%s4740 + $0x30] sm:$0xff]
        %v4748 = vld [vmem:[%s4740 + $0x38] sm:$0xff]
        %v4749 = vld [vmem:[%s4740 + $0x40] sm:$0xff]
        %v4750 = vld [vmem:[%s4740 + $0x48] sm:$0xff]
        %v4751 = vld [vmem:[%s4740 + $0x50] sm:$0xff]
        %v4752 = vld [vmem:[%s4740 + $0x58] sm:$0xff]
        %v4753 = vld [vmem:[%s4740 + $0x60] sm:$0xff]
        %v4754 = vld [vmem:[%s4740 + $0x68] sm:$0xff]
        %v4755 = vld [vmem:[%s4740 + $0x70] sm:$0xff]
        %v4756 = vld [vmem:[%s4740 + $0x78] sm:$0xff]
        %s4757 = scalar_lea.vmem %s10, 4
        %v4758 = vld [vmem:[%s4757] sm:$0x1]
        %v4760 = vperm.slane %v4758, 0
        %4762 = vmatpush.msra.mxu0 %v4756
        %4763 = vmatpush.msra.mxu0 %v4755
        %4764 = vmatpush.msra.mxu0 %v4754
        %4765 = vmatpush.msra.mxu0 %v4753
        %4766 = vmatpush.msra.mxu0 %v4752
        %4767 = vmatpush.msra.mxu0 %v4751
        %4768 = vmatpush.msra.mxu0 %v4750
        %4769 = vmatpush.msra.mxu0 %v4749
        %4770 = vmatpush.msra.mxu0 %v4748
        %4771 = vmatpush.msra.mxu0 %v4747
        %4772 = vmatpush.msra.mxu0 %v4746
        %4773 = vmatpush.msra.mxu0 %v4745
        %4774 = vmatpush.msra.mxu0 %v4744
        %4775 = vmatpush.msra.mxu0 %v4743
        %4776 = vmatpush.msra.mxu0 %v4742
        %4777 = vmatpush.msra.mxu0 %v4741
        %4778 = vmatmul.f32.gmra.mxu0 %v4739
        %v4779 = vpop.f32.mrf.mxu0
        %v4780 = vadd.f32 %v4760, %v4779
        %4781 = vdwg.mxu0
        %v4782 = vadd.f32 %v4705, %v4780
        %s4783 = scalar_lea.vmem %s13, 4
        %v4784 = vld [vmem:[%s4783] sm:$0x1]
        %s4785 = scalar_lea.vmem %s14, 4
        %v4786 = vld [vmem:[%s4785] sm:$0x1]
        %v4787 = vsel %vm705, %v4782, 0.0
        %4788 = vadd.xlane.f32.xlu0 %v4787
        %v4789 = vpop.xlane.xlu0 %4788
        %v4790 = vmul.f32 %v4789, %v1556
        %v4791 = vsub.f32 %v4782, %v4790
        %v4792 = vmul.f32 %v4791, %v4791
        %v4793 = vsel %vm705, %v4792, 0.0
        %4794 = vadd.xlane.f32.xlu0 %v4793
        %v4795 = vpop.xlane.xlu0 %4794
        %v4796 = vmul.f32 %v4795, %v1556
        %v4797 = vadd.f32 %v4796, 1e-05
        %v4798 = vrsqrt.pop %v4797
        %v4799 = vmul.f32 %v4798, %v4797
        %v4800 = vmul.f32 %v4799, %v4798
        %v4801 = vmul.f32 0.5, %v4800
        %v4802 = vsub.f32 1.5, %v4801
        %v4803 = vmul.f32 %v4798, %v4802
        %vm4804 = vweird.f32 %v4797
        %vm4805 = vweird.f32 %v4798
        %vm4806 = vmor %vm4804, %vm4805
        %v4807 = vsel %vm4806, %v4798, %v4803
        %v4808 = vmul.f32 %v4791, %v4807
        %v4810 = vperm.slane %v4784, 0
        %v4812 = vmul.f32 %v4808, %v4810
        %v4814 = vperm.slane %v4786, 0
        %v4816 = vadd.f32 %v4812, %v4814
        %s4817 = scalar_lea.vmem %s3, 160
        %v4818 = vld [vmem:[%s4817] sm:$0xff]
        %v4819 = vld [vmem:[%s4817 + $0x8] sm:$0xff]
        %v4820 = vld [vmem:[%s4817 + $0x10] sm:$0xff]
        %v4821 = vld [vmem:[%s4817 + $0x18] sm:$0xff]
        %s4822 = scalar_lea.vmem %s4, 5
        %v4823 = vld [vmem:[%s4822] sm:$0x1]
        %v4825 = vperm.slane %v4823, 0
        %v4828 = vsel %vm595, %v4816, 0
        %4830 = vmatpush.msra.mxu0 0.0
        %4831 = vmatpush.msra.mxu0 0.0
        %4832 = vmatpush.msra.mxu0 0.0
        %4833 = vmatpush.msra.mxu0 0.0
        %4834 = vmatpush.msra.mxu0 0.0
        %4835 = vmatpush.msra.mxu0 0.0
        %4836 = vmatpush.msra.mxu0 0.0
        %4837 = vmatpush.msra.mxu0 0.0
        %4838 = vmatpush.msra.mxu0 0.0
        %4839 = vmatpush.msra.mxu0 0.0
        %4840 = vmatpush.msra.mxu0 0.0
        %4841 = vmatpush.msra.mxu0 0.0
        %4842 = vmatpush.msra.mxu0 %v4821
        %4843 = vmatpush.msra.mxu0 %v4820
        %4844 = vmatpush.msra.mxu0 %v4819
        %4845 = vmatpush.msra.mxu0 %v4818
        %4846 = vmatmul.f32.gmra.mxu0 %v4828
        %v4847 = vpop.f32.mrf.mxu0
        %v4848 = vadd.f32 %v4825, %v4847
        %4849 = vdwg.mxu0
        %4851 = vrot.lane.b32.xlu0 %v4848, 96
        %v4852 = vpop.permute.xlu0 %4851
        %v4853 = vsel %vm936, %v4848, 0
        %v4855 = vsel %vm936, %v4852, 0
        %4857 = vmatpush.xpose.msra.mxu0 0.0
        %4858 = vmatpush.xpose.msra.mxu0 0.0
        %4859 = vmatpush.xpose.msra.mxu0 0.0
        %4860 = vmatpush.xpose.msra.mxu0 0.0
        %4861 = vmatpush.xpose.msra.mxu0 0.0
        %4862 = vmatpush.xpose.msra.mxu0 0.0
        %4863 = vmatpush.xpose.msra.mxu0 0.0
        %4864 = vmatpush.xpose.msra.mxu0 0.0
        %4865 = vmatpush.xpose.msra.mxu0 0.0
        %4866 = vmatpush.xpose.msra.mxu0 0.0
        %4867 = vmatpush.xpose.msra.mxu0 0.0
        %4868 = vmatpush.xpose.msra.mxu0 0.0
        %4869 = vmatpush.xpose.msra.mxu0 0.0
        %4870 = vmatpush.xpose.msra.mxu0 0.0
        %4871 = vmatpush.xpose.msra.mxu0 0.0
        %4872 = vmatpush.xpose.msra.mxu0 %v4855
        %4873 = vmatmul.f32.gmra.mxu0 %v4853
        %v4874 = vpop.f32.mrf.mxu0
        %v4875 = vadd.f32 0.0, %v4874
        %4876 = vdwg.mxu0
        %v4877 = vmul.f32 %v4875, 0.5
        %v4878 = vsel %vm962, %v4877, -inf
        %4879 = vmax.xlane.f32.xlu0 %v4878
        %v4880 = vpop.xlane.xlu0 %4879
        %v4881 = vsub.f32 %v4877, %v4880
        %v4882 = vmul.f32 %v4881, 1.442695
        %v4883 = vpow.pop %v4882
        %v4884 = vsel %vm962, %v4883, 0.0
        %4885 = vadd.xlane.f32.xlu0 %v4884
        %v4886 = vpop.xlane.xlu0 %4885
        %v4887 = vrcp.pop %v4886
        %v4888 = vmul.f32 %v4883, %v4887
        %4889 = vrot.lane.b32.xlu0 %v4848, 64
        %v4890 = vpop.permute.xlu0 %4889
        %v4892 = vsel %vm976, %v4888, 0
        %v4894 = vsel %vm980, %v4890, 0
        %4896 = vmatpush.msra.mxu0 0.0
        %4897 = vmatpush.msra.mxu0 0.0
        %4898 = vmatpush.msra.mxu0 0.0
        %4899 = vmatpush.msra.mxu0 0.0
        %4900 = vmatpush.msra.mxu0 0.0
        %4901 = vmatpush.msra.mxu0 0.0
        %4902 = vmatpush.msra.mxu0 0.0
        %4903 = vmatpush.msra.mxu0 0.0
        %4904 = vmatpush.msra.mxu0 0.0
        %4905 = vmatpush.msra.mxu0 0.0
        %4906 = vmatpush.msra.mxu0 0.0
        %4907 = vmatpush.msra.mxu0 0.0
        %4908 = vmatpush.msra.mxu0 0.0
        %4909 = vmatpush.msra.mxu0 0.0
        %4910 = vmatpush.msra.mxu0 0.0
        %4911 = vmatpush.msra.mxu0 %v4894
        %4912 = vmatmul.f32.gmra.mxu0 %v4892
        %v4913 = vpop.f32.mrf.mxu0
        %v4914 = vadd.f32 0.0, %v4913
        %4915 = vdwg.mxu0
        %4916 = vrot.lane.b32.xlu0 %v4848, 124
        %v4917 = vpop.permute.xlu0 %4916
        %4918 = vrot.lane.b32.xlu0 %v4848, 92
        %v4919 = vpop.permute.xlu0 %4918
        %v4920 = vsel %vm936, %v4917, 0
        %v4922 = vsel %vm936, %v4919, 0
        %4924 = vmatpush.xpose.msra.mxu0 0.0
        %4925 = vmatpush.xpose.msra.mxu0 0.0
        %4926 = vmatpush.xpose.msra.mxu0 0.0
        %4927 = vmatpush.xpose.msra.mxu0 0.0
        %4928 = vmatpush.xpose.msra.mxu0 0.0
        %4929 = vmatpush.xpose.msra.mxu0 0.0
        %4930 = vmatpush.xpose.msra.mxu0 0.0
        %4931 = vmatpush.xpose.msra.mxu0 0.0
        %4932 = vmatpush.xpose.msra.mxu0 0.0
        %4933 = vmatpush.xpose.msra.mxu0 0.0
        %4934 = vmatpush.xpose.msra.mxu0 0.0
        %4935 = vmatpush.xpose.msra.mxu0 0.0
        %4936 = vmatpush.xpose.msra.mxu0 0.0
        %4937 = vmatpush.xpose.msra.mxu0 0.0
        %4938 = vmatpush.xpose.msra.mxu0 0.0
        %4939 = vmatpush.xpose.msra.mxu0 %v4922
        %4940 = vmatmul.f32.gmra.mxu0 %v4920
        %v4941 = vpop.f32.mrf.mxu0
        %v4942 = vadd.f32 0.0, %v4941
        %4943 = vdwg.mxu0
        %v4944 = vmul.f32 %v4942, 0.5
        %v4945 = vsel %vm962, %v4944, -inf
        %4946 = vmax.xlane.f32.xlu0 %v4945
        %v4947 = vpop.xlane.xlu0 %4946
        %v4948 = vsub.f32 %v4944, %v4947
        %v4949 = vmul.f32 %v4948, 1.442695
        %v4950 = vpow.pop %v4949
        %v4951 = vsel %vm962, %v4950, 0.0
        %4952 = vadd.xlane.f32.xlu0 %v4951
        %v4953 = vpop.xlane.xlu0 %4952
        %v4954 = vrcp.pop %v4953
        %v4955 = vmul.f32 %v4950, %v4954
        %4956 = vrot.lane.b32.xlu0 %v4848, 60
        %v4957 = vpop.permute.xlu0 %4956
        %v4959 = vsel %vm976, %v4955, 0
        %v4961 = vsel %vm980, %v4957, 0
        %4963 = vmatpush.msra.mxu0 0.0
        %4964 = vmatpush.msra.mxu0 0.0
        %4965 = vmatpush.msra.mxu0 0.0
        %4966 = vmatpush.msra.mxu0 0.0
        %4967 = vmatpush.msra.mxu0 0.0
        %4968 = vmatpush.msra.mxu0 0.0
        %4969 = vmatpush.msra.mxu0 0.0
        %4970 = vmatpush.msra.mxu0 0.0
        %4971 = vmatpush.msra.mxu0 0.0
        %4972 = vmatpush.msra.mxu0 0.0
        %4973 = vmatpush.msra.mxu0 0.0
        %4974 = vmatpush.msra.mxu0 0.0
        %4975 = vmatpush.msra.mxu0 0.0
        %4976 = vmatpush.msra.mxu0 0.0
        %4977 = vmatpush.msra.mxu0 0.0
        %4978 = vmatpush.msra.mxu0 %v4961
        %4979 = vmatmul.f32.gmra.mxu0 %v4959
        %v4980 = vpop.f32.mrf.mxu0
        %v4981 = vadd.f32 0.0, %v4980
        %4982 = vdwg.mxu0
        %4983 = vrot.lane.b32.xlu0 %v4848, 120
        %v4984 = vpop.permute.xlu0 %4983
        %4985 = vrot.lane.b32.xlu0 %v4848, 88
        %v4986 = vpop.permute.xlu0 %4985
        %v4987 = vsel %vm936, %v4984, 0
        %v4989 = vsel %vm936, %v4986, 0
        %4991 = vmatpush.xpose.msra.mxu0 0.0
        %4992 = vmatpush.xpose.msra.mxu0 0.0
        %4993 = vmatpush.xpose.msra.mxu0 0.0
        %4994 = vmatpush.xpose.msra.mxu0 0.0
        %4995 = vmatpush.xpose.msra.mxu0 0.0
        %4996 = vmatpush.xpose.msra.mxu0 0.0
        %4997 = vmatpush.xpose.msra.mxu0 0.0
        %4998 = vmatpush.xpose.msra.mxu0 0.0
        %4999 = vmatpush.xpose.msra.mxu0 0.0
        %5000 = vmatpush.xpose.msra.mxu0 0.0
        %5001 = vmatpush.xpose.msra.mxu0 0.0
        %5002 = vmatpush.xpose.msra.mxu0 0.0
        %5003 = vmatpush.xpose.msra.mxu0 0.0
        %5004 = vmatpush.xpose.msra.mxu0 0.0
        %5005 = vmatpush.xpose.msra.mxu0 0.0
        %5006 = vmatpush.xpose.msra.mxu0 %v4989
        %5007 = vmatmul.f32.gmra.mxu0 %v4987
        %v5008 = vpop.f32.mrf.mxu0
        %v5009 = vadd.f32 0.0, %v5008
        %5010 = vdwg.mxu0
        %v5011 = vmul.f32 %v5009, 0.5
        %v5012 = vsel %vm962, %v5011, -inf
        %5013 = vmax.xlane.f32.xlu0 %v5012
        %v5014 = vpop.xlane.xlu0 %5013
        %v5015 = vsub.f32 %v5011, %v5014
        %v5016 = vmul.f32 %v5015, 1.442695
        %v5017 = vpow.pop %v5016
        %v5018 = vsel %vm962, %v5017, 0.0
        %5019 = vadd.xlane.f32.xlu0 %v5018
        %v5020 = vpop.xlane.xlu0 %5019
        %v5021 = vrcp.pop %v5020
        %v5022 = vmul.f32 %v5017, %v5021
        %5023 = vrot.lane.b32.xlu0 %v4848, 56
        %v5024 = vpop.permute.xlu0 %5023
        %v5026 = vsel %vm976, %v5022, 0
        %v5028 = vsel %vm980, %v5024, 0
        %5030 = vmatpush.msra.mxu0 0.0
        %5031 = vmatpush.msra.mxu0 0.0
        %5032 = vmatpush.msra.mxu0 0.0
        %5033 = vmatpush.msra.mxu0 0.0
        %5034 = vmatpush.msra.mxu0 0.0
        %5035 = vmatpush.msra.mxu0 0.0
        %5036 = vmatpush.msra.mxu0 0.0
        %5037 = vmatpush.msra.mxu0 0.0
        %5038 = vmatpush.msra.mxu0 0.0
        %5039 = vmatpush.msra.mxu0 0.0
        %5040 = vmatpush.msra.mxu0 0.0
        %5041 = vmatpush.msra.mxu0 0.0
        %5042 = vmatpush.msra.mxu0 0.0
        %5043 = vmatpush.msra.mxu0 0.0
        %5044 = vmatpush.msra.mxu0 0.0
        %5045 = vmatpush.msra.mxu0 %v5028
        %5046 = vmatmul.f32.gmra.mxu0 %v5026
        %v5047 = vpop.f32.mrf.mxu0
        %v5048 = vadd.f32 0.0, %v5047
        %5049 = vdwg.mxu0
        %5050 = vrot.lane.b32.xlu0 %v4848, 116
        %v5051 = vpop.permute.xlu0 %5050
        %5052 = vrot.lane.b32.xlu0 %v4848, 84
        %v5053 = vpop.permute.xlu0 %5052
        %v5054 = vsel %vm936, %v5051, 0
        %v5056 = vsel %vm936, %v5053, 0
        %5058 = vmatpush.xpose.msra.mxu0 0.0
        %5059 = vmatpush.xpose.msra.mxu0 0.0
        %5060 = vmatpush.xpose.msra.mxu0 0.0
        %5061 = vmatpush.xpose.msra.mxu0 0.0
        %5062 = vmatpush.xpose.msra.mxu0 0.0
        %5063 = vmatpush.xpose.msra.mxu0 0.0
        %5064 = vmatpush.xpose.msra.mxu0 0.0
        %5065 = vmatpush.xpose.msra.mxu0 0.0
        %5066 = vmatpush.xpose.msra.mxu0 0.0
        %5067 = vmatpush.xpose.msra.mxu0 0.0
        %5068 = vmatpush.xpose.msra.mxu0 0.0
        %5069 = vmatpush.xpose.msra.mxu0 0.0
        %5070 = vmatpush.xpose.msra.mxu0 0.0
        %5071 = vmatpush.xpose.msra.mxu0 0.0
        %5072 = vmatpush.xpose.msra.mxu0 0.0
        %5073 = vmatpush.xpose.msra.mxu0 %v5056
        %5074 = vmatmul.f32.gmra.mxu0 %v5054
        %v5075 = vpop.f32.mrf.mxu0
        %v5076 = vadd.f32 0.0, %v5075
        %5077 = vdwg.mxu0
        %v5078 = vmul.f32 %v5076, 0.5
        %v5079 = vsel %vm962, %v5078, -inf
        %5080 = vmax.xlane.f32.xlu0 %v5079
        %v5081 = vpop.xlane.xlu0 %5080
        %v5082 = vsub.f32 %v5078, %v5081
        %v5083 = vmul.f32 %v5082, 1.442695
        %v5084 = vpow.pop %v5083
        %v5085 = vsel %vm962, %v5084, 0.0
        %5086 = vadd.xlane.f32.xlu0 %v5085
        %v5087 = vpop.xlane.xlu0 %5086
        %v5088 = vrcp.pop %v5087
        %v5089 = vmul.f32 %v5084, %v5088
        %5090 = vrot.lane.b32.xlu0 %v4848, 52
        %v5091 = vpop.permute.xlu0 %5090
        %v5093 = vsel %vm976, %v5089, 0
        %v5095 = vsel %vm980, %v5091, 0
        %5097 = vmatpush.msra.mxu0 0.0
        %5098 = vmatpush.msra.mxu0 0.0
        %5099 = vmatpush.msra.mxu0 0.0
        %5100 = vmatpush.msra.mxu0 0.0
        %5101 = vmatpush.msra.mxu0 0.0
        %5102 = vmatpush.msra.mxu0 0.0
        %5103 = vmatpush.msra.mxu0 0.0
        %5104 = vmatpush.msra.mxu0 0.0
        %5105 = vmatpush.msra.mxu0 0.0
        %5106 = vmatpush.msra.mxu0 0.0
        %5107 = vmatpush.msra.mxu0 0.0
        %5108 = vmatpush.msra.mxu0 0.0
        %5109 = vmatpush.msra.mxu0 0.0
        %5110 = vmatpush.msra.mxu0 0.0
        %5111 = vmatpush.msra.mxu0 0.0
        %5112 = vmatpush.msra.mxu0 %v5095
        %5113 = vmatmul.f32.gmra.mxu0 %v5093
        %v5114 = vpop.f32.mrf.mxu0
        %v5115 = vadd.f32 0.0, %v5114
        %5116 = vdwg.mxu0
        %5117 = vrot.lane.b32.xlu0 %v4848, 112
        %v5118 = vpop.permute.xlu0 %5117
        %5119 = vrot.lane.b32.xlu0 %v4848, 80
        %v5120 = vpop.permute.xlu0 %5119
        %v5121 = vsel %vm936, %v5118, 0
        %v5123 = vsel %vm936, %v5120, 0
        %5125 = vmatpush.xpose.msra.mxu0 0.0
        %5126 = vmatpush.xpose.msra.mxu0 0.0
        %5127 = vmatpush.xpose.msra.mxu0 0.0
        %5128 = vmatpush.xpose.msra.mxu0 0.0
        %5129 = vmatpush.xpose.msra.mxu0 0.0
        %5130 = vmatpush.xpose.msra.mxu0 0.0
        %5131 = vmatpush.xpose.msra.mxu0 0.0
        %5132 = vmatpush.xpose.msra.mxu0 0.0
        %5133 = vmatpush.xpose.msra.mxu0 0.0
        %5134 = vmatpush.xpose.msra.mxu0 0.0
        %5135 = vmatpush.xpose.msra.mxu0 0.0
        %5136 = vmatpush.xpose.msra.mxu0 0.0
        %5137 = vmatpush.xpose.msra.mxu0 0.0
        %5138 = vmatpush.xpose.msra.mxu0 0.0
        %5139 = vmatpush.xpose.msra.mxu0 0.0
        %5140 = vmatpush.xpose.msra.mxu0 %v5123
        %5141 = vmatmul.f32.gmra.mxu0 %v5121
        %v5142 = vpop.f32.mrf.mxu0
        %v5143 = vadd.f32 0.0, %v5142
        %5144 = vdwg.mxu0
        %v5145 = vmul.f32 %v5143, 0.5
        %v5146 = vsel %vm962, %v5145, -inf
        %5147 = vmax.xlane.f32.xlu0 %v5146
        %v5148 = vpop.xlane.xlu0 %5147
        %v5149 = vsub.f32 %v5145, %v5148
        %v5150 = vmul.f32 %v5149, 1.442695
        %v5151 = vpow.pop %v5150
        %v5152 = vsel %vm962, %v5151, 0.0
        %5153 = vadd.xlane.f32.xlu0 %v5152
        %v5154 = vpop.xlane.xlu0 %5153
        %v5155 = vrcp.pop %v5154
        %v5156 = vmul.f32 %v5151, %v5155
        %5157 = vrot.lane.b32.xlu0 %v4848, 48
        %v5158 = vpop.permute.xlu0 %5157
        %v5160 = vsel %vm976, %v5156, 0
        %v5162 = vsel %vm980, %v5158, 0
        %5164 = vmatpush.msra.mxu0 0.0
        %5165 = vmatpush.msra.mxu0 0.0
        %5166 = vmatpush.msra.mxu0 0.0
        %5167 = vmatpush.msra.mxu0 0.0
        %5168 = vmatpush.msra.mxu0 0.0
        %5169 = vmatpush.msra.mxu0 0.0
        %5170 = vmatpush.msra.mxu0 0.0
        %5171 = vmatpush.msra.mxu0 0.0
        %5172 = vmatpush.msra.mxu0 0.0
        %5173 = vmatpush.msra.mxu0 0.0
        %5174 = vmatpush.msra.mxu0 0.0
        %5175 = vmatpush.msra.mxu0 0.0
        %5176 = vmatpush.msra.mxu0 0.0
        %5177 = vmatpush.msra.mxu0 0.0
        %5178 = vmatpush.msra.mxu0 0.0
        %5179 = vmatpush.msra.mxu0 %v5162
        %5180 = vmatmul.f32.gmra.mxu0 %v5160
        %v5181 = vpop.f32.mrf.mxu0
        %v5182 = vadd.f32 0.0, %v5181
        %5183 = vdwg.mxu0
        %5184 = vrot.lane.b32.xlu0 %v4848, 108
        %v5185 = vpop.permute.xlu0 %5184
        %5186 = vrot.lane.b32.xlu0 %v4848, 76
        %v5187 = vpop.permute.xlu0 %5186
        %v5188 = vsel %vm936, %v5185, 0
        %v5190 = vsel %vm936, %v5187, 0
        %5192 = vmatpush.xpose.msra.mxu0 0.0
        %5193 = vmatpush.xpose.msra.mxu0 0.0
        %5194 = vmatpush.xpose.msra.mxu0 0.0
        %5195 = vmatpush.xpose.msra.mxu0 0.0
        %5196 = vmatpush.xpose.msra.mxu0 0.0
        %5197 = vmatpush.xpose.msra.mxu0 0.0
        %5198 = vmatpush.xpose.msra.mxu0 0.0
        %5199 = vmatpush.xpose.msra.mxu0 0.0
        %5200 = vmatpush.xpose.msra.mxu0 0.0
        %5201 = vmatpush.xpose.msra.mxu0 0.0
        %5202 = vmatpush.xpose.msra.mxu0 0.0
        %5203 = vmatpush.xpose.msra.mxu0 0.0
        %5204 = vmatpush.xpose.msra.mxu0 0.0
        %5205 = vmatpush.xpose.msra.mxu0 0.0
        %5206 = vmatpush.xpose.msra.mxu0 0.0
        %5207 = vmatpush.xpose.msra.mxu0 %v5190
        %5208 = vmatmul.f32.gmra.mxu0 %v5188
        %v5209 = vpop.f32.mrf.mxu0
        %v5210 = vadd.f32 0.0, %v5209
        %5211 = vdwg.mxu0
        %v5212 = vmul.f32 %v5210, 0.5
        %v5213 = vsel %vm962, %v5212, -inf
        %5214 = vmax.xlane.f32.xlu0 %v5213
        %v5215 = vpop.xlane.xlu0 %5214
        %v5216 = vsub.f32 %v5212, %v5215
        %v5217 = vmul.f32 %v5216, 1.442695
        %v5218 = vpow.pop %v5217
        %v5219 = vsel %vm962, %v5218, 0.0
        %5220 = vadd.xlane.f32.xlu0 %v5219
        %v5221 = vpop.xlane.xlu0 %5220
        %v5222 = vrcp.pop %v5221
        %v5223 = vmul.f32 %v5218, %v5222
        %5224 = vrot.lane.b32.xlu0 %v4848, 44
        %v5225 = vpop.permute.xlu0 %5224
        %v5227 = vsel %vm976, %v5223, 0
        %v5229 = vsel %vm980, %v5225, 0
        %5231 = vmatpush.msra.mxu0 0.0
        %5232 = vmatpush.msra.mxu0 0.0
        %5233 = vmatpush.msra.mxu0 0.0
        %5234 = vmatpush.msra.mxu0 0.0
        %5235 = vmatpush.msra.mxu0 0.0
        %5236 = vmatpush.msra.mxu0 0.0
        %5237 = vmatpush.msra.mxu0 0.0
        %5238 = vmatpush.msra.mxu0 0.0
        %5239 = vmatpush.msra.mxu0 0.0
        %5240 = vmatpush.msra.mxu0 0.0
        %5241 = vmatpush.msra.mxu0 0.0
        %5242 = vmatpush.msra.mxu0 0.0
        %5243 = vmatpush.msra.mxu0 0.0
        %5244 = vmatpush.msra.mxu0 0.0
        %5245 = vmatpush.msra.mxu0 0.0
        %5246 = vmatpush.msra.mxu0 %v5229
        %5247 = vmatmul.f32.gmra.mxu0 %v5227
        %v5248 = vpop.f32.mrf.mxu0
        %v5249 = vadd.f32 0.0, %v5248
        %5250 = vdwg.mxu0
        %5251 = vrot.lane.b32.xlu0 %v4848, 104
        %v5252 = vpop.permute.xlu0 %5251
        %5253 = vrot.lane.b32.xlu0 %v4848, 72
        %v5254 = vpop.permute.xlu0 %5253
        %v5255 = vsel %vm936, %v5252, 0
        %v5257 = vsel %vm936, %v5254, 0
        %5259 = vmatpush.xpose.msra.mxu0 0.0
        %5260 = vmatpush.xpose.msra.mxu0 0.0
        %5261 = vmatpush.xpose.msra.mxu0 0.0
        %5262 = vmatpush.xpose.msra.mxu0 0.0
        %5263 = vmatpush.xpose.msra.mxu0 0.0
        %5264 = vmatpush.xpose.msra.mxu0 0.0
        %5265 = vmatpush.xpose.msra.mxu0 0.0
        %5266 = vmatpush.xpose.msra.mxu0 0.0
        %5267 = vmatpush.xpose.msra.mxu0 0.0
        %5268 = vmatpush.xpose.msra.mxu0 0.0
        %5269 = vmatpush.xpose.msra.mxu0 0.0
        %5270 = vmatpush.xpose.msra.mxu0 0.0
        %5271 = vmatpush.xpose.msra.mxu0 0.0
        %5272 = vmatpush.xpose.msra.mxu0 0.0
        %5273 = vmatpush.xpose.msra.mxu0 0.0
        %5274 = vmatpush.xpose.msra.mxu0 %v5257
        %5275 = vmatmul.f32.gmra.mxu0 %v5255
        %v5276 = vpop.f32.mrf.mxu0
        %v5277 = vadd.f32 0.0, %v5276
        %5278 = vdwg.mxu0
        %v5279 = vmul.f32 %v5277, 0.5
        %v5280 = vsel %vm962, %v5279, -inf
        %5281 = vmax.xlane.f32.xlu0 %v5280
        %v5282 = vpop.xlane.xlu0 %5281
        %v5283 = vsub.f32 %v5279, %v5282
        %v5284 = vmul.f32 %v5283, 1.442695
        %v5285 = vpow.pop %v5284
        %v5286 = vsel %vm962, %v5285, 0.0
        %5287 = vadd.xlane.f32.xlu0 %v5286
        %v5288 = vpop.xlane.xlu0 %5287
        %v5289 = vrcp.pop %v5288
        %v5290 = vmul.f32 %v5285, %v5289
        %5291 = vrot.lane.b32.xlu0 %v4848, 40
        %v5292 = vpop.permute.xlu0 %5291
        %v5294 = vsel %vm976, %v5290, 0
        %v5296 = vsel %vm980, %v5292, 0
        %5298 = vmatpush.msra.mxu0 0.0
        %5299 = vmatpush.msra.mxu0 0.0
        %5300 = vmatpush.msra.mxu0 0.0
        %5301 = vmatpush.msra.mxu0 0.0
        %5302 = vmatpush.msra.mxu0 0.0
        %5303 = vmatpush.msra.mxu0 0.0
        %5304 = vmatpush.msra.mxu0 0.0
        %5305 = vmatpush.msra.mxu0 0.0
        %5306 = vmatpush.msra.mxu0 0.0
        %5307 = vmatpush.msra.mxu0 0.0
        %5308 = vmatpush.msra.mxu0 0.0
        %5309 = vmatpush.msra.mxu0 0.0
        %5310 = vmatpush.msra.mxu0 0.0
        %5311 = vmatpush.msra.mxu0 0.0
        %5312 = vmatpush.msra.mxu0 0.0
        %5313 = vmatpush.msra.mxu0 %v5296
        %5314 = vmatmul.f32.gmra.mxu0 %v5294
        %v5315 = vpop.f32.mrf.mxu0
        %v5316 = vadd.f32 0.0, %v5315
        %5317 = vdwg.mxu0
        %5318 = vrot.lane.b32.xlu0 %v4848, 100
        %v5319 = vpop.permute.xlu0 %5318
        %5320 = vrot.lane.b32.xlu0 %v4848, 68
        %v5321 = vpop.permute.xlu0 %5320
        %v5322 = vsel %vm936, %v5319, 0
        %v5324 = vsel %vm936, %v5321, 0
        %5326 = vmatpush.xpose.msra.mxu0 0.0
        %5327 = vmatpush.xpose.msra.mxu0 0.0
        %5328 = vmatpush.xpose.msra.mxu0 0.0
        %5329 = vmatpush.xpose.msra.mxu0 0.0
        %5330 = vmatpush.xpose.msra.mxu0 0.0
        %5331 = vmatpush.xpose.msra.mxu0 0.0
        %5332 = vmatpush.xpose.msra.mxu0 0.0
        %5333 = vmatpush.xpose.msra.mxu0 0.0
        %5334 = vmatpush.xpose.msra.mxu0 0.0
        %5335 = vmatpush.xpose.msra.mxu0 0.0
        %5336 = vmatpush.xpose.msra.mxu0 0.0
        %5337 = vmatpush.xpose.msra.mxu0 0.0
        %5338 = vmatpush.xpose.msra.mxu0 0.0
        %5339 = vmatpush.xpose.msra.mxu0 0.0
        %5340 = vmatpush.xpose.msra.mxu0 0.0
        %5341 = vmatpush.xpose.msra.mxu0 %v5324
        %5342 = vmatmul.f32.gmra.mxu0 %v5322
        %v5343 = vpop.f32.mrf.mxu0
        %v5344 = vadd.f32 0.0, %v5343
        %5345 = vdwg.mxu0
        %v5346 = vmul.f32 %v5344, 0.5
        %v5347 = vsel %vm962, %v5346, -inf
        %5348 = vmax.xlane.f32.xlu0 %v5347
        %v5349 = vpop.xlane.xlu0 %5348
        %v5350 = vsub.f32 %v5346, %v5349
        %v5351 = vmul.f32 %v5350, 1.442695
        %v5352 = vpow.pop %v5351
        %v5353 = vsel %vm962, %v5352, 0.0
        %5354 = vadd.xlane.f32.xlu0 %v5353
        %v5355 = vpop.xlane.xlu0 %5354
        %v5356 = vrcp.pop %v5355
        %v5357 = vmul.f32 %v5352, %v5356
        %5358 = vrot.lane.b32.xlu0 %v4848, 36
        %v5359 = vpop.permute.xlu0 %5358
        %v5361 = vsel %vm976, %v5357, 0
        %v5363 = vsel %vm980, %v5359, 0
        %5365 = vmatpush.msra.mxu0 0.0
        %5366 = vmatpush.msra.mxu0 0.0
        %5367 = vmatpush.msra.mxu0 0.0
        %5368 = vmatpush.msra.mxu0 0.0
        %5369 = vmatpush.msra.mxu0 0.0
        %5370 = vmatpush.msra.mxu0 0.0
        %5371 = vmatpush.msra.mxu0 0.0
        %5372 = vmatpush.msra.mxu0 0.0
        %5373 = vmatpush.msra.mxu0 0.0
        %5374 = vmatpush.msra.mxu0 0.0
        %5375 = vmatpush.msra.mxu0 0.0
        %5376 = vmatpush.msra.mxu0 0.0
        %5377 = vmatpush.msra.mxu0 0.0
        %5378 = vmatpush.msra.mxu0 0.0
        %5379 = vmatpush.msra.mxu0 0.0
        %5380 = vmatpush.msra.mxu0 %v5363
        %5381 = vmatmul.f32.gmra.mxu0 %v5361
        %v5382 = vpop.f32.mrf.mxu0
        %v5383 = vadd.f32 0.0, %v5382
        %5384 = vdwg.mxu0
        %5386 = vrot.lane.b32.xlu0 %v4981, 4
        %v5387 = vpop.permute.xlu0 %5386
        %5390 = vrot.lane.b32.xlu0 %v5048, 8
        %v5391 = vpop.permute.xlu0 %5390
        %5394 = vrot.lane.b32.xlu0 %v5115, 12
        %v5395 = vpop.permute.xlu0 %5394
        %5398 = vrot.lane.b32.xlu0 %v5182, 16
        %v5399 = vpop.permute.xlu0 %5398
        %5402 = vrot.lane.b32.xlu0 %v5249, 20
        %v5403 = vpop.permute.xlu0 %5402
        %5406 = vrot.lane.b32.xlu0 %v5316, 24
        %v5407 = vpop.permute.xlu0 %5406
        %5410 = vrot.lane.b32.xlu0 %v5383, 28
        %v5411 = vpop.permute.xlu0 %5410
        %v5413 = vsel %vm936, %v4914, %v5387
        %v5414 = vsel %vm1501, %v5413, %v5391
        %v5415 = vsel %vm1503, %v5414, %v5395
        %v5416 = vsel %vm1505, %v5415, %v5399
        %v5417 = vsel %vm1507, %v5416, %v5403
        %v5418 = vsel %vm1509, %v5417, %v5407
        %v5419 = vsel %vm1511, %v5418, %v5411
        %s5420 = scalar_lea.vmem %s5, 160
        %v5421 = vld [vmem:[%s5420] sm:$0xff]
        %v5422 = vld [vmem:[%s5420 + $0x8] sm:$0xff]
        %v5423 = vld [vmem:[%s5420 + $0x10] sm:$0xff]
        %v5424 = vld [vmem:[%s5420 + $0x18] sm:$0xff]
        %s5425 = scalar_lea.vmem %s6, 5
        %v5426 = vld [vmem:[%s5425] sm:$0x1]
        %v5428 = vperm.slane %v5426, 0
        %v5431 = vsel %vm595, %v5419, 0
        %5433 = vmatpush.msra.mxu0 0.0
        %5434 = vmatpush.msra.mxu0 0.0
        %5435 = vmatpush.msra.mxu0 0.0
        %5436 = vmatpush.msra.mxu0 0.0
        %5437 = vmatpush.msra.mxu0 0.0
        %5438 = vmatpush.msra.mxu0 0.0
        %5439 = vmatpush.msra.mxu0 0.0
        %5440 = vmatpush.msra.mxu0 0.0
        %5441 = vmatpush.msra.mxu0 0.0
        %5442 = vmatpush.msra.mxu0 0.0
        %5443 = vmatpush.msra.mxu0 0.0
        %5444 = vmatpush.msra.mxu0 0.0
        %5445 = vmatpush.msra.mxu0 %v5424
        %5446 = vmatpush.msra.mxu0 %v5423
        %5447 = vmatpush.msra.mxu0 %v5422
        %5448 = vmatpush.msra.mxu0 %v5421
        %5449 = vmatmul.f32.gmra.mxu0 %v5431
        %v5450 = vpop.f32.mrf.mxu0
        %v5451 = vadd.f32 %v5428, %v5450
        %5452 = vdwg.mxu0
        %v5453 = vadd.f32 %v4816, %v5451
        %s5454 = scalar_lea.vmem %s11, 5
        %v5455 = vld [vmem:[%s5454] sm:$0x1]
        %s5456 = scalar_lea.vmem %s12, 5
        %v5457 = vld [vmem:[%s5456] sm:$0x1]
        %v5458 = vsel %vm705, %v5453, 0.0
        %5459 = vadd.xlane.f32.xlu0 %v5458
        %v5460 = vpop.xlane.xlu0 %5459
        %v5461 = vmul.f32 %v5460, %v1556
        %v5462 = vsub.f32 %v5453, %v5461
        %v5463 = vmul.f32 %v5462, %v5462
        %v5464 = vsel %vm705, %v5463, 0.0
        %5465 = vadd.xlane.f32.xlu0 %v5464
        %v5466 = vpop.xlane.xlu0 %5465
        %v5467 = vmul.f32 %v5466, %v1556
        %v5468 = vadd.f32 %v5467, 1e-05
        %v5469 = vrsqrt.pop %v5468
        %v5470 = vmul.f32 %v5469, %v5468
        %v5471 = vmul.f32 %v5470, %v5469
        %v5472 = vmul.f32 0.5, %v5471
        %v5473 = vsub.f32 1.5, %v5472
        %v5474 = vmul.f32 %v5469, %v5473
        %vm5475 = vweird.f32 %v5468
        %vm5476 = vweird.f32 %v5469
        %vm5477 = vmor %vm5475, %vm5476
        %v5478 = vsel %vm5477, %v5469, %v5474
        %v5479 = vmul.f32 %v5462, %v5478
        %v5481 = vperm.slane %v5455, 0
        %v5483 = vmul.f32 %v5479, %v5481
        %v5485 = vperm.slane %v5457, 0
        %v5487 = vadd.f32 %v5483, %v5485
        %s5488 = scalar_lea.vmem %s7, 160
        %v5489 = vld [vmem:[%s5488] sm:$0xff]
        %v5490 = vld [vmem:[%s5488 + $0x8] sm:$0xff]
        %v5491 = vld [vmem:[%s5488 + $0x10] sm:$0xff]
        %v5492 = vld [vmem:[%s5488 + $0x18] sm:$0xff]
        %s5493 = scalar_lea.vmem %s8, 5
        %v5494 = vld [vmem:[%s5493] sm:$0x1]
        %v5496 = vperm.slane %v5494, 0
        %v5499 = vsel %vm595, %v5487, 0
        %5501 = vmatpush.msra.mxu0 0.0
        %5502 = vmatpush.msra.mxu0 0.0
        %5503 = vmatpush.msra.mxu0 0.0
        %5504 = vmatpush.msra.mxu0 0.0
        %5505 = vmatpush.msra.mxu0 0.0
        %5506 = vmatpush.msra.mxu0 0.0
        %5507 = vmatpush.msra.mxu0 0.0
        %5508 = vmatpush.msra.mxu0 0.0
        %5509 = vmatpush.msra.mxu0 0.0
        %5510 = vmatpush.msra.mxu0 0.0
        %5511 = vmatpush.msra.mxu0 0.0
        %5512 = vmatpush.msra.mxu0 0.0
        %5513 = vmatpush.msra.mxu0 %v5492
        %5514 = vmatpush.msra.mxu0 %v5491
        %5515 = vmatpush.msra.mxu0 %v5490
        %5516 = vmatpush.msra.mxu0 %v5489
        %5517 = vmatmul.f32.gmra.mxu0 %v5499
        %v5518 = vpop.f32.mrf.mxu0
        %v5519 = vadd.f32 %v5496, %v5518
        %5520 = vdwg.mxu0
        %v5521 = vmax.f32 %v5519, 0.0
        %s5522 = scalar_lea.vmem %s9, 640
        %v5523 = vld [vmem:[%s5522] sm:$0xff]
        %v5524 = vld [vmem:[%s5522 + $0x8] sm:$0xff]
        %v5525 = vld [vmem:[%s5522 + $0x10] sm:$0xff]
        %v5526 = vld [vmem:[%s5522 + $0x18] sm:$0xff]
        %v5527 = vld [vmem:[%s5522 + $0x20] sm:$0xff]
        %v5528 = vld [vmem:[%s5522 + $0x28] sm:$0xff]
        %v5529 = vld [vmem:[%s5522 + $0x30] sm:$0xff]
        %v5530 = vld [vmem:[%s5522 + $0x38] sm:$0xff]
        %v5531 = vld [vmem:[%s5522 + $0x40] sm:$0xff]
        %v5532 = vld [vmem:[%s5522 + $0x48] sm:$0xff]
        %v5533 = vld [vmem:[%s5522 + $0x50] sm:$0xff]
        %v5534 = vld [vmem:[%s5522 + $0x58] sm:$0xff]
        %v5535 = vld [vmem:[%s5522 + $0x60] sm:$0xff]
        %v5536 = vld [vmem:[%s5522 + $0x68] sm:$0xff]
        %v5537 = vld [vmem:[%s5522 + $0x70] sm:$0xff]
        %v5538 = vld [vmem:[%s5522 + $0x78] sm:$0xff]
        %s5539 = scalar_lea.vmem %s10, 5
        %v5540 = vld [vmem:[%s5539] sm:$0x1]
        %v5542 = vperm.slane %v5540, 0
        %5544 = vmatpush.msra.mxu0 %v5538
        %5545 = vmatpush.msra.mxu0 %v5537
        %5546 = vmatpush.msra.mxu0 %v5536
        %5547 = vmatpush.msra.mxu0 %v5535
        %5548 = vmatpush.msra.mxu0 %v5534
        %5549 = vmatpush.msra.mxu0 %v5533
        %5550 = vmatpush.msra.mxu0 %v5532
        %5551 = vmatpush.msra.mxu0 %v5531
        %5552 = vmatpush.msra.mxu0 %v5530
        %5553 = vmatpush.msra.mxu0 %v5529
        %5554 = vmatpush.msra.mxu0 %v5528
        %5555 = vmatpush.msra.mxu0 %v5527
        %5556 = vmatpush.msra.mxu0 %v5526
        %5557 = vmatpush.msra.mxu0 %v5525
        %5558 = vmatpush.msra.mxu0 %v5524
        %5559 = vmatpush.msra.mxu0 %v5523
        %5560 = vmatmul.f32.gmra.mxu0 %v5521
        %v5561 = vpop.f32.mrf.mxu0
        %v5562 = vadd.f32 %v5542, %v5561
        %5563 = vdwg.mxu0
        %v5564 = vadd.f32 %v5487, %v5562
        %s5565 = scalar_lea.vmem %s13, 5
        %v5566 = vld [vmem:[%s5565] sm:$0x1]
        %s5567 = scalar_lea.vmem %s14, 5
        %v5568 = vld [vmem:[%s5567] sm:$0x1]
        %v5569 = vsel %vm705, %v5564, 0.0
        %5570 = vadd.xlane.f32.xlu0 %v5569
        %v5571 = vpop.xlane.xlu0 %5570
        %v5572 = vmul.f32 %v5571, %v1556
        %v5573 = vsub.f32 %v5564, %v5572
        %v5574 = vmul.f32 %v5573, %v5573
        %v5575 = vsel %vm705, %v5574, 0.0
        %5576 = vadd.xlane.f32.xlu0 %v5575
        %v5577 = vpop.xlane.xlu0 %5576
        %v5578 = vmul.f32 %v5577, %v1556
        %v5579 = vadd.f32 %v5578, 1e-05
        %v5580 = vrsqrt.pop %v5579
        %v5581 = vmul.f32 %v5580, %v5579
        %v5582 = vmul.f32 %v5581, %v5580
        %v5583 = vmul.f32 0.5, %v5582
        %v5584 = vsub.f32 1.5, %v5583
        %v5585 = vmul.f32 %v5580, %v5584
        %vm5586 = vweird.f32 %v5579
        %vm5587 = vweird.f32 %v5580
        %vm5588 = vmor %vm5586, %vm5587
        %v5589 = vsel %vm5588, %v5580, %v5585
        %v5590 = vmul.f32 %v5573, %v5589
        %v5592 = vperm.slane %v5566, 0
        %v5594 = vmul.f32 %v5590, %v5592
        %v5596 = vperm.slane %v5568, 0
        %v5598 = vadd.f32 %v5594, %v5596
        %5599 = vst.msk [vmem:[%s487] sm:$0x3] %vm705, %v5598
        %s5600 = sand.u32 %s357, 1
        %s5601 = scalar_lea.sflag [#allocation3], %s5600
        %s5602 = sand.u32 %s357, 1
        %s5603 = smul.addr %s5602, 2
        %s5604 = scalar_lea.vmem [#allocation2], %s5603
        // Predicated region
        $region81: #{forward.1} parent=79 // pred_check
          %p5605 = pneg %p367
        $region82: #{forward.1} parent=79 // pred_check_branch
          %5607 = sbr.rel (%p5605) target = $region84
        $region83: #{forward.1} parent=79 // pred_region
          %5609 = vsyncadd %s5601, 0
          %s5610 = smul.addr %s29, 2
          %s5611 = scalar_lea.hbm %s15, %s5610
          %s5613 = sshll.u32 %s5604, 4
          %s5614 = int_to_ptr.vmem [resolvable:$true] %s5613
          %s5615 = sshll.u32 %s5611, 4
          %s5616 = int_to_ptr.hbm [resolvable:$true] %s5615
          %5618 = dma.vmem_to_hbm [thread:$0]  %s5614, 32, %s5616, %s5601
        $region84: #{forward.1} parent=79 // pred_fallthru
          _
      $region80: #{forward.1} parent=5 // pred_fallthru
        _
      %p5619 = scmp.le.s32.totalorder 2, %s24
      // Predicated region
      $region85: #{forward.1} parent=5 // pred_check
        %p5620 = pneg %p5619
      $region86: #{forward.1} parent=5 // pred_check_branch
        %5622 = sbr.rel (%p5620) target = $region88
      $region87: #{forward.1} parent=5 // pred_region
        %s5623 = ssub.s32 %s24, 2
        // Predicated region
        $region89: #{forward.1} parent=87 // pred_check
          %p5624 = pneg %p373
        $region90: #{forward.1} parent=87 // pred_check_branch
          %5626 = sbr.rel (%p5624) target = $region92
        $region91: #{forward.1} parent=87 // pred_region
          %s5627 = sand.u32 %s358, 1
          %s5628 = scalar_lea.sflag [#allocation3], %s5627
          %s5629 = sand.u32 %s358, 1
          %s5630 = smul.addr %s5629, 2
          %s5631 = scalar_lea.vmem [#allocation2], %s5630
          %5633 = dma.done %s5628, 32
        $region92: #{forward.1} parent=87 // pred_fallthru
          _
      $region88: #{forward.1} parent=5 // pred_fallthru
        _
    $region6: #{forward.1} parent=1 // loop_footer
      %s28 = sadd.s32 1, %s24
    $region7: #{forward.1} parent=1 // loop_footer_branch
      %23 = sbr.rel target = $region3
    $region8: #{forward.1} parent=1 // loop_exit
      _
    %5634 = vsyncpa [#allocation3], 1
    %s5635 = scalar_lea.sflag [#allocation3], 1
    %5636 = vsyncpa %s5635, 1

</llo_original>
